<compile_context>
chip_gen: v7x
topology: tpu7x:2x2x1
jax: 0.10.0
libtpu: 0.0.40
codegen_flags: <defaults>
</compile_context>

<pallas_src>
import functools

import jax
import jax.numpy as jnp
from jax import lax
from jax.experimental import pallas as pl
from jax.experimental.pallas import tpu as pltpu


# ----------------------------- kernel helpers -------------------------------

def _layernorm(x, eps):
    # elementwise_affine=False LayerNorm over last dim (biased variance).
    mu = jnp.mean(x, axis=-1, keepdims=True)
    var = jnp.mean((x - mu) ** 2, axis=-1, keepdims=True)
    return (x - mu) * lax.rsqrt(var + eps)


def _gelu_tanh(x):
    # nn.GELU(approximate='tanh')
    c = 0.7978845608028654  # sqrt(2/pi)
    return 0.5 * x * (1.0 + jnp.tanh(c * (x + 0.044715 * x * x * x)))


def _split_heads(t, num_heads):
    # (N, D) -> (num_heads, N, hd).  Lane slices are stacked on a new leading
    # (batch) axis; this runs once per batch element in the prologue and feeds
    # the batched attention einsums (no per-head matmuls downstream).
    n, d = t.shape
    hd = d // num_heads
    return jnp.stack(
        [t[:, h * hd:(h + 1) * hd] for h in range(num_heads)], axis=0)


# --------------------------------- kernel -----------------------------------

def dit_block_kernel(x_ref, c_ref, w_ada_ref, b_ada_ref, w_qkv_ref, b_qkv_ref,
                     w_projr_ref, b_proj_ref, w_fc1_ref, b_fc1_ref,
                     w_fc2_ref, b_fc2_ref, o_ref,
                     ada_sc, q_sc, k_sc, v_sc, *, num_heads, eps=1e-6):
    qi = pl.program_id(1)
    _, N, D = x_ref.shape
    _, TQ, _ = o_ref.shape
    hd = D // num_heads
    sm_scale = 1.0 / (hd ** 0.5)
    bf16 = jnp.bfloat16

    # ---- per-batch prologue: adaLN row + full-sequence Q/K/V, cached ----
    @pl.when(qi == 0)
    def _prologue():
        cvec = c_ref[0]                                    # (1, D)   f32
        c_act = cvec * jax.nn.sigmoid(cvec)                # SiLU
        ada = jnp.dot(c_act.astype(bf16), w_ada_ref[...],
                      preferred_element_type=jnp.float32) + b_ada_ref[...]
        ada_sc[...] = ada                                  # (1, 6D)  f32

        xf = x_ref[0]                                      # (N, D)   f32
        h = _layernorm(xf, eps) * (1.0 + ada[:, 1 * D:2 * D]) + ada[:, 0:D]
        qkv = jnp.dot(h.astype(bf16), w_qkv_ref[...],
                      preferred_element_type=jnp.float32) + b_qkv_ref[...]
        q_sc[...] = _split_heads(qkv[:, 0:D], num_heads).astype(bf16)
        k_sc[...] = _split_heads(qkv[:, D:2 * D], num_heads).astype(bf16)
        v_sc[...] = _split_heads(qkv[:, 2 * D:3 * D], num_heads).astype(bf16)

    # adaLN chunks: aligned 128-wide lane slices of the cached (1, 6D) row.
    gate_msa = ada_sc[:, 2 * D:3 * D]
    shift_mlp = ada_sc[:, 3 * D:4 * D]
    scale_mlp = ada_sc[:, 4 * D:5 * D]
    gate_mlp = ada_sc[:, 5 * D:6 * D]

    q0 = pl.multiple_of(qi * TQ, TQ)
    x_t = x_ref[0, pl.ds(q0, TQ), :]                       # (TQ, D)          f32
    q_t = q_sc[:, pl.ds(q0, TQ), :]                        # (heads, TQ, hd)  bf16

    # ---- attention: batched over the head axis, f32 accumulation ----
    s = jnp.einsum('hqd,hkd->hqk', q_t, k_sc[...],
                   preferred_element_type=jnp.float32) * sm_scale
    s = s - jnp.max(s, axis=-1, keepdims=True)
    p = jnp.exp(s)
    p = p * pl.reciprocal(jnp.sum(p, axis=-1, keepdims=True), approx=True)
    ctx = jnp.einsum('hqk,hkd->hqd', p.astype(bf16), v_sc[...],
                     preferred_element_type=jnp.float32)   # (heads, TQ, hd)
    # Output projection folded per head: sum_h ctx_h @ w_proj[h] (+ bias).
    attn = jnp.einsum('hqd,hdf->hqf', ctx.astype(bf16), w_projr_ref[...],
                      preferred_element_type=jnp.float32)  # (heads, TQ, D)
    attn = jnp.sum(attn, axis=0) + b_proj_ref[...]         # (TQ, D)
    x1 = x_t + gate_msa * attn

    # ---- MLP branch ----
    h2 = _layernorm(x1, eps) * (1.0 + scale_mlp) + shift_mlp
    m = jnp.dot(h2.astype(bf16), w_fc1_ref[...],
                preferred_element_type=jnp.float32) + b_fc1_ref[...]
    m = _gelu_tanh(m)
    m = jnp.dot(m.astype(bf16), w_fc2_ref[...],
                preferred_element_type=jnp.float32) + b_fc2_ref[...]
    o_ref[0] = (x1 + gate_mlp * m).astype(o_ref.dtype)


# -------------------------------- wrapper ------------------------------------

def dit_block(x, c, params, num_heads, *, tq=128):
    B, N, D = x.shape
    H = params["w_fc1"].shape[1]
    assert D % num_heads == 0
    hd = D // num_heads
    tq = min(tq, N)
    assert N % tq == 0, "sequence length must be divisible by the query tile"
    nq = N // tq
    bf16 = jnp.bfloat16

    # MXU-feeding weights stored as bf16; biases / activations stay f32.
    w_ada = params["w_ada"].astype(bf16)
    w_qkv = params["w_qkv"].astype(bf16)
    w_projr = params["w_proj"].reshape(num_heads, hd, D).astype(bf16)
    w_fc1 = params["w_fc1"].astype(bf16)
    w_fc2 = params["w_fc2"].astype(bf16)
    b_ada, b_qkv = params["b_ada"], params["b_qkv"]
    b_proj, b_fc1, b_fc2 = params["b_proj"], params["b_fc1"], params["b_fc2"]

    # Reshape c so the per-batch block's last two dims equal the full dims.
    c3 = c.reshape(B, 1, D)

    def const_spec(shape):
        nd = len(shape)
        return pl.BlockSpec(shape, lambda b, q, _nd=nd: (0,) * _nd)

    kernel = functools.partial(dit_block_kernel, num_heads=num_heads)

    return pl.pallas_call(
        kernel,
        out_shape=jax.ShapeDtypeStruct((B, N, D), x.dtype),
        grid=(B, nq),
        in_specs=[
            pl.BlockSpec((1, N, D), lambda b, q: (b, 0, 0)),     # x (full seq / batch)
            pl.BlockSpec((1, 1, D), lambda b, q: (b, 0, 0)),     # c (per batch)
            const_spec((D, 6 * D)), const_spec((1, 6 * D)),      # adaLN w, b
            const_spec((D, 3 * D)), const_spec((1, 3 * D)),      # qkv w, b
            const_spec((num_heads, hd, D)), const_spec((1, D)),  # proj w (head-split), b
            const_spec((D, H)), const_spec((1, H)),              # fc1 w, b
            const_spec((H, D)), const_spec((1, D)),              # fc2 w, b
        ],
        out_specs=pl.BlockSpec((1, tq, D), lambda b, q: (b, q, 0)),
        scratch_shapes=[
            pltpu.VMEM((1, 6 * D), jnp.float32),        # cached adaLN row
            pltpu.VMEM((num_heads, N, hd), bf16),       # cached Q (full seq)
            pltpu.VMEM((num_heads, N, hd), bf16),       # cached K
            pltpu.VMEM((num_heads, N, hd), bf16),       # cached V
        ],
        compiler_params=pltpu.CompilerParams(
            dimension_semantics=("parallel", "arbitrary"),
            vmem_limit_bytes=48 * 1024 * 1024),
    )(x, c3, w_ada, b_ada, w_qkv, b_qkv, w_projr, b_proj,
      w_fc1, b_fc1, w_fc2, b_fc2)


# ----------------------------- pure-JAX reference ----------------------------

def dit_block_ref(x, c, p, num_heads, eps=1e-6):
    B, N, D = x.shape
    hd = D // num_heads

    def ln(z):
        mu = z.mean(-1, keepdims=True)
        var = ((z - mu) ** 2).mean(-1, keepdims=True)
        return (z - mu) / jnp.sqrt(var + eps)

    c_act = c * jax.nn.sigmoid(c)
    ada = c_act @ p["w_ada"] + p["b_ada"][0]
    (shift_msa, scale_msa, gate_msa,
     shift_mlp, scale_mlp, gate_mlp) = jnp.split(ada, 6, axis=1)

    h = ln(x) * (1 + scale_msa[:, None, :]) + shift_msa[:, None, :]
    qkv = h @ p["w_qkv"] + p["b_qkv"][0]
    qkv = qkv.reshape(B, N, 3, num_heads, hd).transpose(2, 0, 3, 1, 4)
    q, k, v = qkv[0], qkv[1], qkv[2]
    s = jnp.einsum("bhqd,bhkd->bhqk", q, k) * (hd ** -0.5)
    pm = jax.nn.softmax(s, axis=-1)
    attn = jnp.einsum("bhqk,bhkd->bhqd", pm, v).transpose(0, 2, 1, 3).reshape(B, N, D)
    attn = attn @ p["w_proj"] + p["b_proj"][0]
    x1 = x + gate_msa[:, None, :] * attn

    h2 = ln(x1) * (1 + scale_mlp[:, None, :]) + shift_mlp[:, None, :]
    m = h2 @ p["w_fc1"] + p["b_fc1"][0]
    m = 0.5 * m * (1 + jnp.tanh(0.7978845608028654 * (m + 0.044715 * m ** 3)))
    m = m @ p["w_fc2"] + p["b_fc2"][0]
    return x1 + gate_mlp[:, None, :] * m


# ---------------------------------- main --------------------------------------

if __name__ == "__main__":
    # 128-aligned (but still small) shapes so all blocks/slices are lane-dense.
    B, N, D = 2, 256, 128          # batch, tokens, hidden_size
    num_heads = 4
    mlp_ratio = 4.0
    H = int(D * mlp_ratio)

    key = jax.random.PRNGKey(0)
    ks = jax.random.split(key, 12)

    def init(k, shape, s=0.02):
        return s * jax.random.normal(k, shape, dtype=jnp.float32)

    params = {
        "w_ada":  init(ks[0], (D, 6 * D)),
        "b_ada":  init(ks[1], (1, 6 * D)),
        "w_qkv":  init(ks[2], (D, 3 * D)),
        "b_qkv":  init(ks[3], (1, 3 * D)),
        "w_proj": init(ks[4], (D, D)),
        "b_proj": init(ks[5], (1, D)),
        "w_fc1":  init(ks[6], (D, H)),
        "b_fc1":  init(ks[7], (1, H)),
        "w_fc2":  init(ks[8], (H, D)),
        "b_fc2":  init(ks[9], (1, D)),
    }

    x = jax.random.normal(ks[10], (B, N, D), dtype=jnp.float32)
    c = jax.random.normal(ks[11], (B, D), dtype=jnp.float32)

    out = jax.block_until_ready(dit_block(x, c, params, num_heads, tq=128))
    ref = jax.block_until_ready(dit_block_ref(x, c, params, num_heads))

    assert out.shape == (B, N, D)
    max_err = float(jnp.max(jnp.abs(out - ref)))
    assert jnp.allclose(out, ref, atol=2e-2, rtol=2e-2), max_err
    print("KERNEL_OK")
</pallas_src>

<mosaic_0001>
module attributes {stable_mosaic.version = 11 : i64} {
  func.func @dit_block_kernel(%arg0: i32, %arg1: i32, %arg2: memref<1x256x128xf32, #tpu.memory_space<vmem>>, %arg3: memref<1x1x128xf32, #tpu.memory_space<vmem>>, %arg4: memref<128x768xbf16, #tpu.memory_space<vmem>>, %arg5: memref<1x768xf32, #tpu.memory_space<vmem>>, %arg6: memref<128x384xbf16, #tpu.memory_space<vmem>>, %arg7: memref<1x384xf32, #tpu.memory_space<vmem>>, %arg8: memref<4x32x128xbf16, #tpu.memory_space<vmem>>, %arg9: memref<1x128xf32, #tpu.memory_space<vmem>>, %arg10: memref<128x512xbf16, #tpu.memory_space<vmem>>, %arg11: memref<1x512xf32, #tpu.memory_space<vmem>>, %arg12: memref<512x128xbf16, #tpu.memory_space<vmem>>, %arg13: memref<1x128xf32, #tpu.memory_space<vmem>>, %arg14: memref<1x128x128xf32, #tpu.memory_space<vmem>>, %arg15: memref<1x768xf32, #tpu.memory_space<vmem>>, %arg16: memref<4x256x32xbf16, #tpu.memory_space<vmem>>, %arg17: memref<4x256x32xbf16, #tpu.memory_space<vmem>>, %arg18: memref<4x256x32xbf16, #tpu.memory_space<vmem>>) attributes {dimension_semantics = [#tpu.dimension_semantics<parallel>, #tpu.dimension_semantics<arbitrary>], iteration_bounds = array<i64: 2, 2>, scalar_prefetch = 0 : i64, scratch_operands = 4 : i64, tpu.core_type = #tpu.core_type<tc>, window_params = [{transform_indices = @transform_0, window_bounds = array<i64: 1, 256, 128>}, {transform_indices = @transform_1, window_bounds = array<i64: 1, 1, 128>}, {pipeline_mode = #tpu.pipeline_mode<synchronous>, transform_indices = @transform_2, window_bounds = array<i64: 128, 768>}, {pipeline_mode = #tpu.pipeline_mode<synchronous>, transform_indices = @transform_3, window_bounds = array<i64: 1, 768>}, {pipeline_mode = #tpu.pipeline_mode<synchronous>, transform_indices = @transform_4, window_bounds = array<i64: 128, 384>}, {pipeline_mode = #tpu.pipeline_mode<synchronous>, transform_indices = @transform_5, window_bounds = array<i64: 1, 384>}, {pipeline_mode = #tpu.pipeline_mode<synchronous>, transform_indices = @transform_6, window_bounds = array<i64: 4, 32, 128>}, {pipeline_mode = #tpu.pipeline_mode<synchronous>, transform_indices = @transform_7, window_bounds = array<i64: 1, 128>}, {pipeline_mode = #tpu.pipeline_mode<synchronous>, transform_indices = @transform_8, window_bounds = array<i64: 128, 512>}, {pipeline_mode = #tpu.pipeline_mode<synchronous>, transform_indices = @transform_9, window_bounds = array<i64: 1, 512>}, {pipeline_mode = #tpu.pipeline_mode<synchronous>, transform_indices = @transform_10, window_bounds = array<i64: 512, 128>}, {pipeline_mode = #tpu.pipeline_mode<synchronous>, transform_indices = @transform_11, window_bounds = array<i64: 1, 128>}, {transform_indices = @transform_12, window_bounds = array<i64: 1, 128, 128>}]} {
    %c0_i32 = arith.constant 0 : i32
    %0 = arith.cmpi eq, %arg1, %c0_i32 : i32
    %1 = arith.extui %0 : i1 to i32
    %c0_i32_0 = arith.constant 0 : i32
    %2 = arith.cmpi ne, %1, %c0_i32_0 : i32
    scf.if %2 {
      %c0_48 = arith.constant 0 : index
      %c0_49 = arith.constant 0 : index
      %c0_50 = arith.constant 0 : index
      %96 = vector.load %arg3[%c0_48, %c0_49, %c0_50] : memref<1x1x128xf32, #tpu.memory_space<vmem>>, vector<1x1x128xf32>
      %97 = vector.shape_cast %96 : vector<1x1x128xf32> to vector<1x128xf32>
      %98 = arith.negf %97 : vector<1x128xf32>
      %99 = math.exp %98 : vector<1x128xf32>
      %cst_51 = arith.constant 1.000000e+00 : f32
      %100 = vector.broadcast %cst_51 : f32 to vector<1x128xf32>
      %101 = arith.addf %100, %99 : vector<1x128xf32>
      %102 = arith.divf %100, %101 : vector<1x128xf32>
      %103 = arith.mulf %97, %102 : vector<1x128xf32>
      %104 = arith.truncf %103 : vector<1x128xf32> to vector<1x128xbf16>
      %c0_52 = arith.constant 0 : index
      %c0_53 = arith.constant 0 : index
      %105 = vector.load %arg4[%c0_52, %c0_53] : memref<128x768xbf16, #tpu.memory_space<vmem>>, vector<128x768xbf16>
      %cst_54 = arith.constant dense<0.000000e+00> : vector<1x768xf32>
      %106 = tpu.matmul %104, %105, %cst_54 {dimension_numbers = #tpu.dot_dimension_numbers<[1], [0], [0], [1], [0, 0, 1, 1], [], []>} : vector<1x128xbf16>, vector<128x768xbf16>, vector<1x768xf32> -> vector<1x768xf32>
      %c0_55 = arith.constant 0 : index
      %c0_56 = arith.constant 0 : index
      %107 = vector.load %arg5[%c0_55, %c0_56] : memref<1x768xf32, #tpu.memory_space<vmem>>, vector<1x768xf32>
      %108 = arith.addf %106, %107 : vector<1x768xf32>
      %c0_57 = arith.constant 0 : index
      %c0_58 = arith.constant 0 : index
      %109 = vector.load %arg15[%c0_57, %c0_58] : memref<1x768xf32, #tpu.memory_space<vmem>>, vector<1x768xf32>
      tpu.vector_store %arg15[%c0_57, %c0_58], %108 {strides = array<i32>} : memref<1x768xf32, #tpu.memory_space<vmem>>, vector<1x768xf32>,
      %c0_59 = arith.constant 0 : index
      %c0_60 = arith.constant 0 : index
      %c0_61 = arith.constant 0 : index
      %110 = vector.load %arg2[%c0_59, %c0_60, %c0_61] : memref<1x256x128xf32, #tpu.memory_space<vmem>>, vector<1x256x128xf32>
      %111 = vector.shape_cast %110 : vector<1x256x128xf32> to vector<256x128xf32>
      %cst_62 = arith.constant dense<0.000000e+00> : vector<256xf32>
      %112 = vector.multi_reduction <add>, %111, %cst_62 [1] : vector<256x128xf32> to vector<256xf32>
      %113 = vector.shape_cast %112 : vector<256xf32> to vector<256x1xf32>
      %cst_63 = arith.constant 1.280000e+02 : f32
      %114 = vector.broadcast %cst_63 : f32 to vector<256x1xf32>
      %115 = arith.divf %113, %114 : vector<256x1xf32>
      %116 = vector.broadcast %115 : vector<256x1xf32> to vector<256x128xf32>
      %117 = arith.subf %111, %116 : vector<256x128xf32>
      %118 = arith.mulf %117, %117 : vector<256x128xf32>
      %cst_64 = arith.constant dense<0.000000e+00> : vector<256xf32>
      %119 = vector.multi_reduction <add>, %118, %cst_64 [1] : vector<256x128xf32> to vector<256xf32>
      %120 = vector.shape_cast %119 : vector<256xf32> to vector<256x1xf32>
      %cst_65 = arith.constant 1.280000e+02 : f32
      %121 = vector.broadcast %cst_65 : f32 to vector<256x1xf32>
      %122 = arith.divf %120, %121 : vector<256x1xf32>
      %123 = vector.broadcast %115 : vector<256x1xf32> to vector<256x128xf32>
      %124 = arith.subf %111, %123 : vector<256x128xf32>
      %cst_66 = arith.constant 9.99999997E-7 : f32
      %125 = vector.broadcast %cst_66 : f32 to vector<256x1xf32>
      %126 = arith.addf %122, %125 : vector<256x1xf32>
      %127 = math.rsqrt %126 : vector<256x1xf32>
      %128 = vector.broadcast %127 : vector<256x1xf32> to vector<256x128xf32>
      %129 = arith.mulf %124, %128 : vector<256x128xf32>
      %130 = vector.extract_strided_slice %108 {offsets = [0, 128], sizes = [1, 128], strides = [1, 1]} : vector<1x768xf32> to vector<1x128xf32>
      %cst_67 = arith.constant 1.000000e+00 : f32
      %131 = vector.broadcast %cst_67 : f32 to vector<1x128xf32>
      %132 = arith.addf %131, %130 : vector<1x128xf32>
      %133 = vector.broadcast %132 : vector<1x128xf32> to vector<256x128xf32>
      %134 = arith.mulf %129, %133 : vector<256x128xf32>
      %135 = vector.extract_strided_slice %108 {offsets = [0, 0], sizes = [1, 128], strides = [1, 1]} : vector<1x768xf32> to vector<1x128xf32>
      %136 = vector.broadcast %135 : vector<1x128xf32> to vector<256x128xf32>
      %137 = arith.addf %134, %136 : vector<256x128xf32>
      %138 = arith.truncf %137 : vector<256x128xf32> to vector<256x128xbf16>
      %c0_68 = arith.constant 0 : index
      %c0_69 = arith.constant 0 : index
      %139 = vector.load %arg6[%c0_68, %c0_69] : memref<128x384xbf16, #tpu.memory_space<vmem>>, vector<128x384xbf16>
      %cst_70 = arith.constant dense<0.000000e+00> : vector<256x384xf32>
      %140 = tpu.matmul %138, %139, %cst_70 {dimension_numbers = #tpu.dot_dimension_numbers<[1], [0], [0], [1], [0, 0, 1, 1], [], []>} : vector<256x128xbf16>, vector<128x384xbf16>, vector<256x384xf32> -> vector<256x384xf32>
      %c0_71 = arith.constant 0 : index
      %c0_72 = arith.constant 0 : index
      %141 = vector.load %arg7[%c0_71, %c0_72] : memref<1x384xf32, #tpu.memory_space<vmem>>, vector<1x384xf32>
      %142 = vector.broadcast %141 : vector<1x384xf32> to vector<256x384xf32>
      %143 = arith.addf %140, %142 : vector<256x384xf32>
      %144 = vector.extract_strided_slice %143 {offsets = [0, 0], sizes = [256, 128], strides = [1, 1]} : vector<256x384xf32> to vector<256x128xf32>
      %145 = vector.extract_strided_slice %144 {offsets = [0, 0], sizes = [256, 32], strides = [1, 1]} : vector<256x128xf32> to vector<256x32xf32>
      %146 = vector.extract_strided_slice %144 {offsets = [0, 32], sizes = [256, 32], strides = [1, 1]} : vector<256x128xf32> to vector<256x32xf32>
      %147 = vector.extract_strided_slice %144 {offsets = [0, 64], sizes = [256, 32], strides = [1, 1]} : vector<256x128xf32> to vector<256x32xf32>
      %148 = vector.extract_strided_slice %144 {offsets = [0, 96], sizes = [256, 32], strides = [1, 1]} : vector<256x128xf32> to vector<256x32xf32>
      %149 = vector.shape_cast %145 : vector<256x32xf32> to vector<1x256x32xf32>
      %150 = vector.shape_cast %146 : vector<256x32xf32> to vector<1x256x32xf32>
      %151 = vector.shape_cast %147 : vector<256x32xf32> to vector<1x256x32xf32>
      %152 = vector.shape_cast %148 : vector<256x32xf32> to vector<1x256x32xf32>
      %153 = tpu.concatenate %149, %150, %151, %152 in 0 : vector<1x256x32xf32>, vector<1x256x32xf32>, vector<1x256x32xf32>, vector<1x256x32xf32> -> vector<4x256x32xf32>
      %154 = arith.truncf %153 : vector<4x256x32xf32> to vector<4x256x32xbf16>
      %c0_73 = arith.constant 0 : index
      %c0_74 = arith.constant 0 : index
      %c0_75 = arith.constant 0 : index
      %155 = vector.load %arg16[%c0_73, %c0_74, %c0_75] : memref<4x256x32xbf16, #tpu.memory_space<vmem>>, vector<4x256x32xbf16>
      tpu.vector_store %arg16[%c0_73, %c0_74, %c0_75], %154 {strides = array<i32>} : memref<4x256x32xbf16, #tpu.memory_space<vmem>>, vector<4x256x32xbf16>,
      %156 = vector.extract_strided_slice %143 {offsets = [0, 128], sizes = [256, 128], strides = [1, 1]} : vector<256x384xf32> to vector<256x128xf32>
      %157 = vector.extract_strided_slice %156 {offsets = [0, 0], sizes = [256, 32], strides = [1, 1]} : vector<256x128xf32> to vector<256x32xf32>
      %158 = vector.extract_strided_slice %156 {offsets = [0, 32], sizes = [256, 32], strides = [1, 1]} : vector<256x128xf32> to vector<256x32xf32>
      %159 = vector.extract_strided_slice %156 {offsets = [0, 64], sizes = [256, 32], strides = [1, 1]} : vector<256x128xf32> to vector<256x32xf32>
      %160 = vector.extract_strided_slice %156 {offsets = [0, 96], sizes = [256, 32], strides = [1, 1]} : vector<256x128xf32> to vector<256x32xf32>
      %161 = vector.shape_cast %157 : vector<256x32xf32> to vector<1x256x32xf32>
      %162 = vector.shape_cast %158 : vector<256x32xf32> to vector<1x256x32xf32>
      %163 = vector.shape_cast %159 : vector<256x32xf32> to vector<1x256x32xf32>
      %164 = vector.shape_cast %160 : vector<256x32xf32> to vector<1x256x32xf32>
      %165 = tpu.concatenate %161, %162, %163, %164 in 0 : vector<1x256x32xf32>, vector<1x256x32xf32>, vector<1x256x32xf32>, vector<1x256x32xf32> -> vector<4x256x32xf32>
      %166 = arith.truncf %165 : vector<4x256x32xf32> to vector<4x256x32xbf16>
      %c0_76 = arith.constant 0 : index
      %c0_77 = arith.constant 0 : index
      %c0_78 = arith.constant 0 : index
      %167 = vector.load %arg17[%c0_76, %c0_77, %c0_78] : memref<4x256x32xbf16, #tpu.memory_space<vmem>>, vector<4x256x32xbf16>
      tpu.vector_store %arg17[%c0_76, %c0_77, %c0_78], %166 {strides = array<i32>} : memref<4x256x32xbf16, #tpu.memory_space<vmem>>, vector<4x256x32xbf16>,
      %168 = vector.extract_strided_slice %143 {offsets = [0, 256], sizes = [256, 128], strides = [1, 1]} : vector<256x384xf32> to vector<256x128xf32>
      %169 = vector.extract_strided_slice %168 {offsets = [0, 0], sizes = [256, 32], strides = [1, 1]} : vector<256x128xf32> to vector<256x32xf32>
      %170 = vector.extract_strided_slice %168 {offsets = [0, 32], sizes = [256, 32], strides = [1, 1]} : vector<256x128xf32> to vector<256x32xf32>
      %171 = vector.extract_strided_slice %168 {offsets = [0, 64], sizes = [256, 32], strides = [1, 1]} : vector<256x128xf32> to vector<256x32xf32>
      %172 = vector.extract_strided_slice %168 {offsets = [0, 96], sizes = [256, 32], strides = [1, 1]} : vector<256x128xf32> to vector<256x32xf32>
      %173 = vector.shape_cast %169 : vector<256x32xf32> to vector<1x256x32xf32>
      %174 = vector.shape_cast %170 : vector<256x32xf32> to vector<1x256x32xf32>
      %175 = vector.shape_cast %171 : vector<256x32xf32> to vector<1x256x32xf32>
      %176 = vector.shape_cast %172 : vector<256x32xf32> to vector<1x256x32xf32>
      %177 = tpu.concatenate %173, %174, %175, %176 in 0 : vector<1x256x32xf32>, vector<1x256x32xf32>, vector<1x256x32xf32>, vector<1x256x32xf32> -> vector<4x256x32xf32>
      %178 = arith.truncf %177 : vector<4x256x32xf32> to vector<4x256x32xbf16>
      %c0_79 = arith.constant 0 : index
      %c0_80 = arith.constant 0 : index
      %c0_81 = arith.constant 0 : index
      %179 = vector.load %arg18[%c0_79, %c0_80, %c0_81] : memref<4x256x32xbf16, #tpu.memory_space<vmem>>, vector<4x256x32xbf16>
      tpu.vector_store %arg18[%c0_79, %c0_80, %c0_81], %178 {strides = array<i32>} : memref<4x256x32xbf16, #tpu.memory_space<vmem>>, vector<4x256x32xbf16>,
    } else {
    }
    %c0 = arith.constant 0 : index
    %c256 = arith.constant 256 : index
    %3 = vector.load %arg15[%c0, %c256] : memref<1x768xf32, #tpu.memory_space<vmem>>, vector<1x128xf32>
    %c0_1 = arith.constant 0 : index
    %c384 = arith.constant 384 : index
    %4 = vector.load %arg15[%c0_1, %c384] : memref<1x768xf32, #tpu.memory_space<vmem>>, vector<1x128xf32>
    %c0_2 = arith.constant 0 : index
    %c512 = arith.constant 512 : index
    %5 = vector.load %arg15[%c0_2, %c512] : memref<1x768xf32, #tpu.memory_space<vmem>>, vector<1x128xf32>
    %c0_3 = arith.constant 0 : index
    %c640 = arith.constant 640 : index
    %6 = vector.load %arg15[%c0_3, %c640] : memref<1x768xf32, #tpu.memory_space<vmem>>, vector<1x128xf32>
    %c128_i32 = arith.constant 128 : i32
    %7 = arith.muli %arg1, %c128_i32 : i32
    %8 = tpu.assume_multiple %7, 128 : i32
    %c0_4 = arith.constant 0 : index
    %9 = arith.index_cast %8 : i32 to index
    %c0_5 = arith.constant 0 : index
    %10 = vector.load %arg2[%c0_4, %9, %c0_5] : memref<1x256x128xf32, #tpu.memory_space<vmem>>, vector<1x128x128xf32>
    %11 = vector.shape_cast %10 : vector<1x128x128xf32> to vector<128x128xf32>
    %c0_6 = arith.constant 0 : index
    %12 = arith.index_cast %8 : i32 to index
    %c0_7 = arith.constant 0 : index
    %13 = vector.load %arg16[%c0_6, %12, %c0_7] : memref<4x256x32xbf16, #tpu.memory_space<vmem>>, vector<4x128x32xbf16>
    %c0_8 = arith.constant 0 : index
    %c0_9 = arith.constant 0 : index
    %c0_10 = arith.constant 0 : index
    %14 = vector.load %arg17[%c0_8, %c0_9, %c0_10] : memref<4x256x32xbf16, #tpu.memory_space<vmem>>, vector<4x256x32xbf16>
    "tpu.trace_start"() <{level = 10 : i32, message = "hqd,hkd->hqk"}> : () -> ()
    %cst = arith.constant dense<0.000000e+00> : vector<4x128x256xf32>
    %15 = tpu.matmul %13, %14, %cst {dimension_numbers = #tpu.dot_dimension_numbers<[2], [2], [1], [1], [0, 0, 0, 1, 1, 1], [0], [0]>} : vector<4x128x32xbf16>, vector<4x256x32xbf16>, vector<4x128x256xf32> -> vector<4x128x256xf32>
    "tpu.trace_stop"() : () -> ()
    %cst_11 = arith.constant 0.176776692 : f32
    %16 = vector.broadcast %cst_11 : f32 to vector<4x128x256xf32>
    %17 = arith.mulf %15, %16 : vector<4x128x256xf32>
    %cst_12 = arith.constant dense<0xFF800000> : vector<4x128xf32>
    %18 = vector.multi_reduction <maximumf>, %17, %cst_12 [2] : vector<4x128x256xf32> to vector<4x128xf32>
    %19 = vector.shape_cast %18 : vector<4x128xf32> to vector<4x128x1xf32>
    %20 = vector.broadcast %19 : vector<4x128x1xf32> to vector<4x128x256xf32>
    %21 = arith.subf %17, %20 : vector<4x128x256xf32>
    %22 = math.exp %21 : vector<4x128x256xf32>
    %cst_13 = arith.constant dense<0.000000e+00> : vector<4x128xf32>
    %23 = vector.multi_reduction <add>, %22, %cst_13 [2] : vector<4x128x256xf32> to vector<4x128xf32>
    %24 = vector.shape_cast %23 : vector<4x128xf32> to vector<4x128x1xf32>
    %25 = tpu.reciprocal %24 {approx = true} : vector<4x128x1xf32> -> vector<4x128x1xf32>
    %26 = vector.broadcast %25 : vector<4x128x1xf32> to vector<4x128x256xf32>
    %27 = arith.mulf %22, %26 : vector<4x128x256xf32>
    %28 = arith.truncf %27 : vector<4x128x256xf32> to vector<4x128x256xbf16>
    %c0_14 = arith.constant 0 : index
    %c0_15 = arith.constant 0 : index
    %c0_16 = arith.constant 0 : index
    %29 = vector.load %arg18[%c0_14, %c0_15, %c0_16] : memref<4x256x32xbf16, #tpu.memory_space<vmem>>, vector<4x256x32xbf16>
    "tpu.trace_start"() <{level = 10 : i32, message = "hqk,hkd->hqd"}> : () -> ()
    %cst_17 = arith.constant dense<0.000000e+00> : vector<4x128x32xf32>
    %30 = tpu.matmul %28, %29, %cst_17 {dimension_numbers = #tpu.dot_dimension_numbers<[2], [1], [1], [2], [0, 0, 0, 1, 1, 2], [0], [0]>} : vector<4x128x256xbf16>, vector<4x256x32xbf16>, vector<4x128x32xf32> -> vector<4x128x32xf32>
    "tpu.trace_stop"() : () -> ()
    %31 = arith.truncf %30 : vector<4x128x32xf32> to vector<4x128x32xbf16>
    %c0_18 = arith.constant 0 : index
    %c0_19 = arith.constant 0 : index
    %c0_20 = arith.constant 0 : index
    %32 = vector.load %arg8[%c0_18, %c0_19, %c0_20] : memref<4x32x128xbf16, #tpu.memory_space<vmem>>, vector<4x32x128xbf16>
    "tpu.trace_start"() <{level = 10 : i32, message = "hqd,hdf->hqf"}> : () -> ()
    %cst_21 = arith.constant dense<0.000000e+00> : vector<4x128x128xf32>
    %33 = tpu.matmul %31, %32, %cst_21 {dimension_numbers = #tpu.dot_dimension_numbers<[2], [1], [1], [2], [0, 0, 0, 1, 1, 2], [0], [0]>} : vector<4x128x32xbf16>, vector<4x32x128xbf16>, vector<4x128x128xf32> -> vector<4x128x128xf32>
    "tpu.trace_stop"() : () -> ()
    %cst_22 = arith.constant dense<0.000000e+00> : vector<128x128xf32>
    %34 = vector.multi_reduction <add>, %33, %cst_22 [0] : vector<4x128x128xf32> to vector<128x128xf32>
    %c0_23 = arith.constant 0 : index
    %c0_24 = arith.constant 0 : index
    %35 = vector.load %arg9[%c0_23, %c0_24] : memref<1x128xf32, #tpu.memory_space<vmem>>, vector<1x128xf32>
    %36 = vector.broadcast %35 : vector<1x128xf32> to vector<128x128xf32>
    %37 = arith.addf %34, %36 : vector<128x128xf32>
    %38 = vector.broadcast %3 : vector<1x128xf32> to vector<128x128xf32>
    %39 = arith.mulf %38, %37 : vector<128x128xf32>
    %40 = arith.addf %11, %39 : vector<128x128xf32>
    %cst_25 = arith.constant dense<0.000000e+00> : vector<128xf32>
    %41 = vector.multi_reduction <add>, %40, %cst_25 [1] : vector<128x128xf32> to vector<128xf32>
    %42 = vector.shape_cast %41 : vector<128xf32> to vector<128x1xf32>
    %cst_26 = arith.constant 1.280000e+02 : f32
    %43 = vector.broadcast %cst_26 : f32 to vector<128x1xf32>
    %44 = arith.divf %42, %43 : vector<128x1xf32>
    %45 = vector.broadcast %44 : vector<128x1xf32> to vector<128x128xf32>
    %46 = arith.subf %40, %45 : vector<128x128xf32>
    %47 = arith.mulf %46, %46 : vector<128x128xf32>
    %cst_27 = arith.constant dense<0.000000e+00> : vector<128xf32>
    %48 = vector.multi_reduction <add>, %47, %cst_27 [1] : vector<128x128xf32> to vector<128xf32>
    %49 = vector.shape_cast %48 : vector<128xf32> to vector<128x1xf32>
    %cst_28 = arith.constant 1.280000e+02 : f32
    %50 = vector.broadcast %cst_28 : f32 to vector<128x1xf32>
    %51 = arith.divf %49, %50 : vector<128x1xf32>
    %52 = vector.broadcast %44 : vector<128x1xf32> to vector<128x128xf32>
    %53 = arith.subf %40, %52 : vector<128x128xf32>
    %cst_29 = arith.constant 9.99999997E-7 : f32
    %54 = vector.broadcast %cst_29 : f32 to vector<128x1xf32>
    %55 = arith.addf %51, %54 : vector<128x1xf32>
    %56 = math.rsqrt %55 : vector<128x1xf32>
    %57 = vector.broadcast %56 : vector<128x1xf32> to vector<128x128xf32>
    %58 = arith.mulf %53, %57 : vector<128x128xf32>
    %cst_30 = arith.constant 1.000000e+00 : f32
    %59 = vector.broadcast %cst_30 : f32 to vector<1x128xf32>
    %60 = arith.addf %59, %5 : vector<1x128xf32>
    %61 = vector.broadcast %60 : vector<1x128xf32> to vector<128x128xf32>
    %62 = arith.mulf %58, %61 : vector<128x128xf32>
    %63 = vector.broadcast %4 : vector<1x128xf32> to vector<128x128xf32>
    %64 = arith.addf %62, %63 : vector<128x128xf32>
    %65 = arith.truncf %64 : vector<128x128xf32> to vector<128x128xbf16>
    %c0_31 = arith.constant 0 : index
    %c0_32 = arith.constant 0 : index
    %66 = vector.load %arg10[%c0_31, %c0_32] : memref<128x512xbf16, #tpu.memory_space<vmem>>, vector<128x512xbf16>
    %cst_33 = arith.constant dense<0.000000e+00> : vector<128x512xf32>
    %67 = tpu.matmul %65, %66, %cst_33 {dimension_numbers = #tpu.dot_dimension_numbers<[1], [0], [0], [1], [0, 0, 1, 1], [], []>} : vector<128x128xbf16>, vector<128x512xbf16>, vector<128x512xf32> -> vector<128x512xf32>
    %c0_34 = arith.constant 0 : index
    %c0_35 = arith.constant 0 : index
    %68 = vector.load %arg11[%c0_34, %c0_35] : memref<1x512xf32, #tpu.memory_space<vmem>>, vector<1x512xf32>
    %69 = vector.broadcast %68 : vector<1x512xf32> to vector<128x512xf32>
    %70 = arith.addf %67, %69 : vector<128x512xf32>
    %cst_36 = arith.constant 5.000000e-01 : f32
    %71 = vector.broadcast %cst_36 : f32 to vector<128x512xf32>
    %72 = arith.mulf %71, %70 : vector<128x512xf32>
    %cst_37 = arith.constant 4.471500e-02 : f32
    %73 = vector.broadcast %cst_37 : f32 to vector<128x512xf32>
    %74 = arith.mulf %73, %70 : vector<128x512xf32>
    %75 = arith.mulf %74, %70 : vector<128x512xf32>
    %76 = arith.mulf %75, %70 : vector<128x512xf32>
    %77 = arith.addf %70, %76 : vector<128x512xf32>
    %cst_38 = arith.constant 0.797884583 : f32
    %78 = vector.broadcast %cst_38 : f32 to vector<128x512xf32>
    %79 = arith.mulf %78, %77 : vector<128x512xf32>
    %80 = math.tanh %79 : vector<128x512xf32>
    %cst_39 = arith.constant 1.000000e+00 : f32
    %81 = vector.broadcast %cst_39 : f32 to vector<128x512xf32>
    %82 = arith.addf %81, %80 : vector<128x512xf32>
    %83 = arith.mulf %72, %82 : vector<128x512xf32>
    %84 = arith.truncf %83 : vector<128x512xf32> to vector<128x512xbf16>
    %c0_40 = arith.constant 0 : index
    %c0_41 = arith.constant 0 : index
    %85 = vector.load %arg12[%c0_40, %c0_41] : memref<512x128xbf16, #tpu.memory_space<vmem>>, vector<512x128xbf16>
    %cst_42 = arith.constant dense<0.000000e+00> : vector<128x128xf32>
    %86 = tpu.matmul %84, %85, %cst_42 {dimension_numbers = #tpu.dot_dimension_numbers<[1], [0], [0], [1], [0, 0, 1, 1], [], []>} : vector<128x512xbf16>, vector<512x128xbf16>, vector<128x128xf32> -> vector<128x128xf32>
    %c0_43 = arith.constant 0 : index
    %c0_44 = arith.constant 0 : index
    %87 = vector.load %arg13[%c0_43, %c0_44] : memref<1x128xf32, #tpu.memory_space<vmem>>, vector<1x128xf32>
    %88 = vector.broadcast %87 : vector<1x128xf32> to vector<128x128xf32>
    %89 = arith.addf %86, %88 : vector<128x128xf32>
    %90 = vector.broadcast %6 : vector<1x128xf32> to vector<128x128xf32>
    %91 = arith.mulf %90, %89 : vector<128x128xf32>
    %92 = arith.addf %40, %91 : vector<128x128xf32>
    %c0_45 = arith.constant 0 : index
    %c0_46 = arith.constant 0 : index
    %c0_47 = arith.constant 0 : index
    %93 = vector.load %arg14[%c0_45, %c0_46, %c0_47] : memref<1x128x128xf32, #tpu.memory_space<vmem>>, vector<1x128x128xf32>
    %94 = vector.shape_cast %93 : vector<1x128x128xf32> to vector<128x128xf32>
    %95 = vector.shape_cast %92 : vector<128x128xf32> to vector<1x128x128xf32>
    tpu.vector_store %arg14[%c0_45, %c0_46, %c0_47], %95 {strides = array<i32>} : memref<1x128x128xf32, #tpu.memory_space<vmem>>, vector<1x128x128xf32>,
    return
  }
  func.func @transform_0(%arg0: i32, %arg1: i32) -> (i32, i32, i32) {
    %c0_i32 = arith.constant 0 : i32
    %c0_i32_0 = arith.constant 0 : i32
    %c0_i32_1 = arith.constant 0 : i32
    return %arg0, %c0_i32, %c0_i32_0 : i32, i32, i32
  }
  func.func @transform_1(%arg0: i32, %arg1: i32) -> (i32, i32, i32) {
    %c0_i32 = arith.constant 0 : i32
    %c0_i32_0 = arith.constant 0 : i32
    %c0_i32_1 = arith.constant 0 : i32
    return %arg0, %c0_i32, %c0_i32_0 : i32, i32, i32
  }
  func.func @transform_2(%arg0: i32, %arg1: i32) -> (i32, i32) {
    %c0_i32 = arith.constant 0 : i32
    %c0_i32_0 = arith.constant 0 : i32
    %c0_i32_1 = arith.constant 0 : i32
    return %c0_i32, %c0_i32_0 : i32, i32
  }
  func.func @transform_3(%arg0: i32, %arg1: i32) -> (i32, i32) {
    %c0_i32 = arith.constant 0 : i32
    %c0_i32_0 = arith.constant 0 : i32
    %c0_i32_1 = arith.constant 0 : i32
    return %c0_i32, %c0_i32_0 : i32, i32
  }
  func.func @transform_4(%arg0: i32, %arg1: i32) -> (i32, i32) {
    %c0_i32 = arith.constant 0 : i32
    %c0_i32_0 = arith.constant 0 : i32
    %c0_i32_1 = arith.constant 0 : i32
    return %c0_i32, %c0_i32_0 : i32, i32
  }
  func.func @transform_5(%arg0: i32, %arg1: i32) -> (i32, i32) {
    %c0_i32 = arith.constant 0 : i32
    %c0_i32_0 = arith.constant 0 : i32
    %c0_i32_1 = arith.constant 0 : i32
    return %c0_i32, %c0_i32_0 : i32, i32
  }
  func.func @transform_6(%arg0: i32, %arg1: i32) -> (i32, i32, i32) {
    %c0_i32 = arith.constant 0 : i32
    %c0_i32_0 = arith.constant 0 : i32
    %c0_i32_1 = arith.constant 0 : i32
    %c0_i32_2 = arith.constant 0 : i32
    return %c0_i32, %c0_i32_0, %c0_i32_1 : i32, i32, i32
  }
  func.func @transform_7(%arg0: i32, %arg1: i32) -> (i32, i32) {
    %c0_i32 = arith.constant 0 : i32
    %c0_i32_0 = arith.constant 0 : i32
    %c0_i32_1 = arith.constant 0 : i32
    return %c0_i32, %c0_i32_0 : i32, i32
  }
  func.func @transform_8(%arg0: i32, %arg1: i32) -> (i32, i32) {
    %c0_i32 = arith.constant 0 : i32
    %c0_i32_0 = arith.constant 0 : i32
    %c0_i32_1 = arith.constant 0 : i32
    return %c0_i32, %c0_i32_0 : i32, i32
  }
  func.func @transform_9(%arg0: i32, %arg1: i32) -> (i32, i32) {
    %c0_i32 = arith.constant 0 : i32
    %c0_i32_0 = arith.constant 0 : i32
    %c0_i32_1 = arith.constant 0 : i32
    return %c0_i32, %c0_i32_0 : i32, i32
  }
  func.func @transform_10(%arg0: i32, %arg1: i32) -> (i32, i32) {
    %c0_i32 = arith.constant 0 : i32
    %c0_i32_0 = arith.constant 0 : i32
    %c0_i32_1 = arith.constant 0 : i32
    return %c0_i32, %c0_i32_0 : i32, i32
  }
  func.func @transform_11(%arg0: i32, %arg1: i32) -> (i32, i32) {
    %c0_i32 = arith.constant 0 : i32
    %c0_i32_0 = arith.constant 0 : i32
    %c0_i32_1 = arith.constant 0 : i32
    return %c0_i32, %c0_i32_0 : i32, i32
  }
  func.func @transform_12(%arg0: i32, %arg1: i32) -> (i32, i32, i32) {
    %c0_i32 = arith.constant 0 : i32
    %c0_i32_0 = arith.constant 0 : i32
    return %arg0, %arg1, %c0_i32 : i32, i32, i32
  }
}

</mosaic_0001>

<llo_original>
// kernel: tpu_custom_call.1
$region0: #{tpu_custom_call.1}
  #allocation0 [shape = 'u32[]', space=smem, size = 0x4, offset = 0x4, fixed_abs, tag = 'smem constant byte address 0x4 - core index']
  #allocation1 [shape = 'u32[144,128]{1,0:T(1,128)}', space=vmem, size = 0x12000, scoped, tag = 'internal scratch']
  #allocation2 [shape = 'f32[1,768]{1,0:T(1,128)}', space=vmem, size = 0xc00, scoped, tag = 'scratch operand']
  #allocation3 [shape = 'bf16[4,256,32]{2,1,0:T(16,128)(2,1)}', space=vmem, size = 0x40000, scoped, tag = 'scratch operand']
  #allocation4 [shape = 'bf16[4,256,32]{2,1,0:T(16,128)(2,1)}', space=vmem, size = 0x40000, scoped, tag = 'scratch operand']
  #allocation5 [shape = 'bf16[4,256,32]{2,1,0:T(16,128)(2,1)}', space=vmem, size = 0x40000, scoped, tag = 'scratch operand']
  %s0 = inlined_call_operand.hbm [shape: f32[2,256,128], index: 0, kind: input, shape index: {}]
  %s1 = inlined_call_operand.hbm [shape: f32[2,1,128], index: 1, kind: input, shape index: {}]
  %s2 = inlined_call_operand.hbm [shape: bf16[128,768], index: 2, kind: input, shape index: {}]
  %s3 = inlined_call_operand.vmem [shape: f32[1,768], index: 3, kind: input, shape index: {}]
  %s4 = inlined_call_operand.hbm [shape: bf16[128,384], index: 4, kind: input, shape index: {}]
  %s5 = inlined_call_operand.vmem [shape: f32[1,384], index: 5, kind: input, shape index: {}]
  %s6 = inlined_call_operand.hbm [shape: bf16[4,32,128], index: 6, kind: input, shape index: {}]
  %s7 = inlined_call_operand.vmem [shape: f32[1,128], index: 7, kind: input, shape index: {}]
  %s8 = inlined_call_operand.hbm [shape: bf16[128,512], index: 8, kind: input, shape index: {}]
  %s9 = inlined_call_operand.vmem [shape: f32[1,512], index: 9, kind: input, shape index: {}]
  %s10 = inlined_call_operand.hbm [shape: bf16[512,128], index: 10, kind: input, shape index: {}]
  %s11 = inlined_call_operand.vmem [shape: f32[1,128], index: 11, kind: input, shape index: {}]
  %s12 = inlined_call_operand.hbm [shape: f32[2,256,128], index: 12, kind: output, shape index: {}]
  %s13 = sld [smem:[#allocation0]]
  $region113: #{tpu_custom_call.1} parent=0
    _
  %s15 = ssub.s32 1, %s13
  %s16 = scalar_select 0, %s15, %s13
  $region1: #{tpu_custom_call.1} parent=0
    #allocation6 [shape = 'u8[262144]{0}', space=vmem, size = 0x40000, scoped, tag = 'input window, operand 0']
    #allocation7 [shape = 's32[2]{0}', space=sflag, size = 0x8, scoped, tag = 'scoped memory for tpu_custom_call.1']
    #allocation8 [shape = 's32[2]{0}', space=sflag, size = 0x8, scoped, tag = 'scoped memory for tpu_custom_call.1']
    #allocation9 [shape = 'u8[1024]{0}', space=vmem, size = 0x400, scoped, tag = 'input window, operand 1']
    #allocation10 [shape = 's32[2]{0}', space=sflag, size = 0x8, scoped, tag = 'scoped memory for tpu_custom_call.1']
    #allocation11 [shape = 'u8[196608]{0}', space=vmem, size = 0x30000, scoped, tag = 'input window, operand 2, single buffered']
    #allocation12 [shape = 'u8[98304]{0}', space=vmem, size = 0x18000, scoped, tag = 'input window, operand 4, single buffered']
    #allocation13 [shape = 's32[1]{0}', space=sflag, size = 0x4, scoped, tag = 'scoped memory for tpu_custom_call.1']
    #allocation14 [shape = 'u8[32768]{0}', space=vmem, size = 0x8000, scoped, tag = 'input window, operand 6, single buffered']
    #allocation15 [shape = 'u8[131072]{0}', space=vmem, size = 0x20000, scoped, tag = 'input window, operand 8, single buffered']
    #allocation16 [shape = 's32[1]{0}', space=sflag, size = 0x4, scoped, tag = 'scoped memory for tpu_custom_call.1']
    #allocation17 [shape = 'u8[131072]{0}', space=vmem, size = 0x20000, scoped, tag = 'input window, operand 10, single buffered']
    #allocation18 [shape = 'u8[131072]{0}', space=vmem, size = 0x20000, scoped, tag = 'output window, operand 0']
    %17 = vsyncpa [#allocation7], 0
    %s18 = scalar_lea.sflag [#allocation7], 1
    %19 = vsyncpa %s18, 0
    %20 = vsyncpa [#allocation10], 0
    %s21 = scalar_lea.sflag [#allocation10], 1
    %22 = vsyncpa %s21, 0
    %23 = vsyncpa [#allocation13], 0
    %24 = vsyncpa [#allocation16], 0
    %25 = vsyncpa [#allocation8], 0
    %s26 = scalar_lea.sflag [#allocation8], 1
    %27 = vsyncpa %s26, 0
    loop: start=0, step=1, limit=6
    $region2: #{tpu_custom_call.1} parent=1 // loop_pre_header
      _
    $region3: #{tpu_custom_call.1} parent=1 // loop_header
      %s29 = sphi 0, %s33
      %p30 = scmp.ge.s32.totalorder %s29, 6
      %s36 = sphi 0, %s48
      %s37 = sphi 0, %s44
      %s38 = sphi 0, %s36
      %s39 = sphi 0, %s37
      %s40 = sphi 0, %s38
      %s41 = sphi 0, %s39
      %s51 = sphi 0, %s53
      %s54 = sphi 0, %s51
      %s55 = sphi 0, %s54
      %s71 = sphi 0, %s55
      %s77 = sphi 0, %s79
      %s80 = sphi 0, %s77
      %s81 = sphi 0, %s80
      %s97 = sphi 0, %s81
      %s101 = sphi 0, %s101
      %s103 = sphi 0, %s101
      %s104 = sphi 0, %s103
      %s118 = sphi 0, %s104
      %s122 = sphi 0, %s122
      %s124 = sphi 0, %s122
      %s125 = sphi 0, %s124
      %s139 = sphi 0, %s125
      %s143 = sphi 0, %s143
      %s145 = sphi 0, %s143
      %s146 = sphi 0, %s145
      %s160 = sphi 0, %s146
      %s164 = sphi 0, %s164
      %s166 = sphi 0, %s164
      %s167 = sphi 0, %s166
      %s181 = sphi 0, %s167
      %s185 = sphi 0, %s185
      %s187 = sphi 0, %s185
      %s188 = sphi 0, %s187
      %s202 = sphi 0, %s188
      %s206 = sphi 0, %s206
      %s208 = sphi 0, %s206
      %s209 = sphi 0, %s208
      %s223 = sphi 0, %s209
      %s227 = sphi 0, %s227
      %s229 = sphi 0, %s227
      %s230 = sphi 0, %s229
      %s244 = sphi 0, %s230
      %s248 = sphi 0, %s248
      %s250 = sphi 0, %s248
      %s251 = sphi 0, %s250
      %s265 = sphi 0, %s251
      %s269 = sphi 0, %s269
      %s271 = sphi 0, %s269
      %s272 = sphi 0, %s271
      %s286 = sphi 0, %s272
      %s290 = sphi 0, %s290
      %s292 = sphi 0, %s290
      %s293 = sphi 0, %s292
      %s307 = sphi 0, %s293
      %s315 = sphi 0, %s317
      %s318 = sphi 0, %s315
      %s319 = sphi 0, %s318
      %s335 = sphi 0, %s319
    $region4: #{tpu_custom_call.1} parent=1 // loop_header_branch
      %32 = sbr.rel (%p30) target = $region8
    $region5: #{tpu_custom_call.1} parent=1 // loop_body
      %s34 = ssub.s32 %s29, 1
      %s35 = ssub.s32 %s29, 2
      %s42 = sadd.s32 1, %s37
      %p43 = scmp.ge.s32.totalorder %s42, 2
      %s44 = scalar_select %p43, 0, %s42
      %s45 = sadd.s32 1, %s36
      %s46 = scalar_select %p43, %s45, %s36
      %p47 = scmp.ge.s32.totalorder %s46, 2
      %s48 = scalar_select %p47, 0, %s46
      %s49 = ssub.s32 %s36, %s48
      %p50 = scmp.eq.s32.totalorder %s49, 0
      %s52 = sadd.s32 %s51, 1
      %s53 = scalar_select %p50, %s51, %s52
      %p56 = pneg %p50
      %p57 = scmp.eq.s32.totalorder %s29, 3
      %p58 = por %p56, %p57
      %p59 = scmp.ne.s32.totalorder %s51, %s54
      %p60 = scmp.eq.s32.totalorder %s29, 0
      %p61 = por %p59, %p60
      %p62 = scmp.ne.s32.totalorder %s51, %s54
      %p63 = scmp.eq.s32.totalorder %s34, 3
      %p64 = por %p62, %p63
      %p65 = scmp.ne.s32.totalorder %s54, %s55
      %p66 = scmp.eq.s32.totalorder %s34, 0
      %p67 = por %p65, %p66
      %p68 = scmp.ne.s32.totalorder %s54, %s55
      %p69 = scmp.eq.s32.totalorder %s35, 3
      %p70 = por %p68, %p69
      %p72 = scmp.ne.s32.totalorder %s55, %s71
      %p73 = scmp.eq.s32.totalorder %s35, 0
      %p74 = por %p72, %p73
      %s75 = ssub.s32 %s36, %s48
      %p76 = scmp.eq.s32.totalorder %s75, 0
      %s78 = sadd.s32 %s77, 1
      %s79 = scalar_select %p76, %s77, %s78
      %p82 = pneg %p76
      %p83 = scmp.eq.s32.totalorder %s29, 3
      %p84 = por %p82, %p83
      %p85 = scmp.ne.s32.totalorder %s77, %s80
      %p86 = scmp.eq.s32.totalorder %s29, 0
      %p87 = por %p85, %p86
      %p88 = scmp.ne.s32.totalorder %s77, %s80
      %p89 = scmp.eq.s32.totalorder %s34, 3
      %p90 = por %p88, %p89
      %p91 = scmp.ne.s32.totalorder %s80, %s81
      %p92 = scmp.eq.s32.totalorder %s34, 0
      %p93 = por %p91, %p92
      %p94 = scmp.ne.s32.totalorder %s80, %s81
      %p95 = scmp.eq.s32.totalorder %s35, 3
      %p96 = por %p94, %p95
      %p98 = scmp.ne.s32.totalorder %s81, %s97
      %p99 = scmp.eq.s32.totalorder %s35, 0
      %p100 = por %p98, %p99
      %s102 = sadd.s32 %s101, 1
      %p105 = scmp.eq.s32.totalorder %s29, 3
      %p106 = scmp.ne.s32.totalorder %s101, %s103
      %p107 = scmp.eq.s32.totalorder %s29, 0
      %p108 = por %p106, %p107
      %p109 = scmp.ne.s32.totalorder %s101, %s103
      %p110 = scmp.eq.s32.totalorder %s34, 3
      %p111 = por %p109, %p110
      %p112 = scmp.ne.s32.totalorder %s103, %s104
      %p113 = scmp.eq.s32.totalorder %s34, 0
      %p114 = por %p112, %p113
      %p115 = scmp.ne.s32.totalorder %s103, %s104
      %p116 = scmp.eq.s32.totalorder %s35, 3
      %p117 = por %p115, %p116
      %p119 = scmp.ne.s32.totalorder %s104, %s118
      %p120 = scmp.eq.s32.totalorder %s35, 0
      %p121 = por %p119, %p120
      %s123 = sadd.s32 %s122, 1
      %p126 = scmp.eq.s32.totalorder %s29, 3
      %p127 = scmp.ne.s32.totalorder %s122, %s124
      %p128 = scmp.eq.s32.totalorder %s29, 0
      %p129 = por %p127, %p128
      %p130 = scmp.ne.s32.totalorder %s122, %s124
      %p131 = scmp.eq.s32.totalorder %s34, 3
      %p132 = por %p130, %p131
      %p133 = scmp.ne.s32.totalorder %s124, %s125
      %p134 = scmp.eq.s32.totalorder %s34, 0
      %p135 = por %p133, %p134
      %p136 = scmp.ne.s32.totalorder %s124, %s125
      %p137 = scmp.eq.s32.totalorder %s35, 3
      %p138 = por %p136, %p137
      %p140 = scmp.ne.s32.totalorder %s125, %s139
      %p141 = scmp.eq.s32.totalorder %s35, 0
      %p142 = por %p140, %p141
      %s144 = sadd.s32 %s143, 1
      %p147 = scmp.eq.s32.totalorder %s29, 3
      %p148 = scmp.ne.s32.totalorder %s143, %s145
      %p149 = scmp.eq.s32.totalorder %s29, 0
      %p150 = por %p148, %p149
      %p151 = scmp.ne.s32.totalorder %s143, %s145
      %p152 = scmp.eq.s32.totalorder %s34, 3
      %p153 = por %p151, %p152
      %p154 = scmp.ne.s32.totalorder %s145, %s146
      %p155 = scmp.eq.s32.totalorder %s34, 0
      %p156 = por %p154, %p155
      %p157 = scmp.ne.s32.totalorder %s145, %s146
      %p158 = scmp.eq.s32.totalorder %s35, 3
      %p159 = por %p157, %p158
      %p161 = scmp.ne.s32.totalorder %s146, %s160
      %p162 = scmp.eq.s32.totalorder %s35, 0
      %p163 = por %p161, %p162
      %s165 = sadd.s32 %s164, 1
      %p168 = scmp.eq.s32.totalorder %s29, 3
      %p169 = scmp.ne.s32.totalorder %s164, %s166
      %p170 = scmp.eq.s32.totalorder %s29, 0
      %p171 = por %p169, %p170
      %p172 = scmp.ne.s32.totalorder %s164, %s166
      %p173 = scmp.eq.s32.totalorder %s34, 3
      %p174 = por %p172, %p173
      %p175 = scmp.ne.s32.totalorder %s166, %s167
      %p176 = scmp.eq.s32.totalorder %s34, 0
      %p177 = por %p175, %p176
      %p178 = scmp.ne.s32.totalorder %s166, %s167
      %p179 = scmp.eq.s32.totalorder %s35, 3
      %p180 = por %p178, %p179
      %p182 = scmp.ne.s32.totalorder %s167, %s181
      %p183 = scmp.eq.s32.totalorder %s35, 0
      %p184 = por %p182, %p183
      %s186 = sadd.s32 %s185, 1
      %p189 = scmp.eq.s32.totalorder %s29, 3
      %p190 = scmp.ne.s32.totalorder %s185, %s187
      %p191 = scmp.eq.s32.totalorder %s29, 0
      %p192 = por %p190, %p191
      %p193 = scmp.ne.s32.totalorder %s185, %s187
      %p194 = scmp.eq.s32.totalorder %s34, 3
      %p195 = por %p193, %p194
      %p196 = scmp.ne.s32.totalorder %s187, %s188
      %p197 = scmp.eq.s32.totalorder %s34, 0
      %p198 = por %p196, %p197
      %p199 = scmp.ne.s32.totalorder %s187, %s188
      %p200 = scmp.eq.s32.totalorder %s35, 3
      %p201 = por %p199, %p200
      %p203 = scmp.ne.s32.totalorder %s188, %s202
      %p204 = scmp.eq.s32.totalorder %s35, 0
      %p205 = por %p203, %p204
      %s207 = sadd.s32 %s206, 1
      %p210 = scmp.eq.s32.totalorder %s29, 3
      %p211 = scmp.ne.s32.totalorder %s206, %s208
      %p212 = scmp.eq.s32.totalorder %s29, 0
      %p213 = por %p211, %p212
      %p214 = scmp.ne.s32.totalorder %s206, %s208
      %p215 = scmp.eq.s32.totalorder %s34, 3
      %p216 = por %p214, %p215
      %p217 = scmp.ne.s32.totalorder %s208, %s209
      %p218 = scmp.eq.s32.totalorder %s34, 0
      %p219 = por %p217, %p218
      %p220 = scmp.ne.s32.totalorder %s208, %s209
      %p221 = scmp.eq.s32.totalorder %s35, 3
      %p222 = por %p220, %p221
      %p224 = scmp.ne.s32.totalorder %s209, %s223
      %p225 = scmp.eq.s32.totalorder %s35, 0
      %p226 = por %p224, %p225
      %s228 = sadd.s32 %s227, 1
      %p231 = scmp.eq.s32.totalorder %s29, 3
      %p232 = scmp.ne.s32.totalorder %s227, %s229
      %p233 = scmp.eq.s32.totalorder %s29, 0
      %p234 = por %p232, %p233
      %p235 = scmp.ne.s32.totalorder %s227, %s229
      %p236 = scmp.eq.s32.totalorder %s34, 3
      %p237 = por %p235, %p236
      %p238 = scmp.ne.s32.totalorder %s229, %s230
      %p239 = scmp.eq.s32.totalorder %s34, 0
      %p240 = por %p238, %p239
      %p241 = scmp.ne.s32.totalorder %s229, %s230
      %p242 = scmp.eq.s32.totalorder %s35, 3
      %p243 = por %p241, %p242
      %p245 = scmp.ne.s32.totalorder %s230, %s244
      %p246 = scmp.eq.s32.totalorder %s35, 0
      %p247 = por %p245, %p246
      %s249 = sadd.s32 %s248, 1
      %p252 = scmp.eq.s32.totalorder %s29, 3
      %p253 = scmp.ne.s32.totalorder %s248, %s250
      %p254 = scmp.eq.s32.totalorder %s29, 0
      %p255 = por %p253, %p254
      %p256 = scmp.ne.s32.totalorder %s248, %s250
      %p257 = scmp.eq.s32.totalorder %s34, 3
      %p258 = por %p256, %p257
      %p259 = scmp.ne.s32.totalorder %s250, %s251
      %p260 = scmp.eq.s32.totalorder %s34, 0
      %p261 = por %p259, %p260
      %p262 = scmp.ne.s32.totalorder %s250, %s251
      %p263 = scmp.eq.s32.totalorder %s35, 3
      %p264 = por %p262, %p263
      %p266 = scmp.ne.s32.totalorder %s251, %s265
      %p267 = scmp.eq.s32.totalorder %s35, 0
      %p268 = por %p266, %p267
      %s270 = sadd.s32 %s269, 1
      %p273 = scmp.eq.s32.totalorder %s29, 3
      %p274 = scmp.ne.s32.totalorder %s269, %s271
      %p275 = scmp.eq.s32.totalorder %s29, 0
      %p276 = por %p274, %p275
      %p277 = scmp.ne.s32.totalorder %s269, %s271
      %p278 = scmp.eq.s32.totalorder %s34, 3
      %p279 = por %p277, %p278
      %p280 = scmp.ne.s32.totalorder %s271, %s272
      %p281 = scmp.eq.s32.totalorder %s34, 0
      %p282 = por %p280, %p281
      %p283 = scmp.ne.s32.totalorder %s271, %s272
      %p284 = scmp.eq.s32.totalorder %s35, 3
      %p285 = por %p283, %p284
      %p287 = scmp.ne.s32.totalorder %s272, %s286
      %p288 = scmp.eq.s32.totalorder %s35, 0
      %p289 = por %p287, %p288
      %s291 = sadd.s32 %s290, 1
      %p294 = scmp.eq.s32.totalorder %s29, 3
      %p295 = scmp.ne.s32.totalorder %s290, %s292
      %p296 = scmp.eq.s32.totalorder %s29, 0
      %p297 = por %p295, %p296
      %p298 = scmp.ne.s32.totalorder %s290, %s292
      %p299 = scmp.eq.s32.totalorder %s34, 3
      %p300 = por %p298, %p299
      %p301 = scmp.ne.s32.totalorder %s292, %s293
      %p302 = scmp.eq.s32.totalorder %s34, 0
      %p303 = por %p301, %p302
      %p304 = scmp.ne.s32.totalorder %s292, %s293
      %p305 = scmp.eq.s32.totalorder %s35, 3
      %p306 = por %p304, %p305
      %p308 = scmp.ne.s32.totalorder %s293, %s307
      %p309 = scmp.eq.s32.totalorder %s35, 0
      %p310 = por %p308, %p309
      %s311 = ssub.s32 %s36, %s48
      %s312 = ssub.s32 %s37, %s44
      %s313 = sor.u32 %s311, %s312
      %p314 = scmp.eq.s32.totalorder %s313, 0
      %s316 = sadd.s32 %s315, 1
      %s317 = scalar_select %p314, %s315, %s316
      %p320 = pneg %p314
      %p321 = scmp.eq.s32.totalorder %s29, 3
      %p322 = por %p320, %p321
      %p323 = scmp.ne.s32.totalorder %s315, %s318
      %p324 = scmp.eq.s32.totalorder %s29, 0
      %p325 = por %p323, %p324
      %p326 = scmp.ne.s32.totalorder %s315, %s318
      %p327 = scmp.eq.s32.totalorder %s34, 3
      %p328 = por %p326, %p327
      %p329 = scmp.ne.s32.totalorder %s318, %s319
      %p330 = scmp.eq.s32.totalorder %s34, 0
      %p331 = por %p329, %p330
      %p332 = scmp.ne.s32.totalorder %s318, %s319
      %p333 = scmp.eq.s32.totalorder %s35, 3
      %p334 = por %p332, %p333
      %p336 = scmp.ne.s32.totalorder %s319, %s335
      %p337 = scmp.eq.s32.totalorder %s35, 0
      %p338 = por %p336, %p337
      %p339 = scmp.le.s32.totalorder 1, %s29
      %p340 = scmp.lt.s32.totalorder %s29, 5
      %p341 = pnand %p339, %p340
      %p342 = pneg %p341
      // Predicated region
      $region9: #{tpu_custom_call.1} parent=5 // pred_check
        _
      $region10: #{tpu_custom_call.1} parent=5 // pred_check_branch
        %344 = sbr.rel (%p341) target = $region12
      $region11: #{tpu_custom_call.1} parent=5 // pred_region
        %s345 = ssub.s32 %s29, 1
        // Predicated region
        $region13: #{tpu_custom_call.1} parent=11 // pred_check
          %p346 = pneg %p114
        $region14: #{tpu_custom_call.1} parent=11 // pred_check_branch
          %348 = sbr.rel (%p346) target = $region16
        $region15: #{tpu_custom_call.1} parent=11 // pred_region
          %s350 = ssub.s32 6144, 6144
          %351 = vsyncadd [#allocation10], %s350
          %s352 = sshll.u32 [#allocation11], 4
          %s353 = int_to_ptr.vmem [resolvable:$true] %s352
          %358 = dma.hbm_to_vmem [thread:$0]  %s2, 6144, %s353, [#allocation10], 384, 384, 24
        $region16: #{tpu_custom_call.1} parent=11 // pred_fallthru
          _
        // Predicated region
        $region17: #{tpu_custom_call.1} parent=11 // pred_check
          %p359 = pneg %p135
        $region18: #{tpu_custom_call.1} parent=11 // pred_check_branch
          %361 = sbr.rel (%p359) target = $region20
        $region19: #{tpu_custom_call.1} parent=11 // pred_region
          _
        $region20: #{tpu_custom_call.1} parent=11 // pred_fallthru
          _
        // Predicated region
        $region21: #{tpu_custom_call.1} parent=11 // pred_check
          %p362 = pneg %p156
        $region22: #{tpu_custom_call.1} parent=11 // pred_check_branch
          %364 = sbr.rel (%p362) target = $region24
        $region23: #{tpu_custom_call.1} parent=11 // pred_region
          %s366 = ssub.s32 3072, 3072
          %367 = vsyncadd [#allocation13], %s366
          %s368 = sshll.u32 [#allocation12], 4
          %s369 = int_to_ptr.vmem [resolvable:$true] %s368
          %374 = dma.hbm_to_vmem [thread:$0]  %s4, 3072, %s369, [#allocation13], 192, 192, 12
        $region24: #{tpu_custom_call.1} parent=11 // pred_fallthru
          _
        // Predicated region
        $region25: #{tpu_custom_call.1} parent=11 // pred_check
          %p375 = pneg %p177
        $region26: #{tpu_custom_call.1} parent=11 // pred_check_branch
          %377 = sbr.rel (%p375) target = $region28
        $region27: #{tpu_custom_call.1} parent=11 // pred_region
          _
        $region28: #{tpu_custom_call.1} parent=11 // pred_fallthru
          _
        // Predicated region
        $region29: #{tpu_custom_call.1} parent=11 // pred_check
          %p378 = pneg %p198
        $region30: #{tpu_custom_call.1} parent=11 // pred_check_branch
          %380 = sbr.rel (%p378) target = $region32
        $region31: #{tpu_custom_call.1} parent=11 // pred_region
          %s382 = ssub.s32 1024, 1024
          %383 = vsyncadd [#allocation13], %s382
          %s384 = sshll.u32 [#allocation14], 4
          %s385 = int_to_ptr.vmem [resolvable:$true] %s384
          %390 = dma.hbm_to_vmem [thread:$0]  %s6, 1024, %s385, [#allocation13], 64, 64, 4
        $region32: #{tpu_custom_call.1} parent=11 // pred_fallthru
          _
        // Predicated region
        $region33: #{tpu_custom_call.1} parent=11 // pred_check
          %p391 = pneg %p219
        $region34: #{tpu_custom_call.1} parent=11 // pred_check_branch
          %393 = sbr.rel (%p391) target = $region36
        $region35: #{tpu_custom_call.1} parent=11 // pred_region
          _
        $region36: #{tpu_custom_call.1} parent=11 // pred_fallthru
          _
        // Predicated region
        $region37: #{tpu_custom_call.1} parent=11 // pred_check
          %p394 = pneg %p240
        $region38: #{tpu_custom_call.1} parent=11 // pred_check_branch
          %396 = sbr.rel (%p394) target = $region40
        $region39: #{tpu_custom_call.1} parent=11 // pred_region
          %s398 = ssub.s32 4096, 4096
          %399 = vsyncadd [#allocation16], %s398
          %s400 = sshll.u32 [#allocation15], 4
          %s401 = int_to_ptr.vmem [resolvable:$true] %s400
          %406 = dma.hbm_to_vmem [thread:$0]  %s8, 4096, %s401, [#allocation16], 256, 256, 16
        $region40: #{tpu_custom_call.1} parent=11 // pred_fallthru
          _
        // Predicated region
        $region41: #{tpu_custom_call.1} parent=11 // pred_check
          %p407 = pneg %p261
        $region42: #{tpu_custom_call.1} parent=11 // pred_check_branch
          %409 = sbr.rel (%p407) target = $region44
        $region43: #{tpu_custom_call.1} parent=11 // pred_region
          _
        $region44: #{tpu_custom_call.1} parent=11 // pred_fallthru
          _
        // Predicated region
        $region45: #{tpu_custom_call.1} parent=11 // pred_check
          %p410 = pneg %p282
        $region46: #{tpu_custom_call.1} parent=11 // pred_check_branch
          %412 = sbr.rel (%p410) target = $region48
        $region47: #{tpu_custom_call.1} parent=11 // pred_region
          %s414 = ssub.s32 4096, 4096
          %415 = vsyncadd [#allocation16], %s414
          %s416 = sshll.u32 [#allocation17], 4
          %s417 = int_to_ptr.vmem [resolvable:$true] %s416
          %422 = dma.hbm_to_vmem [thread:$0]  %s10, 4096, %s417, [#allocation16], 64, 64, 4
        $region48: #{tpu_custom_call.1} parent=11 // pred_fallthru
          _
        // Predicated region
        $region49: #{tpu_custom_call.1} parent=11 // pred_check
          %p423 = pneg %p303
        $region50: #{tpu_custom_call.1} parent=11 // pred_check_branch
          %425 = sbr.rel (%p423) target = $region52
        $region51: #{tpu_custom_call.1} parent=11 // pred_region
          _
        $region52: #{tpu_custom_call.1} parent=11 // pred_fallthru
          _
      $region12: #{tpu_custom_call.1} parent=5 // pred_fallthru
        _
      %p426 = scmp.lt.s32.totalorder %s29, 4
      // Predicated region
      $region53: #{tpu_custom_call.1} parent=5 // pred_check
        %p427 = pneg %p426
      $region54: #{tpu_custom_call.1} parent=5 // pred_check_branch
        %429 = sbr.rel (%p427) target = $region56
      $region55: #{tpu_custom_call.1} parent=5 // pred_region
        // Predicated region
        $region57: #{tpu_custom_call.1} parent=55 // pred_check
          %p430 = pneg %p61
        $region58: #{tpu_custom_call.1} parent=55 // pred_check_branch
          %432 = sbr.rel (%p430) target = $region60
        $region59: #{tpu_custom_call.1} parent=55 // pred_region
          %s433 = sand.u32 %s51, 1
          %s434 = scalar_lea.sflag [#allocation7], %s433
          %s435 = sand.u32 %s51, 1
          %s436 = smul.addr %s435, 256
          %s437 = scalar_lea.vmem [#allocation6], %s436
          %s439 = ssub.s32 4096, 4096
          %440 = vsyncadd %s434, %s439
          %s441 = smul.addr %s36, 32
          %s442 = smul.addr %s441, 128
          %s443 = scalar_lea.hbm %s0, %s442
          %s444 = sshll.u32 %s437, 4
          %s445 = int_to_ptr.vmem [resolvable:$true] %s444
          %450 = dma.hbm_to_vmem [thread:$0]  %s443, 4096, %s445, %s434, 128, 128, 8
        $region60: #{tpu_custom_call.1} parent=55 // pred_fallthru
          _
        // Predicated region
        $region61: #{tpu_custom_call.1} parent=55 // pred_check
          %p451 = pneg %p87
        $region62: #{tpu_custom_call.1} parent=55 // pred_check_branch
          %453 = sbr.rel (%p451) target = $region64
        $region63: #{tpu_custom_call.1} parent=55 // pred_region
          %s454 = sand.u32 %s29, 1
          %s455 = scalar_lea.sflag [#allocation10], %s454
          %s456 = sand.u32 %s77, 1
          %s457 = scalar_lea.vmem [#allocation9], %s456
          %s459 = ssub.s32 16, 16
          %460 = vsyncadd %s455, %s459
          %s461 = smul.addr %s36, 16
          %s462 = scalar_lea.hbm %s1, %s461
          %s464 = sshll.u32 %s457, 4
          %s465 = int_to_ptr.vmem [resolvable:$true] %s464
          %467 = dma.hbm_to_vmem [thread:$0]  %s462, 16, %s465, %s455
        $region64: #{tpu_custom_call.1} parent=55 // pred_fallthru
          _
      $region56: #{tpu_custom_call.1} parent=5 // pred_fallthru
        _
      %p468 = scmp.le.s32.totalorder 1, %s29
      %p469 = scmp.lt.s32.totalorder %s29, 5
      %p470 = pnand %p468, %p469
      %p471 = pneg %p470
      // Predicated region
      $region65: #{tpu_custom_call.1} parent=5 // pred_check
        _
      $region66: #{tpu_custom_call.1} parent=5 // pred_check_branch
        %473 = sbr.rel (%p470) target = $region68
      $region67: #{tpu_custom_call.1} parent=5 // pred_region
        %s474 = ssub.s32 %s29, 1
        %s475 = sand.u32 %s54, 1
        %s476 = scalar_lea.sflag [#allocation7], %s475
        %s477 = sand.u32 %s54, 1
        %s478 = smul.addr %s477, 256
        %s479 = scalar_lea.vmem [#allocation6], %s478
        // Predicated region
        $region69: #{tpu_custom_call.1} parent=67 // pred_check
          %p480 = pneg %p67
        $region70: #{tpu_custom_call.1} parent=67 // pred_check_branch
          %482 = sbr.rel (%p480) target = $region72
        $region71: #{tpu_custom_call.1} parent=67 // pred_region
          %483 = dma.done %s476, 4096
        $region72: #{tpu_custom_call.1} parent=67 // pred_fallthru
          _
        %s484 = sand.u32 %s34, 1
        %s485 = scalar_lea.sflag [#allocation10], %s484
        %s486 = sand.u32 %s80, 1
        %s487 = scalar_lea.vmem [#allocation9], %s486
        // Predicated region
        $region73: #{tpu_custom_call.1} parent=67 // pred_check
          %p488 = pneg %p93
        $region74: #{tpu_custom_call.1} parent=67 // pred_check_branch
          %490 = sbr.rel (%p488) target = $region76
        $region75: #{tpu_custom_call.1} parent=67 // pred_region
          %491 = dma.done %s485, 16
        $region76: #{tpu_custom_call.1} parent=67 // pred_fallthru
          _
        // Predicated region
        $region77: #{tpu_custom_call.1} parent=67 // pred_check
          %p492 = pneg %p114
        $region78: #{tpu_custom_call.1} parent=67 // pred_check_branch
          %494 = sbr.rel (%p492) target = $region80
        $region79: #{tpu_custom_call.1} parent=67 // pred_region
          %495 = dma.done [#allocation10], 6144
        $region80: #{tpu_custom_call.1} parent=67 // pred_fallthru
          _
        // Predicated region
        $region81: #{tpu_custom_call.1} parent=67 // pred_check
          %p496 = pneg %p156
        $region82: #{tpu_custom_call.1} parent=67 // pred_check_branch
          %498 = sbr.rel (%p496) target = $region84
        $region83: #{tpu_custom_call.1} parent=67 // pred_region
          %499 = dma.done [#allocation13], 3072
        $region84: #{tpu_custom_call.1} parent=67 // pred_fallthru
          _
        // Predicated region
        $region85: #{tpu_custom_call.1} parent=67 // pred_check
          %p500 = pneg %p198
        $region86: #{tpu_custom_call.1} parent=67 // pred_check_branch
          %502 = sbr.rel (%p500) target = $region88
        $region87: #{tpu_custom_call.1} parent=67 // pred_region
          %503 = dma.done [#allocation13], 1024
        $region88: #{tpu_custom_call.1} parent=67 // pred_fallthru
          _
        // Predicated region
        $region89: #{tpu_custom_call.1} parent=67 // pred_check
          %p504 = pneg %p240
        $region90: #{tpu_custom_call.1} parent=67 // pred_check_branch
          %506 = sbr.rel (%p504) target = $region92
        $region91: #{tpu_custom_call.1} parent=67 // pred_region
          %507 = dma.done [#allocation16], 4096
        $region92: #{tpu_custom_call.1} parent=67 // pred_fallthru
          _
        // Predicated region
        $region93: #{tpu_custom_call.1} parent=67 // pred_check
          %p508 = pneg %p282
        $region94: #{tpu_custom_call.1} parent=67 // pred_check_branch
          %510 = sbr.rel (%p508) target = $region96
        $region95: #{tpu_custom_call.1} parent=67 // pred_region
          %511 = dma.done [#allocation16], 4096
        $region96: #{tpu_custom_call.1} parent=67 // pred_fallthru
          _
        %s512 = sand.u32 %s54, 1
        %s513 = scalar_lea.sflag [#allocation7], %s512
        %s514 = sand.u32 %s54, 1
        %s515 = smul.addr %s514, 256
        %s516 = scalar_lea.vmem [#allocation6], %s515
        %p517 = pneg %p67
        %p518 = pneg %p64
        %s519 = sand.u32 %s34, 1
        %s520 = scalar_lea.sflag [#allocation10], %s519
        %s521 = sand.u32 %s80, 1
        %s522 = scalar_lea.vmem [#allocation9], %s521
        %p523 = pneg %p93
        %p524 = pneg %p90
        %p525 = pneg %p114
        %p526 = pneg %p111
        %p527 = pneg %p135
        %p528 = pneg %p132
        %p529 = pneg %p156
        %p530 = pneg %p153
        %p531 = pneg %p177
        %p532 = pneg %p174
        %p533 = pneg %p198
        %p534 = pneg %p195
        %p535 = pneg %p219
        %p536 = pneg %p216
        %p537 = pneg %p240
        %p538 = pneg %p237
        %p539 = pneg %p261
        %p540 = pneg %p258
        %p541 = pneg %p282
        %p542 = pneg %p279
        %p543 = pneg %p303
        %p544 = pneg %p300
        %p545 = pneg %p331
        %p546 = pneg %p328
        %s547 = sand.u32 %s318, 1
        %s548 = scalar_lea.sflag [#allocation8], %s547
        %s549 = sand.u32 %s318, 1
        %s550 = smul.addr %s549, 128
        %s551 = scalar_lea.vmem [#allocation18], %s550
        %s552 = smul.u32 16, %s39
        %p554 = scmp.eq.s32.totalorder %s39, 0
        // Predicated region
        $region97: #{tpu_custom_call.1} parent=67 // pred_check
          %p555 = pneg %p554
        $region98: #{tpu_custom_call.1} parent=67 // pred_check_branch
          %557 = sbr.rel (%p555) target = $region100
        $region99: #{tpu_custom_call.1} parent=67 // pred_region
          %v558 = vld [vmem:[%s487] sm:$0x1]
          %v559 = vxor.u32 %v558, 2147483648
          %v560 = vmul.f32 %v559, 1.442695
          %v561 = vpow.pop %v560
          %v562 = vadd.f32 %v561, 1.0
          %v563 = vrcp.pop %v562
          %v564 = vmul.f32 1.0, %v563
          %v565 = vmul.f32 %v558, %v564
          %v566 = vpack.c.bf16 %v565, %v565
          %v567 = vld [vmem:[#allocation11] sm:$0xff]
          %v568 = vld [vmem:[#allocation11 + $0x8] sm:$0xff]
          %v569 = vld [vmem:[#allocation11 + $0x10] sm:$0xff]
          %v570 = vld [vmem:[#allocation11 + $0x18] sm:$0xff]
          %v571 = vld [vmem:[#allocation11 + $0x20] sm:$0xff]
          %v572 = vld [vmem:[#allocation11 + $0x28] sm:$0xff]
          %v573 = vld [vmem:[#allocation11 + $0x30] sm:$0xff]
          %v574 = vld [vmem:[#allocation11 + $0x38] sm:$0xff]
          %v575 = vld [vmem:[#allocation11 + $0x40] sm:$0xff]
          %v576 = vld [vmem:[#allocation11 + $0x48] sm:$0xff]
          %v577 = vld [vmem:[#allocation11 + $0x50] sm:$0xff]
          %v578 = vld [vmem:[#allocation11 + $0x58] sm:$0xff]
          %v579 = vld [vmem:[#allocation11 + $0x60] sm:$0xff]
          %v580 = vld [vmem:[#allocation11 + $0x68] sm:$0xff]
          %v581 = vld [vmem:[#allocation11 + $0x70] sm:$0xff]
          %v582 = vld [vmem:[#allocation11 + $0x78] sm:$0xff]
          %v583 = vld [vmem:[#allocation11 + $0x80] sm:$0xff]
          %v584 = vld [vmem:[#allocation11 + $0x88] sm:$0xff]
          %v585 = vld [vmem:[#allocation11 + $0x90] sm:$0xff]
          %v586 = vld [vmem:[#allocation11 + $0x98] sm:$0xff]
          %v587 = vld [vmem:[#allocation11 + $0xa0] sm:$0xff]
          %v588 = vld [vmem:[#allocation11 + $0xa8] sm:$0xff]
          %v589 = vld [vmem:[#allocation11 + $0xb0] sm:$0xff]
          %v590 = vld [vmem:[#allocation11 + $0xb8] sm:$0xff]
          %v591 = vld [vmem:[#allocation11 + $0xc0] sm:$0xff]
          %v592 = vld [vmem:[#allocation11 + $0xc8] sm:$0xff]
          %v593 = vld [vmem:[#allocation11 + $0xd0] sm:$0xff]
          %v594 = vld [vmem:[#allocation11 + $0xd8] sm:$0xff]
          %v595 = vld [vmem:[#allocation11 + $0xe0] sm:$0xff]
          %v596 = vld [vmem:[#allocation11 + $0xe8] sm:$0xff]
          %v597 = vld [vmem:[#allocation11 + $0xf0] sm:$0xff]
          %v598 = vld [vmem:[#allocation11 + $0xf8] sm:$0xff]
          %v599 = vld [vmem:[#allocation11 + $0x100] sm:$0xff]
          %v600 = vld [vmem:[#allocation11 + $0x108] sm:$0xff]
          %v601 = vld [vmem:[#allocation11 + $0x110] sm:$0xff]
          %v602 = vld [vmem:[#allocation11 + $0x118] sm:$0xff]
          %v603 = vld [vmem:[#allocation11 + $0x120] sm:$0xff]
          %v604 = vld [vmem:[#allocation11 + $0x128] sm:$0xff]
          %v605 = vld [vmem:[#allocation11 + $0x130] sm:$0xff]
          %v606 = vld [vmem:[#allocation11 + $0x138] sm:$0xff]
          %v607 = vld [vmem:[#allocation11 + $0x140] sm:$0xff]
          %v608 = vld [vmem:[#allocation11 + $0x148] sm:$0xff]
          %v609 = vld [vmem:[#allocation11 + $0x150] sm:$0xff]
          %v610 = vld [vmem:[#allocation11 + $0x158] sm:$0xff]
          %v611 = vld [vmem:[#allocation11 + $0x160] sm:$0xff]
          %v612 = vld [vmem:[#allocation11 + $0x168] sm:$0xff]
          %v613 = vld [vmem:[#allocation11 + $0x170] sm:$0xff]
          %v614 = vld [vmem:[#allocation11 + $0x178] sm:$0xff]
          %v615 = vld [vmem:[%s3] sm:$0x3f]
          %v664 = vunpack.c.l.b16 %v567
          %v665 = vunpack.c.h.b16 %v567
          %v666 = vunpack.c.l.b16 %v568
          %v667 = vunpack.c.h.b16 %v568
          %v668 = vunpack.c.l.b16 %v569
          %v669 = vunpack.c.h.b16 %v569
          %v670 = vunpack.c.l.b16 %v570
          %v671 = vunpack.c.h.b16 %v570
          %v672 = vunpack.c.l.b16 %v571
          %v673 = vunpack.c.h.b16 %v571
          %v674 = vunpack.c.l.b16 %v572
          %v675 = vunpack.c.h.b16 %v572
          %v676 = vunpack.c.l.b16 %v573
          %v677 = vunpack.c.h.b16 %v573
          %v678 = vunpack.c.l.b16 %v574
          %v679 = vunpack.c.h.b16 %v574
          %v680 = vunpack.c.l.b16 %v575
          %v681 = vunpack.c.h.b16 %v575
          %v682 = vunpack.c.l.b16 %v576
          %v683 = vunpack.c.h.b16 %v576
          %v684 = vunpack.c.l.b16 %v577
          %v685 = vunpack.c.h.b16 %v577
          %v686 = vunpack.c.l.b16 %v578
          %v687 = vunpack.c.h.b16 %v578
          %v688 = vunpack.c.l.b16 %v579
          %v689 = vunpack.c.h.b16 %v579
          %v690 = vunpack.c.l.b16 %v580
          %v691 = vunpack.c.h.b16 %v580
          %v692 = vunpack.c.l.b16 %v581
          %v693 = vunpack.c.h.b16 %v581
          %v694 = vunpack.c.l.b16 %v582
          %v695 = vunpack.c.h.b16 %v582
          %v696 = vunpack.c.l.b16 %v583
          %v697 = vunpack.c.h.b16 %v583
          %v698 = vunpack.c.l.b16 %v584
          %v699 = vunpack.c.h.b16 %v584
          %v700 = vunpack.c.l.b16 %v585
          %v701 = vunpack.c.h.b16 %v585
          %v702 = vunpack.c.l.b16 %v586
          %v703 = vunpack.c.h.b16 %v586
          %v704 = vunpack.c.l.b16 %v587
          %v705 = vunpack.c.h.b16 %v587
          %v706 = vunpack.c.l.b16 %v588
          %v707 = vunpack.c.h.b16 %v588
          %v708 = vunpack.c.l.b16 %v589
          %v709 = vunpack.c.h.b16 %v589
          %v710 = vunpack.c.l.b16 %v590
          %v711 = vunpack.c.h.b16 %v590
          %v712 = vunpack.c.l.b16 %v591
          %v713 = vunpack.c.h.b16 %v591
          %v714 = vunpack.c.l.b16 %v592
          %v715 = vunpack.c.h.b16 %v592
          %v716 = vunpack.c.l.b16 %v593
          %v717 = vunpack.c.h.b16 %v593
          %v718 = vunpack.c.l.b16 %v594
          %v719 = vunpack.c.h.b16 %v594
          %v720 = vunpack.c.l.b16 %v595
          %v721 = vunpack.c.h.b16 %v595
          %v722 = vunpack.c.l.b16 %v596
          %v723 = vunpack.c.h.b16 %v596
          %v724 = vunpack.c.l.b16 %v597
          %v725 = vunpack.c.h.b16 %v597
          %v726 = vunpack.c.l.b16 %v598
          %v727 = vunpack.c.h.b16 %v598
          %v728 = vunpack.c.l.b16 %v599
          %v729 = vunpack.c.h.b16 %v599
          %v730 = vunpack.c.l.b16 %v600
          %v731 = vunpack.c.h.b16 %v600
          %v732 = vunpack.c.l.b16 %v601
          %v733 = vunpack.c.h.b16 %v601
          %v734 = vunpack.c.l.b16 %v602
          %v735 = vunpack.c.h.b16 %v602
          %v736 = vunpack.c.l.b16 %v603
          %v737 = vunpack.c.h.b16 %v603
          %v738 = vunpack.c.l.b16 %v604
          %v739 = vunpack.c.h.b16 %v604
          %v740 = vunpack.c.l.b16 %v605
          %v741 = vunpack.c.h.b16 %v605
          %v742 = vunpack.c.l.b16 %v606
          %v743 = vunpack.c.h.b16 %v606
          %v744 = vunpack.c.l.b16 %v607
          %v745 = vunpack.c.h.b16 %v607
          %v746 = vunpack.c.l.b16 %v608
          %v747 = vunpack.c.h.b16 %v608
          %v748 = vunpack.c.l.b16 %v609
          %v749 = vunpack.c.h.b16 %v609
          %v750 = vunpack.c.l.b16 %v610
          %v751 = vunpack.c.h.b16 %v610
          %v752 = vunpack.c.l.b16 %v611
          %v753 = vunpack.c.h.b16 %v611
          %v754 = vunpack.c.l.b16 %v612
          %v755 = vunpack.c.h.b16 %v612
          %v756 = vunpack.c.l.b16 %v613
          %v757 = vunpack.c.h.b16 %v613
          %v758 = vunpack.c.l.b16 %v614
          %v759 = vunpack.c.h.b16 %v614
          %v760 = vpack.c.b16 %v670, %v664
          %v761 = vpack.c.b16 %v671, %v665
          %v762 = vpack.c.b16 %v672, %v666
          %v763 = vpack.c.b16 %v673, %v667
          %v764 = vpack.c.b16 %v674, %v668
          %v765 = vpack.c.b16 %v675, %v669
          %v766 = vpack.c.b16 %v682, %v676
          %v767 = vpack.c.b16 %v683, %v677
          %v768 = vpack.c.b16 %v684, %v678
          %v769 = vpack.c.b16 %v685, %v679
          %v770 = vpack.c.b16 %v686, %v680
          %v771 = vpack.c.b16 %v687, %v681
          %v772 = vpack.c.b16 %v694, %v688
          %v773 = vpack.c.b16 %v695, %v689
          %v774 = vpack.c.b16 %v696, %v690
          %v775 = vpack.c.b16 %v697, %v691
          %v776 = vpack.c.b16 %v698, %v692
          %v777 = vpack.c.b16 %v699, %v693
          %v778 = vpack.c.b16 %v706, %v700
          %v779 = vpack.c.b16 %v707, %v701
          %v780 = vpack.c.b16 %v708, %v702
          %v781 = vpack.c.b16 %v709, %v703
          %v782 = vpack.c.b16 %v710, %v704
          %v783 = vpack.c.b16 %v711, %v705
          %v784 = vpack.c.b16 %v718, %v712
          %v785 = vpack.c.b16 %v719, %v713
          %v786 = vpack.c.b16 %v720, %v714
          %v787 = vpack.c.b16 %v721, %v715
          %v788 = vpack.c.b16 %v722, %v716
          %v789 = vpack.c.b16 %v723, %v717
          %v790 = vpack.c.b16 %v730, %v724
          %v791 = vpack.c.b16 %v731, %v725
          %v792 = vpack.c.b16 %v732, %v726
          %v793 = vpack.c.b16 %v733, %v727
          %v794 = vpack.c.b16 %v734, %v728
          %v795 = vpack.c.b16 %v735, %v729
          %v796 = vpack.c.b16 %v742, %v736
          %v797 = vpack.c.b16 %v743, %v737
          %v798 = vpack.c.b16 %v744, %v738
          %v799 = vpack.c.b16 %v745, %v739
          %v800 = vpack.c.b16 %v746, %v740
          %v801 = vpack.c.b16 %v747, %v741
          %v802 = vpack.c.b16 %v754, %v748
          %v803 = vpack.c.b16 %v755, %v749
          %v804 = vpack.c.b16 %v756, %v750
          %v805 = vpack.c.b16 %v757, %v751
          %v806 = vpack.c.b16 %v758, %v752
          %v807 = vpack.c.b16 %v759, %v753
          %v857 = vlaneseq
          %v858 = vshrl.u32 %v857, 7
          %v859 = vsub.s32 0, %v858
          %v860 = vrot.slane %v615, %v859
          %v861 = vlaneseq
          %v862 = vshrl.u32 %v861, 7
          %v863 = vsub.s32 1, %v862
          %v864 = vrot.slane %v615, %v863
          %v865 = vlaneseq
          %v866 = vshrl.u32 %v865, 7
          %v867 = vsub.s32 2, %v866
          %v868 = vrot.slane %v615, %v867
          %v869 = vlaneseq
          %v870 = vshrl.u32 %v869, 7
          %v871 = vsub.s32 3, %v870
          %v872 = vrot.slane %v615, %v871
          %v873 = vlaneseq
          %v874 = vshrl.u32 %v873, 7
          %v875 = vsub.s32 4, %v874
          %v876 = vrot.slane %v615, %v875
          %v877 = vlaneseq
          %v878 = vshrl.u32 %v877, 7
          %v879 = vsub.s32 5, %v878
          %v880 = vrot.slane %v615, %v879
          %887 = vmatprep.subr.bf16.mxu0 %v761
          %888 = vmatpush1.bf16.msra.mxu0 %v760
          %889 = vmatprep.subr.bf16.mxu0 %v767
          %890 = vmatpush1.bf16.msra.mxu0 %v766
          %891 = vmatprep.subr.bf16.mxu0 %v773
          %892 = vmatpush1.bf16.msra.mxu0 %v772
          %893 = vmatprep.subr.bf16.mxu0 %v779
          %894 = vmatpush1.bf16.msra.mxu0 %v778
          %895 = vmatprep.subr.bf16.mxu0 %v785
          %896 = vmatpush1.bf16.msra.mxu0 %v784
          %897 = vmatprep.subr.bf16.mxu0 %v791
          %898 = vmatpush1.bf16.msra.mxu0 %v790
          %899 = vmatprep.subr.bf16.mxu0 %v797
          %900 = vmatpush1.bf16.msra.mxu0 %v796
          %901 = vmatprep.subr.bf16.mxu0 %v803
          %902 = vmatpush1.bf16.msra.mxu0 %v802
          %903 = vmatprep.subr.bf16.mxu0 0
          %904 = vmatpush1.bf16.msra.mxu0 0
          %905 = vmatprep.subr.bf16.mxu0 0
          %906 = vmatpush1.bf16.msra.mxu0 0
          %907 = vmatprep.subr.bf16.mxu0 0
          %908 = vmatpush1.bf16.msra.mxu0 0
          %909 = vmatprep.subr.bf16.mxu0 0
          %910 = vmatpush1.bf16.msra.mxu0 0
          %911 = vmatprep.subr.bf16.mxu0 0
          %912 = vmatpush1.bf16.msra.mxu0 0
          %913 = vmatprep.subr.bf16.mxu0 0
          %914 = vmatpush1.bf16.msra.mxu0 0
          %915 = vmatprep.subr.bf16.mxu0 0
          %916 = vmatpush1.bf16.msra.mxu0 0
          %917 = vmatprep.subr.bf16.mxu0 0
          %918 = vmatpush1.bf16.msra.mxu0 0
          %919 = vmatprep.mubr.bf16.mxu0 0
          %920 = vmatmul.mubr.bf16.gmra.mrb[0].mxu0 %v566
          %v921 = vpop.f32.mrb[0].mxu0
          %v922 = vadd.f32 %v860, %v921
          %v923 = vpop.f32.mrb[0].mxu0
          %v924 = vadd.f32 %v864, %v923
          %v925 = vpop.f32.mrb[0].mxu0
          %v926 = vpop.f32.mrb[0].mxu0
          %927 = vdwg.mxu0
          %928 = vmatprep.subr.bf16.mxu0 %v763
          %929 = vmatpush1.bf16.msra.mxu0 %v762
          %930 = vmatprep.subr.bf16.mxu0 %v769
          %931 = vmatpush1.bf16.msra.mxu0 %v768
          %932 = vmatprep.subr.bf16.mxu0 %v775
          %933 = vmatpush1.bf16.msra.mxu0 %v774
          %934 = vmatprep.subr.bf16.mxu0 %v781
          %935 = vmatpush1.bf16.msra.mxu0 %v780
          %936 = vmatprep.subr.bf16.mxu0 %v787
          %937 = vmatpush1.bf16.msra.mxu0 %v786
          %938 = vmatprep.subr.bf16.mxu0 %v793
          %939 = vmatpush1.bf16.msra.mxu0 %v792
          %940 = vmatprep.subr.bf16.mxu0 %v799
          %941 = vmatpush1.bf16.msra.mxu0 %v798
          %942 = vmatprep.subr.bf16.mxu0 %v805
          %943 = vmatpush1.bf16.msra.mxu0 %v804
          %944 = vmatprep.subr.bf16.mxu0 0
          %945 = vmatpush1.bf16.msra.mxu0 0
          %946 = vmatprep.subr.bf16.mxu0 0
          %947 = vmatpush1.bf16.msra.mxu0 0
          %948 = vmatprep.subr.bf16.mxu0 0
          %949 = vmatpush1.bf16.msra.mxu0 0
          %950 = vmatprep.subr.bf16.mxu0 0
          %951 = vmatpush1.bf16.msra.mxu0 0
          %952 = vmatprep.subr.bf16.mxu0 0
          %953 = vmatpush1.bf16.msra.mxu0 0
          %954 = vmatprep.subr.bf16.mxu0 0
          %955 = vmatpush1.bf16.msra.mxu0 0
          %956 = vmatprep.subr.bf16.mxu0 0
          %957 = vmatpush1.bf16.msra.mxu0 0
          %958 = vmatprep.subr.bf16.mxu0 0
          %959 = vmatpush1.bf16.msra.mxu0 0
          %960 = vmatprep.mubr.bf16.mxu0 0
          %961 = vmatmul.mubr.bf16.gmra.mrb[0].mxu0 %v566
          %v962 = vpop.f32.mrb[0].mxu0
          %v963 = vadd.f32 %v868, %v962
          %v964 = vpop.f32.mrb[0].mxu0
          %v965 = vadd.f32 %v872, %v964
          %v966 = vpop.f32.mrb[0].mxu0
          %v967 = vpop.f32.mrb[0].mxu0
          %968 = vdwg.mxu0
          %969 = vmatprep.subr.bf16.mxu0 %v765
          %970 = vmatpush1.bf16.msra.mxu0 %v764
          %971 = vmatprep.subr.bf16.mxu0 %v771
          %972 = vmatpush1.bf16.msra.mxu0 %v770
          %973 = vmatprep.subr.bf16.mxu0 %v777
          %974 = vmatpush1.bf16.msra.mxu0 %v776
          %975 = vmatprep.subr.bf16.mxu0 %v783
          %976 = vmatpush1.bf16.msra.mxu0 %v782
          %977 = vmatprep.subr.bf16.mxu0 %v789
          %978 = vmatpush1.bf16.msra.mxu0 %v788
          %979 = vmatprep.subr.bf16.mxu0 %v795
          %980 = vmatpush1.bf16.msra.mxu0 %v794
          %981 = vmatprep.subr.bf16.mxu0 %v801
          %982 = vmatpush1.bf16.msra.mxu0 %v800
          %983 = vmatprep.subr.bf16.mxu0 %v807
          %984 = vmatpush1.bf16.msra.mxu0 %v806
          %985 = vmatprep.subr.bf16.mxu0 0
          %986 = vmatpush1.bf16.msra.mxu0 0
          %987 = vmatprep.subr.bf16.mxu0 0
          %988 = vmatpush1.bf16.msra.mxu0 0
          %989 = vmatprep.subr.bf16.mxu0 0
          %990 = vmatpush1.bf16.msra.mxu0 0
          %991 = vmatprep.subr.bf16.mxu0 0
          %992 = vmatpush1.bf16.msra.mxu0 0
          %993 = vmatprep.subr.bf16.mxu0 0
          %994 = vmatpush1.bf16.msra.mxu0 0
          %995 = vmatprep.subr.bf16.mxu0 0
          %996 = vmatpush1.bf16.msra.mxu0 0
          %997 = vmatprep.subr.bf16.mxu0 0
          %998 = vmatpush1.bf16.msra.mxu0 0
          %999 = vmatprep.subr.bf16.mxu0 0
          %1000 = vmatpush1.bf16.msra.mxu0 0
          %1001 = vmatprep.mubr.bf16.mxu0 0
          %1002 = vmatmul.mubr.bf16.gmra.mrb[0].mxu0 %v566
          %v1003 = vpop.f32.mrb[0].mxu0
          %v1004 = vadd.f32 %v876, %v1003
          %v1005 = vpop.f32.mrb[0].mxu0
          %v1006 = vadd.f32 %v880, %v1005
          %v1007 = vpop.f32.mrb[0].mxu0
          %v1008 = vpop.f32.mrb[0].mxu0
          %1009 = vdwg.mxu0
          %v1016 = vcombine.low %v922, %v924
          %v1017 = vcombine.low %v963, %v965
          %v1018 = vcombine.low %v1004, %v1006
          %v1020 = vunpack.c.l.s4 1966171168
          %v1021 = vunpack.c.0.s8 %v1020
          %v1022 = vlaneseq
          %v1023 = vshrl.u32 %v1022, 7
          %v1024 = vsub.s32 %v1021, %v1023
          %v1025 = vrot.slane %v1016, %v1024
          %v1027 = vunpack.c.l.s4 1966171168
          %v1028 = vunpack.c.0.s8 %v1027
          %v1029 = vlaneseq
          %v1030 = vshrl.u32 %v1029, 7
          %v1031 = vsub.s32 %v1028, %v1030
          %v1032 = vrot.slane %v1017, %v1031
          %v1034 = vunpack.c.l.s4 1966171168
          %v1035 = vunpack.c.0.s8 %v1034
          %v1036 = vlaneseq
          %v1037 = vshrl.u32 %v1036, 7
          %v1038 = vsub.s32 %v1035, %v1037
          %v1039 = vrot.slane %v1018, %v1038
          %v1040 = vcombine.low %v1025, %v1032
          %v1042 = vunpack.c.l.s4 1966171168
          %v1043 = vunpack.c.0.s8 %v1042
          %v1044 = vlaneseq
          %v1045 = vshrl.u32 %v1044, 7
          %v1046 = vsub.s32 %v1043, %v1045
          %v1047 = vrot.slane %v1040, %v1046
          %v1049 = vunpack.c.l.s4 1966171168
          %v1050 = vunpack.c.0.s8 %v1049
          %v1051 = vlaneseq
          %v1052 = vshrl.u32 %v1051, 7
          %v1053 = vsub.s32 %v1050, %v1052
          %v1054 = vrot.slane %v1039, %v1053
          %v1055 = vcombine.low %v1047, %v1054
          %v1057 = vlaneseq
          %vm1058 = vcmp.ge.s32.totalorder %v1057, 0
          %vm1059 = vcmp.lt.s32.totalorder %v1057, 768
          %vm1060 = vmand %vm1058, %vm1059
          %1061 = vst.msk [vmem:[#allocation2] sm:$0x3f] %vm1060, %v1055
          %v1062 = vld [vmem:[%s479] sm:$0xff]
          %v1063 = vld [vmem:[%s479 + $0x8] sm:$0xff]
          %v1064 = vld [vmem:[%s479 + $0x10] sm:$0xff]
          %v1065 = vld [vmem:[%s479 + $0x18] sm:$0xff]
          %v1066 = vld [vmem:[%s479 + $0x20] sm:$0xff]
          %v1067 = vld [vmem:[%s479 + $0x28] sm:$0xff]
          %v1068 = vld [vmem:[%s479 + $0x30] sm:$0xff]
          %v1069 = vld [vmem:[%s479 + $0x38] sm:$0xff]
          %v1070 = vld [vmem:[%s479 + $0x40] sm:$0xff]
          %v1071 = vld [vmem:[%s479 + $0x48] sm:$0xff]
          %v1072 = vld [vmem:[%s479 + $0x50] sm:$0xff]
          %v1073 = vld [vmem:[%s479 + $0x58] sm:$0xff]
          %v1074 = vld [vmem:[%s479 + $0x60] sm:$0xff]
          %v1075 = vld [vmem:[%s479 + $0x68] sm:$0xff]
          %v1076 = vld [vmem:[%s479 + $0x70] sm:$0xff]
          %v1077 = vld [vmem:[%s479 + $0x78] sm:$0xff]
          %v1078 = vld [vmem:[%s479 + $0x80] sm:$0xff]
          %v1079 = vld [vmem:[%s479 + $0x88] sm:$0xff]
          %v1080 = vld [vmem:[%s479 + $0x90] sm:$0xff]
          %v1081 = vld [vmem:[%s479 + $0x98] sm:$0xff]
          %v1082 = vld [vmem:[%s479 + $0xa0] sm:$0xff]
          %v1083 = vld [vmem:[%s479 + $0xa8] sm:$0xff]
          %v1084 = vld [vmem:[%s479 + $0xb0] sm:$0xff]
          %v1085 = vld [vmem:[%s479 + $0xb8] sm:$0xff]
          %v1086 = vld [vmem:[%s479 + $0xc0] sm:$0xff]
          %v1087 = vld [vmem:[%s479 + $0xc8] sm:$0xff]
          %v1088 = vld [vmem:[%s479 + $0xd0] sm:$0xff]
          %v1089 = vld [vmem:[%s479 + $0xd8] sm:$0xff]
          %v1090 = vld [vmem:[%s479 + $0xe0] sm:$0xff]
          %v1091 = vld [vmem:[%s479 + $0xe8] sm:$0xff]
          %v1092 = vld [vmem:[%s479 + $0xf0] sm:$0xff]
          %v1093 = vld [vmem:[%s479 + $0xf8] sm:$0xff]
          %1094 = vadd.xlane.f32.xlu0 %v1062
          %v1095 = vpop.xlane.xlu0 %1094
          %1096 = vadd.xlane.f32.xlu0 %v1063
          %v1097 = vpop.xlane.xlu0 %1096
          %1098 = vadd.xlane.f32.xlu0 %v1064
          %v1099 = vpop.xlane.xlu0 %1098
          %1100 = vadd.xlane.f32.xlu0 %v1065
          %v1101 = vpop.xlane.xlu0 %1100
          %1102 = vadd.xlane.f32.xlu0 %v1066
          %v1103 = vpop.xlane.xlu0 %1102
          %1104 = vadd.xlane.f32.xlu0 %v1067
          %v1105 = vpop.xlane.xlu0 %1104
          %1106 = vadd.xlane.f32.xlu0 %v1068
          %v1107 = vpop.xlane.xlu0 %1106
          %1108 = vadd.xlane.f32.xlu0 %v1069
          %v1109 = vpop.xlane.xlu0 %1108
          %1110 = vadd.xlane.f32.xlu0 %v1070
          %v1111 = vpop.xlane.xlu0 %1110
          %1112 = vadd.xlane.f32.xlu0 %v1071
          %v1113 = vpop.xlane.xlu0 %1112
          %1114 = vadd.xlane.f32.xlu0 %v1072
          %v1115 = vpop.xlane.xlu0 %1114
          %1116 = vadd.xlane.f32.xlu0 %v1073
          %v1117 = vpop.xlane.xlu0 %1116
          %1118 = vadd.xlane.f32.xlu0 %v1074
          %v1119 = vpop.xlane.xlu0 %1118
          %1120 = vadd.xlane.f32.xlu0 %v1075
          %v1121 = vpop.xlane.xlu0 %1120
          %1122 = vadd.xlane.f32.xlu0 %v1076
          %v1123 = vpop.xlane.xlu0 %1122
          %1124 = vadd.xlane.f32.xlu0 %v1077
          %v1125 = vpop.xlane.xlu0 %1124
          %1126 = vadd.xlane.f32.xlu0 %v1078
          %v1127 = vpop.xlane.xlu0 %1126
          %1128 = vadd.xlane.f32.xlu0 %v1079
          %v1129 = vpop.xlane.xlu0 %1128
          %1130 = vadd.xlane.f32.xlu0 %v1080
          %v1131 = vpop.xlane.xlu0 %1130
          %1132 = vadd.xlane.f32.xlu0 %v1081
          %v1133 = vpop.xlane.xlu0 %1132
          %1134 = vadd.xlane.f32.xlu0 %v1082
          %v1135 = vpop.xlane.xlu0 %1134
          %1136 = vadd.xlane.f32.xlu0 %v1083
          %v1137 = vpop.xlane.xlu0 %1136
          %1138 = vadd.xlane.f32.xlu0 %v1084
          %v1139 = vpop.xlane.xlu0 %1138
          %1140 = vadd.xlane.f32.xlu0 %v1085
          %v1141 = vpop.xlane.xlu0 %1140
          %1142 = vadd.xlane.f32.xlu0 %v1086
          %v1143 = vpop.xlane.xlu0 %1142
          %1144 = vadd.xlane.f32.xlu0 %v1087
          %v1145 = vpop.xlane.xlu0 %1144
          %1146 = vadd.xlane.f32.xlu0 %v1088
          %v1147 = vpop.xlane.xlu0 %1146
          %1148 = vadd.xlane.f32.xlu0 %v1089
          %v1149 = vpop.xlane.xlu0 %1148
          %1150 = vadd.xlane.f32.xlu0 %v1090
          %v1151 = vpop.xlane.xlu0 %1150
          %1152 = vadd.xlane.f32.xlu0 %v1091
          %v1153 = vpop.xlane.xlu0 %1152
          %1154 = vadd.xlane.f32.xlu0 %v1092
          %v1155 = vpop.xlane.xlu0 %1154
          %1156 = vadd.xlane.f32.xlu0 %v1093
          %v1157 = vpop.xlane.xlu0 %1156
          %v1158 = vrcp.pop 128.0
          %v1159 = vmul.f32 %v1095, %v1158
          %v1160 = vmul.f32 %v1097, %v1158
          %v1161 = vmul.f32 %v1099, %v1158
          %v1162 = vmul.f32 %v1101, %v1158
          %v1163 = vmul.f32 %v1103, %v1158
          %v1164 = vmul.f32 %v1105, %v1158
          %v1165 = vmul.f32 %v1107, %v1158
          %v1166 = vmul.f32 %v1109, %v1158
          %v1167 = vmul.f32 %v1111, %v1158
          %v1168 = vmul.f32 %v1113, %v1158
          %v1169 = vmul.f32 %v1115, %v1158
          %v1170 = vmul.f32 %v1117, %v1158
          %v1171 = vmul.f32 %v1119, %v1158
          %v1172 = vmul.f32 %v1121, %v1158
          %v1173 = vmul.f32 %v1123, %v1158
          %v1174 = vmul.f32 %v1125, %v1158
          %v1175 = vmul.f32 %v1127, %v1158
          %v1176 = vmul.f32 %v1129, %v1158
          %v1177 = vmul.f32 %v1131, %v1158
          %v1178 = vmul.f32 %v1133, %v1158
          %v1179 = vmul.f32 %v1135, %v1158
          %v1180 = vmul.f32 %v1137, %v1158
          %v1181 = vmul.f32 %v1139, %v1158
          %v1182 = vmul.f32 %v1141, %v1158
          %v1183 = vmul.f32 %v1143, %v1158
          %v1184 = vmul.f32 %v1145, %v1158
          %v1185 = vmul.f32 %v1147, %v1158
          %v1186 = vmul.f32 %v1149, %v1158
          %v1187 = vmul.f32 %v1151, %v1158
          %v1188 = vmul.f32 %v1153, %v1158
          %v1189 = vmul.f32 %v1155, %v1158
          %v1190 = vmul.f32 %v1157, %v1158
          %v1191 = vsub.f32 %v1062, %v1159
          %v1192 = vsub.f32 %v1063, %v1160
          %v1193 = vsub.f32 %v1064, %v1161
          %v1194 = vsub.f32 %v1065, %v1162
          %v1195 = vsub.f32 %v1066, %v1163
          %v1196 = vsub.f32 %v1067, %v1164
          %v1197 = vsub.f32 %v1068, %v1165
          %v1198 = vsub.f32 %v1069, %v1166
          %v1199 = vsub.f32 %v1070, %v1167
          %v1200 = vsub.f32 %v1071, %v1168
          %v1201 = vsub.f32 %v1072, %v1169
          %v1202 = vsub.f32 %v1073, %v1170
          %v1203 = vsub.f32 %v1074, %v1171
          %v1204 = vsub.f32 %v1075, %v1172
          %v1205 = vsub.f32 %v1076, %v1173
          %v1206 = vsub.f32 %v1077, %v1174
          %v1207 = vsub.f32 %v1078, %v1175
          %v1208 = vsub.f32 %v1079, %v1176
          %v1209 = vsub.f32 %v1080, %v1177
          %v1210 = vsub.f32 %v1081, %v1178
          %v1211 = vsub.f32 %v1082, %v1179
          %v1212 = vsub.f32 %v1083, %v1180
          %v1213 = vsub.f32 %v1084, %v1181
          %v1214 = vsub.f32 %v1085, %v1182
          %v1215 = vsub.f32 %v1086, %v1183
          %v1216 = vsub.f32 %v1087, %v1184
          %v1217 = vsub.f32 %v1088, %v1185
          %v1218 = vsub.f32 %v1089, %v1186
          %v1219 = vsub.f32 %v1090, %v1187
          %v1220 = vsub.f32 %v1091, %v1188
          %v1221 = vsub.f32 %v1092, %v1189
          %v1222 = vsub.f32 %v1093, %v1190
          %v1223 = vmul.f32 %v1191, %v1191
          %v1224 = vmul.f32 %v1192, %v1192
          %v1225 = vmul.f32 %v1193, %v1193
          %v1226 = vmul.f32 %v1194, %v1194
          %v1227 = vmul.f32 %v1195, %v1195
          %v1228 = vmul.f32 %v1196, %v1196
          %v1229 = vmul.f32 %v1197, %v1197
          %v1230 = vmul.f32 %v1198, %v1198
          %v1231 = vmul.f32 %v1199, %v1199
          %v1232 = vmul.f32 %v1200, %v1200
          %v1233 = vmul.f32 %v1201, %v1201
          %v1234 = vmul.f32 %v1202, %v1202
          %v1235 = vmul.f32 %v1203, %v1203
          %v1236 = vmul.f32 %v1204, %v1204
          %v1237 = vmul.f32 %v1205, %v1205
          %v1238 = vmul.f32 %v1206, %v1206
          %v1239 = vmul.f32 %v1207, %v1207
          %v1240 = vmul.f32 %v1208, %v1208
          %v1241 = vmul.f32 %v1209, %v1209
          %v1242 = vmul.f32 %v1210, %v1210
          %v1243 = vmul.f32 %v1211, %v1211
          %v1244 = vmul.f32 %v1212, %v1212
          %v1245 = vmul.f32 %v1213, %v1213
          %v1246 = vmul.f32 %v1214, %v1214
          %v1247 = vmul.f32 %v1215, %v1215
          %v1248 = vmul.f32 %v1216, %v1216
          %v1249 = vmul.f32 %v1217, %v1217
          %v1250 = vmul.f32 %v1218, %v1218
          %v1251 = vmul.f32 %v1219, %v1219
          %v1252 = vmul.f32 %v1220, %v1220
          %v1253 = vmul.f32 %v1221, %v1221
          %v1254 = vmul.f32 %v1222, %v1222
          %1255 = vadd.xlane.f32.xlu0 %v1223
          %v1256 = vpop.xlane.xlu0 %1255
          %1257 = vadd.xlane.f32.xlu0 %v1224
          %v1258 = vpop.xlane.xlu0 %1257
          %1259 = vadd.xlane.f32.xlu0 %v1225
          %v1260 = vpop.xlane.xlu0 %1259
          %1261 = vadd.xlane.f32.xlu0 %v1226
          %v1262 = vpop.xlane.xlu0 %1261
          %1263 = vadd.xlane.f32.xlu0 %v1227
          %v1264 = vpop.xlane.xlu0 %1263
          %1265 = vadd.xlane.f32.xlu0 %v1228
          %v1266 = vpop.xlane.xlu0 %1265
          %1267 = vadd.xlane.f32.xlu0 %v1229
          %v1268 = vpop.xlane.xlu0 %1267
          %1269 = vadd.xlane.f32.xlu0 %v1230
          %v1270 = vpop.xlane.xlu0 %1269
          %1271 = vadd.xlane.f32.xlu0 %v1231
          %v1272 = vpop.xlane.xlu0 %1271
          %1273 = vadd.xlane.f32.xlu0 %v1232
          %v1274 = vpop.xlane.xlu0 %1273
          %1275 = vadd.xlane.f32.xlu0 %v1233
          %v1276 = vpop.xlane.xlu0 %1275
          %1277 = vadd.xlane.f32.xlu0 %v1234
          %v1278 = vpop.xlane.xlu0 %1277
          %1279 = vadd.xlane.f32.xlu0 %v1235
          %v1280 = vpop.xlane.xlu0 %1279
          %1281 = vadd.xlane.f32.xlu0 %v1236
          %v1282 = vpop.xlane.xlu0 %1281
          %1283 = vadd.xlane.f32.xlu0 %v1237
          %v1284 = vpop.xlane.xlu0 %1283
          %1285 = vadd.xlane.f32.xlu0 %v1238
          %v1286 = vpop.xlane.xlu0 %1285
          %1287 = vadd.xlane.f32.xlu0 %v1239
          %v1288 = vpop.xlane.xlu0 %1287
          %1289 = vadd.xlane.f32.xlu0 %v1240
          %v1290 = vpop.xlane.xlu0 %1289
          %1291 = vadd.xlane.f32.xlu0 %v1241
          %v1292 = vpop.xlane.xlu0 %1291
          %1293 = vadd.xlane.f32.xlu0 %v1242
          %v1294 = vpop.xlane.xlu0 %1293
          %1295 = vadd.xlane.f32.xlu0 %v1243
          %v1296 = vpop.xlane.xlu0 %1295
          %1297 = vadd.xlane.f32.xlu0 %v1244
          %v1298 = vpop.xlane.xlu0 %1297
          %1299 = vadd.xlane.f32.xlu0 %v1245
          %v1300 = vpop.xlane.xlu0 %1299
          %1301 = vadd.xlane.f32.xlu0 %v1246
          %v1302 = vpop.xlane.xlu0 %1301
          %1303 = vadd.xlane.f32.xlu0 %v1247
          %v1304 = vpop.xlane.xlu0 %1303
          %1305 = vadd.xlane.f32.xlu0 %v1248
          %v1306 = vpop.xlane.xlu0 %1305
          %1307 = vadd.xlane.f32.xlu0 %v1249
          %v1308 = vpop.xlane.xlu0 %1307
          %1309 = vadd.xlane.f32.xlu0 %v1250
          %v1310 = vpop.xlane.xlu0 %1309
          %1311 = vadd.xlane.f32.xlu0 %v1251
          %v1312 = vpop.xlane.xlu0 %1311
          %1313 = vadd.xlane.f32.xlu0 %v1252
          %v1314 = vpop.xlane.xlu0 %1313
          %1315 = vadd.xlane.f32.xlu0 %v1253
          %v1316 = vpop.xlane.xlu0 %1315
          %1317 = vadd.xlane.f32.xlu0 %v1254
          %v1318 = vpop.xlane.xlu0 %1317
          %v1319 = vmul.f32 %v1256, %v1158
          %v1320 = vmul.f32 %v1258, %v1158
          %v1321 = vmul.f32 %v1260, %v1158
          %v1322 = vmul.f32 %v1262, %v1158
          %v1323 = vmul.f32 %v1264, %v1158
          %v1324 = vmul.f32 %v1266, %v1158
          %v1325 = vmul.f32 %v1268, %v1158
          %v1326 = vmul.f32 %v1270, %v1158
          %v1327 = vmul.f32 %v1272, %v1158
          %v1328 = vmul.f32 %v1274, %v1158
          %v1329 = vmul.f32 %v1276, %v1158
          %v1330 = vmul.f32 %v1278, %v1158
          %v1331 = vmul.f32 %v1280, %v1158
          %v1332 = vmul.f32 %v1282, %v1158
          %v1333 = vmul.f32 %v1284, %v1158
          %v1334 = vmul.f32 %v1286, %v1158
          %v1335 = vmul.f32 %v1288, %v1158
          %v1336 = vmul.f32 %v1290, %v1158
          %v1337 = vmul.f32 %v1292, %v1158
          %v1338 = vmul.f32 %v1294, %v1158
          %v1339 = vmul.f32 %v1296, %v1158
          %v1340 = vmul.f32 %v1298, %v1158
          %v1341 = vmul.f32 %v1300, %v1158
          %v1342 = vmul.f32 %v1302, %v1158
          %v1343 = vmul.f32 %v1304, %v1158
          %v1344 = vmul.f32 %v1306, %v1158
          %v1345 = vmul.f32 %v1308, %v1158
          %v1346 = vmul.f32 %v1310, %v1158
          %v1347 = vmul.f32 %v1312, %v1158
          %v1348 = vmul.f32 %v1314, %v1158
          %v1349 = vmul.f32 %v1316, %v1158
          %v1350 = vmul.f32 %v1318, %v1158
          %v1351 = vadd.f32 %v1319, 1e-06
          %v1352 = vadd.f32 %v1320, 1e-06
          %v1353 = vadd.f32 %v1321, 1e-06
          %v1354 = vadd.f32 %v1322, 1e-06
          %v1355 = vadd.f32 %v1323, 1e-06
          %v1356 = vadd.f32 %v1324, 1e-06
          %v1357 = vadd.f32 %v1325, 1e-06
          %v1358 = vadd.f32 %v1326, 1e-06
          %v1359 = vadd.f32 %v1327, 1e-06
          %v1360 = vadd.f32 %v1328, 1e-06
          %v1361 = vadd.f32 %v1329, 1e-06
          %v1362 = vadd.f32 %v1330, 1e-06
          %v1363 = vadd.f32 %v1331, 1e-06
          %v1364 = vadd.f32 %v1332, 1e-06
          %v1365 = vadd.f32 %v1333, 1e-06
          %v1366 = vadd.f32 %v1334, 1e-06
          %v1367 = vadd.f32 %v1335, 1e-06
          %v1368 = vadd.f32 %v1336, 1e-06
          %v1369 = vadd.f32 %v1337, 1e-06
          %v1370 = vadd.f32 %v1338, 1e-06
          %v1371 = vadd.f32 %v1339, 1e-06
          %v1372 = vadd.f32 %v1340, 1e-06
          %v1373 = vadd.f32 %v1341, 1e-06
          %v1374 = vadd.f32 %v1342, 1e-06
          %v1375 = vadd.f32 %v1343, 1e-06
          %v1376 = vadd.f32 %v1344, 1e-06
          %v1377 = vadd.f32 %v1345, 1e-06
          %v1378 = vadd.f32 %v1346, 1e-06
          %v1379 = vadd.f32 %v1347, 1e-06
          %v1380 = vadd.f32 %v1348, 1e-06
          %v1381 = vadd.f32 %v1349, 1e-06
          %v1382 = vadd.f32 %v1350, 1e-06
          %v1383 = vrsqrt.pop %v1351
          %v1384 = vrsqrt.pop %v1352
          %v1385 = vrsqrt.pop %v1353
          %v1386 = vrsqrt.pop %v1354
          %v1387 = vrsqrt.pop %v1355
          %v1388 = vrsqrt.pop %v1356
          %v1389 = vrsqrt.pop %v1357
          %v1390 = vrsqrt.pop %v1358
          %v1391 = vrsqrt.pop %v1359
          %v1392 = vrsqrt.pop %v1360
          %v1393 = vrsqrt.pop %v1361
          %v1394 = vrsqrt.pop %v1362
          %v1395 = vrsqrt.pop %v1363
          %v1396 = vrsqrt.pop %v1364
          %v1397 = vrsqrt.pop %v1365
          %v1398 = vrsqrt.pop %v1366
          %v1399 = vrsqrt.pop %v1367
          %v1400 = vrsqrt.pop %v1368
          %v1401 = vrsqrt.pop %v1369
          %v1402 = vrsqrt.pop %v1370
          %v1403 = vrsqrt.pop %v1371
          %v1404 = vrsqrt.pop %v1372
          %v1405 = vrsqrt.pop %v1373
          %v1406 = vrsqrt.pop %v1374
          %v1407 = vrsqrt.pop %v1375
          %v1408 = vrsqrt.pop %v1376
          %v1409 = vrsqrt.pop %v1377
          %v1410 = vrsqrt.pop %v1378
          %v1411 = vrsqrt.pop %v1379
          %v1412 = vrsqrt.pop %v1380
          %v1413 = vrsqrt.pop %v1381
          %v1414 = vrsqrt.pop %v1382
          %v1415 = vmul.f32 %v1191, %v1383
          %v1416 = vmul.f32 %v1192, %v1384
          %v1417 = vmul.f32 %v1193, %v1385
          %v1418 = vmul.f32 %v1194, %v1386
          %v1419 = vmul.f32 %v1195, %v1387
          %v1420 = vmul.f32 %v1196, %v1388
          %v1421 = vmul.f32 %v1197, %v1389
          %v1422 = vmul.f32 %v1198, %v1390
          %v1423 = vmul.f32 %v1199, %v1391
          %v1424 = vmul.f32 %v1200, %v1392
          %v1425 = vmul.f32 %v1201, %v1393
          %v1426 = vmul.f32 %v1202, %v1394
          %v1427 = vmul.f32 %v1203, %v1395
          %v1428 = vmul.f32 %v1204, %v1396
          %v1429 = vmul.f32 %v1205, %v1397
          %v1430 = vmul.f32 %v1206, %v1398
          %v1431 = vmul.f32 %v1207, %v1399
          %v1432 = vmul.f32 %v1208, %v1400
          %v1433 = vmul.f32 %v1209, %v1401
          %v1434 = vmul.f32 %v1210, %v1402
          %v1435 = vmul.f32 %v1211, %v1403
          %v1436 = vmul.f32 %v1212, %v1404
          %v1437 = vmul.f32 %v1213, %v1405
          %v1438 = vmul.f32 %v1214, %v1406
          %v1439 = vmul.f32 %v1215, %v1407
          %v1440 = vmul.f32 %v1216, %v1408
          %v1441 = vmul.f32 %v1217, %v1409
          %v1442 = vmul.f32 %v1218, %v1410
          %v1443 = vmul.f32 %v1219, %v1411
          %v1444 = vmul.f32 %v1220, %v1412
          %v1445 = vmul.f32 %v1221, %v1413
          %v1446 = vmul.f32 %v1222, %v1414
          %v1447 = vadd.f32 %v924, 1.0
          %v1448 = vlaneseq
          %v1449 = vshrl.u32 %v1448, 7
          %v1450 = vsub.s32 0, %v1449
          %v1451 = vrot.slane %v1447, %v1450
          %v1452 = vmul.f32 %v1415, %v1451
          %v1453 = vmul.f32 %v1416, %v1451
          %v1454 = vmul.f32 %v1417, %v1451
          %v1455 = vmul.f32 %v1418, %v1451
          %v1456 = vmul.f32 %v1419, %v1451
          %v1457 = vmul.f32 %v1420, %v1451
          %v1458 = vmul.f32 %v1421, %v1451
          %v1459 = vmul.f32 %v1422, %v1451
          %v1460 = vmul.f32 %v1423, %v1451
          %v1461 = vmul.f32 %v1424, %v1451
          %v1462 = vmul.f32 %v1425, %v1451
          %v1463 = vmul.f32 %v1426, %v1451
          %v1464 = vmul.f32 %v1427, %v1451
          %v1465 = vmul.f32 %v1428, %v1451
          %v1466 = vmul.f32 %v1429, %v1451
          %v1467 = vmul.f32 %v1430, %v1451
          %v1468 = vmul.f32 %v1431, %v1451
          %v1469 = vmul.f32 %v1432, %v1451
          %v1470 = vmul.f32 %v1433, %v1451
          %v1471 = vmul.f32 %v1434, %v1451
          %v1472 = vmul.f32 %v1435, %v1451
          %v1473 = vmul.f32 %v1436, %v1451
          %v1474 = vmul.f32 %v1437, %v1451
          %v1475 = vmul.f32 %v1438, %v1451
          %v1476 = vmul.f32 %v1439, %v1451
          %v1477 = vmul.f32 %v1440, %v1451
          %v1478 = vmul.f32 %v1441, %v1451
          %v1479 = vmul.f32 %v1442, %v1451
          %v1480 = vmul.f32 %v1443, %v1451
          %v1481 = vmul.f32 %v1444, %v1451
          %v1482 = vmul.f32 %v1445, %v1451
          %v1483 = vmul.f32 %v1446, %v1451
          %v1484 = vlaneseq
          %v1485 = vshrl.u32 %v1484, 7
          %v1486 = vsub.s32 0, %v1485
          %v1487 = vrot.slane %v922, %v1486
          %v1488 = vadd.f32 %v1452, %v1487
          %v1489 = vadd.f32 %v1453, %v1487
          %v1490 = vadd.f32 %v1454, %v1487
          %v1491 = vadd.f32 %v1455, %v1487
          %v1492 = vadd.f32 %v1456, %v1487
          %v1493 = vadd.f32 %v1457, %v1487
          %v1494 = vadd.f32 %v1458, %v1487
          %v1495 = vadd.f32 %v1459, %v1487
          %v1496 = vadd.f32 %v1460, %v1487
          %v1497 = vadd.f32 %v1461, %v1487
          %v1498 = vadd.f32 %v1462, %v1487
          %v1499 = vadd.f32 %v1463, %v1487
          %v1500 = vadd.f32 %v1464, %v1487
          %v1501 = vadd.f32 %v1465, %v1487
          %v1502 = vadd.f32 %v1466, %v1487
          %v1503 = vadd.f32 %v1467, %v1487
          %v1504 = vadd.f32 %v1468, %v1487
          %v1505 = vadd.f32 %v1469, %v1487
          %v1506 = vadd.f32 %v1470, %v1487
          %v1507 = vadd.f32 %v1471, %v1487
          %v1508 = vadd.f32 %v1472, %v1487
          %v1509 = vadd.f32 %v1473, %v1487
          %v1510 = vadd.f32 %v1474, %v1487
          %v1511 = vadd.f32 %v1475, %v1487
          %v1512 = vadd.f32 %v1476, %v1487
          %v1513 = vadd.f32 %v1477, %v1487
          %v1514 = vadd.f32 %v1478, %v1487
          %v1515 = vadd.f32 %v1479, %v1487
          %v1516 = vadd.f32 %v1480, %v1487
          %v1517 = vadd.f32 %v1481, %v1487
          %v1518 = vadd.f32 %v1482, %v1487
          %v1519 = vadd.f32 %v1483, %v1487
          %v1520 = vpack.c.bf16 %v1489, %v1488
          %v1521 = vpack.c.bf16 %v1491, %v1490
          %v1522 = vpack.c.bf16 %v1493, %v1492
          %v1523 = vpack.c.bf16 %v1495, %v1494
          %v1524 = vpack.c.bf16 %v1497, %v1496
          %v1525 = vpack.c.bf16 %v1499, %v1498
          %v1526 = vpack.c.bf16 %v1501, %v1500
          %v1527 = vpack.c.bf16 %v1503, %v1502
          %v1528 = vpack.c.bf16 %v1505, %v1504
          %v1529 = vpack.c.bf16 %v1507, %v1506
          %v1530 = vpack.c.bf16 %v1509, %v1508
          %v1531 = vpack.c.bf16 %v1511, %v1510
          %v1532 = vpack.c.bf16 %v1513, %v1512
          %v1533 = vpack.c.bf16 %v1515, %v1514
          %v1534 = vpack.c.bf16 %v1517, %v1516
          %v1535 = vpack.c.bf16 %v1519, %v1518
          %v1536 = vld [vmem:[#allocation12] sm:$0xff]
          %v1537 = vld [vmem:[#allocation12 + $0x8] sm:$0xf]
          %v1538 = vld [vmem:[#allocation12 + $0xc] sm:$0xff]
          %v1539 = vld [vmem:[#allocation12 + $0x14] sm:$0xf]
          %v1540 = vld [vmem:[#allocation12 + $0x18] sm:$0xff]
          %v1541 = vld [vmem:[#allocation12 + $0x20] sm:$0xf]
          %v1542 = vld [vmem:[#allocation12 + $0x24] sm:$0xff]
          %v1543 = vld [vmem:[#allocation12 + $0x2c] sm:$0xf]
          %v1544 = vld [vmem:[#allocation12 + $0x30] sm:$0xff]
          %v1545 = vld [vmem:[#allocation12 + $0x38] sm:$0xf]
          %v1546 = vld [vmem:[#allocation12 + $0x3c] sm:$0xff]
          %v1547 = vld [vmem:[#allocation12 + $0x44] sm:$0xf]
          %v1548 = vld [vmem:[#allocation12 + $0x48] sm:$0xff]
          %v1549 = vld [vmem:[#allocation12 + $0x50] sm:$0xf]
          %v1550 = vld [vmem:[#allocation12 + $0x54] sm:$0xff]
          %v1551 = vld [vmem:[#allocation12 + $0x5c] sm:$0xf]
          %v1552 = vld [vmem:[#allocation12 + $0x60] sm:$0xff]
          %v1553 = vld [vmem:[#allocation12 + $0x68] sm:$0xf]
          %v1554 = vld [vmem:[#allocation12 + $0x6c] sm:$0xff]
          %v1555 = vld [vmem:[#allocation12 + $0x74] sm:$0xf]
          %v1556 = vld [vmem:[#allocation12 + $0x78] sm:$0xff]
          %v1557 = vld [vmem:[#allocation12 + $0x80] sm:$0xf]
          %v1558 = vld [vmem:[#allocation12 + $0x84] sm:$0xff]
          %v1559 = vld [vmem:[#allocation12 + $0x8c] sm:$0xf]
          %v1560 = vld [vmem:[#allocation12 + $0x90] sm:$0xff]
          %v1561 = vld [vmem:[#allocation12 + $0x98] sm:$0xf]
          %v1562 = vld [vmem:[#allocation12 + $0x9c] sm:$0xff]
          %v1563 = vld [vmem:[#allocation12 + $0xa4] sm:$0xf]
          %v1564 = vld [vmem:[#allocation12 + $0xa8] sm:$0xff]
          %v1565 = vld [vmem:[#allocation12 + $0xb0] sm:$0xf]
          %v1566 = vld [vmem:[#allocation12 + $0xb4] sm:$0xff]
          %v1567 = vld [vmem:[#allocation12 + $0xbc] sm:$0xf]
          %v1568 = vld [vmem:[%s5] sm:$0x7]
          %v1570 = vlaneseq
          %v1571 = vshrl.u32 %v1570, 7
          %v1572 = vsub.s32 0, %v1571
          %v1573 = vrot.slane %v1568, %v1572
          %v1574 = vlaneseq
          %v1575 = vshrl.u32 %v1574, 7
          %v1576 = vsub.s32 1, %v1575
          %v1577 = vrot.slane %v1568, %v1576
          %v1578 = vlaneseq
          %v1579 = vshrl.u32 %v1578, 7
          %v1580 = vsub.s32 2, %v1579
          %v1581 = vrot.slane %v1568, %v1580
          %v1617 = vunpack.c.l.b16 %v1536
          %v1618 = vunpack.c.h.b16 %v1536
          %v1619 = vunpack.c.l.b16 %v1537
          %v1620 = vunpack.c.l.b16 %v1538
          %v1621 = vunpack.c.h.b16 %v1538
          %v1622 = vunpack.c.l.b16 %v1539
          %v1623 = vunpack.c.l.b16 %v1540
          %v1624 = vunpack.c.h.b16 %v1540
          %v1625 = vunpack.c.l.b16 %v1541
          %v1626 = vunpack.c.l.b16 %v1542
          %v1627 = vunpack.c.h.b16 %v1542
          %v1628 = vunpack.c.l.b16 %v1543
          %v1629 = vunpack.c.l.b16 %v1544
          %v1630 = vunpack.c.h.b16 %v1544
          %v1631 = vunpack.c.l.b16 %v1545
          %v1632 = vunpack.c.l.b16 %v1546
          %v1633 = vunpack.c.h.b16 %v1546
          %v1634 = vunpack.c.l.b16 %v1547
          %v1635 = vunpack.c.l.b16 %v1548
          %v1636 = vunpack.c.h.b16 %v1548
          %v1637 = vunpack.c.l.b16 %v1549
          %v1638 = vunpack.c.l.b16 %v1550
          %v1639 = vunpack.c.h.b16 %v1550
          %v1640 = vunpack.c.l.b16 %v1551
          %v1641 = vunpack.c.l.b16 %v1552
          %v1642 = vunpack.c.h.b16 %v1552
          %v1643 = vunpack.c.l.b16 %v1553
          %v1644 = vunpack.c.l.b16 %v1554
          %v1645 = vunpack.c.h.b16 %v1554
          %v1646 = vunpack.c.l.b16 %v1555
          %v1647 = vunpack.c.l.b16 %v1556
          %v1648 = vunpack.c.h.b16 %v1556
          %v1649 = vunpack.c.l.b16 %v1557
          %v1650 = vunpack.c.l.b16 %v1558
          %v1651 = vunpack.c.h.b16 %v1558
          %v1652 = vunpack.c.l.b16 %v1559
          %v1653 = vunpack.c.l.b16 %v1560
          %v1654 = vunpack.c.h.b16 %v1560
          %v1655 = vunpack.c.l.b16 %v1561
          %v1656 = vunpack.c.l.b16 %v1562
          %v1657 = vunpack.c.h.b16 %v1562
          %v1658 = vunpack.c.l.b16 %v1563
          %v1659 = vunpack.c.l.b16 %v1564
          %v1660 = vunpack.c.h.b16 %v1564
          %v1661 = vunpack.c.l.b16 %v1565
          %v1662 = vunpack.c.l.b16 %v1566
          %v1663 = vunpack.c.h.b16 %v1566
          %v1664 = vunpack.c.l.b16 %v1567
          %v1665 = vpack.c.b16 %v1620, %v1617
          %v1666 = vpack.c.b16 %v1621, %v1618
          %v1667 = vpack.c.b16 %v1622, %v1619
          %v1668 = vpack.c.b16 %v1626, %v1623
          %v1669 = vpack.c.b16 %v1627, %v1624
          %v1670 = vpack.c.b16 %v1628, %v1625
          %v1671 = vpack.c.b16 %v1632, %v1629
          %v1672 = vpack.c.b16 %v1633, %v1630
          %v1673 = vpack.c.b16 %v1634, %v1631
          %v1674 = vpack.c.b16 %v1638, %v1635
          %v1675 = vpack.c.b16 %v1639, %v1636
          %v1676 = vpack.c.b16 %v1640, %v1637
          %v1677 = vpack.c.b16 %v1644, %v1641
          %v1678 = vpack.c.b16 %v1645, %v1642
          %v1679 = vpack.c.b16 %v1646, %v1643
          %v1680 = vpack.c.b16 %v1650, %v1647
          %v1681 = vpack.c.b16 %v1651, %v1648
          %v1682 = vpack.c.b16 %v1652, %v1649
          %v1683 = vpack.c.b16 %v1656, %v1653
          %v1684 = vpack.c.b16 %v1657, %v1654
          %v1685 = vpack.c.b16 %v1658, %v1655
          %v1686 = vpack.c.b16 %v1662, %v1659
          %v1687 = vpack.c.b16 %v1663, %v1660
          %v1688 = vpack.c.b16 %v1664, %v1661
          %1713 = vmatprep.subr.bf16.mxu0 %v1666
          %1714 = vmatpush1.bf16.msra.mxu0 %v1665
          %1715 = vmatprep.subr.bf16.mxu0 %v1669
          %1716 = vmatpush1.bf16.msra.mxu0 %v1668
          %1717 = vmatprep.subr.bf16.mxu0 %v1672
          %1718 = vmatpush1.bf16.msra.mxu0 %v1671
          %1719 = vmatprep.subr.bf16.mxu0 %v1675
          %1720 = vmatpush1.bf16.msra.mxu0 %v1674
          %1721 = vmatprep.subr.bf16.mxu0 %v1678
          %1722 = vmatpush1.bf16.msra.mxu0 %v1677
          %1723 = vmatprep.subr.bf16.mxu0 %v1681
          %1724 = vmatpush1.bf16.msra.mxu0 %v1680
          %1725 = vmatprep.subr.bf16.mxu0 %v1684
          %1726 = vmatpush1.bf16.msra.mxu0 %v1683
          %1727 = vmatprep.subr.bf16.mxu0 %v1687
          %1728 = vmatpush1.bf16.msra.mxu0 %v1686
          %1729 = vmatprep.subr.bf16.mxu0 0
          %1730 = vmatpush1.bf16.msra.mxu0 0
          %1731 = vmatprep.subr.bf16.mxu0 0
          %1732 = vmatpush1.bf16.msra.mxu0 0
          %1733 = vmatprep.subr.bf16.mxu0 0
          %1734 = vmatpush1.bf16.msra.mxu0 0
          %1735 = vmatprep.subr.bf16.mxu0 0
          %1736 = vmatpush1.bf16.msra.mxu0 0
          %1737 = vmatprep.subr.bf16.mxu0 0
          %1738 = vmatpush1.bf16.msra.mxu0 0
          %1739 = vmatprep.subr.bf16.mxu0 0
          %1740 = vmatpush1.bf16.msra.mxu0 0
          %1741 = vmatprep.subr.bf16.mxu0 0
          %1742 = vmatpush1.bf16.msra.mxu0 0
          %1743 = vmatprep.subr.bf16.mxu0 0
          %1744 = vmatpush1.bf16.msra.mxu0 0
          %1745 = vmatprep.mubr.bf16.mxu0 0
          %1746 = vmatmul.mubr.bf16.gmra.mrb[0].mxu0 %v1520
          %v1747 = vpop.f32.mrb[0].mxu0
          %v1748 = vadd.f32 %v1573, %v1747
          %v1749 = vpop.f32.mrb[0].mxu0
          %v1750 = vadd.f32 %v1577, %v1749
          %v1751 = vpop.f32.mrb[0].mxu0
          %v1752 = vadd.f32 %v1573, %v1751
          %v1753 = vpop.f32.mrb[0].mxu0
          %v1754 = vadd.f32 %v1577, %v1753
          %1755 = vmatprep.mubr.bf16.mxu0 0
          %1756 = vmatmul.mubr.bf16.gmra.mrb[0].mxu0 %v1521
          %v1757 = vpop.f32.mrb[0].mxu0
          %v1758 = vadd.f32 %v1573, %v1757
          %v1759 = vpop.f32.mrb[0].mxu0
          %v1760 = vadd.f32 %v1577, %v1759
          %v1761 = vpop.f32.mrb[0].mxu0
          %v1762 = vadd.f32 %v1573, %v1761
          %v1763 = vpop.f32.mrb[0].mxu0
          %v1764 = vadd.f32 %v1577, %v1763
          %1765 = vmatprep.mubr.bf16.mxu0 0
          %1766 = vmatmul.mubr.bf16.gmra.mrb[0].mxu0 %v1522
          %v1767 = vpop.f32.mrb[0].mxu0
          %v1768 = vadd.f32 %v1573, %v1767
          %v1769 = vpop.f32.mrb[0].mxu0
          %v1770 = vadd.f32 %v1577, %v1769
          %v1771 = vpop.f32.mrb[0].mxu0
          %v1772 = vadd.f32 %v1573, %v1771
          %v1773 = vpop.f32.mrb[0].mxu0
          %v1774 = vadd.f32 %v1577, %v1773
          %1775 = vmatprep.mubr.bf16.mxu0 0
          %1776 = vmatmul.mubr.bf16.gmra.mrb[0].mxu0 %v1523
          %v1777 = vpop.f32.mrb[0].mxu0
          %v1778 = vadd.f32 %v1573, %v1777
          %v1779 = vpop.f32.mrb[0].mxu0
          %v1780 = vadd.f32 %v1577, %v1779
          %v1781 = vpop.f32.mrb[0].mxu0
          %v1782 = vadd.f32 %v1573, %v1781
          %v1783 = vpop.f32.mrb[0].mxu0
          %v1784 = vadd.f32 %v1577, %v1783
          %1785 = vmatprep.mubr.bf16.mxu0 0
          %1786 = vmatmul.mubr.bf16.gmra.mrb[0].mxu0 %v1524
          %v1787 = vpop.f32.mrb[0].mxu0
          %v1788 = vadd.f32 %v1573, %v1787
          %v1789 = vpop.f32.mrb[0].mxu0
          %v1790 = vadd.f32 %v1577, %v1789
          %v1791 = vpop.f32.mrb[0].mxu0
          %v1792 = vadd.f32 %v1573, %v1791
          %v1793 = vpop.f32.mrb[0].mxu0
          %v1794 = vadd.f32 %v1577, %v1793
          %1795 = vmatprep.mubr.bf16.mxu0 0
          %1796 = vmatmul.mubr.bf16.gmra.mrb[0].mxu0 %v1525
          %v1797 = vpop.f32.mrb[0].mxu0
          %v1798 = vadd.f32 %v1573, %v1797
          %v1799 = vpop.f32.mrb[0].mxu0
          %v1800 = vadd.f32 %v1577, %v1799
          %v1801 = vpop.f32.mrb[0].mxu0
          %v1802 = vadd.f32 %v1573, %v1801
          %v1803 = vpop.f32.mrb[0].mxu0
          %v1804 = vadd.f32 %v1577, %v1803
          %1805 = vmatprep.mubr.bf16.mxu0 0
          %1806 = vmatmul.mubr.bf16.gmra.mrb[0].mxu0 %v1526
          %v1807 = vpop.f32.mrb[0].mxu0
          %v1808 = vadd.f32 %v1573, %v1807
          %v1809 = vpop.f32.mrb[0].mxu0
          %v1810 = vadd.f32 %v1577, %v1809
          %v1811 = vpop.f32.mrb[0].mxu0
          %v1812 = vadd.f32 %v1573, %v1811
          %v1813 = vpop.f32.mrb[0].mxu0
          %v1814 = vadd.f32 %v1577, %v1813
          %1815 = vmatprep.mubr.bf16.mxu0 0
          %1816 = vmatmul.mubr.bf16.gmra.mrb[0].mxu0 %v1527
          %v1817 = vpop.f32.mrb[0].mxu0
          %v1818 = vadd.f32 %v1573, %v1817
          %v1819 = vpop.f32.mrb[0].mxu0
          %v1820 = vadd.f32 %v1577, %v1819
          %v1821 = vpop.f32.mrb[0].mxu0
          %v1822 = vadd.f32 %v1573, %v1821
          %v1823 = vpop.f32.mrb[0].mxu0
          %v1824 = vadd.f32 %v1577, %v1823
          %1825 = vmatprep.mubr.bf16.mxu0 0
          %1826 = vmatmul.mubr.bf16.gmra.mrb[0].mxu0 %v1528
          %v1827 = vpop.f32.mrb[0].mxu0
          %v1828 = vadd.f32 %v1573, %v1827
          %v1829 = vpop.f32.mrb[0].mxu0
          %v1830 = vadd.f32 %v1577, %v1829
          %v1831 = vpop.f32.mrb[0].mxu0
          %v1832 = vadd.f32 %v1573, %v1831
          %v1833 = vpop.f32.mrb[0].mxu0
          %v1834 = vadd.f32 %v1577, %v1833
          %1835 = vmatprep.mubr.bf16.mxu0 0
          %1836 = vmatmul.mubr.bf16.gmra.mrb[0].mxu0 %v1529
          %v1837 = vpop.f32.mrb[0].mxu0
          %v1838 = vadd.f32 %v1573, %v1837
          %v1839 = vpop.f32.mrb[0].mxu0
          %v1840 = vadd.f32 %v1577, %v1839
          %v1841 = vpop.f32.mrb[0].mxu0
          %v1842 = vadd.f32 %v1573, %v1841
          %v1843 = vpop.f32.mrb[0].mxu0
          %v1844 = vadd.f32 %v1577, %v1843
          %1845 = vmatprep.mubr.bf16.mxu0 0
          %1846 = vmatmul.mubr.bf16.gmra.mrb[0].mxu0 %v1530
          %v1847 = vpop.f32.mrb[0].mxu0
          %v1848 = vadd.f32 %v1573, %v1847
          %v1849 = vpop.f32.mrb[0].mxu0
          %v1850 = vadd.f32 %v1577, %v1849
          %v1851 = vpop.f32.mrb[0].mxu0
          %v1852 = vadd.f32 %v1573, %v1851
          %v1853 = vpop.f32.mrb[0].mxu0
          %v1854 = vadd.f32 %v1577, %v1853
          %1855 = vmatprep.mubr.bf16.mxu0 0
          %1856 = vmatmul.mubr.bf16.gmra.mrb[0].mxu0 %v1531
          %v1857 = vpop.f32.mrb[0].mxu0
          %v1858 = vadd.f32 %v1573, %v1857
          %v1859 = vpop.f32.mrb[0].mxu0
          %v1860 = vadd.f32 %v1577, %v1859
          %v1861 = vpop.f32.mrb[0].mxu0
          %v1862 = vadd.f32 %v1573, %v1861
          %v1863 = vpop.f32.mrb[0].mxu0
          %v1864 = vadd.f32 %v1577, %v1863
          %1865 = vmatprep.mubr.bf16.mxu0 0
          %1866 = vmatmul.mubr.bf16.gmra.mrb[0].mxu0 %v1532
          %v1867 = vpop.f32.mrb[0].mxu0
          %v1868 = vadd.f32 %v1573, %v1867
          %v1869 = vpop.f32.mrb[0].mxu0
          %v1870 = vadd.f32 %v1577, %v1869
          %v1871 = vpop.f32.mrb[0].mxu0
          %v1872 = vadd.f32 %v1573, %v1871
          %v1873 = vpop.f32.mrb[0].mxu0
          %v1874 = vadd.f32 %v1577, %v1873
          %1875 = vmatprep.mubr.bf16.mxu0 0
          %1876 = vmatmul.mubr.bf16.gmra.mrb[0].mxu0 %v1533
          %v1877 = vpop.f32.mrb[0].mxu0
          %v1878 = vadd.f32 %v1573, %v1877
          %v1879 = vpop.f32.mrb[0].mxu0
          %v1880 = vadd.f32 %v1577, %v1879
          %v1881 = vpop.f32.mrb[0].mxu0
          %v1882 = vadd.f32 %v1573, %v1881
          %v1883 = vpop.f32.mrb[0].mxu0
          %v1884 = vadd.f32 %v1577, %v1883
          %1885 = vmatprep.mubr.bf16.mxu0 0
          %1886 = vmatmul.mubr.bf16.gmra.mrb[0].mxu0 %v1534
          %v1887 = vpop.f32.mrb[0].mxu0
          %v1888 = vadd.f32 %v1573, %v1887
          %v1889 = vpop.f32.mrb[0].mxu0
          %v1890 = vadd.f32 %v1577, %v1889
          %v1891 = vpop.f32.mrb[0].mxu0
          %v1892 = vadd.f32 %v1573, %v1891
          %v1893 = vpop.f32.mrb[0].mxu0
          %v1894 = vadd.f32 %v1577, %v1893
          %1895 = vmatprep.mubr.bf16.mxu0 0
          %1896 = vmatmul.mubr.bf16.gmra.mrb[0].mxu0 %v1535
          %v1897 = vpop.f32.mrb[0].mxu0
          %v1898 = vadd.f32 %v1573, %v1897
          %v1899 = vpop.f32.mrb[0].mxu0
          %v1900 = vadd.f32 %v1577, %v1899
          %v1901 = vpop.f32.mrb[0].mxu0
          %v1902 = vadd.f32 %v1573, %v1901
          %v1903 = vpop.f32.mrb[0].mxu0
          %v1904 = vadd.f32 %v1577, %v1903
          %1905 = vdwg.mxu0
          %1906 = vmatprep.subr.bf16.mxu0 0
          %1907 = vmatpush1.bf16.msra.mxu0 %v1667
          %1908 = vmatprep.subr.bf16.mxu0 0
          %1909 = vmatpush1.bf16.msra.mxu0 %v1670
          %1910 = vmatprep.subr.bf16.mxu0 0
          %1911 = vmatpush1.bf16.msra.mxu0 %v1673
          %1912 = vmatprep.subr.bf16.mxu0 0
          %1913 = vmatpush1.bf16.msra.mxu0 %v1676
          %1914 = vmatprep.subr.bf16.mxu0 0
          %1915 = vmatpush1.bf16.msra.mxu0 %v1679
          %1916 = vmatprep.subr.bf16.mxu0 0
          %1917 = vmatpush1.bf16.msra.mxu0 %v1682
          %1918 = vmatprep.subr.bf16.mxu0 0
          %1919 = vmatpush1.bf16.msra.mxu0 %v1685
          %1920 = vmatprep.subr.bf16.mxu0 0
          %1921 = vmatpush1.bf16.msra.mxu0 %v1688
          %1922 = vmatprep.subr.bf16.mxu0 0
          %1923 = vmatpush1.bf16.msra.mxu0 0
          %1924 = vmatprep.subr.bf16.mxu0 0
          %1925 = vmatpush1.bf16.msra.mxu0 0
          %1926 = vmatprep.subr.bf16.mxu0 0
          %1927 = vmatpush1.bf16.msra.mxu0 0
          %1928 = vmatprep.subr.bf16.mxu0 0
          %1929 = vmatpush1.bf16.msra.mxu0 0
          %1930 = vmatprep.subr.bf16.mxu0 0
          %1931 = vmatpush1.bf16.msra.mxu0 0
          %1932 = vmatprep.subr.bf16.mxu0 0
          %1933 = vmatpush1.bf16.msra.mxu0 0
          %1934 = vmatprep.subr.bf16.mxu0 0
          %1935 = vmatpush1.bf16.msra.mxu0 0
          %1936 = vmatprep.subr.bf16.mxu0 0
          %1937 = vmatpush1.bf16.msra.mxu0 0
          %1938 = vmatprep.mubr.bf16.mxu0 0
          %1939 = vmatmul.mubr.bf16.gmra.mrb[0].mxu0 %v1520
          %v1940 = vpop.f32.mrb[0].mxu0
          %v1941 = vadd.f32 %v1581, %v1940
          %v1942 = vpop.f32.mrb[0].mxu0
          %v1943 = vpop.f32.mrb[0].mxu0
          %v1944 = vadd.f32 %v1581, %v1943
          %v1945 = vpop.f32.mrb[0].mxu0
          %1946 = vmatprep.mubr.bf16.mxu0 0
          %1947 = vmatmul.mubr.bf16.gmra.mrb[0].mxu0 %v1521
          %v1948 = vpop.f32.mrb[0].mxu0
          %v1949 = vadd.f32 %v1581, %v1948
          %v1950 = vpop.f32.mrb[0].mxu0
          %v1951 = vpop.f32.mrb[0].mxu0
          %v1952 = vadd.f32 %v1581, %v1951
          %v1953 = vpop.f32.mrb[0].mxu0
          %1954 = vmatprep.mubr.bf16.mxu0 0
          %1955 = vmatmul.mubr.bf16.gmra.mrb[0].mxu0 %v1522
          %v1956 = vpop.f32.mrb[0].mxu0
          %v1957 = vadd.f32 %v1581, %v1956
          %v1958 = vpop.f32.mrb[0].mxu0
          %v1959 = vpop.f32.mrb[0].mxu0
          %v1960 = vadd.f32 %v1581, %v1959
          %v1961 = vpop.f32.mrb[0].mxu0
          %1962 = vmatprep.mubr.bf16.mxu0 0
          %1963 = vmatmul.mubr.bf16.gmra.mrb[0].mxu0 %v1523
          %v1964 = vpop.f32.mrb[0].mxu0
          %v1965 = vadd.f32 %v1581, %v1964
          %v1966 = vpop.f32.mrb[0].mxu0
          %v1967 = vpop.f32.mrb[0].mxu0
          %v1968 = vadd.f32 %v1581, %v1967
          %v1969 = vpop.f32.mrb[0].mxu0
          %1970 = vmatprep.mubr.bf16.mxu0 0
          %1971 = vmatmul.mubr.bf16.gmra.mrb[0].mxu0 %v1524
          %v1972 = vpop.f32.mrb[0].mxu0
          %v1973 = vadd.f32 %v1581, %v1972
          %v1974 = vpop.f32.mrb[0].mxu0
          %v1975 = vpop.f32.mrb[0].mxu0
          %v1976 = vadd.f32 %v1581, %v1975
          %v1977 = vpop.f32.mrb[0].mxu0
          %1978 = vmatprep.mubr.bf16.mxu0 0
          %1979 = vmatmul.mubr.bf16.gmra.mrb[0].mxu0 %v1525
          %v1980 = vpop.f32.mrb[0].mxu0
          %v1981 = vadd.f32 %v1581, %v1980
          %v1982 = vpop.f32.mrb[0].mxu0
          %v1983 = vpop.f32.mrb[0].mxu0
          %v1984 = vadd.f32 %v1581, %v1983
          %v1985 = vpop.f32.mrb[0].mxu0
          %1986 = vmatprep.mubr.bf16.mxu0 0
          %1987 = vmatmul.mubr.bf16.gmra.mrb[0].mxu0 %v1526
          %v1988 = vpop.f32.mrb[0].mxu0
          %v1989 = vadd.f32 %v1581, %v1988
          %v1990 = vpop.f32.mrb[0].mxu0
          %v1991 = vpop.f32.mrb[0].mxu0
          %v1992 = vadd.f32 %v1581, %v1991
          %v1993 = vpop.f32.mrb[0].mxu0
          %1994 = vmatprep.mubr.bf16.mxu0 0
          %1995 = vmatmul.mubr.bf16.gmra.mrb[0].mxu0 %v1527
          %v1996 = vpop.f32.mrb[0].mxu0
          %v1997 = vadd.f32 %v1581, %v1996
          %v1998 = vpop.f32.mrb[0].mxu0
          %v1999 = vpop.f32.mrb[0].mxu0
          %v2000 = vadd.f32 %v1581, %v1999
          %v2001 = vpop.f32.mrb[0].mxu0
          %2002 = vmatprep.mubr.bf16.mxu0 0
          %2003 = vmatmul.mubr.bf16.gmra.mrb[0].mxu0 %v1528
          %v2004 = vpop.f32.mrb[0].mxu0
          %v2005 = vadd.f32 %v1581, %v2004
          %v2006 = vpop.f32.mrb[0].mxu0
          %v2007 = vpop.f32.mrb[0].mxu0
          %v2008 = vadd.f32 %v1581, %v2007
          %v2009 = vpop.f32.mrb[0].mxu0
          %2010 = vmatprep.mubr.bf16.mxu0 0
          %2011 = vmatmul.mubr.bf16.gmra.mrb[0].mxu0 %v1529
          %v2012 = vpop.f32.mrb[0].mxu0
          %v2013 = vadd.f32 %v1581, %v2012
          %v2014 = vpop.f32.mrb[0].mxu0
          %v2015 = vpop.f32.mrb[0].mxu0
          %v2016 = vadd.f32 %v1581, %v2015
          %v2017 = vpop.f32.mrb[0].mxu0
          %2018 = vmatprep.mubr.bf16.mxu0 0
          %2019 = vmatmul.mubr.bf16.gmra.mrb[0].mxu0 %v1530
          %v2020 = vpop.f32.mrb[0].mxu0
          %v2021 = vadd.f32 %v1581, %v2020
          %v2022 = vpop.f32.mrb[0].mxu0
          %v2023 = vpop.f32.mrb[0].mxu0
          %v2024 = vadd.f32 %v1581, %v2023
          %v2025 = vpop.f32.mrb[0].mxu0
          %2026 = vmatprep.mubr.bf16.mxu0 0
          %2027 = vmatmul.mubr.bf16.gmra.mrb[0].mxu0 %v1531
          %v2028 = vpop.f32.mrb[0].mxu0
          %v2029 = vadd.f32 %v1581, %v2028
          %v2030 = vpop.f32.mrb[0].mxu0
          %v2031 = vpop.f32.mrb[0].mxu0
          %v2032 = vadd.f32 %v1581, %v2031
          %v2033 = vpop.f32.mrb[0].mxu0
          %2034 = vmatprep.mubr.bf16.mxu0 0
          %2035 = vmatmul.mubr.bf16.gmra.mrb[0].mxu0 %v1532
          %v2036 = vpop.f32.mrb[0].mxu0
          %v2037 = vadd.f32 %v1581, %v2036
          %v2038 = vpop.f32.mrb[0].mxu0
          %v2039 = vpop.f32.mrb[0].mxu0
          %v2040 = vadd.f32 %v1581, %v2039
          %v2041 = vpop.f32.mrb[0].mxu0
          %2042 = vmatprep.mubr.bf16.mxu0 0
          %2043 = vmatmul.mubr.bf16.gmra.mrb[0].mxu0 %v1533
          %v2044 = vpop.f32.mrb[0].mxu0
          %v2045 = vadd.f32 %v1581, %v2044
          %v2046 = vpop.f32.mrb[0].mxu0
          %v2047 = vpop.f32.mrb[0].mxu0
          %v2048 = vadd.f32 %v1581, %v2047
          %v2049 = vpop.f32.mrb[0].mxu0
          %2050 = vmatprep.mubr.bf16.mxu0 0
          %2051 = vmatmul.mubr.bf16.gmra.mrb[0].mxu0 %v1534
          %v2052 = vpop.f32.mrb[0].mxu0
          %v2053 = vadd.f32 %v1581, %v2052
          %v2054 = vpop.f32.mrb[0].mxu0
          %v2055 = vpop.f32.mrb[0].mxu0
          %v2056 = vadd.f32 %v1581, %v2055
          %v2057 = vpop.f32.mrb[0].mxu0
          %2058 = vmatprep.mubr.bf16.mxu0 0
          %2059 = vmatmul.mubr.bf16.gmra.mrb[0].mxu0 %v1535
          %v2060 = vpop.f32.mrb[0].mxu0
          %v2061 = vadd.f32 %v1581, %v2060
          %v2062 = vpop.f32.mrb[0].mxu0
          %v2063 = vpop.f32.mrb[0].mxu0
          %v2064 = vadd.f32 %v1581, %v2063
          %v2065 = vpop.f32.mrb[0].mxu0
          %2066 = vdwg.mxu0
          %2099 = vrot.lane.b32.xlu0 %v1748, 96
          %v2100 = vpop.permute.xlu0 %2099
          %2101 = vrot.lane.b32.xlu0 %v1752, 96
          %v2102 = vpop.permute.xlu0 %2101
          %2103 = vrot.lane.b32.xlu0 %v1758, 96
          %v2104 = vpop.permute.xlu0 %2103
          %2105 = vrot.lane.b32.xlu0 %v1762, 96
          %v2106 = vpop.permute.xlu0 %2105
          %2107 = vrot.lane.b32.xlu0 %v1768, 96
          %v2108 = vpop.permute.xlu0 %2107
          %2109 = vrot.lane.b32.xlu0 %v1772, 96
          %v2110 = vpop.permute.xlu0 %2109
          %2111 = vrot.lane.b32.xlu0 %v1778, 96
          %v2112 = vpop.permute.xlu0 %2111
          %2113 = vrot.lane.b32.xlu0 %v1782, 96
          %v2114 = vpop.permute.xlu0 %2113
          %2115 = vrot.lane.b32.xlu0 %v1788, 96
          %v2116 = vpop.permute.xlu0 %2115
          %2117 = vrot.lane.b32.xlu0 %v1792, 96
          %v2118 = vpop.permute.xlu0 %2117
          %2119 = vrot.lane.b32.xlu0 %v1798, 96
          %v2120 = vpop.permute.xlu0 %2119
          %2121 = vrot.lane.b32.xlu0 %v1802, 96
          %v2122 = vpop.permute.xlu0 %2121
          %2123 = vrot.lane.b32.xlu0 %v1808, 96
          %v2124 = vpop.permute.xlu0 %2123
          %2125 = vrot.lane.b32.xlu0 %v1812, 96
          %v2126 = vpop.permute.xlu0 %2125
          %2127 = vrot.lane.b32.xlu0 %v1818, 96
          %v2128 = vpop.permute.xlu0 %2127
          %2129 = vrot.lane.b32.xlu0 %v1822, 96
          %v2130 = vpop.permute.xlu0 %2129
          %2131 = vrot.lane.b32.xlu0 %v1828, 96
          %v2132 = vpop.permute.xlu0 %2131
          %2133 = vrot.lane.b32.xlu0 %v1832, 96
          %v2134 = vpop.permute.xlu0 %2133
          %2135 = vrot.lane.b32.xlu0 %v1838, 96
          %v2136 = vpop.permute.xlu0 %2135
          %2137 = vrot.lane.b32.xlu0 %v1842, 96
          %v2138 = vpop.permute.xlu0 %2137
          %2139 = vrot.lane.b32.xlu0 %v1848, 96
          %v2140 = vpop.permute.xlu0 %2139
          %2141 = vrot.lane.b32.xlu0 %v1852, 96
          %v2142 = vpop.permute.xlu0 %2141
          %2143 = vrot.lane.b32.xlu0 %v1858, 96
          %v2144 = vpop.permute.xlu0 %2143
          %2145 = vrot.lane.b32.xlu0 %v1862, 96
          %v2146 = vpop.permute.xlu0 %2145
          %2147 = vrot.lane.b32.xlu0 %v1868, 96
          %v2148 = vpop.permute.xlu0 %2147
          %2149 = vrot.lane.b32.xlu0 %v1872, 96
          %v2150 = vpop.permute.xlu0 %2149
          %2151 = vrot.lane.b32.xlu0 %v1878, 96
          %v2152 = vpop.permute.xlu0 %2151
          %2153 = vrot.lane.b32.xlu0 %v1882, 96
          %v2154 = vpop.permute.xlu0 %2153
          %2155 = vrot.lane.b32.xlu0 %v1888, 96
          %v2156 = vpop.permute.xlu0 %2155
          %2157 = vrot.lane.b32.xlu0 %v1892, 96
          %v2158 = vpop.permute.xlu0 %2157
          %2159 = vrot.lane.b32.xlu0 %v1898, 96
          %v2160 = vpop.permute.xlu0 %2159
          %2161 = vrot.lane.b32.xlu0 %v1902, 96
          %v2162 = vpop.permute.xlu0 %2161
          %2195 = vrot.lane.b32.xlu0 %v1748, 64
          %v2196 = vpop.permute.xlu0 %2195
          %2197 = vrot.lane.b32.xlu0 %v1752, 64
          %v2198 = vpop.permute.xlu0 %2197
          %2199 = vrot.lane.b32.xlu0 %v1758, 64
          %v2200 = vpop.permute.xlu0 %2199
          %2201 = vrot.lane.b32.xlu0 %v1762, 64
          %v2202 = vpop.permute.xlu0 %2201
          %2203 = vrot.lane.b32.xlu0 %v1768, 64
          %v2204 = vpop.permute.xlu0 %2203
          %2205 = vrot.lane.b32.xlu0 %v1772, 64
          %v2206 = vpop.permute.xlu0 %2205
          %2207 = vrot.lane.b32.xlu0 %v1778, 64
          %v2208 = vpop.permute.xlu0 %2207
          %2209 = vrot.lane.b32.xlu0 %v1782, 64
          %v2210 = vpop.permute.xlu0 %2209
          %2211 = vrot.lane.b32.xlu0 %v1788, 64
          %v2212 = vpop.permute.xlu0 %2211
          %2213 = vrot.lane.b32.xlu0 %v1792, 64
          %v2214 = vpop.permute.xlu0 %2213
          %2215 = vrot.lane.b32.xlu0 %v1798, 64
          %v2216 = vpop.permute.xlu0 %2215
          %2217 = vrot.lane.b32.xlu0 %v1802, 64
          %v2218 = vpop.permute.xlu0 %2217
          %2219 = vrot.lane.b32.xlu0 %v1808, 64
          %v2220 = vpop.permute.xlu0 %2219
          %2221 = vrot.lane.b32.xlu0 %v1812, 64
          %v2222 = vpop.permute.xlu0 %2221
          %2223 = vrot.lane.b32.xlu0 %v1818, 64
          %v2224 = vpop.permute.xlu0 %2223
          %2225 = vrot.lane.b32.xlu0 %v1822, 64
          %v2226 = vpop.permute.xlu0 %2225
          %2227 = vrot.lane.b32.xlu0 %v1828, 64
          %v2228 = vpop.permute.xlu0 %2227
          %2229 = vrot.lane.b32.xlu0 %v1832, 64
          %v2230 = vpop.permute.xlu0 %2229
          %2231 = vrot.lane.b32.xlu0 %v1838, 64
          %v2232 = vpop.permute.xlu0 %2231
          %2233 = vrot.lane.b32.xlu0 %v1842, 64
          %v2234 = vpop.permute.xlu0 %2233
          %2235 = vrot.lane.b32.xlu0 %v1848, 64
          %v2236 = vpop.permute.xlu0 %2235
          %2237 = vrot.lane.b32.xlu0 %v1852, 64
          %v2238 = vpop.permute.xlu0 %2237
          %2239 = vrot.lane.b32.xlu0 %v1858, 64
          %v2240 = vpop.permute.xlu0 %2239
          %2241 = vrot.lane.b32.xlu0 %v1862, 64
          %v2242 = vpop.permute.xlu0 %2241
          %2243 = vrot.lane.b32.xlu0 %v1868, 64
          %v2244 = vpop.permute.xlu0 %2243
          %2245 = vrot.lane.b32.xlu0 %v1872, 64
          %v2246 = vpop.permute.xlu0 %2245
          %2247 = vrot.lane.b32.xlu0 %v1878, 64
          %v2248 = vpop.permute.xlu0 %2247
          %2249 = vrot.lane.b32.xlu0 %v1882, 64
          %v2250 = vpop.permute.xlu0 %2249
          %2251 = vrot.lane.b32.xlu0 %v1888, 64
          %v2252 = vpop.permute.xlu0 %2251
          %2253 = vrot.lane.b32.xlu0 %v1892, 64
          %v2254 = vpop.permute.xlu0 %2253
          %2255 = vrot.lane.b32.xlu0 %v1898, 64
          %v2256 = vpop.permute.xlu0 %2255
          %2257 = vrot.lane.b32.xlu0 %v1902, 64
          %v2258 = vpop.permute.xlu0 %2257
          %2291 = vrot.lane.b32.xlu0 %v1748, 32
          %v2292 = vpop.permute.xlu0 %2291
          %2293 = vrot.lane.b32.xlu0 %v1752, 32
          %v2294 = vpop.permute.xlu0 %2293
          %2295 = vrot.lane.b32.xlu0 %v1758, 32
          %v2296 = vpop.permute.xlu0 %2295
          %2297 = vrot.lane.b32.xlu0 %v1762, 32
          %v2298 = vpop.permute.xlu0 %2297
          %2299 = vrot.lane.b32.xlu0 %v1768, 32
          %v2300 = vpop.permute.xlu0 %2299
          %2301 = vrot.lane.b32.xlu0 %v1772, 32
          %v2302 = vpop.permute.xlu0 %2301
          %2303 = vrot.lane.b32.xlu0 %v1778, 32
          %v2304 = vpop.permute.xlu0 %2303
          %2305 = vrot.lane.b32.xlu0 %v1782, 32
          %v2306 = vpop.permute.xlu0 %2305
          %2307 = vrot.lane.b32.xlu0 %v1788, 32
          %v2308 = vpop.permute.xlu0 %2307
          %2309 = vrot.lane.b32.xlu0 %v1792, 32
          %v2310 = vpop.permute.xlu0 %2309
          %2311 = vrot.lane.b32.xlu0 %v1798, 32
          %v2312 = vpop.permute.xlu0 %2311
          %2313 = vrot.lane.b32.xlu0 %v1802, 32
          %v2314 = vpop.permute.xlu0 %2313
          %2315 = vrot.lane.b32.xlu0 %v1808, 32
          %v2316 = vpop.permute.xlu0 %2315
          %2317 = vrot.lane.b32.xlu0 %v1812, 32
          %v2318 = vpop.permute.xlu0 %2317
          %2319 = vrot.lane.b32.xlu0 %v1818, 32
          %v2320 = vpop.permute.xlu0 %2319
          %2321 = vrot.lane.b32.xlu0 %v1822, 32
          %v2322 = vpop.permute.xlu0 %2321
          %2323 = vrot.lane.b32.xlu0 %v1828, 32
          %v2324 = vpop.permute.xlu0 %2323
          %2325 = vrot.lane.b32.xlu0 %v1832, 32
          %v2326 = vpop.permute.xlu0 %2325
          %2327 = vrot.lane.b32.xlu0 %v1838, 32
          %v2328 = vpop.permute.xlu0 %2327
          %2329 = vrot.lane.b32.xlu0 %v1842, 32
          %v2330 = vpop.permute.xlu0 %2329
          %2331 = vrot.lane.b32.xlu0 %v1848, 32
          %v2332 = vpop.permute.xlu0 %2331
          %2333 = vrot.lane.b32.xlu0 %v1852, 32
          %v2334 = vpop.permute.xlu0 %2333
          %2335 = vrot.lane.b32.xlu0 %v1858, 32
          %v2336 = vpop.permute.xlu0 %2335
          %2337 = vrot.lane.b32.xlu0 %v1862, 32
          %v2338 = vpop.permute.xlu0 %2337
          %2339 = vrot.lane.b32.xlu0 %v1868, 32
          %v2340 = vpop.permute.xlu0 %2339
          %2341 = vrot.lane.b32.xlu0 %v1872, 32
          %v2342 = vpop.permute.xlu0 %2341
          %2343 = vrot.lane.b32.xlu0 %v1878, 32
          %v2344 = vpop.permute.xlu0 %2343
          %2345 = vrot.lane.b32.xlu0 %v1882, 32
          %v2346 = vpop.permute.xlu0 %2345
          %2347 = vrot.lane.b32.xlu0 %v1888, 32
          %v2348 = vpop.permute.xlu0 %2347
          %2349 = vrot.lane.b32.xlu0 %v1892, 32
          %v2350 = vpop.permute.xlu0 %2349
          %2351 = vrot.lane.b32.xlu0 %v1898, 32
          %v2352 = vpop.permute.xlu0 %2351
          %2353 = vrot.lane.b32.xlu0 %v1902, 32
          %v2354 = vpop.permute.xlu0 %2353
          %v2387 = vpack.c.bf16 %v1752, %v1748
          %v2388 = vpack.c.bf16 %v1762, %v1758
          %v2389 = vpack.c.bf16 %v1772, %v1768
          %v2390 = vpack.c.bf16 %v1782, %v1778
          %v2391 = vpack.c.bf16 %v1792, %v1788
          %v2392 = vpack.c.bf16 %v1802, %v1798
          %v2393 = vpack.c.bf16 %v1812, %v1808
          %v2394 = vpack.c.bf16 %v1822, %v1818
          %v2395 = vpack.c.bf16 %v1832, %v1828
          %v2396 = vpack.c.bf16 %v1842, %v1838
          %v2397 = vpack.c.bf16 %v1852, %v1848
          %v2398 = vpack.c.bf16 %v1862, %v1858
          %v2399 = vpack.c.bf16 %v1872, %v1868
          %v2400 = vpack.c.bf16 %v1882, %v1878
          %v2401 = vpack.c.bf16 %v1892, %v1888
          %v2402 = vpack.c.bf16 %v1902, %v1898
          %v2403 = vpack.c.bf16 %v2102, %v2100
          %v2404 = vpack.c.bf16 %v2106, %v2104
          %v2405 = vpack.c.bf16 %v2110, %v2108
          %v2406 = vpack.c.bf16 %v2114, %v2112
          %v2407 = vpack.c.bf16 %v2118, %v2116
          %v2408 = vpack.c.bf16 %v2122, %v2120
          %v2409 = vpack.c.bf16 %v2126, %v2124
          %v2410 = vpack.c.bf16 %v2130, %v2128
          %v2411 = vpack.c.bf16 %v2134, %v2132
          %v2412 = vpack.c.bf16 %v2138, %v2136
          %v2413 = vpack.c.bf16 %v2142, %v2140
          %v2414 = vpack.c.bf16 %v2146, %v2144
          %v2415 = vpack.c.bf16 %v2150, %v2148
          %v2416 = vpack.c.bf16 %v2154, %v2152
          %v2417 = vpack.c.bf16 %v2158, %v2156
          %v2418 = vpack.c.bf16 %v2162, %v2160
          %v2419 = vpack.c.bf16 %v2198, %v2196
          %v2420 = vpack.c.bf16 %v2202, %v2200
          %v2421 = vpack.c.bf16 %v2206, %v2204
          %v2422 = vpack.c.bf16 %v2210, %v2208
          %v2423 = vpack.c.bf16 %v2214, %v2212
          %v2424 = vpack.c.bf16 %v2218, %v2216
          %v2425 = vpack.c.bf16 %v2222, %v2220
          %v2426 = vpack.c.bf16 %v2226, %v2224
          %v2427 = vpack.c.bf16 %v2230, %v2228
          %v2428 = vpack.c.bf16 %v2234, %v2232
          %v2429 = vpack.c.bf16 %v2238, %v2236
          %v2430 = vpack.c.bf16 %v2242, %v2240
          %v2431 = vpack.c.bf16 %v2246, %v2244
          %v2432 = vpack.c.bf16 %v2250, %v2248
          %v2433 = vpack.c.bf16 %v2254, %v2252
          %v2434 = vpack.c.bf16 %v2258, %v2256
          %v2435 = vpack.c.bf16 %v2294, %v2292
          %v2436 = vpack.c.bf16 %v2298, %v2296
          %v2437 = vpack.c.bf16 %v2302, %v2300
          %v2438 = vpack.c.bf16 %v2306, %v2304
          %v2439 = vpack.c.bf16 %v2310, %v2308
          %v2440 = vpack.c.bf16 %v2314, %v2312
          %v2441 = vpack.c.bf16 %v2318, %v2316
          %v2442 = vpack.c.bf16 %v2322, %v2320
          %v2443 = vpack.c.bf16 %v2326, %v2324
          %v2444 = vpack.c.bf16 %v2330, %v2328
          %v2445 = vpack.c.bf16 %v2334, %v2332
          %v2446 = vpack.c.bf16 %v2338, %v2336
          %v2447 = vpack.c.bf16 %v2342, %v2340
          %v2448 = vpack.c.bf16 %v2346, %v2344
          %v2449 = vpack.c.bf16 %v2350, %v2348
          %v2450 = vpack.c.bf16 %v2354, %v2352
          %vm2451 = vcmask 261120
          %2452 = vst.msk [vmem:[#allocation3] sm:$0xff] %vm2451, %v2387
          %2453 = vst.msk [vmem:[#allocation3 + $0x8] sm:$0xff] %vm2451, %v2388
          %2454 = vst.msk [vmem:[#allocation3 + $0x10] sm:$0xff] %vm2451, %v2389
          %2455 = vst.msk [vmem:[#allocation3 + $0x18] sm:$0xff] %vm2451, %v2390
          %2456 = vst.msk [vmem:[#allocation3 + $0x20] sm:$0xff] %vm2451, %v2391
          %2457 = vst.msk [vmem:[#allocation3 + $0x28] sm:$0xff] %vm2451, %v2392
          %2458 = vst.msk [vmem:[#allocation3 + $0x30] sm:$0xff] %vm2451, %v2393
          %2459 = vst.msk [vmem:[#allocation3 + $0x38] sm:$0xff] %vm2451, %v2394
          %2460 = vst.msk [vmem:[#allocation3 + $0x40] sm:$0xff] %vm2451, %v2395
          %2461 = vst.msk [vmem:[#allocation3 + $0x48] sm:$0xff] %vm2451, %v2396
          %2462 = vst.msk [vmem:[#allocation3 + $0x50] sm:$0xff] %vm2451, %v2397
          %2463 = vst.msk [vmem:[#allocation3 + $0x58] sm:$0xff] %vm2451, %v2398
          %2464 = vst.msk [vmem:[#allocation3 + $0x60] sm:$0xff] %vm2451, %v2399
          %2465 = vst.msk [vmem:[#allocation3 + $0x68] sm:$0xff] %vm2451, %v2400
          %2466 = vst.msk [vmem:[#allocation3 + $0x70] sm:$0xff] %vm2451, %v2401
          %2467 = vst.msk [vmem:[#allocation3 + $0x78] sm:$0xff] %vm2451, %v2402
          %2468 = vst.msk [vmem:[#allocation3 + $0x80] sm:$0xff] %vm2451, %v2403
          %2469 = vst.msk [vmem:[#allocation3 + $0x88] sm:$0xff] %vm2451, %v2404
          %2470 = vst.msk [vmem:[#allocation3 + $0x90] sm:$0xff] %vm2451, %v2405
          %2471 = vst.msk [vmem:[#allocation3 + $0x98] sm:$0xff] %vm2451, %v2406
          %2472 = vst.msk [vmem:[#allocation3 + $0xa0] sm:$0xff] %vm2451, %v2407
          %2473 = vst.msk [vmem:[#allocation3 + $0xa8] sm:$0xff] %vm2451, %v2408
          %2474 = vst.msk [vmem:[#allocation3 + $0xb0] sm:$0xff] %vm2451, %v2409
          %2475 = vst.msk [vmem:[#allocation3 + $0xb8] sm:$0xff] %vm2451, %v2410
          %2476 = vst.msk [vmem:[#allocation3 + $0xc0] sm:$0xff] %vm2451, %v2411
          %2477 = vst.msk [vmem:[#allocation3 + $0xc8] sm:$0xff] %vm2451, %v2412
          %2478 = vst.msk [vmem:[#allocation3 + $0xd0] sm:$0xff] %vm2451, %v2413
          %2479 = vst.msk [vmem:[#allocation3 + $0xd8] sm:$0xff] %vm2451, %v2414
          %2480 = vst.msk [vmem:[#allocation3 + $0xe0] sm:$0xff] %vm2451, %v2415
          %2481 = vst.msk [vmem:[#allocation3 + $0xe8] sm:$0xff] %vm2451, %v2416
          %2482 = vst.msk [vmem:[#allocation3 + $0xf0] sm:$0xff] %vm2451, %v2417
          %2483 = vst.msk [vmem:[#allocation3 + $0xf8] sm:$0xff] %vm2451, %v2418
          %2484 = vst.msk [vmem:[#allocation3 + $0x100] sm:$0xff] %vm2451, %v2419
          %2485 = vst.msk [vmem:[#allocation3 + $0x108] sm:$0xff] %vm2451, %v2420
          %2486 = vst.msk [vmem:[#allocation3 + $0x110] sm:$0xff] %vm2451, %v2421
          %2487 = vst.msk [vmem:[#allocation3 + $0x118] sm:$0xff] %vm2451, %v2422
          %2488 = vst.msk [vmem:[#allocation3 + $0x120] sm:$0xff] %vm2451, %v2423
          %2489 = vst.msk [vmem:[#allocation3 + $0x128] sm:$0xff] %vm2451, %v2424
          %2490 = vst.msk [vmem:[#allocation3 + $0x130] sm:$0xff] %vm2451, %v2425
          %2491 = vst.msk [vmem:[#allocation3 + $0x138] sm:$0xff] %vm2451, %v2426
          %2492 = vst.msk [vmem:[#allocation3 + $0x140] sm:$0xff] %vm2451, %v2427
          %2493 = vst.msk [vmem:[#allocation3 + $0x148] sm:$0xff] %vm2451, %v2428
          %2494 = vst.msk [vmem:[#allocation3 + $0x150] sm:$0xff] %vm2451, %v2429
          %2495 = vst.msk [vmem:[#allocation3 + $0x158] sm:$0xff] %vm2451, %v2430
          %2496 = vst.msk [vmem:[#allocation3 + $0x160] sm:$0xff] %vm2451, %v2431
          %2497 = vst.msk [vmem:[#allocation3 + $0x168] sm:$0xff] %vm2451, %v2432
          %2498 = vst.msk [vmem:[#allocation3 + $0x170] sm:$0xff] %vm2451, %v2433
          %2499 = vst.msk [vmem:[#allocation3 + $0x178] sm:$0xff] %vm2451, %v2434
          %2500 = vst.msk [vmem:[#allocation3 + $0x180] sm:$0xff] %vm2451, %v2435
          %2501 = vst.msk [vmem:[#allocation3 + $0x188] sm:$0xff] %vm2451, %v2436
          %2502 = vst.msk [vmem:[#allocation3 + $0x190] sm:$0xff] %vm2451, %v2437
          %2503 = vst.msk [vmem:[#allocation3 + $0x198] sm:$0xff] %vm2451, %v2438
          %2504 = vst.msk [vmem:[#allocation3 + $0x1a0] sm:$0xff] %vm2451, %v2439
          %2505 = vst.msk [vmem:[#allocation3 + $0x1a8] sm:$0xff] %vm2451, %v2440
          %2506 = vst.msk [vmem:[#allocation3 + $0x1b0] sm:$0xff] %vm2451, %v2441
          %2507 = vst.msk [vmem:[#allocation3 + $0x1b8] sm:$0xff] %vm2451, %v2442
          %2508 = vst.msk [vmem:[#allocation3 + $0x1c0] sm:$0xff] %vm2451, %v2443
          %2509 = vst.msk [vmem:[#allocation3 + $0x1c8] sm:$0xff] %vm2451, %v2444
          %2510 = vst.msk [vmem:[#allocation3 + $0x1d0] sm:$0xff] %vm2451, %v2445
          %2511 = vst.msk [vmem:[#allocation3 + $0x1d8] sm:$0xff] %vm2451, %v2446
          %2512 = vst.msk [vmem:[#allocation3 + $0x1e0] sm:$0xff] %vm2451, %v2447
          %2513 = vst.msk [vmem:[#allocation3 + $0x1e8] sm:$0xff] %vm2451, %v2448
          %2514 = vst.msk [vmem:[#allocation3 + $0x1f0] sm:$0xff] %vm2451, %v2449
          %2515 = vst.msk [vmem:[#allocation3 + $0x1f8] sm:$0xff] %vm2451, %v2450
          %2548 = vrot.lane.b32.xlu0 %v1750, 96
          %v2549 = vpop.permute.xlu0 %2548
          %2550 = vrot.lane.b32.xlu0 %v1754, 96
          %v2551 = vpop.permute.xlu0 %2550
          %2552 = vrot.lane.b32.xlu0 %v1760, 96
          %v2553 = vpop.permute.xlu0 %2552
          %2554 = vrot.lane.b32.xlu0 %v1764, 96
          %v2555 = vpop.permute.xlu0 %2554
          %2556 = vrot.lane.b32.xlu0 %v1770, 96
          %v2557 = vpop.permute.xlu0 %2556
          %2558 = vrot.lane.b32.xlu0 %v1774, 96
          %v2559 = vpop.permute.xlu0 %2558
          %2560 = vrot.lane.b32.xlu0 %v1780, 96
          %v2561 = vpop.permute.xlu0 %2560
          %2562 = vrot.lane.b32.xlu0 %v1784, 96
          %v2563 = vpop.permute.xlu0 %2562
          %2564 = vrot.lane.b32.xlu0 %v1790, 96
          %v2565 = vpop.permute.xlu0 %2564
          %2566 = vrot.lane.b32.xlu0 %v1794, 96
          %v2567 = vpop.permute.xlu0 %2566
          %2568 = vrot.lane.b32.xlu0 %v1800, 96
          %v2569 = vpop.permute.xlu0 %2568
          %2570 = vrot.lane.b32.xlu0 %v1804, 96
          %v2571 = vpop.permute.xlu0 %2570
          %2572 = vrot.lane.b32.xlu0 %v1810, 96
          %v2573 = vpop.permute.xlu0 %2572
          %2574 = vrot.lane.b32.xlu0 %v1814, 96
          %v2575 = vpop.permute.xlu0 %2574
          %2576 = vrot.lane.b32.xlu0 %v1820, 96
          %v2577 = vpop.permute.xlu0 %2576
          %2578 = vrot.lane.b32.xlu0 %v1824, 96
          %v2579 = vpop.permute.xlu0 %2578
          %2580 = vrot.lane.b32.xlu0 %v1830, 96
          %v2581 = vpop.permute.xlu0 %2580
          %2582 = vrot.lane.b32.xlu0 %v1834, 96
          %v2583 = vpop.permute.xlu0 %2582
          %2584 = vrot.lane.b32.xlu0 %v1840, 96
          %v2585 = vpop.permute.xlu0 %2584
          %2586 = vrot.lane.b32.xlu0 %v1844, 96
          %v2587 = vpop.permute.xlu0 %2586
          %2588 = vrot.lane.b32.xlu0 %v1850, 96
          %v2589 = vpop.permute.xlu0 %2588
          %2590 = vrot.lane.b32.xlu0 %v1854, 96
          %v2591 = vpop.permute.xlu0 %2590
          %2592 = vrot.lane.b32.xlu0 %v1860, 96
          %v2593 = vpop.permute.xlu0 %2592
          %2594 = vrot.lane.b32.xlu0 %v1864, 96
          %v2595 = vpop.permute.xlu0 %2594
          %2596 = vrot.lane.b32.xlu0 %v1870, 96
          %v2597 = vpop.permute.xlu0 %2596
          %2598 = vrot.lane.b32.xlu0 %v1874, 96
          %v2599 = vpop.permute.xlu0 %2598
          %2600 = vrot.lane.b32.xlu0 %v1880, 96
          %v2601 = vpop.permute.xlu0 %2600
          %2602 = vrot.lane.b32.xlu0 %v1884, 96
          %v2603 = vpop.permute.xlu0 %2602
          %2604 = vrot.lane.b32.xlu0 %v1890, 96
          %v2605 = vpop.permute.xlu0 %2604
          %2606 = vrot.lane.b32.xlu0 %v1894, 96
          %v2607 = vpop.permute.xlu0 %2606
          %2608 = vrot.lane.b32.xlu0 %v1900, 96
          %v2609 = vpop.permute.xlu0 %2608
          %2610 = vrot.lane.b32.xlu0 %v1904, 96
          %v2611 = vpop.permute.xlu0 %2610
          %2644 = vrot.lane.b32.xlu0 %v1750, 64
          %v2645 = vpop.permute.xlu0 %2644
          %2646 = vrot.lane.b32.xlu0 %v1754, 64
          %v2647 = vpop.permute.xlu0 %2646
          %2648 = vrot.lane.b32.xlu0 %v1760, 64
          %v2649 = vpop.permute.xlu0 %2648
          %2650 = vrot.lane.b32.xlu0 %v1764, 64
          %v2651 = vpop.permute.xlu0 %2650
          %2652 = vrot.lane.b32.xlu0 %v1770, 64
          %v2653 = vpop.permute.xlu0 %2652
          %2654 = vrot.lane.b32.xlu0 %v1774, 64
          %v2655 = vpop.permute.xlu0 %2654
          %2656 = vrot.lane.b32.xlu0 %v1780, 64
          %v2657 = vpop.permute.xlu0 %2656
          %2658 = vrot.lane.b32.xlu0 %v1784, 64
          %v2659 = vpop.permute.xlu0 %2658
          %2660 = vrot.lane.b32.xlu0 %v1790, 64
          %v2661 = vpop.permute.xlu0 %2660
          %2662 = vrot.lane.b32.xlu0 %v1794, 64
          %v2663 = vpop.permute.xlu0 %2662
          %2664 = vrot.lane.b32.xlu0 %v1800, 64
          %v2665 = vpop.permute.xlu0 %2664
          %2666 = vrot.lane.b32.xlu0 %v1804, 64
          %v2667 = vpop.permute.xlu0 %2666
          %2668 = vrot.lane.b32.xlu0 %v1810, 64
          %v2669 = vpop.permute.xlu0 %2668
          %2670 = vrot.lane.b32.xlu0 %v1814, 64
          %v2671 = vpop.permute.xlu0 %2670
          %2672 = vrot.lane.b32.xlu0 %v1820, 64
          %v2673 = vpop.permute.xlu0 %2672
          %2674 = vrot.lane.b32.xlu0 %v1824, 64
          %v2675 = vpop.permute.xlu0 %2674
          %2676 = vrot.lane.b32.xlu0 %v1830, 64
          %v2677 = vpop.permute.xlu0 %2676
          %2678 = vrot.lane.b32.xlu0 %v1834, 64
          %v2679 = vpop.permute.xlu0 %2678
          %2680 = vrot.lane.b32.xlu0 %v1840, 64
          %v2681 = vpop.permute.xlu0 %2680
          %2682 = vrot.lane.b32.xlu0 %v1844, 64
          %v2683 = vpop.permute.xlu0 %2682
          %2684 = vrot.lane.b32.xlu0 %v1850, 64
          %v2685 = vpop.permute.xlu0 %2684
          %2686 = vrot.lane.b32.xlu0 %v1854, 64
          %v2687 = vpop.permute.xlu0 %2686
          %2688 = vrot.lane.b32.xlu0 %v1860, 64
          %v2689 = vpop.permute.xlu0 %2688
          %2690 = vrot.lane.b32.xlu0 %v1864, 64
          %v2691 = vpop.permute.xlu0 %2690
          %2692 = vrot.lane.b32.xlu0 %v1870, 64
          %v2693 = vpop.permute.xlu0 %2692
          %2694 = vrot.lane.b32.xlu0 %v1874, 64
          %v2695 = vpop.permute.xlu0 %2694
          %2696 = vrot.lane.b32.xlu0 %v1880, 64
          %v2697 = vpop.permute.xlu0 %2696
          %2698 = vrot.lane.b32.xlu0 %v1884, 64
          %v2699 = vpop.permute.xlu0 %2698
          %2700 = vrot.lane.b32.xlu0 %v1890, 64
          %v2701 = vpop.permute.xlu0 %2700
          %2702 = vrot.lane.b32.xlu0 %v1894, 64
          %v2703 = vpop.permute.xlu0 %2702
          %2704 = vrot.lane.b32.xlu0 %v1900, 64
          %v2705 = vpop.permute.xlu0 %2704
          %2706 = vrot.lane.b32.xlu0 %v1904, 64
          %v2707 = vpop.permute.xlu0 %2706
          %2740 = vrot.lane.b32.xlu0 %v1750, 32
          %v2741 = vpop.permute.xlu0 %2740
          %2742 = vrot.lane.b32.xlu0 %v1754, 32
          %v2743 = vpop.permute.xlu0 %2742
          %2744 = vrot.lane.b32.xlu0 %v1760, 32
          %v2745 = vpop.permute.xlu0 %2744
          %2746 = vrot.lane.b32.xlu0 %v1764, 32
          %v2747 = vpop.permute.xlu0 %2746
          %2748 = vrot.lane.b32.xlu0 %v1770, 32
          %v2749 = vpop.permute.xlu0 %2748
          %2750 = vrot.lane.b32.xlu0 %v1774, 32
          %v2751 = vpop.permute.xlu0 %2750
          %2752 = vrot.lane.b32.xlu0 %v1780, 32
          %v2753 = vpop.permute.xlu0 %2752
          %2754 = vrot.lane.b32.xlu0 %v1784, 32
          %v2755 = vpop.permute.xlu0 %2754
          %2756 = vrot.lane.b32.xlu0 %v1790, 32
          %v2757 = vpop.permute.xlu0 %2756
          %2758 = vrot.lane.b32.xlu0 %v1794, 32
          %v2759 = vpop.permute.xlu0 %2758
          %2760 = vrot.lane.b32.xlu0 %v1800, 32
          %v2761 = vpop.permute.xlu0 %2760
          %2762 = vrot.lane.b32.xlu0 %v1804, 32
          %v2763 = vpop.permute.xlu0 %2762
          %2764 = vrot.lane.b32.xlu0 %v1810, 32
          %v2765 = vpop.permute.xlu0 %2764
          %2766 = vrot.lane.b32.xlu0 %v1814, 32
          %v2767 = vpop.permute.xlu0 %2766
          %2768 = vrot.lane.b32.xlu0 %v1820, 32
          %v2769 = vpop.permute.xlu0 %2768
          %2770 = vrot.lane.b32.xlu0 %v1824, 32
          %v2771 = vpop.permute.xlu0 %2770
          %2772 = vrot.lane.b32.xlu0 %v1830, 32
          %v2773 = vpop.permute.xlu0 %2772
          %2774 = vrot.lane.b32.xlu0 %v1834, 32
          %v2775 = vpop.permute.xlu0 %2774
          %2776 = vrot.lane.b32.xlu0 %v1840, 32
          %v2777 = vpop.permute.xlu0 %2776
          %2778 = vrot.lane.b32.xlu0 %v1844, 32
          %v2779 = vpop.permute.xlu0 %2778
          %2780 = vrot.lane.b32.xlu0 %v1850, 32
          %v2781 = vpop.permute.xlu0 %2780
          %2782 = vrot.lane.b32.xlu0 %v1854, 32
          %v2783 = vpop.permute.xlu0 %2782
          %2784 = vrot.lane.b32.xlu0 %v1860, 32
          %v2785 = vpop.permute.xlu0 %2784
          %2786 = vrot.lane.b32.xlu0 %v1864, 32
          %v2787 = vpop.permute.xlu0 %2786
          %2788 = vrot.lane.b32.xlu0 %v1870, 32
          %v2789 = vpop.permute.xlu0 %2788
          %2790 = vrot.lane.b32.xlu0 %v1874, 32
          %v2791 = vpop.permute.xlu0 %2790
          %2792 = vrot.lane.b32.xlu0 %v1880, 32
          %v2793 = vpop.permute.xlu0 %2792
          %2794 = vrot.lane.b32.xlu0 %v1884, 32
          %v2795 = vpop.permute.xlu0 %2794
          %2796 = vrot.lane.b32.xlu0 %v1890, 32
          %v2797 = vpop.permute.xlu0 %2796
          %2798 = vrot.lane.b32.xlu0 %v1894, 32
          %v2799 = vpop.permute.xlu0 %2798
          %2800 = vrot.lane.b32.xlu0 %v1900, 32
          %v2801 = vpop.permute.xlu0 %2800
          %2802 = vrot.lane.b32.xlu0 %v1904, 32
          %v2803 = vpop.permute.xlu0 %2802
          %v2836 = vpack.c.bf16 %v1754, %v1750
          %v2837 = vpack.c.bf16 %v1764, %v1760
          %v2838 = vpack.c.bf16 %v1774, %v1770
          %v2839 = vpack.c.bf16 %v1784, %v1780
          %v2840 = vpack.c.bf16 %v1794, %v1790
          %v2841 = vpack.c.bf16 %v1804, %v1800
          %v2842 = vpack.c.bf16 %v1814, %v1810
          %v2843 = vpack.c.bf16 %v1824, %v1820
          %v2844 = vpack.c.bf16 %v1834, %v1830
          %v2845 = vpack.c.bf16 %v1844, %v1840
          %v2846 = vpack.c.bf16 %v1854, %v1850
          %v2847 = vpack.c.bf16 %v1864, %v1860
          %v2848 = vpack.c.bf16 %v1874, %v1870
          %v2849 = vpack.c.bf16 %v1884, %v1880
          %v2850 = vpack.c.bf16 %v1894, %v1890
          %v2851 = vpack.c.bf16 %v1904, %v1900
          %v2852 = vpack.c.bf16 %v2551, %v2549
          %v2853 = vpack.c.bf16 %v2555, %v2553
          %v2854 = vpack.c.bf16 %v2559, %v2557
          %v2855 = vpack.c.bf16 %v2563, %v2561
          %v2856 = vpack.c.bf16 %v2567, %v2565
          %v2857 = vpack.c.bf16 %v2571, %v2569
          %v2858 = vpack.c.bf16 %v2575, %v2573
          %v2859 = vpack.c.bf16 %v2579, %v2577
          %v2860 = vpack.c.bf16 %v2583, %v2581
          %v2861 = vpack.c.bf16 %v2587, %v2585
          %v2862 = vpack.c.bf16 %v2591, %v2589
          %v2863 = vpack.c.bf16 %v2595, %v2593
          %v2864 = vpack.c.bf16 %v2599, %v2597
          %v2865 = vpack.c.bf16 %v2603, %v2601
          %v2866 = vpack.c.bf16 %v2607, %v2605
          %v2867 = vpack.c.bf16 %v2611, %v2609
          %v2868 = vpack.c.bf16 %v2647, %v2645
          %v2869 = vpack.c.bf16 %v2651, %v2649
          %v2870 = vpack.c.bf16 %v2655, %v2653
          %v2871 = vpack.c.bf16 %v2659, %v2657
          %v2872 = vpack.c.bf16 %v2663, %v2661
          %v2873 = vpack.c.bf16 %v2667, %v2665
          %v2874 = vpack.c.bf16 %v2671, %v2669
          %v2875 = vpack.c.bf16 %v2675, %v2673
          %v2876 = vpack.c.bf16 %v2679, %v2677
          %v2877 = vpack.c.bf16 %v2683, %v2681
          %v2878 = vpack.c.bf16 %v2687, %v2685
          %v2879 = vpack.c.bf16 %v2691, %v2689
          %v2880 = vpack.c.bf16 %v2695, %v2693
          %v2881 = vpack.c.bf16 %v2699, %v2697
          %v2882 = vpack.c.bf16 %v2703, %v2701
          %v2883 = vpack.c.bf16 %v2707, %v2705
          %v2884 = vpack.c.bf16 %v2743, %v2741
          %v2885 = vpack.c.bf16 %v2747, %v2745
          %v2886 = vpack.c.bf16 %v2751, %v2749
          %v2887 = vpack.c.bf16 %v2755, %v2753
          %v2888 = vpack.c.bf16 %v2759, %v2757
          %v2889 = vpack.c.bf16 %v2763, %v2761
          %v2890 = vpack.c.bf16 %v2767, %v2765
          %v2891 = vpack.c.bf16 %v2771, %v2769
          %v2892 = vpack.c.bf16 %v2775, %v2773
          %v2893 = vpack.c.bf16 %v2779, %v2777
          %v2894 = vpack.c.bf16 %v2783, %v2781
          %v2895 = vpack.c.bf16 %v2787, %v2785
          %v2896 = vpack.c.bf16 %v2791, %v2789
          %v2897 = vpack.c.bf16 %v2795, %v2793
          %v2898 = vpack.c.bf16 %v2799, %v2797
          %v2899 = vpack.c.bf16 %v2803, %v2801
          %2900 = vst.msk [vmem:[#allocation4] sm:$0xff] %vm2451, %v2836
          %2901 = vst.msk [vmem:[#allocation4 + $0x8] sm:$0xff] %vm2451, %v2837
          %2902 = vst.msk [vmem:[#allocation4 + $0x10] sm:$0xff] %vm2451, %v2838
          %2903 = vst.msk [vmem:[#allocation4 + $0x18] sm:$0xff] %vm2451, %v2839
          %2904 = vst.msk [vmem:[#allocation4 + $0x20] sm:$0xff] %vm2451, %v2840
          %2905 = vst.msk [vmem:[#allocation4 + $0x28] sm:$0xff] %vm2451, %v2841
          %2906 = vst.msk [vmem:[#allocation4 + $0x30] sm:$0xff] %vm2451, %v2842
          %2907 = vst.msk [vmem:[#allocation4 + $0x38] sm:$0xff] %vm2451, %v2843
          %2908 = vst.msk [vmem:[#allocation4 + $0x40] sm:$0xff] %vm2451, %v2844
          %2909 = vst.msk [vmem:[#allocation4 + $0x48] sm:$0xff] %vm2451, %v2845
          %2910 = vst.msk [vmem:[#allocation4 + $0x50] sm:$0xff] %vm2451, %v2846
          %2911 = vst.msk [vmem:[#allocation4 + $0x58] sm:$0xff] %vm2451, %v2847
          %2912 = vst.msk [vmem:[#allocation4 + $0x60] sm:$0xff] %vm2451, %v2848
          %2913 = vst.msk [vmem:[#allocation4 + $0x68] sm:$0xff] %vm2451, %v2849
          %2914 = vst.msk [vmem:[#allocation4 + $0x70] sm:$0xff] %vm2451, %v2850
          %2915 = vst.msk [vmem:[#allocation4 + $0x78] sm:$0xff] %vm2451, %v2851
          %2916 = vst.msk [vmem:[#allocation4 + $0x80] sm:$0xff] %vm2451, %v2852
          %2917 = vst.msk [vmem:[#allocation4 + $0x88] sm:$0xff] %vm2451, %v2853
          %2918 = vst.msk [vmem:[#allocation4 + $0x90] sm:$0xff] %vm2451, %v2854
          %2919 = vst.msk [vmem:[#allocation4 + $0x98] sm:$0xff] %vm2451, %v2855
          %2920 = vst.msk [vmem:[#allocation4 + $0xa0] sm:$0xff] %vm2451, %v2856
          %2921 = vst.msk [vmem:[#allocation4 + $0xa8] sm:$0xff] %vm2451, %v2857
          %2922 = vst.msk [vmem:[#allocation4 + $0xb0] sm:$0xff] %vm2451, %v2858
          %2923 = vst.msk [vmem:[#allocation4 + $0xb8] sm:$0xff] %vm2451, %v2859
          %2924 = vst.msk [vmem:[#allocation4 + $0xc0] sm:$0xff] %vm2451, %v2860
          %2925 = vst.msk [vmem:[#allocation4 + $0xc8] sm:$0xff] %vm2451, %v2861
          %2926 = vst.msk [vmem:[#allocation4 + $0xd0] sm:$0xff] %vm2451, %v2862
          %2927 = vst.msk [vmem:[#allocation4 + $0xd8] sm:$0xff] %vm2451, %v2863
          %2928 = vst.msk [vmem:[#allocation4 + $0xe0] sm:$0xff] %vm2451, %v2864
          %2929 = vst.msk [vmem:[#allocation4 + $0xe8] sm:$0xff] %vm2451, %v2865
          %2930 = vst.msk [vmem:[#allocation4 + $0xf0] sm:$0xff] %vm2451, %v2866
          %2931 = vst.msk [vmem:[#allocation4 + $0xf8] sm:$0xff] %vm2451, %v2867
          %2932 = vst.msk [vmem:[#allocation4 + $0x100] sm:$0xff] %vm2451, %v2868
          %2933 = vst.msk [vmem:[#allocation4 + $0x108] sm:$0xff] %vm2451, %v2869
          %2934 = vst.msk [vmem:[#allocation4 + $0x110] sm:$0xff] %vm2451, %v2870
          %2935 = vst.msk [vmem:[#allocation4 + $0x118] sm:$0xff] %vm2451, %v2871
          %2936 = vst.msk [vmem:[#allocation4 + $0x120] sm:$0xff] %vm2451, %v2872
          %2937 = vst.msk [vmem:[#allocation4 + $0x128] sm:$0xff] %vm2451, %v2873
          %2938 = vst.msk [vmem:[#allocation4 + $0x130] sm:$0xff] %vm2451, %v2874
          %2939 = vst.msk [vmem:[#allocation4 + $0x138] sm:$0xff] %vm2451, %v2875
          %2940 = vst.msk [vmem:[#allocation4 + $0x140] sm:$0xff] %vm2451, %v2876
          %2941 = vst.msk [vmem:[#allocation4 + $0x148] sm:$0xff] %vm2451, %v2877
          %2942 = vst.msk [vmem:[#allocation4 + $0x150] sm:$0xff] %vm2451, %v2878
          %2943 = vst.msk [vmem:[#allocation4 + $0x158] sm:$0xff] %vm2451, %v2879
          %2944 = vst.msk [vmem:[#allocation4 + $0x160] sm:$0xff] %vm2451, %v2880
          %2945 = vst.msk [vmem:[#allocation4 + $0x168] sm:$0xff] %vm2451, %v2881
          %2946 = vst.msk [vmem:[#allocation4 + $0x170] sm:$0xff] %vm2451, %v2882
          %2947 = vst.msk [vmem:[#allocation4 + $0x178] sm:$0xff] %vm2451, %v2883
          %2948 = vst.msk [vmem:[#allocation4 + $0x180] sm:$0xff] %vm2451, %v2884
          %2949 = vst.msk [vmem:[#allocation4 + $0x188] sm:$0xff] %vm2451, %v2885
          %2950 = vst.msk [vmem:[#allocation4 + $0x190] sm:$0xff] %vm2451, %v2886
          %2951 = vst.msk [vmem:[#allocation4 + $0x198] sm:$0xff] %vm2451, %v2887
          %2952 = vst.msk [vmem:[#allocation4 + $0x1a0] sm:$0xff] %vm2451, %v2888
          %2953 = vst.msk [vmem:[#allocation4 + $0x1a8] sm:$0xff] %vm2451, %v2889
          %2954 = vst.msk [vmem:[#allocation4 + $0x1b0] sm:$0xff] %vm2451, %v2890
          %2955 = vst.msk [vmem:[#allocation4 + $0x1b8] sm:$0xff] %vm2451, %v2891
          %2956 = vst.msk [vmem:[#allocation4 + $0x1c0] sm:$0xff] %vm2451, %v2892
          %2957 = vst.msk [vmem:[#allocation4 + $0x1c8] sm:$0xff] %vm2451, %v2893
          %2958 = vst.msk [vmem:[#allocation4 + $0x1d0] sm:$0xff] %vm2451, %v2894
          %2959 = vst.msk [vmem:[#allocation4 + $0x1d8] sm:$0xff] %vm2451, %v2895
          %2960 = vst.msk [vmem:[#allocation4 + $0x1e0] sm:$0xff] %vm2451, %v2896
          %2961 = vst.msk [vmem:[#allocation4 + $0x1e8] sm:$0xff] %vm2451, %v2897
          %2962 = vst.msk [vmem:[#allocation4 + $0x1f0] sm:$0xff] %vm2451, %v2898
          %2963 = vst.msk [vmem:[#allocation4 + $0x1f8] sm:$0xff] %vm2451, %v2899
          %2996 = vrot.lane.b32.xlu0 %v1941, 96
          %v2997 = vpop.permute.xlu0 %2996
          %2998 = vrot.lane.b32.xlu0 %v1944, 96
          %v2999 = vpop.permute.xlu0 %2998
          %3000 = vrot.lane.b32.xlu0 %v1949, 96
          %v3001 = vpop.permute.xlu0 %3000
          %3002 = vrot.lane.b32.xlu0 %v1952, 96
          %v3003 = vpop.permute.xlu0 %3002
          %3004 = vrot.lane.b32.xlu0 %v1957, 96
          %v3005 = vpop.permute.xlu0 %3004
          %3006 = vrot.lane.b32.xlu0 %v1960, 96
          %v3007 = vpop.permute.xlu0 %3006
          %3008 = vrot.lane.b32.xlu0 %v1965, 96
          %v3009 = vpop.permute.xlu0 %3008
          %3010 = vrot.lane.b32.xlu0 %v1968, 96
          %v3011 = vpop.permute.xlu0 %3010
          %3012 = vrot.lane.b32.xlu0 %v1973, 96
          %v3013 = vpop.permute.xlu0 %3012
          %3014 = vrot.lane.b32.xlu0 %v1976, 96
          %v3015 = vpop.permute.xlu0 %3014
          %3016 = vrot.lane.b32.xlu0 %v1981, 96
          %v3017 = vpop.permute.xlu0 %3016
          %3018 = vrot.lane.b32.xlu0 %v1984, 96
          %v3019 = vpop.permute.xlu0 %3018
          %3020 = vrot.lane.b32.xlu0 %v1989, 96
          %v3021 = vpop.permute.xlu0 %3020
          %3022 = vrot.lane.b32.xlu0 %v1992, 96
          %v3023 = vpop.permute.xlu0 %3022
          %3024 = vrot.lane.b32.xlu0 %v1997, 96
          %v3025 = vpop.permute.xlu0 %3024
          %3026 = vrot.lane.b32.xlu0 %v2000, 96
          %v3027 = vpop.permute.xlu0 %3026
          %3028 = vrot.lane.b32.xlu0 %v2005, 96
          %v3029 = vpop.permute.xlu0 %3028
          %3030 = vrot.lane.b32.xlu0 %v2008, 96
          %v3031 = vpop.permute.xlu0 %3030
          %3032 = vrot.lane.b32.xlu0 %v2013, 96
          %v3033 = vpop.permute.xlu0 %3032
          %3034 = vrot.lane.b32.xlu0 %v2016, 96
          %v3035 = vpop.permute.xlu0 %3034
          %3036 = vrot.lane.b32.xlu0 %v2021, 96
          %v3037 = vpop.permute.xlu0 %3036
          %3038 = vrot.lane.b32.xlu0 %v2024, 96
          %v3039 = vpop.permute.xlu0 %3038
          %3040 = vrot.lane.b32.xlu0 %v2029, 96
          %v3041 = vpop.permute.xlu0 %3040
          %3042 = vrot.lane.b32.xlu0 %v2032, 96
          %v3043 = vpop.permute.xlu0 %3042
          %3044 = vrot.lane.b32.xlu0 %v2037, 96
          %v3045 = vpop.permute.xlu0 %3044
          %3046 = vrot.lane.b32.xlu0 %v2040, 96
          %v3047 = vpop.permute.xlu0 %3046
          %3048 = vrot.lane.b32.xlu0 %v2045, 96
          %v3049 = vpop.permute.xlu0 %3048
          %3050 = vrot.lane.b32.xlu0 %v2048, 96
          %v3051 = vpop.permute.xlu0 %3050
          %3052 = vrot.lane.b32.xlu0 %v2053, 96
          %v3053 = vpop.permute.xlu0 %3052
          %3054 = vrot.lane.b32.xlu0 %v2056, 96
          %v3055 = vpop.permute.xlu0 %3054
          %3056 = vrot.lane.b32.xlu0 %v2061, 96
          %v3057 = vpop.permute.xlu0 %3056
          %3058 = vrot.lane.b32.xlu0 %v2064, 96
          %v3059 = vpop.permute.xlu0 %3058
          %3092 = vrot.lane.b32.xlu0 %v1941, 64
          %v3093 = vpop.permute.xlu0 %3092
          %3094 = vrot.lane.b32.xlu0 %v1944, 64
          %v3095 = vpop.permute.xlu0 %3094
          %3096 = vrot.lane.b32.xlu0 %v1949, 64
          %v3097 = vpop.permute.xlu0 %3096
          %3098 = vrot.lane.b32.xlu0 %v1952, 64
          %v3099 = vpop.permute.xlu0 %3098
          %3100 = vrot.lane.b32.xlu0 %v1957, 64
          %v3101 = vpop.permute.xlu0 %3100
          %3102 = vrot.lane.b32.xlu0 %v1960, 64
          %v3103 = vpop.permute.xlu0 %3102
          %3104 = vrot.lane.b32.xlu0 %v1965, 64
          %v3105 = vpop.permute.xlu0 %3104
          %3106 = vrot.lane.b32.xlu0 %v1968, 64
          %v3107 = vpop.permute.xlu0 %3106
          %3108 = vrot.lane.b32.xlu0 %v1973, 64
          %v3109 = vpop.permute.xlu0 %3108
          %3110 = vrot.lane.b32.xlu0 %v1976, 64
          %v3111 = vpop.permute.xlu0 %3110
          %3112 = vrot.lane.b32.xlu0 %v1981, 64
          %v3113 = vpop.permute.xlu0 %3112
          %3114 = vrot.lane.b32.xlu0 %v1984, 64
          %v3115 = vpop.permute.xlu0 %3114
          %3116 = vrot.lane.b32.xlu0 %v1989, 64
          %v3117 = vpop.permute.xlu0 %3116
          %3118 = vrot.lane.b32.xlu0 %v1992, 64
          %v3119 = vpop.permute.xlu0 %3118
          %3120 = vrot.lane.b32.xlu0 %v1997, 64
          %v3121 = vpop.permute.xlu0 %3120
          %3122 = vrot.lane.b32.xlu0 %v2000, 64
          %v3123 = vpop.permute.xlu0 %3122
          %3124 = vrot.lane.b32.xlu0 %v2005, 64
          %v3125 = vpop.permute.xlu0 %3124
          %3126 = vrot.lane.b32.xlu0 %v2008, 64
          %v3127 = vpop.permute.xlu0 %3126
          %3128 = vrot.lane.b32.xlu0 %v2013, 64
          %v3129 = vpop.permute.xlu0 %3128
          %3130 = vrot.lane.b32.xlu0 %v2016, 64
          %v3131 = vpop.permute.xlu0 %3130
          %3132 = vrot.lane.b32.xlu0 %v2021, 64
          %v3133 = vpop.permute.xlu0 %3132
          %3134 = vrot.lane.b32.xlu0 %v2024, 64
          %v3135 = vpop.permute.xlu0 %3134
          %3136 = vrot.lane.b32.xlu0 %v2029, 64
          %v3137 = vpop.permute.xlu0 %3136
          %3138 = vrot.lane.b32.xlu0 %v2032, 64
          %v3139 = vpop.permute.xlu0 %3138
          %3140 = vrot.lane.b32.xlu0 %v2037, 64
          %v3141 = vpop.permute.xlu0 %3140
          %3142 = vrot.lane.b32.xlu0 %v2040, 64
          %v3143 = vpop.permute.xlu0 %3142
          %3144 = vrot.lane.b32.xlu0 %v2045, 64
          %v3145 = vpop.permute.xlu0 %3144
          %3146 = vrot.lane.b32.xlu0 %v2048, 64
          %v3147 = vpop.permute.xlu0 %3146
          %3148 = vrot.lane.b32.xlu0 %v2053, 64
          %v3149 = vpop.permute.xlu0 %3148
          %3150 = vrot.lane.b32.xlu0 %v2056, 64
          %v3151 = vpop.permute.xlu0 %3150
          %3152 = vrot.lane.b32.xlu0 %v2061, 64
          %v3153 = vpop.permute.xlu0 %3152
          %3154 = vrot.lane.b32.xlu0 %v2064, 64
          %v3155 = vpop.permute.xlu0 %3154
          %3188 = vrot.lane.b32.xlu0 %v1941, 32
          %v3189 = vpop.permute.xlu0 %3188
          %3190 = vrot.lane.b32.xlu0 %v1944, 32
          %v3191 = vpop.permute.xlu0 %3190
          %3192 = vrot.lane.b32.xlu0 %v1949, 32
          %v3193 = vpop.permute.xlu0 %3192
          %3194 = vrot.lane.b32.xlu0 %v1952, 32
          %v3195 = vpop.permute.xlu0 %3194
          %3196 = vrot.lane.b32.xlu0 %v1957, 32
          %v3197 = vpop.permute.xlu0 %3196
          %3198 = vrot.lane.b32.xlu0 %v1960, 32
          %v3199 = vpop.permute.xlu0 %3198
          %3200 = vrot.lane.b32.xlu0 %v1965, 32
          %v3201 = vpop.permute.xlu0 %3200
          %3202 = vrot.lane.b32.xlu0 %v1968, 32
          %v3203 = vpop.permute.xlu0 %3202
          %3204 = vrot.lane.b32.xlu0 %v1973, 32
          %v3205 = vpop.permute.xlu0 %3204
          %3206 = vrot.lane.b32.xlu0 %v1976, 32
          %v3207 = vpop.permute.xlu0 %3206
          %3208 = vrot.lane.b32.xlu0 %v1981, 32
          %v3209 = vpop.permute.xlu0 %3208
          %3210 = vrot.lane.b32.xlu0 %v1984, 32
          %v3211 = vpop.permute.xlu0 %3210
          %3212 = vrot.lane.b32.xlu0 %v1989, 32
          %v3213 = vpop.permute.xlu0 %3212
          %3214 = vrot.lane.b32.xlu0 %v1992, 32
          %v3215 = vpop.permute.xlu0 %3214
          %3216 = vrot.lane.b32.xlu0 %v1997, 32
          %v3217 = vpop.permute.xlu0 %3216
          %3218 = vrot.lane.b32.xlu0 %v2000, 32
          %v3219 = vpop.permute.xlu0 %3218
          %3220 = vrot.lane.b32.xlu0 %v2005, 32
          %v3221 = vpop.permute.xlu0 %3220
          %3222 = vrot.lane.b32.xlu0 %v2008, 32
          %v3223 = vpop.permute.xlu0 %3222
          %3224 = vrot.lane.b32.xlu0 %v2013, 32
          %v3225 = vpop.permute.xlu0 %3224
          %3226 = vrot.lane.b32.xlu0 %v2016, 32
          %v3227 = vpop.permute.xlu0 %3226
          %3228 = vrot.lane.b32.xlu0 %v2021, 32
          %v3229 = vpop.permute.xlu0 %3228
          %3230 = vrot.lane.b32.xlu0 %v2024, 32
          %v3231 = vpop.permute.xlu0 %3230
          %3232 = vrot.lane.b32.xlu0 %v2029, 32
          %v3233 = vpop.permute.xlu0 %3232
          %3234 = vrot.lane.b32.xlu0 %v2032, 32
          %v3235 = vpop.permute.xlu0 %3234
          %3236 = vrot.lane.b32.xlu0 %v2037, 32
          %v3237 = vpop.permute.xlu0 %3236
          %3238 = vrot.lane.b32.xlu0 %v2040, 32
          %v3239 = vpop.permute.xlu0 %3238
          %3240 = vrot.lane.b32.xlu0 %v2045, 32
          %v3241 = vpop.permute.xlu0 %3240
          %3242 = vrot.lane.b32.xlu0 %v2048, 32
          %v3243 = vpop.permute.xlu0 %3242
          %3244 = vrot.lane.b32.xlu0 %v2053, 32
          %v3245 = vpop.permute.xlu0 %3244
          %3246 = vrot.lane.b32.xlu0 %v2056, 32
          %v3247 = vpop.permute.xlu0 %3246
          %3248 = vrot.lane.b32.xlu0 %v2061, 32
          %v3249 = vpop.permute.xlu0 %3248
          %3250 = vrot.lane.b32.xlu0 %v2064, 32
          %v3251 = vpop.permute.xlu0 %3250
          %v3284 = vpack.c.bf16 %v1944, %v1941
          %v3285 = vpack.c.bf16 %v1952, %v1949
          %v3286 = vpack.c.bf16 %v1960, %v1957
          %v3287 = vpack.c.bf16 %v1968, %v1965
          %v3288 = vpack.c.bf16 %v1976, %v1973
          %v3289 = vpack.c.bf16 %v1984, %v1981
          %v3290 = vpack.c.bf16 %v1992, %v1989
          %v3291 = vpack.c.bf16 %v2000, %v1997
          %v3292 = vpack.c.bf16 %v2008, %v2005
          %v3293 = vpack.c.bf16 %v2016, %v2013
          %v3294 = vpack.c.bf16 %v2024, %v2021
          %v3295 = vpack.c.bf16 %v2032, %v2029
          %v3296 = vpack.c.bf16 %v2040, %v2037
          %v3297 = vpack.c.bf16 %v2048, %v2045
          %v3298 = vpack.c.bf16 %v2056, %v2053
          %v3299 = vpack.c.bf16 %v2064, %v2061
          %v3300 = vpack.c.bf16 %v2999, %v2997
          %v3301 = vpack.c.bf16 %v3003, %v3001
          %v3302 = vpack.c.bf16 %v3007, %v3005
          %v3303 = vpack.c.bf16 %v3011, %v3009
          %v3304 = vpack.c.bf16 %v3015, %v3013
          %v3305 = vpack.c.bf16 %v3019, %v3017
          %v3306 = vpack.c.bf16 %v3023, %v3021
          %v3307 = vpack.c.bf16 %v3027, %v3025
          %v3308 = vpack.c.bf16 %v3031, %v3029
          %v3309 = vpack.c.bf16 %v3035, %v3033
          %v3310 = vpack.c.bf16 %v3039, %v3037
          %v3311 = vpack.c.bf16 %v3043, %v3041
          %v3312 = vpack.c.bf16 %v3047, %v3045
          %v3313 = vpack.c.bf16 %v3051, %v3049
          %v3314 = vpack.c.bf16 %v3055, %v3053
          %v3315 = vpack.c.bf16 %v3059, %v3057
          %v3316 = vpack.c.bf16 %v3095, %v3093
          %v3317 = vpack.c.bf16 %v3099, %v3097
          %v3318 = vpack.c.bf16 %v3103, %v3101
          %v3319 = vpack.c.bf16 %v3107, %v3105
          %v3320 = vpack.c.bf16 %v3111, %v3109
          %v3321 = vpack.c.bf16 %v3115, %v3113
          %v3322 = vpack.c.bf16 %v3119, %v3117
          %v3323 = vpack.c.bf16 %v3123, %v3121
          %v3324 = vpack.c.bf16 %v3127, %v3125
          %v3325 = vpack.c.bf16 %v3131, %v3129
          %v3326 = vpack.c.bf16 %v3135, %v3133
          %v3327 = vpack.c.bf16 %v3139, %v3137
          %v3328 = vpack.c.bf16 %v3143, %v3141
          %v3329 = vpack.c.bf16 %v3147, %v3145
          %v3330 = vpack.c.bf16 %v3151, %v3149
          %v3331 = vpack.c.bf16 %v3155, %v3153
          %v3332 = vpack.c.bf16 %v3191, %v3189
          %v3333 = vpack.c.bf16 %v3195, %v3193
          %v3334 = vpack.c.bf16 %v3199, %v3197
          %v3335 = vpack.c.bf16 %v3203, %v3201
          %v3336 = vpack.c.bf16 %v3207, %v3205
          %v3337 = vpack.c.bf16 %v3211, %v3209
          %v3338 = vpack.c.bf16 %v3215, %v3213
          %v3339 = vpack.c.bf16 %v3219, %v3217
          %v3340 = vpack.c.bf16 %v3223, %v3221
          %v3341 = vpack.c.bf16 %v3227, %v3225
          %v3342 = vpack.c.bf16 %v3231, %v3229
          %v3343 = vpack.c.bf16 %v3235, %v3233
          %v3344 = vpack.c.bf16 %v3239, %v3237
          %v3345 = vpack.c.bf16 %v3243, %v3241
          %v3346 = vpack.c.bf16 %v3247, %v3245
          %v3347 = vpack.c.bf16 %v3251, %v3249
          %3348 = vst.msk [vmem:[#allocation5] sm:$0xff] %vm2451, %v3284
          %3349 = vst.msk [vmem:[#allocation5 + $0x8] sm:$0xff] %vm2451, %v3285
          %3350 = vst.msk [vmem:[#allocation5 + $0x10] sm:$0xff] %vm2451, %v3286
          %3351 = vst.msk [vmem:[#allocation5 + $0x18] sm:$0xff] %vm2451, %v3287
          %3352 = vst.msk [vmem:[#allocation5 + $0x20] sm:$0xff] %vm2451, %v3288
          %3353 = vst.msk [vmem:[#allocation5 + $0x28] sm:$0xff] %vm2451, %v3289
          %3354 = vst.msk [vmem:[#allocation5 + $0x30] sm:$0xff] %vm2451, %v3290
          %3355 = vst.msk [vmem:[#allocation5 + $0x38] sm:$0xff] %vm2451, %v3291
          %3356 = vst.msk [vmem:[#allocation5 + $0x40] sm:$0xff] %vm2451, %v3292
          %3357 = vst.msk [vmem:[#allocation5 + $0x48] sm:$0xff] %vm2451, %v3293
          %3358 = vst.msk [vmem:[#allocation5 + $0x50] sm:$0xff] %vm2451, %v3294
          %3359 = vst.msk [vmem:[#allocation5 + $0x58] sm:$0xff] %vm2451, %v3295
          %3360 = vst.msk [vmem:[#allocation5 + $0x60] sm:$0xff] %vm2451, %v3296
          %3361 = vst.msk [vmem:[#allocation5 + $0x68] sm:$0xff] %vm2451, %v3297
          %3362 = vst.msk [vmem:[#allocation5 + $0x70] sm:$0xff] %vm2451, %v3298
          %3363 = vst.msk [vmem:[#allocation5 + $0x78] sm:$0xff] %vm2451, %v3299
          %3364 = vst.msk [vmem:[#allocation5 + $0x80] sm:$0xff] %vm2451, %v3300
          %3365 = vst.msk [vmem:[#allocation5 + $0x88] sm:$0xff] %vm2451, %v3301
          %3366 = vst.msk [vmem:[#allocation5 + $0x90] sm:$0xff] %vm2451, %v3302
          %3367 = vst.msk [vmem:[#allocation5 + $0x98] sm:$0xff] %vm2451, %v3303
          %3368 = vst.msk [vmem:[#allocation5 + $0xa0] sm:$0xff] %vm2451, %v3304
          %3369 = vst.msk [vmem:[#allocation5 + $0xa8] sm:$0xff] %vm2451, %v3305
          %3370 = vst.msk [vmem:[#allocation5 + $0xb0] sm:$0xff] %vm2451, %v3306
          %3371 = vst.msk [vmem:[#allocation5 + $0xb8] sm:$0xff] %vm2451, %v3307
          %3372 = vst.msk [vmem:[#allocation5 + $0xc0] sm:$0xff] %vm2451, %v3308
          %3373 = vst.msk [vmem:[#allocation5 + $0xc8] sm:$0xff] %vm2451, %v3309
          %3374 = vst.msk [vmem:[#allocation5 + $0xd0] sm:$0xff] %vm2451, %v3310
          %3375 = vst.msk [vmem:[#allocation5 + $0xd8] sm:$0xff] %vm2451, %v3311
          %3376 = vst.msk [vmem:[#allocation5 + $0xe0] sm:$0xff] %vm2451, %v3312
          %3377 = vst.msk [vmem:[#allocation5 + $0xe8] sm:$0xff] %vm2451, %v3313
          %3378 = vst.msk [vmem:[#allocation5 + $0xf0] sm:$0xff] %vm2451, %v3314
          %3379 = vst.msk [vmem:[#allocation5 + $0xf8] sm:$0xff] %vm2451, %v3315
          %3380 = vst.msk [vmem:[#allocation5 + $0x100] sm:$0xff] %vm2451, %v3316
          %3381 = vst.msk [vmem:[#allocation5 + $0x108] sm:$0xff] %vm2451, %v3317
          %3382 = vst.msk [vmem:[#allocation5 + $0x110] sm:$0xff] %vm2451, %v3318
          %3383 = vst.msk [vmem:[#allocation5 + $0x118] sm:$0xff] %vm2451, %v3319
          %3384 = vst.msk [vmem:[#allocation5 + $0x120] sm:$0xff] %vm2451, %v3320
          %3385 = vst.msk [vmem:[#allocation5 + $0x128] sm:$0xff] %vm2451, %v3321
          %3386 = vst.msk [vmem:[#allocation5 + $0x130] sm:$0xff] %vm2451, %v3322
          %3387 = vst.msk [vmem:[#allocation5 + $0x138] sm:$0xff] %vm2451, %v3323
          %3388 = vst.msk [vmem:[#allocation5 + $0x140] sm:$0xff] %vm2451, %v3324
          %3389 = vst.msk [vmem:[#allocation5 + $0x148] sm:$0xff] %vm2451, %v3325
          %3390 = vst.msk [vmem:[#allocation5 + $0x150] sm:$0xff] %vm2451, %v3326
          %3391 = vst.msk [vmem:[#allocation5 + $0x158] sm:$0xff] %vm2451, %v3327
          %3392 = vst.msk [vmem:[#allocation5 + $0x160] sm:$0xff] %vm2451, %v3328
          %3393 = vst.msk [vmem:[#allocation5 + $0x168] sm:$0xff] %vm2451, %v3329
          %3394 = vst.msk [vmem:[#allocation5 + $0x170] sm:$0xff] %vm2451, %v3330
          %3395 = vst.msk [vmem:[#allocation5 + $0x178] sm:$0xff] %vm2451, %v3331
          %3396 = vst.msk [vmem:[#allocation5 + $0x180] sm:$0xff] %vm2451, %v3332
          %3397 = vst.msk [vmem:[#allocation5 + $0x188] sm:$0xff] %vm2451, %v3333
          %3398 = vst.msk [vmem:[#allocation5 + $0x190] sm:$0xff] %vm2451, %v3334
          %3399 = vst.msk [vmem:[#allocation5 + $0x198] sm:$0xff] %vm2451, %v3335
          %3400 = vst.msk [vmem:[#allocation5 + $0x1a0] sm:$0xff] %vm2451, %v3336
          %3401 = vst.msk [vmem:[#allocation5 + $0x1a8] sm:$0xff] %vm2451, %v3337
          %3402 = vst.msk [vmem:[#allocation5 + $0x1b0] sm:$0xff] %vm2451, %v3338
          %3403 = vst.msk [vmem:[#allocation5 + $0x1b8] sm:$0xff] %vm2451, %v3339
          %3404 = vst.msk [vmem:[#allocation5 + $0x1c0] sm:$0xff] %vm2451, %v3340
          %3405 = vst.msk [vmem:[#allocation5 + $0x1c8] sm:$0xff] %vm2451, %v3341
          %3406 = vst.msk [vmem:[#allocation5 + $0x1d0] sm:$0xff] %vm2451, %v3342
          %3407 = vst.msk [vmem:[#allocation5 + $0x1d8] sm:$0xff] %vm2451, %v3343
          %3408 = vst.msk [vmem:[#allocation5 + $0x1e0] sm:$0xff] %vm2451, %v3344
          %3409 = vst.msk [vmem:[#allocation5 + $0x1e8] sm:$0xff] %vm2451, %v3345
          %3410 = vst.msk [vmem:[#allocation5 + $0x1f0] sm:$0xff] %vm2451, %v3346
          %3411 = vst.msk [vmem:[#allocation5 + $0x1f8] sm:$0xff] %vm2451, %v3347
        $region100: #{tpu_custom_call.1} parent=67 // pred_fallthru
          _
        %v3412 = vld [vmem:[#allocation2 + $0x2] sm:$0x1]
        %v3413 = vld [vmem:[#allocation2 + $0x3] sm:$0x1]
        %v3414 = vld [vmem:[#allocation2 + $0x4] sm:$0x1]
        %v3415 = vld [vmem:[#allocation2 + $0x5] sm:$0x1]
        %s3416 = smul.u32 %s39, 128
        %s3417 = scalar_lea.vmem %s479, %s3416 [#allocation6]
        %v3418 = vld [vmem:[%s3417] sm:$0xff]
        %v3419 = vld [vmem:[%s3417 + $0x8] sm:$0xff]
        %v3420 = vld [vmem:[%s3417 + $0x10] sm:$0xff]
        %v3421 = vld [vmem:[%s3417 + $0x18] sm:$0xff]
        %v3422 = vld [vmem:[%s3417 + $0x20] sm:$0xff]
        %v3423 = vld [vmem:[%s3417 + $0x28] sm:$0xff]
        %v3424 = vld [vmem:[%s3417 + $0x30] sm:$0xff]
        %v3425 = vld [vmem:[%s3417 + $0x38] sm:$0xff]
        %v3426 = vld [vmem:[%s3417 + $0x40] sm:$0xff]
        %v3427 = vld [vmem:[%s3417 + $0x48] sm:$0xff]
        %v3428 = vld [vmem:[%s3417 + $0x50] sm:$0xff]
        %v3429 = vld [vmem:[%s3417 + $0x58] sm:$0xff]
        %v3430 = vld [vmem:[%s3417 + $0x60] sm:$0xff]
        %v3431 = vld [vmem:[%s3417 + $0x68] sm:$0xff]
        %v3432 = vld [vmem:[%s3417 + $0x70] sm:$0xff]
        %v3433 = vld [vmem:[%s3417 + $0x78] sm:$0xff]
        %s3434 = sshra.s32 %s3416, 4
        %s3435 = sand.u32 %s3416, 15
        %s3436 = smul.addr %s3434, 8
        %s3437 = scalar_lea.vmem [#allocation3], %s3436
        %v3438 = vld [vmem:[%s3437] sm:$0xff]
        %v3439 = vld [vmem:[%s3437 + $0x8] sm:$0xff]
        %v3440 = vld [vmem:[%s3437 + $0x10] sm:$0xff]
        %v3441 = vld [vmem:[%s3437 + $0x18] sm:$0xff]
        %v3442 = vld [vmem:[%s3437 + $0x20] sm:$0xff]
        %v3443 = vld [vmem:[%s3437 + $0x28] sm:$0xff]
        %v3444 = vld [vmem:[%s3437 + $0x30] sm:$0xff]
        %v3445 = vld [vmem:[%s3437 + $0x38] sm:$0xff]
        %v3446 = vld [vmem:[%s3437 + $0x80] sm:$0xff]
        %v3447 = vld [vmem:[%s3437 + $0x88] sm:$0xff]
        %v3448 = vld [vmem:[%s3437 + $0x90] sm:$0xff]
        %v3449 = vld [vmem:[%s3437 + $0x98] sm:$0xff]
        %v3450 = vld [vmem:[%s3437 + $0xa0] sm:$0xff]
        %v3451 = vld [vmem:[%s3437 + $0xa8] sm:$0xff]
        %v3452 = vld [vmem:[%s3437 + $0xb0] sm:$0xff]
        %v3453 = vld [vmem:[%s3437 + $0xb8] sm:$0xff]
        %v3454 = vld [vmem:[%s3437 + $0x100] sm:$0xff]
        %v3455 = vld [vmem:[%s3437 + $0x108] sm:$0xff]
        %v3456 = vld [vmem:[%s3437 + $0x110] sm:$0xff]
        %v3457 = vld [vmem:[%s3437 + $0x118] sm:$0xff]
        %v3458 = vld [vmem:[%s3437 + $0x120] sm:$0xff]
        %v3459 = vld [vmem:[%s3437 + $0x128] sm:$0xff]
        %v3460 = vld [vmem:[%s3437 + $0x130] sm:$0xff]
        %v3461 = vld [vmem:[%s3437 + $0x138] sm:$0xff]
        %v3462 = vld [vmem:[%s3437 + $0x180] sm:$0xff]
        %v3463 = vld [vmem:[%s3437 + $0x188] sm:$0xff]
        %v3464 = vld [vmem:[%s3437 + $0x190] sm:$0xff]
        %v3465 = vld [vmem:[%s3437 + $0x198] sm:$0xff]
        %v3466 = vld [vmem:[%s3437 + $0x1a0] sm:$0xff]
        %v3467 = vld [vmem:[%s3437 + $0x1a8] sm:$0xff]
        %v3468 = vld [vmem:[%s3437 + $0x1b0] sm:$0xff]
        %v3469 = vld [vmem:[%s3437 + $0x1b8] sm:$0xff]
        %v3470 = vld [vmem:[#allocation4] sm:$0xff]
        %v3471 = vld [vmem:[#allocation4 + $0x8] sm:$0xff]
        %v3472 = vld [vmem:[#allocation4 + $0x10] sm:$0xff]
        %v3473 = vld [vmem:[#allocation4 + $0x18] sm:$0xff]
        %v3474 = vld [vmem:[#allocation4 + $0x20] sm:$0xff]
        %v3475 = vld [vmem:[#allocation4 + $0x28] sm:$0xff]
        %v3476 = vld [vmem:[#allocation4 + $0x30] sm:$0xff]
        %v3477 = vld [vmem:[#allocation4 + $0x38] sm:$0xff]
        %v3478 = vld [vmem:[#allocation4 + $0x40] sm:$0xff]
        %v3479 = vld [vmem:[#allocation4 + $0x48] sm:$0xff]
        %v3480 = vld [vmem:[#allocation4 + $0x50] sm:$0xff]
        %v3481 = vld [vmem:[#allocation4 + $0x58] sm:$0xff]
        %v3482 = vld [vmem:[#allocation4 + $0x60] sm:$0xff]
        %v3483 = vld [vmem:[#allocation4 + $0x68] sm:$0xff]
        %v3484 = vld [vmem:[#allocation4 + $0x70] sm:$0xff]
        %v3485 = vld [vmem:[#allocation4 + $0x78] sm:$0xff]
        %v3486 = vld [vmem:[#allocation4 + $0x80] sm:$0xff]
        %v3487 = vld [vmem:[#allocation4 + $0x88] sm:$0xff]
        %v3488 = vld [vmem:[#allocation4 + $0x90] sm:$0xff]
        %v3489 = vld [vmem:[#allocation4 + $0x98] sm:$0xff]
        %v3490 = vld [vmem:[#allocation4 + $0xa0] sm:$0xff]
        %v3491 = vld [vmem:[#allocation4 + $0xa8] sm:$0xff]
        %v3492 = vld [vmem:[#allocation4 + $0xb0] sm:$0xff]
        %v3493 = vld [vmem:[#allocation4 + $0xb8] sm:$0xff]
        %v3494 = vld [vmem:[#allocation4 + $0xc0] sm:$0xff]
        %v3495 = vld [vmem:[#allocation4 + $0xc8] sm:$0xff]
        %v3496 = vld [vmem:[#allocation4 + $0xd0] sm:$0xff]
        %v3497 = vld [vmem:[#allocation4 + $0xd8] sm:$0xff]
        %v3498 = vld [vmem:[#allocation4 + $0xe0] sm:$0xff]
        %v3499 = vld [vmem:[#allocation4 + $0xe8] sm:$0xff]
        %v3500 = vld [vmem:[#allocation4 + $0xf0] sm:$0xff]
        %v3501 = vld [vmem:[#allocation4 + $0xf8] sm:$0xff]
        %v3502 = vld [vmem:[#allocation4 + $0x100] sm:$0xff]
        %v3503 = vld [vmem:[#allocation4 + $0x108] sm:$0xff]
        %v3504 = vld [vmem:[#allocation4 + $0x110] sm:$0xff]
        %v3505 = vld [vmem:[#allocation4 + $0x118] sm:$0xff]
        %v3506 = vld [vmem:[#allocation4 + $0x120] sm:$0xff]
        %v3507 = vld [vmem:[#allocation4 + $0x128] sm:$0xff]
        %v3508 = vld [vmem:[#allocation4 + $0x130] sm:$0xff]
        %v3509 = vld [vmem:[#allocation4 + $0x138] sm:$0xff]
        %v3510 = vld [vmem:[#allocation4 + $0x140] sm:$0xff]
        %v3511 = vld [vmem:[#allocation4 + $0x148] sm:$0xff]
        %v3512 = vld [vmem:[#allocation4 + $0x150] sm:$0xff]
        %v3513 = vld [vmem:[#allocation4 + $0x158] sm:$0xff]
        %v3514 = vld [vmem:[#allocation4 + $0x160] sm:$0xff]
        %v3515 = vld [vmem:[#allocation4 + $0x168] sm:$0xff]
        %v3516 = vld [vmem:[#allocation4 + $0x170] sm:$0xff]
        %v3517 = vld [vmem:[#allocation4 + $0x178] sm:$0xff]
        %v3518 = vld [vmem:[#allocation4 + $0x180] sm:$0xff]
        %v3519 = vld [vmem:[#allocation4 + $0x188] sm:$0xff]
        %v3520 = vld [vmem:[#allocation4 + $0x190] sm:$0xff]
        %v3521 = vld [vmem:[#allocation4 + $0x198] sm:$0xff]
        %v3522 = vld [vmem:[#allocation4 + $0x1a0] sm:$0xff]
        %v3523 = vld [vmem:[#allocation4 + $0x1a8] sm:$0xff]
        %v3524 = vld [vmem:[#allocation4 + $0x1b0] sm:$0xff]
        %v3525 = vld [vmem:[#allocation4 + $0x1b8] sm:$0xff]
        %v3526 = vld [vmem:[#allocation4 + $0x1c0] sm:$0xff]
        %v3527 = vld [vmem:[#allocation4 + $0x1c8] sm:$0xff]
        %v3528 = vld [vmem:[#allocation4 + $0x1d0] sm:$0xff]
        %v3529 = vld [vmem:[#allocation4 + $0x1d8] sm:$0xff]
        %v3530 = vld [vmem:[#allocation4 + $0x1e0] sm:$0xff]
        %v3531 = vld [vmem:[#allocation4 + $0x1e8] sm:$0xff]
        %v3532 = vld [vmem:[#allocation4 + $0x1f0] sm:$0xff]
        %v3533 = vld [vmem:[#allocation4 + $0x1f8] sm:$0xff]
        %vm3534 = vcmask 261120
        %v3536 = vsel %vm3534, %v3438, 0
        %v3539 = vsel %vm3534, %v3439, 0
        %v3542 = vsel %vm3534, %v3440, 0
        %v3545 = vsel %vm3534, %v3441, 0
        %v3548 = vsel %vm3534, %v3442, 0
        %v3551 = vsel %vm3534, %v3443, 0
        %v3554 = vsel %vm3534, %v3444, 0
        %v3557 = vsel %vm3534, %v3445, 0
        %v3560 = vsel %vm3534, %v3470, 0
        %v3563 = vsel %vm3534, %v3471, 0
        %v3566 = vsel %vm3534, %v3472, 0
        %v3569 = vsel %vm3534, %v3473, 0
        %v3572 = vsel %vm3534, %v3474, 0
        %v3575 = vsel %vm3534, %v3475, 0
        %v3578 = vsel %vm3534, %v3476, 0
        %v3581 = vsel %vm3534, %v3477, 0
        %v3584 = vsel %vm3534, %v3478, 0
        %v3587 = vsel %vm3534, %v3479, 0
        %v3590 = vsel %vm3534, %v3480, 0
        %v3593 = vsel %vm3534, %v3481, 0
        %v3596 = vsel %vm3534, %v3482, 0
        %v3599 = vsel %vm3534, %v3483, 0
        %v3602 = vsel %vm3534, %v3484, 0
        %v3605 = vsel %vm3534, %v3485, 0
        %3607 = vmatprep.subr.bf16.mxu0 0
        %3608 = vmatpush1.bf16.xpose.msra.mxu0 %v3560
        %3609 = vmatprep.subr.bf16.mxu0 0
        %3610 = vmatpush1.bf16.xpose.msra.mxu0 %v3563
        %3611 = vmatprep.subr.bf16.mxu0 0
        %3612 = vmatpush1.bf16.xpose.msra.mxu0 %v3566
        %3613 = vmatprep.subr.bf16.mxu0 0
        %3614 = vmatpush1.bf16.xpose.msra.mxu0 %v3569
        %3615 = vmatprep.subr.bf16.mxu0 0
        %3616 = vmatpush1.bf16.xpose.msra.mxu0 %v3572
        %3617 = vmatprep.subr.bf16.mxu0 0
        %3618 = vmatpush1.bf16.xpose.msra.mxu0 %v3575
        %3619 = vmatprep.subr.bf16.mxu0 0
        %3620 = vmatpush1.bf16.xpose.msra.mxu0 %v3578
        %3621 = vmatprep.subr.bf16.mxu0 0
        %3622 = vmatpush1.bf16.xpose.msra.mxu0 %v3581
        %3623 = vmatprep.subr.bf16.mxu0 0
        %3624 = vmatpush1.bf16.xpose.msra.mxu0 %v3584
        %3625 = vmatprep.subr.bf16.mxu0 0
        %3626 = vmatpush1.bf16.xpose.msra.mxu0 %v3587
        %3627 = vmatprep.subr.bf16.mxu0 0
        %3628 = vmatpush1.bf16.xpose.msra.mxu0 %v3590
        %3629 = vmatprep.subr.bf16.mxu0 0
        %3630 = vmatpush1.bf16.xpose.msra.mxu0 %v3593
        %3631 = vmatprep.subr.bf16.mxu0 0
        %3632 = vmatpush1.bf16.xpose.msra.mxu0 %v3596
        %3633 = vmatprep.subr.bf16.mxu0 0
        %3634 = vmatpush1.bf16.xpose.msra.mxu0 %v3599
        %3635 = vmatprep.subr.bf16.mxu0 0
        %3636 = vmatpush1.bf16.xpose.msra.mxu0 %v3602
        %3637 = vmatprep.subr.bf16.mxu0 0
        %3638 = vmatpush1.bf16.xpose.msra.mxu0 %v3605
        %3639 = vmatprep.mubr.bf16.mxu0 0
        %3640 = vmatmul.mubr.bf16.gmra.mrb[0].mxu0 %v3536
        %v3641 = vpop.f32.mrb[0].mxu0
        %v3642 = vadd.f32 0.0, %v3641
        %v3643 = vpop.f32.mrb[0].mxu0
        %v3644 = vadd.f32 0.0, %v3643
        %v3645 = vpop.f32.mrb[0].mxu0
        %v3646 = vadd.f32 0.0, %v3645
        %v3647 = vpop.f32.mrb[0].mxu0
        %v3648 = vadd.f32 0.0, %v3647
        %3649 = vmatprep.mubr.bf16.mxu0 0
        %3650 = vmatmul.mubr.bf16.gmra.mrb[0].mxu0 %v3539
        %v3651 = vpop.f32.mrb[0].mxu0
        %v3652 = vadd.f32 0.0, %v3651
        %v3653 = vpop.f32.mrb[0].mxu0
        %v3654 = vadd.f32 0.0, %v3653
        %v3655 = vpop.f32.mrb[0].mxu0
        %v3656 = vadd.f32 0.0, %v3655
        %v3657 = vpop.f32.mrb[0].mxu0
        %v3658 = vadd.f32 0.0, %v3657
        %3659 = vmatprep.mubr.bf16.mxu0 0
        %3660 = vmatmul.mubr.bf16.gmra.mrb[0].mxu0 %v3542
        %v3661 = vpop.f32.mrb[0].mxu0
        %v3662 = vadd.f32 0.0, %v3661
        %v3663 = vpop.f32.mrb[0].mxu0
        %v3664 = vadd.f32 0.0, %v3663
        %v3665 = vpop.f32.mrb[0].mxu0
        %v3666 = vadd.f32 0.0, %v3665
        %v3667 = vpop.f32.mrb[0].mxu0
        %v3668 = vadd.f32 0.0, %v3667
        %3669 = vmatprep.mubr.bf16.mxu0 0
        %3670 = vmatmul.mubr.bf16.gmra.mrb[0].mxu0 %v3545
        %v3671 = vpop.f32.mrb[0].mxu0
        %v3672 = vadd.f32 0.0, %v3671
        %v3673 = vpop.f32.mrb[0].mxu0
        %v3674 = vadd.f32 0.0, %v3673
        %v3675 = vpop.f32.mrb[0].mxu0
        %v3676 = vadd.f32 0.0, %v3675
        %v3677 = vpop.f32.mrb[0].mxu0
        %v3678 = vadd.f32 0.0, %v3677
        %3679 = vmatprep.mubr.bf16.mxu0 0
        %3680 = vmatmul.mubr.bf16.gmra.mrb[0].mxu0 %v3548
        %v3681 = vpop.f32.mrb[0].mxu0
        %v3682 = vadd.f32 0.0, %v3681
        %v3683 = vpop.f32.mrb[0].mxu0
        %v3684 = vadd.f32 0.0, %v3683
        %v3685 = vpop.f32.mrb[0].mxu0
        %v3686 = vadd.f32 0.0, %v3685
        %v3687 = vpop.f32.mrb[0].mxu0
        %v3688 = vadd.f32 0.0, %v3687
        %3689 = vmatprep.mubr.bf16.mxu0 0
        %3690 = vmatmul.mubr.bf16.gmra.mrb[0].mxu0 %v3551
        %v3691 = vpop.f32.mrb[0].mxu0
        %v3692 = vadd.f32 0.0, %v3691
        %v3693 = vpop.f32.mrb[0].mxu0
        %v3694 = vadd.f32 0.0, %v3693
        %v3695 = vpop.f32.mrb[0].mxu0
        %v3696 = vadd.f32 0.0, %v3695
        %v3697 = vpop.f32.mrb[0].mxu0
        %v3698 = vadd.f32 0.0, %v3697
        %3699 = vmatprep.mubr.bf16.mxu0 0
        %3700 = vmatmul.mubr.bf16.gmra.mrb[0].mxu0 %v3554
        %v3701 = vpop.f32.mrb[0].mxu0
        %v3702 = vadd.f32 0.0, %v3701
        %v3703 = vpop.f32.mrb[0].mxu0
        %v3704 = vadd.f32 0.0, %v3703
        %v3705 = vpop.f32.mrb[0].mxu0
        %v3706 = vadd.f32 0.0, %v3705
        %v3707 = vpop.f32.mrb[0].mxu0
        %v3708 = vadd.f32 0.0, %v3707
        %3709 = vmatprep.mubr.bf16.mxu0 0
        %3710 = vmatmul.mubr.bf16.gmra.mrb[0].mxu0 %v3557
        %v3711 = vpop.f32.mrb[0].mxu0
        %v3712 = vadd.f32 0.0, %v3711
        %v3713 = vpop.f32.mrb[0].mxu0
        %v3714 = vadd.f32 0.0, %v3713
        %v3715 = vpop.f32.mrb[0].mxu0
        %v3716 = vadd.f32 0.0, %v3715
        %v3717 = vpop.f32.mrb[0].mxu0
        %v3718 = vadd.f32 0.0, %v3717
        %3719 = vdwg.mxu0
        %v3721 = vsel %vm3534, %v3446, 0
        %v3724 = vsel %vm3534, %v3447, 0
        %v3727 = vsel %vm3534, %v3448, 0
        %v3730 = vsel %vm3534, %v3449, 0
        %v3733 = vsel %vm3534, %v3450, 0
        %v3736 = vsel %vm3534, %v3451, 0
        %v3739 = vsel %vm3534, %v3452, 0
        %v3742 = vsel %vm3534, %v3453, 0
        %v3745 = vsel %vm3534, %v3486, 0
        %v3748 = vsel %vm3534, %v3487, 0
        %v3751 = vsel %vm3534, %v3488, 0
        %v3754 = vsel %vm3534, %v3489, 0
        %v3757 = vsel %vm3534, %v3490, 0
        %v3760 = vsel %vm3534, %v3491, 0
        %v3763 = vsel %vm3534, %v3492, 0
        %v3766 = vsel %vm3534, %v3493, 0
        %v3769 = vsel %vm3534, %v3494, 0
        %v3772 = vsel %vm3534, %v3495, 0
        %v3775 = vsel %vm3534, %v3496, 0
        %v3778 = vsel %vm3534, %v3497, 0
        %v3781 = vsel %vm3534, %v3498, 0
        %v3784 = vsel %vm3534, %v3499, 0
        %v3787 = vsel %vm3534, %v3500, 0
        %v3790 = vsel %vm3534, %v3501, 0
        %3792 = vmatprep.subr.bf16.mxu0 0
        %3793 = vmatpush1.bf16.xpose.msra.mxu0 %v3745
        %3794 = vmatprep.subr.bf16.mxu0 0
        %3795 = vmatpush1.bf16.xpose.msra.mxu0 %v3748
        %3796 = vmatprep.subr.bf16.mxu0 0
        %3797 = vmatpush1.bf16.xpose.msra.mxu0 %v3751
        %3798 = vmatprep.subr.bf16.mxu0 0
        %3799 = vmatpush1.bf16.xpose.msra.mxu0 %v3754
        %3800 = vmatprep.subr.bf16.mxu0 0
        %3801 = vmatpush1.bf16.xpose.msra.mxu0 %v3757
        %3802 = vmatprep.subr.bf16.mxu0 0
        %3803 = vmatpush1.bf16.xpose.msra.mxu0 %v3760
        %3804 = vmatprep.subr.bf16.mxu0 0
        %3805 = vmatpush1.bf16.xpose.msra.mxu0 %v3763
        %3806 = vmatprep.subr.bf16.mxu0 0
        %3807 = vmatpush1.bf16.xpose.msra.mxu0 %v3766
        %3808 = vmatprep.subr.bf16.mxu0 0
        %3809 = vmatpush1.bf16.xpose.msra.mxu0 %v3769
        %3810 = vmatprep.subr.bf16.mxu0 0
        %3811 = vmatpush1.bf16.xpose.msra.mxu0 %v3772
        %3812 = vmatprep.subr.bf16.mxu0 0
        %3813 = vmatpush1.bf16.xpose.msra.mxu0 %v3775
        %3814 = vmatprep.subr.bf16.mxu0 0
        %3815 = vmatpush1.bf16.xpose.msra.mxu0 %v3778
        %3816 = vmatprep.subr.bf16.mxu0 0
        %3817 = vmatpush1.bf16.xpose.msra.mxu0 %v3781
        %3818 = vmatprep.subr.bf16.mxu0 0
        %3819 = vmatpush1.bf16.xpose.msra.mxu0 %v3784
        %3820 = vmatprep.subr.bf16.mxu0 0
        %3821 = vmatpush1.bf16.xpose.msra.mxu0 %v3787
        %3822 = vmatprep.subr.bf16.mxu0 0
        %3823 = vmatpush1.bf16.xpose.msra.mxu0 %v3790
        %3824 = vmatprep.mubr.bf16.mxu0 0
        %3825 = vmatmul.mubr.bf16.gmra.mrb[0].mxu0 %v3721
        %v3826 = vpop.f32.mrb[0].mxu0
        %v3827 = vadd.f32 0.0, %v3826
        %v3828 = vpop.f32.mrb[0].mxu0
        %v3829 = vadd.f32 0.0, %v3828
        %v3830 = vpop.f32.mrb[0].mxu0
        %v3831 = vadd.f32 0.0, %v3830
        %v3832 = vpop.f32.mrb[0].mxu0
        %v3833 = vadd.f32 0.0, %v3832
        %3834 = vmatprep.mubr.bf16.mxu0 0
        %3835 = vmatmul.mubr.bf16.gmra.mrb[0].mxu0 %v3724
        %v3836 = vpop.f32.mrb[0].mxu0
        %v3837 = vadd.f32 0.0, %v3836
        %v3838 = vpop.f32.mrb[0].mxu0
        %v3839 = vadd.f32 0.0, %v3838
        %v3840 = vpop.f32.mrb[0].mxu0
        %v3841 = vadd.f32 0.0, %v3840
        %v3842 = vpop.f32.mrb[0].mxu0
        %v3843 = vadd.f32 0.0, %v3842
        %3844 = vmatprep.mubr.bf16.mxu0 0
        %3845 = vmatmul.mubr.bf16.gmra.mrb[0].mxu0 %v3727
        %v3846 = vpop.f32.mrb[0].mxu0
        %v3847 = vadd.f32 0.0, %v3846
        %v3848 = vpop.f32.mrb[0].mxu0
        %v3849 = vadd.f32 0.0, %v3848
        %v3850 = vpop.f32.mrb[0].mxu0
        %v3851 = vadd.f32 0.0, %v3850
        %v3852 = vpop.f32.mrb[0].mxu0
        %v3853 = vadd.f32 0.0, %v3852
        %3854 = vmatprep.mubr.bf16.mxu0 0
        %3855 = vmatmul.mubr.bf16.gmra.mrb[0].mxu0 %v3730
        %v3856 = vpop.f32.mrb[0].mxu0
        %v3857 = vadd.f32 0.0, %v3856
        %v3858 = vpop.f32.mrb[0].mxu0
        %v3859 = vadd.f32 0.0, %v3858
        %v3860 = vpop.f32.mrb[0].mxu0
        %v3861 = vadd.f32 0.0, %v3860
        %v3862 = vpop.f32.mrb[0].mxu0
        %v3863 = vadd.f32 0.0, %v3862
        %3864 = vmatprep.mubr.bf16.mxu0 0
        %3865 = vmatmul.mubr.bf16.gmra.mrb[0].mxu0 %v3733
        %v3866 = vpop.f32.mrb[0].mxu0
        %v3867 = vadd.f32 0.0, %v3866
        %v3868 = vpop.f32.mrb[0].mxu0
        %v3869 = vadd.f32 0.0, %v3868
        %v3870 = vpop.f32.mrb[0].mxu0
        %v3871 = vadd.f32 0.0, %v3870
        %v3872 = vpop.f32.mrb[0].mxu0
        %v3873 = vadd.f32 0.0, %v3872
        %3874 = vmatprep.mubr.bf16.mxu0 0
        %3875 = vmatmul.mubr.bf16.gmra.mrb[0].mxu0 %v3736
        %v3876 = vpop.f32.mrb[0].mxu0
        %v3877 = vadd.f32 0.0, %v3876
        %v3878 = vpop.f32.mrb[0].mxu0
        %v3879 = vadd.f32 0.0, %v3878
        %v3880 = vpop.f32.mrb[0].mxu0
        %v3881 = vadd.f32 0.0, %v3880
        %v3882 = vpop.f32.mrb[0].mxu0
        %v3883 = vadd.f32 0.0, %v3882
        %3884 = vmatprep.mubr.bf16.mxu0 0
        %3885 = vmatmul.mubr.bf16.gmra.mrb[0].mxu0 %v3739
        %v3886 = vpop.f32.mrb[0].mxu0
        %v3887 = vadd.f32 0.0, %v3886
        %v3888 = vpop.f32.mrb[0].mxu0
        %v3889 = vadd.f32 0.0, %v3888
        %v3890 = vpop.f32.mrb[0].mxu0
        %v3891 = vadd.f32 0.0, %v3890
        %v3892 = vpop.f32.mrb[0].mxu0
        %v3893 = vadd.f32 0.0, %v3892
        %3894 = vmatprep.mubr.bf16.mxu0 0
        %3895 = vmatmul.mubr.bf16.gmra.mrb[0].mxu0 %v3742
        %v3896 = vpop.f32.mrb[0].mxu0
        %v3897 = vadd.f32 0.0, %v3896
        %v3898 = vpop.f32.mrb[0].mxu0
        %v3899 = vadd.f32 0.0, %v3898
        %v3900 = vpop.f32.mrb[0].mxu0
        %v3901 = vadd.f32 0.0, %v3900
        %v3902 = vpop.f32.mrb[0].mxu0
        %v3903 = vadd.f32 0.0, %v3902
        %3904 = vdwg.mxu0
        %v3906 = vsel %vm3534, %v3454, 0
        %v3909 = vsel %vm3534, %v3455, 0
        %v3912 = vsel %vm3534, %v3456, 0
        %v3915 = vsel %vm3534, %v3457, 0
        %v3918 = vsel %vm3534, %v3458, 0
        %v3921 = vsel %vm3534, %v3459, 0
        %v3924 = vsel %vm3534, %v3460, 0
        %v3927 = vsel %vm3534, %v3461, 0
        %v3930 = vsel %vm3534, %v3502, 0
        %v3933 = vsel %vm3534, %v3503, 0
        %v3936 = vsel %vm3534, %v3504, 0
        %v3939 = vsel %vm3534, %v3505, 0
        %v3942 = vsel %vm3534, %v3506, 0
        %v3945 = vsel %vm3534, %v3507, 0
        %v3948 = vsel %vm3534, %v3508, 0
        %v3951 = vsel %vm3534, %v3509, 0
        %v3954 = vsel %vm3534, %v3510, 0
        %v3957 = vsel %vm3534, %v3511, 0
        %v3960 = vsel %vm3534, %v3512, 0
        %v3963 = vsel %vm3534, %v3513, 0
        %v3966 = vsel %vm3534, %v3514, 0
        %v3969 = vsel %vm3534, %v3515, 0
        %v3972 = vsel %vm3534, %v3516, 0
        %v3975 = vsel %vm3534, %v3517, 0
        %3977 = vmatprep.subr.bf16.mxu0 0
        %3978 = vmatpush1.bf16.xpose.msra.mxu0 %v3930
        %3979 = vmatprep.subr.bf16.mxu0 0
        %3980 = vmatpush1.bf16.xpose.msra.mxu0 %v3933
        %3981 = vmatprep.subr.bf16.mxu0 0
        %3982 = vmatpush1.bf16.xpose.msra.mxu0 %v3936
        %3983 = vmatprep.subr.bf16.mxu0 0
        %3984 = vmatpush1.bf16.xpose.msra.mxu0 %v3939
        %3985 = vmatprep.subr.bf16.mxu0 0
        %3986 = vmatpush1.bf16.xpose.msra.mxu0 %v3942
        %3987 = vmatprep.subr.bf16.mxu0 0
        %3988 = vmatpush1.bf16.xpose.msra.mxu0 %v3945
        %3989 = vmatprep.subr.bf16.mxu0 0
        %3990 = vmatpush1.bf16.xpose.msra.mxu0 %v3948
        %3991 = vmatprep.subr.bf16.mxu0 0
        %3992 = vmatpush1.bf16.xpose.msra.mxu0 %v3951
        %3993 = vmatprep.subr.bf16.mxu0 0
        %3994 = vmatpush1.bf16.xpose.msra.mxu0 %v3954
        %3995 = vmatprep.subr.bf16.mxu0 0
        %3996 = vmatpush1.bf16.xpose.msra.mxu0 %v3957
        %3997 = vmatprep.subr.bf16.mxu0 0
        %3998 = vmatpush1.bf16.xpose.msra.mxu0 %v3960
        %3999 = vmatprep.subr.bf16.mxu0 0
        %4000 = vmatpush1.bf16.xpose.msra.mxu0 %v3963
        %4001 = vmatprep.subr.bf16.mxu0 0
        %4002 = vmatpush1.bf16.xpose.msra.mxu0 %v3966
        %4003 = vmatprep.subr.bf16.mxu0 0
        %4004 = vmatpush1.bf16.xpose.msra.mxu0 %v3969
        %4005 = vmatprep.subr.bf16.mxu0 0
        %4006 = vmatpush1.bf16.xpose.msra.mxu0 %v3972
        %4007 = vmatprep.subr.bf16.mxu0 0
        %4008 = vmatpush1.bf16.xpose.msra.mxu0 %v3975
        %4009 = vmatprep.mubr.bf16.mxu0 0
        %4010 = vmatmul.mubr.bf16.gmra.mrb[0].mxu0 %v3906
        %v4011 = vpop.f32.mrb[0].mxu0
        %v4012 = vadd.f32 0.0, %v4011
        %v4013 = vpop.f32.mrb[0].mxu0
        %v4014 = vadd.f32 0.0, %v4013
        %v4015 = vpop.f32.mrb[0].mxu0
        %v4016 = vadd.f32 0.0, %v4015
        %v4017 = vpop.f32.mrb[0].mxu0
        %v4018 = vadd.f32 0.0, %v4017
        %4019 = vmatprep.mubr.bf16.mxu0 0
        %4020 = vmatmul.mubr.bf16.gmra.mrb[0].mxu0 %v3909
        %v4021 = vpop.f32.mrb[0].mxu0
        %v4022 = vadd.f32 0.0, %v4021
        %v4023 = vpop.f32.mrb[0].mxu0
        %v4024 = vadd.f32 0.0, %v4023
        %v4025 = vpop.f32.mrb[0].mxu0
        %v4026 = vadd.f32 0.0, %v4025
        %v4027 = vpop.f32.mrb[0].mxu0
        %v4028 = vadd.f32 0.0, %v4027
        %4029 = vmatprep.mubr.bf16.mxu0 0
        %4030 = vmatmul.mubr.bf16.gmra.mrb[0].mxu0 %v3912
        %v4031 = vpop.f32.mrb[0].mxu0
        %v4032 = vadd.f32 0.0, %v4031
        %v4033 = vpop.f32.mrb[0].mxu0
        %v4034 = vadd.f32 0.0, %v4033
        %v4035 = vpop.f32.mrb[0].mxu0
        %v4036 = vadd.f32 0.0, %v4035
        %v4037 = vpop.f32.mrb[0].mxu0
        %v4038 = vadd.f32 0.0, %v4037
        %4039 = vmatprep.mubr.bf16.mxu0 0
        %4040 = vmatmul.mubr.bf16.gmra.mrb[0].mxu0 %v3915
        %v4041 = vpop.f32.mrb[0].mxu0
        %v4042 = vadd.f32 0.0, %v4041
        %v4043 = vpop.f32.mrb[0].mxu0
        %v4044 = vadd.f32 0.0, %v4043
        %v4045 = vpop.f32.mrb[0].mxu0
        %v4046 = vadd.f32 0.0, %v4045
        %v4047 = vpop.f32.mrb[0].mxu0
        %v4048 = vadd.f32 0.0, %v4047
        %4049 = vmatprep.mubr.bf16.mxu0 0
        %4050 = vmatmul.mubr.bf16.gmra.mrb[0].mxu0 %v3918
        %v4051 = vpop.f32.mrb[0].mxu0
        %v4052 = vadd.f32 0.0, %v4051
        %v4053 = vpop.f32.mrb[0].mxu0
        %v4054 = vadd.f32 0.0, %v4053
        %v4055 = vpop.f32.mrb[0].mxu0
        %v4056 = vadd.f32 0.0, %v4055
        %v4057 = vpop.f32.mrb[0].mxu0
        %v4058 = vadd.f32 0.0, %v4057
        %4059 = vmatprep.mubr.bf16.mxu0 0
        %4060 = vmatmul.mubr.bf16.gmra.mrb[0].mxu0 %v3921
        %v4061 = vpop.f32.mrb[0].mxu0
        %v4062 = vadd.f32 0.0, %v4061
        %v4063 = vpop.f32.mrb[0].mxu0
        %v4064 = vadd.f32 0.0, %v4063
        %v4065 = vpop.f32.mrb[0].mxu0
        %v4066 = vadd.f32 0.0, %v4065
        %v4067 = vpop.f32.mrb[0].mxu0
        %v4068 = vadd.f32 0.0, %v4067
        %4069 = vmatprep.mubr.bf16.mxu0 0
        %4070 = vmatmul.mubr.bf16.gmra.mrb[0].mxu0 %v3924
        %v4071 = vpop.f32.mrb[0].mxu0
        %v4072 = vadd.f32 0.0, %v4071
        %v4073 = vpop.f32.mrb[0].mxu0
        %v4074 = vadd.f32 0.0, %v4073
        %v4075 = vpop.f32.mrb[0].mxu0
        %v4076 = vadd.f32 0.0, %v4075
        %v4077 = vpop.f32.mrb[0].mxu0
        %v4078 = vadd.f32 0.0, %v4077
        %4079 = vmatprep.mubr.bf16.mxu0 0
        %4080 = vmatmul.mubr.bf16.gmra.mrb[0].mxu0 %v3927
        %v4081 = vpop.f32.mrb[0].mxu0
        %v4082 = vadd.f32 0.0, %v4081
        %v4083 = vpop.f32.mrb[0].mxu0
        %v4084 = vadd.f32 0.0, %v4083
        %v4085 = vpop.f32.mrb[0].mxu0
        %v4086 = vadd.f32 0.0, %v4085
        %v4087 = vpop.f32.mrb[0].mxu0
        %v4088 = vadd.f32 0.0, %v4087
        %4089 = vdwg.mxu0
        %v4091 = vsel %vm3534, %v3462, 0
        %v4094 = vsel %vm3534, %v3463, 0
        %v4097 = vsel %vm3534, %v3464, 0
        %v4100 = vsel %vm3534, %v3465, 0
        %v4103 = vsel %vm3534, %v3466, 0
        %v4106 = vsel %vm3534, %v3467, 0
        %v4109 = vsel %vm3534, %v3468, 0
        %v4112 = vsel %vm3534, %v3469, 0
        %v4115 = vsel %vm3534, %v3518, 0
        %v4118 = vsel %vm3534, %v3519, 0
        %v4121 = vsel %vm3534, %v3520, 0
        %v4124 = vsel %vm3534, %v3521, 0
        %v4127 = vsel %vm3534, %v3522, 0
        %v4130 = vsel %vm3534, %v3523, 0
        %v4133 = vsel %vm3534, %v3524, 0
        %v4136 = vsel %vm3534, %v3525, 0
        %v4139 = vsel %vm3534, %v3526, 0
        %v4142 = vsel %vm3534, %v3527, 0
        %v4145 = vsel %vm3534, %v3528, 0
        %v4148 = vsel %vm3534, %v3529, 0
        %v4151 = vsel %vm3534, %v3530, 0
        %v4154 = vsel %vm3534, %v3531, 0
        %v4157 = vsel %vm3534, %v3532, 0
        %v4160 = vsel %vm3534, %v3533, 0
        %4162 = vmatprep.subr.bf16.mxu0 0
        %4163 = vmatpush1.bf16.xpose.msra.mxu0 %v4115
        %4164 = vmatprep.subr.bf16.mxu0 0
        %4165 = vmatpush1.bf16.xpose.msra.mxu0 %v4118
        %4166 = vmatprep.subr.bf16.mxu0 0
        %4167 = vmatpush1.bf16.xpose.msra.mxu0 %v4121
        %4168 = vmatprep.subr.bf16.mxu0 0
        %4169 = vmatpush1.bf16.xpose.msra.mxu0 %v4124
        %4170 = vmatprep.subr.bf16.mxu0 0
        %4171 = vmatpush1.bf16.xpose.msra.mxu0 %v4127
        %4172 = vmatprep.subr.bf16.mxu0 0
        %4173 = vmatpush1.bf16.xpose.msra.mxu0 %v4130
        %4174 = vmatprep.subr.bf16.mxu0 0
        %4175 = vmatpush1.bf16.xpose.msra.mxu0 %v4133
        %4176 = vmatprep.subr.bf16.mxu0 0
        %4177 = vmatpush1.bf16.xpose.msra.mxu0 %v4136
        %4178 = vmatprep.subr.bf16.mxu0 0
        %4179 = vmatpush1.bf16.xpose.msra.mxu0 %v4139
        %4180 = vmatprep.subr.bf16.mxu0 0
        %4181 = vmatpush1.bf16.xpose.msra.mxu0 %v4142
        %4182 = vmatprep.subr.bf16.mxu0 0
        %4183 = vmatpush1.bf16.xpose.msra.mxu0 %v4145
        %4184 = vmatprep.subr.bf16.mxu0 0
        %4185 = vmatpush1.bf16.xpose.msra.mxu0 %v4148
        %4186 = vmatprep.subr.bf16.mxu0 0
        %4187 = vmatpush1.bf16.xpose.msra.mxu0 %v4151
        %4188 = vmatprep.subr.bf16.mxu0 0
        %4189 = vmatpush1.bf16.xpose.msra.mxu0 %v4154
        %4190 = vmatprep.subr.bf16.mxu0 0
        %4191 = vmatpush1.bf16.xpose.msra.mxu0 %v4157
        %4192 = vmatprep.subr.bf16.mxu0 0
        %4193 = vmatpush1.bf16.xpose.msra.mxu0 %v4160
        %4194 = vmatprep.mubr.bf16.mxu0 0
        %4195 = vmatmul.mubr.bf16.gmra.mrb[0].mxu0 %v4091
        %v4196 = vpop.f32.mrb[0].mxu0
        %v4197 = vadd.f32 0.0, %v4196
        %v4198 = vpop.f32.mrb[0].mxu0
        %v4199 = vadd.f32 0.0, %v4198
        %v4200 = vpop.f32.mrb[0].mxu0
        %v4201 = vadd.f32 0.0, %v4200
        %v4202 = vpop.f32.mrb[0].mxu0
        %v4203 = vadd.f32 0.0, %v4202
        %4204 = vmatprep.mubr.bf16.mxu0 0
        %4205 = vmatmul.mubr.bf16.gmra.mrb[0].mxu0 %v4094
        %v4206 = vpop.f32.mrb[0].mxu0
        %v4207 = vadd.f32 0.0, %v4206
        %v4208 = vpop.f32.mrb[0].mxu0
        %v4209 = vadd.f32 0.0, %v4208
        %v4210 = vpop.f32.mrb[0].mxu0
        %v4211 = vadd.f32 0.0, %v4210
        %v4212 = vpop.f32.mrb[0].mxu0
        %v4213 = vadd.f32 0.0, %v4212
        %4214 = vmatprep.mubr.bf16.mxu0 0
        %4215 = vmatmul.mubr.bf16.gmra.mrb[0].mxu0 %v4097
        %v4216 = vpop.f32.mrb[0].mxu0
        %v4217 = vadd.f32 0.0, %v4216
        %v4218 = vpop.f32.mrb[0].mxu0
        %v4219 = vadd.f32 0.0, %v4218
        %v4220 = vpop.f32.mrb[0].mxu0
        %v4221 = vadd.f32 0.0, %v4220
        %v4222 = vpop.f32.mrb[0].mxu0
        %v4223 = vadd.f32 0.0, %v4222
        %4224 = vmatprep.mubr.bf16.mxu0 0
        %4225 = vmatmul.mubr.bf16.gmra.mrb[0].mxu0 %v4100
        %v4226 = vpop.f32.mrb[0].mxu0
        %v4227 = vadd.f32 0.0, %v4226
        %v4228 = vpop.f32.mrb[0].mxu0
        %v4229 = vadd.f32 0.0, %v4228
        %v4230 = vpop.f32.mrb[0].mxu0
        %v4231 = vadd.f32 0.0, %v4230
        %v4232 = vpop.f32.mrb[0].mxu0
        %v4233 = vadd.f32 0.0, %v4232
        %4234 = vmatprep.mubr.bf16.mxu0 0
        %4235 = vmatmul.mubr.bf16.gmra.mrb[0].mxu0 %v4103
        %v4236 = vpop.f32.mrb[0].mxu0
        %v4237 = vadd.f32 0.0, %v4236
        %v4238 = vpop.f32.mrb[0].mxu0
        %v4239 = vadd.f32 0.0, %v4238
        %v4240 = vpop.f32.mrb[0].mxu0
        %v4241 = vadd.f32 0.0, %v4240
        %v4242 = vpop.f32.mrb[0].mxu0
        %v4243 = vadd.f32 0.0, %v4242
        %4244 = vmatprep.mubr.bf16.mxu0 0
        %4245 = vmatmul.mubr.bf16.gmra.mrb[0].mxu0 %v4106
        %v4246 = vpop.f32.mrb[0].mxu0
        %v4247 = vadd.f32 0.0, %v4246
        %v4248 = vpop.f32.mrb[0].mxu0
        %v4249 = vadd.f32 0.0, %v4248
        %v4250 = vpop.f32.mrb[0].mxu0
        %v4251 = vadd.f32 0.0, %v4250
        %v4252 = vpop.f32.mrb[0].mxu0
        %v4253 = vadd.f32 0.0, %v4252
        %4254 = vmatprep.mubr.bf16.mxu0 0
        %4255 = vmatmul.mubr.bf16.gmra.mrb[0].mxu0 %v4109
        %v4256 = vpop.f32.mrb[0].mxu0
        %v4257 = vadd.f32 0.0, %v4256
        %v4258 = vpop.f32.mrb[0].mxu0
        %v4259 = vadd.f32 0.0, %v4258
        %v4260 = vpop.f32.mrb[0].mxu0
        %v4261 = vadd.f32 0.0, %v4260
        %v4262 = vpop.f32.mrb[0].mxu0
        %v4263 = vadd.f32 0.0, %v4262
        %4264 = vmatprep.mubr.bf16.mxu0 0
        %4265 = vmatmul.mubr.bf16.gmra.mrb[0].mxu0 %v4112
        %v4266 = vpop.f32.mrb[0].mxu0
        %v4267 = vadd.f32 0.0, %v4266
        %v4268 = vpop.f32.mrb[0].mxu0
        %v4269 = vadd.f32 0.0, %v4268
        %v4270 = vpop.f32.mrb[0].mxu0
        %v4271 = vadd.f32 0.0, %v4270
        %v4272 = vpop.f32.mrb[0].mxu0
        %v4273 = vadd.f32 0.0, %v4272
        %4274 = vdwg.mxu0
        %v4275 = vmul.f32 %v3642, 0.17677669
        %v4276 = vmul.f32 %v3644, 0.17677669
        %v4277 = vmul.f32 %v3646, 0.17677669
        %v4278 = vmul.f32 %v3648, 0.17677669
        %v4279 = vmul.f32 %v3652, 0.17677669
        %v4280 = vmul.f32 %v3654, 0.17677669
        %v4281 = vmul.f32 %v3656, 0.17677669
        %v4282 = vmul.f32 %v3658, 0.17677669
        %v4283 = vmul.f32 %v3662, 0.17677669
        %v4284 = vmul.f32 %v3664, 0.17677669
        %v4285 = vmul.f32 %v3666, 0.17677669
        %v4286 = vmul.f32 %v3668, 0.17677669
        %v4287 = vmul.f32 %v3672, 0.17677669
        %v4288 = vmul.f32 %v3674, 0.17677669
        %v4289 = vmul.f32 %v3676, 0.17677669
        %v4290 = vmul.f32 %v3678, 0.17677669
        %v4291 = vmul.f32 %v3682, 0.17677669
        %v4292 = vmul.f32 %v3684, 0.17677669
        %v4293 = vmul.f32 %v3686, 0.17677669
        %v4294 = vmul.f32 %v3688, 0.17677669
        %v4295 = vmul.f32 %v3692, 0.17677669
        %v4296 = vmul.f32 %v3694, 0.17677669
        %v4297 = vmul.f32 %v3696, 0.17677669
        %v4298 = vmul.f32 %v3698, 0.17677669
        %v4299 = vmul.f32 %v3702, 0.17677669
        %v4300 = vmul.f32 %v3704, 0.17677669
        %v4301 = vmul.f32 %v3706, 0.17677669
        %v4302 = vmul.f32 %v3708, 0.17677669
        %v4303 = vmul.f32 %v3712, 0.17677669
        %v4304 = vmul.f32 %v3714, 0.17677669
        %v4305 = vmul.f32 %v3716, 0.17677669
        %v4306 = vmul.f32 %v3718, 0.17677669
        %v4307 = vmul.f32 %v3827, 0.17677669
        %v4308 = vmul.f32 %v3829, 0.17677669
        %v4309 = vmul.f32 %v3831, 0.17677669
        %v4310 = vmul.f32 %v3833, 0.17677669
        %v4311 = vmul.f32 %v3837, 0.17677669
        %v4312 = vmul.f32 %v3839, 0.17677669
        %v4313 = vmul.f32 %v3841, 0.17677669
        %v4314 = vmul.f32 %v3843, 0.17677669
        %v4315 = vmul.f32 %v3847, 0.17677669
        %v4316 = vmul.f32 %v3849, 0.17677669
        %v4317 = vmul.f32 %v3851, 0.17677669
        %v4318 = vmul.f32 %v3853, 0.17677669
        %v4319 = vmul.f32 %v3857, 0.17677669
        %v4320 = vmul.f32 %v3859, 0.17677669
        %v4321 = vmul.f32 %v3861, 0.17677669
        %v4322 = vmul.f32 %v3863, 0.17677669
        %v4323 = vmul.f32 %v3867, 0.17677669
        %v4324 = vmul.f32 %v3869, 0.17677669
        %v4325 = vmul.f32 %v3871, 0.17677669
        %v4326 = vmul.f32 %v3873, 0.17677669
        %v4327 = vmul.f32 %v3877, 0.17677669
        %v4328 = vmul.f32 %v3879, 0.17677669
        %v4329 = vmul.f32 %v3881, 0.17677669
        %v4330 = vmul.f32 %v3883, 0.17677669
        %v4331 = vmul.f32 %v3887, 0.17677669
        %v4332 = vmul.f32 %v3889, 0.17677669
        %v4333 = vmul.f32 %v3891, 0.17677669
        %v4334 = vmul.f32 %v3893, 0.17677669
        %v4335 = vmul.f32 %v3897, 0.17677669
        %v4336 = vmul.f32 %v3899, 0.17677669
        %v4337 = vmul.f32 %v3901, 0.17677669
        %v4338 = vmul.f32 %v3903, 0.17677669
        %v4339 = vmul.f32 %v4012, 0.17677669
        %v4340 = vmul.f32 %v4014, 0.17677669
        %v4341 = vmul.f32 %v4016, 0.17677669
        %v4342 = vmul.f32 %v4018, 0.17677669
        %v4343 = vmul.f32 %v4022, 0.17677669
        %v4344 = vmul.f32 %v4024, 0.17677669
        %v4345 = vmul.f32 %v4026, 0.17677669
        %v4346 = vmul.f32 %v4028, 0.17677669
        %v4347 = vmul.f32 %v4032, 0.17677669
        %v4348 = vmul.f32 %v4034, 0.17677669
        %v4349 = vmul.f32 %v4036, 0.17677669
        %v4350 = vmul.f32 %v4038, 0.17677669
        %v4351 = vmul.f32 %v4042, 0.17677669
        %v4352 = vmul.f32 %v4044, 0.17677669
        %v4353 = vmul.f32 %v4046, 0.17677669
        %v4354 = vmul.f32 %v4048, 0.17677669
        %v4355 = vmul.f32 %v4052, 0.17677669
        %v4356 = vmul.f32 %v4054, 0.17677669
        %v4357 = vmul.f32 %v4056, 0.17677669
        %v4358 = vmul.f32 %v4058, 0.17677669
        %v4359 = vmul.f32 %v4062, 0.17677669
        %v4360 = vmul.f32 %v4064, 0.17677669
        %v4361 = vmul.f32 %v4066, 0.17677669
        %v4362 = vmul.f32 %v4068, 0.17677669
        %v4363 = vmul.f32 %v4072, 0.17677669
        %v4364 = vmul.f32 %v4074, 0.17677669
        %v4365 = vmul.f32 %v4076, 0.17677669
        %v4366 = vmul.f32 %v4078, 0.17677669
        %v4367 = vmul.f32 %v4082, 0.17677669
        %v4368 = vmul.f32 %v4084, 0.17677669
        %v4369 = vmul.f32 %v4086, 0.17677669
        %v4370 = vmul.f32 %v4088, 0.17677669
        %v4371 = vmul.f32 %v4197, 0.17677669
        %v4372 = vmul.f32 %v4199, 0.17677669
        %v4373 = vmul.f32 %v4201, 0.17677669
        %v4374 = vmul.f32 %v4203, 0.17677669
        %v4375 = vmul.f32 %v4207, 0.17677669
        %v4376 = vmul.f32 %v4209, 0.17677669
        %v4377 = vmul.f32 %v4211, 0.17677669
        %v4378 = vmul.f32 %v4213, 0.17677669
        %v4379 = vmul.f32 %v4217, 0.17677669
        %v4380 = vmul.f32 %v4219, 0.17677669
        %v4381 = vmul.f32 %v4221, 0.17677669
        %v4382 = vmul.f32 %v4223, 0.17677669
        %v4383 = vmul.f32 %v4227, 0.17677669
        %v4384 = vmul.f32 %v4229, 0.17677669
        %v4385 = vmul.f32 %v4231, 0.17677669
        %v4386 = vmul.f32 %v4233, 0.17677669
        %v4387 = vmul.f32 %v4237, 0.17677669
        %v4388 = vmul.f32 %v4239, 0.17677669
        %v4389 = vmul.f32 %v4241, 0.17677669
        %v4390 = vmul.f32 %v4243, 0.17677669
        %v4391 = vmul.f32 %v4247, 0.17677669
        %v4392 = vmul.f32 %v4249, 0.17677669
        %v4393 = vmul.f32 %v4251, 0.17677669
        %v4394 = vmul.f32 %v4253, 0.17677669
        %v4395 = vmul.f32 %v4257, 0.17677669
        %v4396 = vmul.f32 %v4259, 0.17677669
        %v4397 = vmul.f32 %v4261, 0.17677669
        %v4398 = vmul.f32 %v4263, 0.17677669
        %v4399 = vmul.f32 %v4267, 0.17677669
        %v4400 = vmul.f32 %v4269, 0.17677669
        %v4401 = vmul.f32 %v4271, 0.17677669
        %v4402 = vmul.f32 %v4273, 0.17677669
        %v4403 = vmax.f32 %v4275, %v4276
        %4404 = vmax.xlane.f32.xlu0 %v4403
        %v4405 = vpop.xlane.xlu0 %4404
        %v4406 = vmax.f32 %v4277, %v4278
        %4407 = vmax.xlane.f32.xlu0 %v4406
        %v4408 = vpop.xlane.xlu0 %4407
        %v4409 = vmax.f32 %v4279, %v4280
        %4410 = vmax.xlane.f32.xlu0 %v4409
        %v4411 = vpop.xlane.xlu0 %4410
        %v4412 = vmax.f32 %v4281, %v4282
        %4413 = vmax.xlane.f32.xlu0 %v4412
        %v4414 = vpop.xlane.xlu0 %4413
        %v4415 = vmax.f32 %v4283, %v4284
        %4416 = vmax.xlane.f32.xlu0 %v4415
        %v4417 = vpop.xlane.xlu0 %4416
        %v4418 = vmax.f32 %v4285, %v4286
        %4419 = vmax.xlane.f32.xlu0 %v4418
        %v4420 = vpop.xlane.xlu0 %4419
        %v4421 = vmax.f32 %v4287, %v4288
        %4422 = vmax.xlane.f32.xlu0 %v4421
        %v4423 = vpop.xlane.xlu0 %4422
        %v4424 = vmax.f32 %v4289, %v4290
        %4425 = vmax.xlane.f32.xlu0 %v4424
        %v4426 = vpop.xlane.xlu0 %4425
        %v4427 = vmax.f32 %v4291, %v4292
        %4428 = vmax.xlane.f32.xlu0 %v4427
        %v4429 = vpop.xlane.xlu0 %4428
        %v4430 = vmax.f32 %v4293, %v4294
        %4431 = vmax.xlane.f32.xlu0 %v4430
        %v4432 = vpop.xlane.xlu0 %4431
        %v4433 = vmax.f32 %v4295, %v4296
        %4434 = vmax.xlane.f32.xlu0 %v4433
        %v4435 = vpop.xlane.xlu0 %4434
        %v4436 = vmax.f32 %v4297, %v4298
        %4437 = vmax.xlane.f32.xlu0 %v4436
        %v4438 = vpop.xlane.xlu0 %4437
        %v4439 = vmax.f32 %v4299, %v4300
        %4440 = vmax.xlane.f32.xlu0 %v4439
        %v4441 = vpop.xlane.xlu0 %4440
        %v4442 = vmax.f32 %v4301, %v4302
        %4443 = vmax.xlane.f32.xlu0 %v4442
        %v4444 = vpop.xlane.xlu0 %4443
        %v4445 = vmax.f32 %v4303, %v4304
        %4446 = vmax.xlane.f32.xlu0 %v4445
        %v4447 = vpop.xlane.xlu0 %4446
        %v4448 = vmax.f32 %v4305, %v4306
        %4449 = vmax.xlane.f32.xlu0 %v4448
        %v4450 = vpop.xlane.xlu0 %4449
        %v4451 = vmax.f32 %v4307, %v4308
        %4452 = vmax.xlane.f32.xlu0 %v4451
        %v4453 = vpop.xlane.xlu0 %4452
        %v4454 = vmax.f32 %v4309, %v4310
        %4455 = vmax.xlane.f32.xlu0 %v4454
        %v4456 = vpop.xlane.xlu0 %4455
        %v4457 = vmax.f32 %v4311, %v4312
        %4458 = vmax.xlane.f32.xlu0 %v4457
        %v4459 = vpop.xlane.xlu0 %4458
        %v4460 = vmax.f32 %v4313, %v4314
        %4461 = vmax.xlane.f32.xlu0 %v4460
        %v4462 = vpop.xlane.xlu0 %4461
        %v4463 = vmax.f32 %v4315, %v4316
        %4464 = vmax.xlane.f32.xlu0 %v4463
        %v4465 = vpop.xlane.xlu0 %4464
        %v4466 = vmax.f32 %v4317, %v4318
        %4467 = vmax.xlane.f32.xlu0 %v4466
        %v4468 = vpop.xlane.xlu0 %4467
        %v4469 = vmax.f32 %v4319, %v4320
        %4470 = vmax.xlane.f32.xlu0 %v4469
        %v4471 = vpop.xlane.xlu0 %4470
        %v4472 = vmax.f32 %v4321, %v4322
        %4473 = vmax.xlane.f32.xlu0 %v4472
        %v4474 = vpop.xlane.xlu0 %4473
        %v4475 = vmax.f32 %v4323, %v4324
        %4476 = vmax.xlane.f32.xlu0 %v4475
        %v4477 = vpop.xlane.xlu0 %4476
        %v4478 = vmax.f32 %v4325, %v4326
        %4479 = vmax.xlane.f32.xlu0 %v4478
        %v4480 = vpop.xlane.xlu0 %4479
        %v4481 = vmax.f32 %v4327, %v4328
        %4482 = vmax.xlane.f32.xlu0 %v4481
        %v4483 = vpop.xlane.xlu0 %4482
        %v4484 = vmax.f32 %v4329, %v4330
        %4485 = vmax.xlane.f32.xlu0 %v4484
        %v4486 = vpop.xlane.xlu0 %4485
        %v4487 = vmax.f32 %v4331, %v4332
        %4488 = vmax.xlane.f32.xlu0 %v4487
        %v4489 = vpop.xlane.xlu0 %4488
        %v4490 = vmax.f32 %v4333, %v4334
        %4491 = vmax.xlane.f32.xlu0 %v4490
        %v4492 = vpop.xlane.xlu0 %4491
        %v4493 = vmax.f32 %v4335, %v4336
        %4494 = vmax.xlane.f32.xlu0 %v4493
        %v4495 = vpop.xlane.xlu0 %4494
        %v4496 = vmax.f32 %v4337, %v4338
        %4497 = vmax.xlane.f32.xlu0 %v4496
        %v4498 = vpop.xlane.xlu0 %4497
        %v4499 = vmax.f32 %v4339, %v4340
        %4500 = vmax.xlane.f32.xlu0 %v4499
        %v4501 = vpop.xlane.xlu0 %4500
        %v4502 = vmax.f32 %v4341, %v4342
        %4503 = vmax.xlane.f32.xlu0 %v4502
        %v4504 = vpop.xlane.xlu0 %4503
        %v4505 = vmax.f32 %v4343, %v4344
        %4506 = vmax.xlane.f32.xlu0 %v4505
        %v4507 = vpop.xlane.xlu0 %4506
        %v4508 = vmax.f32 %v4345, %v4346
        %4509 = vmax.xlane.f32.xlu0 %v4508
        %v4510 = vpop.xlane.xlu0 %4509
        %v4511 = vmax.f32 %v4347, %v4348
        %4512 = vmax.xlane.f32.xlu0 %v4511
        %v4513 = vpop.xlane.xlu0 %4512
        %v4514 = vmax.f32 %v4349, %v4350
        %4515 = vmax.xlane.f32.xlu0 %v4514
        %v4516 = vpop.xlane.xlu0 %4515
        %v4517 = vmax.f32 %v4351, %v4352
        %4518 = vmax.xlane.f32.xlu0 %v4517
        %v4519 = vpop.xlane.xlu0 %4518
        %v4520 = vmax.f32 %v4353, %v4354
        %4521 = vmax.xlane.f32.xlu0 %v4520
        %v4522 = vpop.xlane.xlu0 %4521
        %v4523 = vmax.f32 %v4355, %v4356
        %4524 = vmax.xlane.f32.xlu0 %v4523
        %v4525 = vpop.xlane.xlu0 %4524
        %v4526 = vmax.f32 %v4357, %v4358
        %4527 = vmax.xlane.f32.xlu0 %v4526
        %v4528 = vpop.xlane.xlu0 %4527
        %v4529 = vmax.f32 %v4359, %v4360
        %4530 = vmax.xlane.f32.xlu0 %v4529
        %v4531 = vpop.xlane.xlu0 %4530
        %v4532 = vmax.f32 %v4361, %v4362
        %4533 = vmax.xlane.f32.xlu0 %v4532
        %v4534 = vpop.xlane.xlu0 %4533
        %v4535 = vmax.f32 %v4363, %v4364
        %4536 = vmax.xlane.f32.xlu0 %v4535
        %v4537 = vpop.xlane.xlu0 %4536
        %v4538 = vmax.f32 %v4365, %v4366
        %4539 = vmax.xlane.f32.xlu0 %v4538
        %v4540 = vpop.xlane.xlu0 %4539
        %v4541 = vmax.f32 %v4367, %v4368
        %4542 = vmax.xlane.f32.xlu0 %v4541
        %v4543 = vpop.xlane.xlu0 %4542
        %v4544 = vmax.f32 %v4369, %v4370
        %4545 = vmax.xlane.f32.xlu0 %v4544
        %v4546 = vpop.xlane.xlu0 %4545
        %v4547 = vmax.f32 %v4371, %v4372
        %4548 = vmax.xlane.f32.xlu0 %v4547
        %v4549 = vpop.xlane.xlu0 %4548
        %v4550 = vmax.f32 %v4373, %v4374
        %4551 = vmax.xlane.f32.xlu0 %v4550
        %v4552 = vpop.xlane.xlu0 %4551
        %v4553 = vmax.f32 %v4375, %v4376
        %4554 = vmax.xlane.f32.xlu0 %v4553
        %v4555 = vpop.xlane.xlu0 %4554
        %v4556 = vmax.f32 %v4377, %v4378
        %4557 = vmax.xlane.f32.xlu0 %v4556
        %v4558 = vpop.xlane.xlu0 %4557
        %v4559 = vmax.f32 %v4379, %v4380
        %4560 = vmax.xlane.f32.xlu0 %v4559
        %v4561 = vpop.xlane.xlu0 %4560
        %v4562 = vmax.f32 %v4381, %v4382
        %4563 = vmax.xlane.f32.xlu0 %v4562
        %v4564 = vpop.xlane.xlu0 %4563
        %v4565 = vmax.f32 %v4383, %v4384
        %4566 = vmax.xlane.f32.xlu0 %v4565
        %v4567 = vpop.xlane.xlu0 %4566
        %v4568 = vmax.f32 %v4385, %v4386
        %4569 = vmax.xlane.f32.xlu0 %v4568
        %v4570 = vpop.xlane.xlu0 %4569
        %v4571 = vmax.f32 %v4387, %v4388
        %4572 = vmax.xlane.f32.xlu0 %v4571
        %v4573 = vpop.xlane.xlu0 %4572
        %v4574 = vmax.f32 %v4389, %v4390
        %4575 = vmax.xlane.f32.xlu0 %v4574
        %v4576 = vpop.xlane.xlu0 %4575
        %v4577 = vmax.f32 %v4391, %v4392
        %4578 = vmax.xlane.f32.xlu0 %v4577
        %v4579 = vpop.xlane.xlu0 %4578
        %v4580 = vmax.f32 %v4393, %v4394
        %4581 = vmax.xlane.f32.xlu0 %v4580
        %v4582 = vpop.xlane.xlu0 %4581
        %v4583 = vmax.f32 %v4395, %v4396
        %4584 = vmax.xlane.f32.xlu0 %v4583
        %v4585 = vpop.xlane.xlu0 %4584
        %v4586 = vmax.f32 %v4397, %v4398
        %4587 = vmax.xlane.f32.xlu0 %v4586
        %v4588 = vpop.xlane.xlu0 %4587
        %v4589 = vmax.f32 %v4399, %v4400
        %4590 = vmax.xlane.f32.xlu0 %v4589
        %v4591 = vpop.xlane.xlu0 %4590
        %v4592 = vmax.f32 %v4401, %v4402
        %4593 = vmax.xlane.f32.xlu0 %v4592
        %v4594 = vpop.xlane.xlu0 %4593
        %v4595 = vsub.f32 %v4275, %v4405
        %v4596 = vsub.f32 %v4276, %v4405
        %v4597 = vsub.f32 %v4277, %v4408
        %v4598 = vsub.f32 %v4278, %v4408
        %v4599 = vsub.f32 %v4279, %v4411
        %v4600 = vsub.f32 %v4280, %v4411
        %v4601 = vsub.f32 %v4281, %v4414
        %v4602 = vsub.f32 %v4282, %v4414
        %v4603 = vsub.f32 %v4283, %v4417
        %v4604 = vsub.f32 %v4284, %v4417
        %v4605 = vsub.f32 %v4285, %v4420
        %v4606 = vsub.f32 %v4286, %v4420
        %v4607 = vsub.f32 %v4287, %v4423
        %v4608 = vsub.f32 %v4288, %v4423
        %v4609 = vsub.f32 %v4289, %v4426
        %v4610 = vsub.f32 %v4290, %v4426
        %v4611 = vsub.f32 %v4291, %v4429
        %v4612 = vsub.f32 %v4292, %v4429
        %v4613 = vsub.f32 %v4293, %v4432
        %v4614 = vsub.f32 %v4294, %v4432
        %v4615 = vsub.f32 %v4295, %v4435
        %v4616 = vsub.f32 %v4296, %v4435
        %v4617 = vsub.f32 %v4297, %v4438
        %v4618 = vsub.f32 %v4298, %v4438
        %v4619 = vsub.f32 %v4299, %v4441
        %v4620 = vsub.f32 %v4300, %v4441
        %v4621 = vsub.f32 %v4301, %v4444
        %v4622 = vsub.f32 %v4302, %v4444
        %v4623 = vsub.f32 %v4303, %v4447
        %v4624 = vsub.f32 %v4304, %v4447
        %v4625 = vsub.f32 %v4305, %v4450
        %v4626 = vsub.f32 %v4306, %v4450
        %v4627 = vsub.f32 %v4307, %v4453
        %v4628 = vsub.f32 %v4308, %v4453
        %v4629 = vsub.f32 %v4309, %v4456
        %v4630 = vsub.f32 %v4310, %v4456
        %v4631 = vsub.f32 %v4311, %v4459
        %v4632 = vsub.f32 %v4312, %v4459
        %v4633 = vsub.f32 %v4313, %v4462
        %v4634 = vsub.f32 %v4314, %v4462
        %v4635 = vsub.f32 %v4315, %v4465
        %v4636 = vsub.f32 %v4316, %v4465
        %v4637 = vsub.f32 %v4317, %v4468
        %v4638 = vsub.f32 %v4318, %v4468
        %v4639 = vsub.f32 %v4319, %v4471
        %v4640 = vsub.f32 %v4320, %v4471
        %v4641 = vsub.f32 %v4321, %v4474
        %v4642 = vsub.f32 %v4322, %v4474
        %v4643 = vsub.f32 %v4323, %v4477
        %v4644 = vsub.f32 %v4324, %v4477
        %v4645 = vsub.f32 %v4325, %v4480
        %v4646 = vsub.f32 %v4326, %v4480
        %v4647 = vsub.f32 %v4327, %v4483
        %v4648 = vsub.f32 %v4328, %v4483
        %v4649 = vsub.f32 %v4329, %v4486
        %v4650 = vsub.f32 %v4330, %v4486
        %v4651 = vsub.f32 %v4331, %v4489
        %v4652 = vsub.f32 %v4332, %v4489
        %v4653 = vsub.f32 %v4333, %v4492
        %v4654 = vsub.f32 %v4334, %v4492
        %v4655 = vsub.f32 %v4335, %v4495
        %v4656 = vsub.f32 %v4336, %v4495
        %v4657 = vsub.f32 %v4337, %v4498
        %v4658 = vsub.f32 %v4338, %v4498
        %v4659 = vsub.f32 %v4339, %v4501
        %v4660 = vsub.f32 %v4340, %v4501
        %v4661 = vsub.f32 %v4341, %v4504
        %v4662 = vsub.f32 %v4342, %v4504
        %v4663 = vsub.f32 %v4343, %v4507
        %v4664 = vsub.f32 %v4344, %v4507
        %v4665 = vsub.f32 %v4345, %v4510
        %v4666 = vsub.f32 %v4346, %v4510
        %v4667 = vsub.f32 %v4347, %v4513
        %v4668 = vsub.f32 %v4348, %v4513
        %v4669 = vsub.f32 %v4349, %v4516
        %v4670 = vsub.f32 %v4350, %v4516
        %v4671 = vsub.f32 %v4351, %v4519
        %v4672 = vsub.f32 %v4352, %v4519
        %v4673 = vsub.f32 %v4353, %v4522
        %v4674 = vsub.f32 %v4354, %v4522
        %v4675 = vsub.f32 %v4355, %v4525
        %v4676 = vsub.f32 %v4356, %v4525
        %v4677 = vsub.f32 %v4357, %v4528
        %v4678 = vsub.f32 %v4358, %v4528
        %v4679 = vsub.f32 %v4359, %v4531
        %v4680 = vsub.f32 %v4360, %v4531
        %v4681 = vsub.f32 %v4361, %v4534
        %v4682 = vsub.f32 %v4362, %v4534
        %v4683 = vsub.f32 %v4363, %v4537
        %v4684 = vsub.f32 %v4364, %v4537
        %v4685 = vsub.f32 %v4365, %v4540
        %v4686 = vsub.f32 %v4366, %v4540
        %v4687 = vsub.f32 %v4367, %v4543
        %v4688 = vsub.f32 %v4368, %v4543
        %v4689 = vsub.f32 %v4369, %v4546
        %v4690 = vsub.f32 %v4370, %v4546
        %v4691 = vsub.f32 %v4371, %v4549
        %v4692 = vsub.f32 %v4372, %v4549
        %v4693 = vsub.f32 %v4373, %v4552
        %v4694 = vsub.f32 %v4374, %v4552
        %v4695 = vsub.f32 %v4375, %v4555
        %v4696 = vsub.f32 %v4376, %v4555
        %v4697 = vsub.f32 %v4377, %v4558
        %v4698 = vsub.f32 %v4378, %v4558
        %v4699 = vsub.f32 %v4379, %v4561
        %v4700 = vsub.f32 %v4380, %v4561
        %v4701 = vsub.f32 %v4381, %v4564
        %v4702 = vsub.f32 %v4382, %v4564
        %v4703 = vsub.f32 %v4383, %v4567
        %v4704 = vsub.f32 %v4384, %v4567
        %v4705 = vsub.f32 %v4385, %v4570
        %v4706 = vsub.f32 %v4386, %v4570
        %v4707 = vsub.f32 %v4387, %v4573
        %v4708 = vsub.f32 %v4388, %v4573
        %v4709 = vsub.f32 %v4389, %v4576
        %v4710 = vsub.f32 %v4390, %v4576
        %v4711 = vsub.f32 %v4391, %v4579
        %v4712 = vsub.f32 %v4392, %v4579
        %v4713 = vsub.f32 %v4393, %v4582
        %v4714 = vsub.f32 %v4394, %v4582
        %v4715 = vsub.f32 %v4395, %v4585
        %v4716 = vsub.f32 %v4396, %v4585
        %v4717 = vsub.f32 %v4397, %v4588
        %v4718 = vsub.f32 %v4398, %v4588
        %v4719 = vsub.f32 %v4399, %v4591
        %v4720 = vsub.f32 %v4400, %v4591
        %v4721 = vsub.f32 %v4401, %v4594
        %v4722 = vsub.f32 %v4402, %v4594
        %v4723 = vmul.f32 %v4595, 1.442695
        %v4724 = vpow.pop %v4723
        %v4725 = vmul.f32 %v4596, 1.442695
        %v4726 = vpow.pop %v4725
        %v4727 = vmul.f32 %v4597, 1.442695
        %v4728 = vpow.pop %v4727
        %v4729 = vmul.f32 %v4598, 1.442695
        %v4730 = vpow.pop %v4729
        %v4731 = vmul.f32 %v4599, 1.442695
        %v4732 = vpow.pop %v4731
        %v4733 = vmul.f32 %v4600, 1.442695
        %v4734 = vpow.pop %v4733
        %v4735 = vmul.f32 %v4601, 1.442695
        %v4736 = vpow.pop %v4735
        %v4737 = vmul.f32 %v4602, 1.442695
        %v4738 = vpow.pop %v4737
        %v4739 = vmul.f32 %v4603, 1.442695
        %v4740 = vpow.pop %v4739
        %v4741 = vmul.f32 %v4604, 1.442695
        %v4742 = vpow.pop %v4741
        %v4743 = vmul.f32 %v4605, 1.442695
        %v4744 = vpow.pop %v4743
        %v4745 = vmul.f32 %v4606, 1.442695
        %v4746 = vpow.pop %v4745
        %v4747 = vmul.f32 %v4607, 1.442695
        %v4748 = vpow.pop %v4747
        %v4749 = vmul.f32 %v4608, 1.442695
        %v4750 = vpow.pop %v4749
        %v4751 = vmul.f32 %v4609, 1.442695
        %v4752 = vpow.pop %v4751
        %v4753 = vmul.f32 %v4610, 1.442695
        %v4754 = vpow.pop %v4753
        %v4755 = vmul.f32 %v4611, 1.442695
        %v4756 = vpow.pop %v4755
        %v4757 = vmul.f32 %v4612, 1.442695
        %v4758 = vpow.pop %v4757
        %v4759 = vmul.f32 %v4613, 1.442695
        %v4760 = vpow.pop %v4759
        %v4761 = vmul.f32 %v4614, 1.442695
        %v4762 = vpow.pop %v4761
        %v4763 = vmul.f32 %v4615, 1.442695
        %v4764 = vpow.pop %v4763
        %v4765 = vmul.f32 %v4616, 1.442695
        %v4766 = vpow.pop %v4765
        %v4767 = vmul.f32 %v4617, 1.442695
        %v4768 = vpow.pop %v4767
        %v4769 = vmul.f32 %v4618, 1.442695
        %v4770 = vpow.pop %v4769
        %v4771 = vmul.f32 %v4619, 1.442695
        %v4772 = vpow.pop %v4771
        %v4773 = vmul.f32 %v4620, 1.442695
        %v4774 = vpow.pop %v4773
        %v4775 = vmul.f32 %v4621, 1.442695
        %v4776 = vpow.pop %v4775
        %v4777 = vmul.f32 %v4622, 1.442695
        %v4778 = vpow.pop %v4777
        %v4779 = vmul.f32 %v4623, 1.442695
        %v4780 = vpow.pop %v4779
        %v4781 = vmul.f32 %v4624, 1.442695
        %v4782 = vpow.pop %v4781
        %v4783 = vmul.f32 %v4625, 1.442695
        %v4784 = vpow.pop %v4783
        %v4785 = vmul.f32 %v4626, 1.442695
        %v4786 = vpow.pop %v4785
        %v4787 = vmul.f32 %v4627, 1.442695
        %v4788 = vpow.pop %v4787
        %v4789 = vmul.f32 %v4628, 1.442695
        %v4790 = vpow.pop %v4789
        %v4791 = vmul.f32 %v4629, 1.442695
        %v4792 = vpow.pop %v4791
        %v4793 = vmul.f32 %v4630, 1.442695
        %v4794 = vpow.pop %v4793
        %v4795 = vmul.f32 %v4631, 1.442695
        %v4796 = vpow.pop %v4795
        %v4797 = vmul.f32 %v4632, 1.442695
        %v4798 = vpow.pop %v4797
        %v4799 = vmul.f32 %v4633, 1.442695
        %v4800 = vpow.pop %v4799
        %v4801 = vmul.f32 %v4634, 1.442695
        %v4802 = vpow.pop %v4801
        %v4803 = vmul.f32 %v4635, 1.442695
        %v4804 = vpow.pop %v4803
        %v4805 = vmul.f32 %v4636, 1.442695
        %v4806 = vpow.pop %v4805
        %v4807 = vmul.f32 %v4637, 1.442695
        %v4808 = vpow.pop %v4807
        %v4809 = vmul.f32 %v4638, 1.442695
        %v4810 = vpow.pop %v4809
        %v4811 = vmul.f32 %v4639, 1.442695
        %v4812 = vpow.pop %v4811
        %v4813 = vmul.f32 %v4640, 1.442695
        %v4814 = vpow.pop %v4813
        %v4815 = vmul.f32 %v4641, 1.442695
        %v4816 = vpow.pop %v4815
        %v4817 = vmul.f32 %v4642, 1.442695
        %v4818 = vpow.pop %v4817
        %v4819 = vmul.f32 %v4643, 1.442695
        %v4820 = vpow.pop %v4819
        %v4821 = vmul.f32 %v4644, 1.442695
        %v4822 = vpow.pop %v4821
        %v4823 = vmul.f32 %v4645, 1.442695
        %v4824 = vpow.pop %v4823
        %v4825 = vmul.f32 %v4646, 1.442695
        %v4826 = vpow.pop %v4825
        %v4827 = vmul.f32 %v4647, 1.442695
        %v4828 = vpow.pop %v4827
        %v4829 = vmul.f32 %v4648, 1.442695
        %v4830 = vpow.pop %v4829
        %v4831 = vmul.f32 %v4649, 1.442695
        %v4832 = vpow.pop %v4831
        %v4833 = vmul.f32 %v4650, 1.442695
        %v4834 = vpow.pop %v4833
        %v4835 = vmul.f32 %v4651, 1.442695
        %v4836 = vpow.pop %v4835
        %v4837 = vmul.f32 %v4652, 1.442695
        %v4838 = vpow.pop %v4837
        %v4839 = vmul.f32 %v4653, 1.442695
        %v4840 = vpow.pop %v4839
        %v4841 = vmul.f32 %v4654, 1.442695
        %v4842 = vpow.pop %v4841
        %v4843 = vmul.f32 %v4655, 1.442695
        %v4844 = vpow.pop %v4843
        %v4845 = vmul.f32 %v4656, 1.442695
        %v4846 = vpow.pop %v4845
        %v4847 = vmul.f32 %v4657, 1.442695
        %v4848 = vpow.pop %v4847
        %v4849 = vmul.f32 %v4658, 1.442695
        %v4850 = vpow.pop %v4849
        %v4851 = vmul.f32 %v4659, 1.442695
        %v4852 = vpow.pop %v4851
        %v4853 = vmul.f32 %v4660, 1.442695
        %v4854 = vpow.pop %v4853
        %v4855 = vmul.f32 %v4661, 1.442695
        %v4856 = vpow.pop %v4855
        %v4857 = vmul.f32 %v4662, 1.442695
        %v4858 = vpow.pop %v4857
        %v4859 = vmul.f32 %v4663, 1.442695
        %v4860 = vpow.pop %v4859
        %v4861 = vmul.f32 %v4664, 1.442695
        %v4862 = vpow.pop %v4861
        %v4863 = vmul.f32 %v4665, 1.442695
        %v4864 = vpow.pop %v4863
        %v4865 = vmul.f32 %v4666, 1.442695
        %v4866 = vpow.pop %v4865
        %v4867 = vmul.f32 %v4667, 1.442695
        %v4868 = vpow.pop %v4867
        %v4869 = vmul.f32 %v4668, 1.442695
        %v4870 = vpow.pop %v4869
        %v4871 = vmul.f32 %v4669, 1.442695
        %v4872 = vpow.pop %v4871
        %v4873 = vmul.f32 %v4670, 1.442695
        %v4874 = vpow.pop %v4873
        %v4875 = vmul.f32 %v4671, 1.442695
        %v4876 = vpow.pop %v4875
        %v4877 = vmul.f32 %v4672, 1.442695
        %v4878 = vpow.pop %v4877
        %v4879 = vmul.f32 %v4673, 1.442695
        %v4880 = vpow.pop %v4879
        %v4881 = vmul.f32 %v4674, 1.442695
        %v4882 = vpow.pop %v4881
        %v4883 = vmul.f32 %v4675, 1.442695
        %v4884 = vpow.pop %v4883
        %v4885 = vmul.f32 %v4676, 1.442695
        %v4886 = vpow.pop %v4885
        %v4887 = vmul.f32 %v4677, 1.442695
        %v4888 = vpow.pop %v4887
        %v4889 = vmul.f32 %v4678, 1.442695
        %v4890 = vpow.pop %v4889
        %v4891 = vmul.f32 %v4679, 1.442695
        %v4892 = vpow.pop %v4891
        %v4893 = vmul.f32 %v4680, 1.442695
        %v4894 = vpow.pop %v4893
        %v4895 = vmul.f32 %v4681, 1.442695
        %v4896 = vpow.pop %v4895
        %v4897 = vmul.f32 %v4682, 1.442695
        %v4898 = vpow.pop %v4897
        %v4899 = vmul.f32 %v4683, 1.442695
        %v4900 = vpow.pop %v4899
        %v4901 = vmul.f32 %v4684, 1.442695
        %v4902 = vpow.pop %v4901
        %v4903 = vmul.f32 %v4685, 1.442695
        %v4904 = vpow.pop %v4903
        %v4905 = vmul.f32 %v4686, 1.442695
        %v4906 = vpow.pop %v4905
        %v4907 = vmul.f32 %v4687, 1.442695
        %v4908 = vpow.pop %v4907
        %v4909 = vmul.f32 %v4688, 1.442695
        %v4910 = vpow.pop %v4909
        %v4911 = vmul.f32 %v4689, 1.442695
        %v4912 = vpow.pop %v4911
        %v4913 = vmul.f32 %v4690, 1.442695
        %v4914 = vpow.pop %v4913
        %v4915 = vmul.f32 %v4691, 1.442695
        %v4916 = vpow.pop %v4915
        %v4917 = vmul.f32 %v4692, 1.442695
        %v4918 = vpow.pop %v4917
        %v4919 = vmul.f32 %v4693, 1.442695
        %v4920 = vpow.pop %v4919
        %v4921 = vmul.f32 %v4694, 1.442695
        %v4922 = vpow.pop %v4921
        %v4923 = vmul.f32 %v4695, 1.442695
        %v4924 = vpow.pop %v4923
        %v4925 = vmul.f32 %v4696, 1.442695
        %v4926 = vpow.pop %v4925
        %v4927 = vmul.f32 %v4697, 1.442695
        %v4928 = vpow.pop %v4927
        %v4929 = vmul.f32 %v4698, 1.442695
        %v4930 = vpow.pop %v4929
        %v4931 = vmul.f32 %v4699, 1.442695
        %v4932 = vpow.pop %v4931
        %v4933 = vmul.f32 %v4700, 1.442695
        %v4934 = vpow.pop %v4933
        %v4935 = vmul.f32 %v4701, 1.442695
        %v4936 = vpow.pop %v4935
        %v4937 = vmul.f32 %v4702, 1.442695
        %v4938 = vpow.pop %v4937
        %v4939 = vmul.f32 %v4703, 1.442695
        %v4940 = vpow.pop %v4939
        %v4941 = vmul.f32 %v4704, 1.442695
        %v4942 = vpow.pop %v4941
        %v4943 = vmul.f32 %v4705, 1.442695
        %v4944 = vpow.pop %v4943
        %v4945 = vmul.f32 %v4706, 1.442695
        %v4946 = vpow.pop %v4945
        %v4947 = vmul.f32 %v4707, 1.442695
        %v4948 = vpow.pop %v4947
        %v4949 = vmul.f32 %v4708, 1.442695
        %v4950 = vpow.pop %v4949
        %v4951 = vmul.f32 %v4709, 1.442695
        %v4952 = vpow.pop %v4951
        %v4953 = vmul.f32 %v4710, 1.442695
        %v4954 = vpow.pop %v4953
        %v4955 = vmul.f32 %v4711, 1.442695
        %v4956 = vpow.pop %v4955
        %v4957 = vmul.f32 %v4712, 1.442695
        %v4958 = vpow.pop %v4957
        %v4959 = vmul.f32 %v4713, 1.442695
        %v4960 = vpow.pop %v4959
        %v4961 = vmul.f32 %v4714, 1.442695
        %v4962 = vpow.pop %v4961
        %v4963 = vmul.f32 %v4715, 1.442695
        %v4964 = vpow.pop %v4963
        %v4965 = vmul.f32 %v4716, 1.442695
        %v4966 = vpow.pop %v4965
        %v4967 = vmul.f32 %v4717, 1.442695
        %v4968 = vpow.pop %v4967
        %v4969 = vmul.f32 %v4718, 1.442695
        %v4970 = vpow.pop %v4969
        %v4971 = vmul.f32 %v4719, 1.442695
        %v4972 = vpow.pop %v4971
        %v4973 = vmul.f32 %v4720, 1.442695
        %v4974 = vpow.pop %v4973
        %v4975 = vmul.f32 %v4721, 1.442695
        %v4976 = vpow.pop %v4975
        %v4977 = vmul.f32 %v4722, 1.442695
        %v4978 = vpow.pop %v4977
        %v4979 = vadd.f32 %v4724, %v4726
        %4980 = vadd.xlane.f32.xlu0 %v4979
        %v4981 = vpop.xlane.xlu0 %4980
        %v4982 = vadd.f32 %v4728, %v4730
        %4983 = vadd.xlane.f32.xlu0 %v4982
        %v4984 = vpop.xlane.xlu0 %4983
        %v4985 = vadd.f32 %v4732, %v4734
        %4986 = vadd.xlane.f32.xlu0 %v4985
        %v4987 = vpop.xlane.xlu0 %4986
        %v4988 = vadd.f32 %v4736, %v4738
        %4989 = vadd.xlane.f32.xlu0 %v4988
        %v4990 = vpop.xlane.xlu0 %4989
        %v4991 = vadd.f32 %v4740, %v4742
        %4992 = vadd.xlane.f32.xlu0 %v4991
        %v4993 = vpop.xlane.xlu0 %4992
        %v4994 = vadd.f32 %v4744, %v4746
        %4995 = vadd.xlane.f32.xlu0 %v4994
        %v4996 = vpop.xlane.xlu0 %4995
        %v4997 = vadd.f32 %v4748, %v4750
        %4998 = vadd.xlane.f32.xlu0 %v4997
        %v4999 = vpop.xlane.xlu0 %4998
        %v5000 = vadd.f32 %v4752, %v4754
        %5001 = vadd.xlane.f32.xlu0 %v5000
        %v5002 = vpop.xlane.xlu0 %5001
        %v5003 = vadd.f32 %v4756, %v4758
        %5004 = vadd.xlane.f32.xlu0 %v5003
        %v5005 = vpop.xlane.xlu0 %5004
        %v5006 = vadd.f32 %v4760, %v4762
        %5007 = vadd.xlane.f32.xlu0 %v5006
        %v5008 = vpop.xlane.xlu0 %5007
        %v5009 = vadd.f32 %v4764, %v4766
        %5010 = vadd.xlane.f32.xlu0 %v5009
        %v5011 = vpop.xlane.xlu0 %5010
        %v5012 = vadd.f32 %v4768, %v4770
        %5013 = vadd.xlane.f32.xlu0 %v5012
        %v5014 = vpop.xlane.xlu0 %5013
        %v5015 = vadd.f32 %v4772, %v4774
        %5016 = vadd.xlane.f32.xlu0 %v5015
        %v5017 = vpop.xlane.xlu0 %5016
        %v5018 = vadd.f32 %v4776, %v4778
        %5019 = vadd.xlane.f32.xlu0 %v5018
        %v5020 = vpop.xlane.xlu0 %5019
        %v5021 = vadd.f32 %v4780, %v4782
        %5022 = vadd.xlane.f32.xlu0 %v5021
        %v5023 = vpop.xlane.xlu0 %5022
        %v5024 = vadd.f32 %v4784, %v4786
        %5025 = vadd.xlane.f32.xlu0 %v5024
        %v5026 = vpop.xlane.xlu0 %5025
        %v5027 = vadd.f32 %v4788, %v4790
        %5028 = vadd.xlane.f32.xlu0 %v5027
        %v5029 = vpop.xlane.xlu0 %5028
        %v5030 = vadd.f32 %v4792, %v4794
        %5031 = vadd.xlane.f32.xlu0 %v5030
        %v5032 = vpop.xlane.xlu0 %5031
        %v5033 = vadd.f32 %v4796, %v4798
        %5034 = vadd.xlane.f32.xlu0 %v5033
        %v5035 = vpop.xlane.xlu0 %5034
        %v5036 = vadd.f32 %v4800, %v4802
        %5037 = vadd.xlane.f32.xlu0 %v5036
        %v5038 = vpop.xlane.xlu0 %5037
        %v5039 = vadd.f32 %v4804, %v4806
        %5040 = vadd.xlane.f32.xlu0 %v5039
        %v5041 = vpop.xlane.xlu0 %5040
        %v5042 = vadd.f32 %v4808, %v4810
        %5043 = vadd.xlane.f32.xlu0 %v5042
        %v5044 = vpop.xlane.xlu0 %5043
        %v5045 = vadd.f32 %v4812, %v4814
        %5046 = vadd.xlane.f32.xlu0 %v5045
        %v5047 = vpop.xlane.xlu0 %5046
        %v5048 = vadd.f32 %v4816, %v4818
        %5049 = vadd.xlane.f32.xlu0 %v5048
        %v5050 = vpop.xlane.xlu0 %5049
        %v5051 = vadd.f32 %v4820, %v4822
        %5052 = vadd.xlane.f32.xlu0 %v5051
        %v5053 = vpop.xlane.xlu0 %5052
        %v5054 = vadd.f32 %v4824, %v4826
        %5055 = vadd.xlane.f32.xlu0 %v5054
        %v5056 = vpop.xlane.xlu0 %5055
        %v5057 = vadd.f32 %v4828, %v4830
        %5058 = vadd.xlane.f32.xlu0 %v5057
        %v5059 = vpop.xlane.xlu0 %5058
        %v5060 = vadd.f32 %v4832, %v4834
        %5061 = vadd.xlane.f32.xlu0 %v5060
        %v5062 = vpop.xlane.xlu0 %5061
        %v5063 = vadd.f32 %v4836, %v4838
        %5064 = vadd.xlane.f32.xlu0 %v5063
        %v5065 = vpop.xlane.xlu0 %5064
        %v5066 = vadd.f32 %v4840, %v4842
        %5067 = vadd.xlane.f32.xlu0 %v5066
        %v5068 = vpop.xlane.xlu0 %5067
        %v5069 = vadd.f32 %v4844, %v4846
        %5070 = vadd.xlane.f32.xlu0 %v5069
        %v5071 = vpop.xlane.xlu0 %5070
        %v5072 = vadd.f32 %v4848, %v4850
        %5073 = vadd.xlane.f32.xlu0 %v5072
        %v5074 = vpop.xlane.xlu0 %5073
        %v5075 = vadd.f32 %v4852, %v4854
        %5076 = vadd.xlane.f32.xlu0 %v5075
        %v5077 = vpop.xlane.xlu0 %5076
        %v5078 = vadd.f32 %v4856, %v4858
        %5079 = vadd.xlane.f32.xlu0 %v5078
        %v5080 = vpop.xlane.xlu0 %5079
        %v5081 = vadd.f32 %v4860, %v4862
        %5082 = vadd.xlane.f32.xlu0 %v5081
        %v5083 = vpop.xlane.xlu0 %5082
        %v5084 = vadd.f32 %v4864, %v4866
        %5085 = vadd.xlane.f32.xlu0 %v5084
        %v5086 = vpop.xlane.xlu0 %5085
        %v5087 = vadd.f32 %v4868, %v4870
        %5088 = vadd.xlane.f32.xlu0 %v5087
        %v5089 = vpop.xlane.xlu0 %5088
        %v5090 = vadd.f32 %v4872, %v4874
        %5091 = vadd.xlane.f32.xlu0 %v5090
        %v5092 = vpop.xlane.xlu0 %5091
        %v5093 = vadd.f32 %v4876, %v4878
        %5094 = vadd.xlane.f32.xlu0 %v5093
        %v5095 = vpop.xlane.xlu0 %5094
        %v5096 = vadd.f32 %v4880, %v4882
        %5097 = vadd.xlane.f32.xlu0 %v5096
        %v5098 = vpop.xlane.xlu0 %5097
        %v5099 = vadd.f32 %v4884, %v4886
        %5100 = vadd.xlane.f32.xlu0 %v5099
        %v5101 = vpop.xlane.xlu0 %5100
        %v5102 = vadd.f32 %v4888, %v4890
        %5103 = vadd.xlane.f32.xlu0 %v5102
        %v5104 = vpop.xlane.xlu0 %5103
        %v5105 = vadd.f32 %v4892, %v4894
        %5106 = vadd.xlane.f32.xlu0 %v5105
        %v5107 = vpop.xlane.xlu0 %5106
        %v5108 = vadd.f32 %v4896, %v4898
        %5109 = vadd.xlane.f32.xlu0 %v5108
        %v5110 = vpop.xlane.xlu0 %5109
        %v5111 = vadd.f32 %v4900, %v4902
        %5112 = vadd.xlane.f32.xlu0 %v5111
        %v5113 = vpop.xlane.xlu0 %5112
        %v5114 = vadd.f32 %v4904, %v4906
        %5115 = vadd.xlane.f32.xlu0 %v5114
        %v5116 = vpop.xlane.xlu0 %5115
        %v5117 = vadd.f32 %v4908, %v4910
        %5118 = vadd.xlane.f32.xlu0 %v5117
        %v5119 = vpop.xlane.xlu0 %5118
        %v5120 = vadd.f32 %v4912, %v4914
        %5121 = vadd.xlane.f32.xlu0 %v5120
        %v5122 = vpop.xlane.xlu0 %5121
        %v5123 = vadd.f32 %v4916, %v4918
        %5124 = vadd.xlane.f32.xlu0 %v5123
        %v5125 = vpop.xlane.xlu0 %5124
        %v5126 = vadd.f32 %v4920, %v4922
        %5127 = vadd.xlane.f32.xlu0 %v5126
        %v5128 = vpop.xlane.xlu0 %5127
        %v5129 = vadd.f32 %v4924, %v4926
        %5130 = vadd.xlane.f32.xlu0 %v5129
        %v5131 = vpop.xlane.xlu0 %5130
        %v5132 = vadd.f32 %v4928, %v4930
        %5133 = vadd.xlane.f32.xlu0 %v5132
        %v5134 = vpop.xlane.xlu0 %5133
        %v5135 = vadd.f32 %v4932, %v4934
        %5136 = vadd.xlane.f32.xlu0 %v5135
        %v5137 = vpop.xlane.xlu0 %5136
        %v5138 = vadd.f32 %v4936, %v4938
        %5139 = vadd.xlane.f32.xlu0 %v5138
        %v5140 = vpop.xlane.xlu0 %5139
        %v5141 = vadd.f32 %v4940, %v4942
        %5142 = vadd.xlane.f32.xlu0 %v5141
        %v5143 = vpop.xlane.xlu0 %5142
        %v5144 = vadd.f32 %v4944, %v4946
        %5145 = vadd.xlane.f32.xlu0 %v5144
        %v5146 = vpop.xlane.xlu0 %5145
        %v5147 = vadd.f32 %v4948, %v4950
        %5148 = vadd.xlane.f32.xlu0 %v5147
        %v5149 = vpop.xlane.xlu0 %5148
        %v5150 = vadd.f32 %v4952, %v4954
        %5151 = vadd.xlane.f32.xlu0 %v5150
        %v5152 = vpop.xlane.xlu0 %5151
        %v5153 = vadd.f32 %v4956, %v4958
        %5154 = vadd.xlane.f32.xlu0 %v5153
        %v5155 = vpop.xlane.xlu0 %5154
        %v5156 = vadd.f32 %v4960, %v4962
        %5157 = vadd.xlane.f32.xlu0 %v5156
        %v5158 = vpop.xlane.xlu0 %5157
        %v5159 = vadd.f32 %v4964, %v4966
        %5160 = vadd.xlane.f32.xlu0 %v5159
        %v5161 = vpop.xlane.xlu0 %5160
        %v5162 = vadd.f32 %v4968, %v4970
        %5163 = vadd.xlane.f32.xlu0 %v5162
        %v5164 = vpop.xlane.xlu0 %5163
        %v5165 = vadd.f32 %v4972, %v4974
        %5166 = vadd.xlane.f32.xlu0 %v5165
        %v5167 = vpop.xlane.xlu0 %5166
        %v5168 = vadd.f32 %v4976, %v4978
        %5169 = vadd.xlane.f32.xlu0 %v5168
        %v5170 = vpop.xlane.xlu0 %5169
        %v5171 = vrcp.pop %v4981
        %v5172 = vrcp.pop %v4984
        %v5173 = vrcp.pop %v4987
        %v5174 = vrcp.pop %v4990
        %v5175 = vrcp.pop %v4993
        %v5176 = vrcp.pop %v4996
        %v5177 = vrcp.pop %v4999
        %v5178 = vrcp.pop %v5002
        %v5179 = vrcp.pop %v5005
        %v5180 = vrcp.pop %v5008
        %v5181 = vrcp.pop %v5011
        %v5182 = vrcp.pop %v5014
        %v5183 = vrcp.pop %v5017
        %v5184 = vrcp.pop %v5020
        %v5185 = vrcp.pop %v5023
        %v5186 = vrcp.pop %v5026
        %v5187 = vrcp.pop %v5029
        %v5188 = vrcp.pop %v5032
        %v5189 = vrcp.pop %v5035
        %v5190 = vrcp.pop %v5038
        %v5191 = vrcp.pop %v5041
        %v5192 = vrcp.pop %v5044
        %v5193 = vrcp.pop %v5047
        %v5194 = vrcp.pop %v5050
        %v5195 = vrcp.pop %v5053
        %v5196 = vrcp.pop %v5056
        %v5197 = vrcp.pop %v5059
        %v5198 = vrcp.pop %v5062
        %v5199 = vrcp.pop %v5065
        %v5200 = vrcp.pop %v5068
        %v5201 = vrcp.pop %v5071
        %v5202 = vrcp.pop %v5074
        %v5203 = vrcp.pop %v5077
        %v5204 = vrcp.pop %v5080
        %v5205 = vrcp.pop %v5083
        %v5206 = vrcp.pop %v5086
        %v5207 = vrcp.pop %v5089
        %v5208 = vrcp.pop %v5092
        %v5209 = vrcp.pop %v5095
        %v5210 = vrcp.pop %v5098
        %v5211 = vrcp.pop %v5101
        %v5212 = vrcp.pop %v5104
        %v5213 = vrcp.pop %v5107
        %v5214 = vrcp.pop %v5110
        %v5215 = vrcp.pop %v5113
        %v5216 = vrcp.pop %v5116
        %v5217 = vrcp.pop %v5119
        %v5218 = vrcp.pop %v5122
        %v5219 = vrcp.pop %v5125
        %v5220 = vrcp.pop %v5128
        %v5221 = vrcp.pop %v5131
        %v5222 = vrcp.pop %v5134
        %v5223 = vrcp.pop %v5137
        %v5224 = vrcp.pop %v5140
        %v5225 = vrcp.pop %v5143
        %v5226 = vrcp.pop %v5146
        %v5227 = vrcp.pop %v5149
        %v5228 = vrcp.pop %v5152
        %v5229 = vrcp.pop %v5155
        %v5230 = vrcp.pop %v5158
        %v5231 = vrcp.pop %v5161
        %v5232 = vrcp.pop %v5164
        %v5233 = vrcp.pop %v5167
        %v5234 = vrcp.pop %v5170
        %v5235 = vmul.f32 %v4724, %v5171
        %v5236 = vmul.f32 %v4726, %v5171
        %v5237 = vmul.f32 %v4728, %v5172
        %v5238 = vmul.f32 %v4730, %v5172
        %v5239 = vmul.f32 %v4732, %v5173
        %v5240 = vmul.f32 %v4734, %v5173
        %v5241 = vmul.f32 %v4736, %v5174
        %v5242 = vmul.f32 %v4738, %v5174
        %v5243 = vmul.f32 %v4740, %v5175
        %v5244 = vmul.f32 %v4742, %v5175
        %v5245 = vmul.f32 %v4744, %v5176
        %v5246 = vmul.f32 %v4746, %v5176
        %v5247 = vmul.f32 %v4748, %v5177
        %v5248 = vmul.f32 %v4750, %v5177
        %v5249 = vmul.f32 %v4752, %v5178
        %v5250 = vmul.f32 %v4754, %v5178
        %v5251 = vmul.f32 %v4756, %v5179
        %v5252 = vmul.f32 %v4758, %v5179
        %v5253 = vmul.f32 %v4760, %v5180
        %v5254 = vmul.f32 %v4762, %v5180
        %v5255 = vmul.f32 %v4764, %v5181
        %v5256 = vmul.f32 %v4766, %v5181
        %v5257 = vmul.f32 %v4768, %v5182
        %v5258 = vmul.f32 %v4770, %v5182
        %v5259 = vmul.f32 %v4772, %v5183
        %v5260 = vmul.f32 %v4774, %v5183
        %v5261 = vmul.f32 %v4776, %v5184
        %v5262 = vmul.f32 %v4778, %v5184
        %v5263 = vmul.f32 %v4780, %v5185
        %v5264 = vmul.f32 %v4782, %v5185
        %v5265 = vmul.f32 %v4784, %v5186
        %v5266 = vmul.f32 %v4786, %v5186
        %v5267 = vmul.f32 %v4788, %v5187
        %v5268 = vmul.f32 %v4790, %v5187
        %v5269 = vmul.f32 %v4792, %v5188
        %v5270 = vmul.f32 %v4794, %v5188
        %v5271 = vmul.f32 %v4796, %v5189
        %v5272 = vmul.f32 %v4798, %v5189
        %v5273 = vmul.f32 %v4800, %v5190
        %v5274 = vmul.f32 %v4802, %v5190
        %v5275 = vmul.f32 %v4804, %v5191
        %v5276 = vmul.f32 %v4806, %v5191
        %v5277 = vmul.f32 %v4808, %v5192
        %v5278 = vmul.f32 %v4810, %v5192
        %v5279 = vmul.f32 %v4812, %v5193
        %v5280 = vmul.f32 %v4814, %v5193
        %v5281 = vmul.f32 %v4816, %v5194
        %v5282 = vmul.f32 %v4818, %v5194
        %v5283 = vmul.f32 %v4820, %v5195
        %v5284 = vmul.f32 %v4822, %v5195
        %v5285 = vmul.f32 %v4824, %v5196
        %v5286 = vmul.f32 %v4826, %v5196
        %v5287 = vmul.f32 %v4828, %v5197
        %v5288 = vmul.f32 %v4830, %v5197
        %v5289 = vmul.f32 %v4832, %v5198
        %v5290 = vmul.f32 %v4834, %v5198
        %v5291 = vmul.f32 %v4836, %v5199
        %v5292 = vmul.f32 %v4838, %v5199
        %v5293 = vmul.f32 %v4840, %v5200
        %v5294 = vmul.f32 %v4842, %v5200
        %v5295 = vmul.f32 %v4844, %v5201
        %v5296 = vmul.f32 %v4846, %v5201
        %v5297 = vmul.f32 %v4848, %v5202
        %v5298 = vmul.f32 %v4850, %v5202
        %v5299 = vmul.f32 %v4852, %v5203
        %v5300 = vmul.f32 %v4854, %v5203
        %v5301 = vmul.f32 %v4856, %v5204
        %v5302 = vmul.f32 %v4858, %v5204
        %v5303 = vmul.f32 %v4860, %v5205
        %v5304 = vmul.f32 %v4862, %v5205
        %v5305 = vmul.f32 %v4864, %v5206
        %v5306 = vmul.f32 %v4866, %v5206
        %v5307 = vmul.f32 %v4868, %v5207
        %v5308 = vmul.f32 %v4870, %v5207
        %v5309 = vmul.f32 %v4872, %v5208
        %v5310 = vmul.f32 %v4874, %v5208
        %v5311 = vmul.f32 %v4876, %v5209
        %v5312 = vmul.f32 %v4878, %v5209
        %v5313 = vmul.f32 %v4880, %v5210
        %v5314 = vmul.f32 %v4882, %v5210
        %v5315 = vmul.f32 %v4884, %v5211
        %v5316 = vmul.f32 %v4886, %v5211
        %v5317 = vmul.f32 %v4888, %v5212
        %v5318 = vmul.f32 %v4890, %v5212
        %v5319 = vmul.f32 %v4892, %v5213
        %v5320 = vmul.f32 %v4894, %v5213
        %v5321 = vmul.f32 %v4896, %v5214
        %v5322 = vmul.f32 %v4898, %v5214
        %v5323 = vmul.f32 %v4900, %v5215
        %v5324 = vmul.f32 %v4902, %v5215
        %v5325 = vmul.f32 %v4904, %v5216
        %v5326 = vmul.f32 %v4906, %v5216
        %v5327 = vmul.f32 %v4908, %v5217
        %v5328 = vmul.f32 %v4910, %v5217
        %v5329 = vmul.f32 %v4912, %v5218
        %v5330 = vmul.f32 %v4914, %v5218
        %v5331 = vmul.f32 %v4916, %v5219
        %v5332 = vmul.f32 %v4918, %v5219
        %v5333 = vmul.f32 %v4920, %v5220
        %v5334 = vmul.f32 %v4922, %v5220
        %v5335 = vmul.f32 %v4924, %v5221
        %v5336 = vmul.f32 %v4926, %v5221
        %v5337 = vmul.f32 %v4928, %v5222
        %v5338 = vmul.f32 %v4930, %v5222
        %v5339 = vmul.f32 %v4932, %v5223
        %v5340 = vmul.f32 %v4934, %v5223
        %v5341 = vmul.f32 %v4936, %v5224
        %v5342 = vmul.f32 %v4938, %v5224
        %v5343 = vmul.f32 %v4940, %v5225
        %v5344 = vmul.f32 %v4942, %v5225
        %v5345 = vmul.f32 %v4944, %v5226
        %v5346 = vmul.f32 %v4946, %v5226
        %v5347 = vmul.f32 %v4948, %v5227
        %v5348 = vmul.f32 %v4950, %v5227
        %v5349 = vmul.f32 %v4952, %v5228
        %v5350 = vmul.f32 %v4954, %v5228
        %v5351 = vmul.f32 %v4956, %v5229
        %v5352 = vmul.f32 %v4958, %v5229
        %v5353 = vmul.f32 %v4960, %v5230
        %v5354 = vmul.f32 %v4962, %v5230
        %v5355 = vmul.f32 %v4964, %v5231
        %v5356 = vmul.f32 %v4966, %v5231
        %v5357 = vmul.f32 %v4968, %v5232
        %v5358 = vmul.f32 %v4970, %v5232
        %v5359 = vmul.f32 %v4972, %v5233
        %v5360 = vmul.f32 %v4974, %v5233
        %v5361 = vmul.f32 %v4976, %v5234
        %v5362 = vmul.f32 %v4978, %v5234
        %v5363 = vpack.c.bf16 %v5237, %v5235
        %v5364 = vpack.c.bf16 %v5238, %v5236
        %v5365 = vpack.c.bf16 %v5241, %v5239
        %v5366 = vpack.c.bf16 %v5242, %v5240
        %v5367 = vpack.c.bf16 %v5245, %v5243
        %v5368 = vpack.c.bf16 %v5246, %v5244
        %v5369 = vpack.c.bf16 %v5249, %v5247
        %v5370 = vpack.c.bf16 %v5250, %v5248
        %v5371 = vpack.c.bf16 %v5253, %v5251
        %v5372 = vpack.c.bf16 %v5254, %v5252
        %v5373 = vpack.c.bf16 %v5257, %v5255
        %v5374 = vpack.c.bf16 %v5258, %v5256
        %v5375 = vpack.c.bf16 %v5261, %v5259
        %v5376 = vpack.c.bf16 %v5262, %v5260
        %v5377 = vpack.c.bf16 %v5265, %v5263
        %v5378 = vpack.c.bf16 %v5266, %v5264
        %v5379 = vpack.c.bf16 %v5269, %v5267
        %v5380 = vpack.c.bf16 %v5270, %v5268
        %v5381 = vpack.c.bf16 %v5273, %v5271
        %v5382 = vpack.c.bf16 %v5274, %v5272
        %v5383 = vpack.c.bf16 %v5277, %v5275
        %v5384 = vpack.c.bf16 %v5278, %v5276
        %v5385 = vpack.c.bf16 %v5281, %v5279
        %v5386 = vpack.c.bf16 %v5282, %v5280
        %v5387 = vpack.c.bf16 %v5285, %v5283
        %v5388 = vpack.c.bf16 %v5286, %v5284
        %v5389 = vpack.c.bf16 %v5289, %v5287
        %v5390 = vpack.c.bf16 %v5290, %v5288
        %v5391 = vpack.c.bf16 %v5293, %v5291
        %v5392 = vpack.c.bf16 %v5294, %v5292
        %v5393 = vpack.c.bf16 %v5297, %v5295
        %v5394 = vpack.c.bf16 %v5298, %v5296
        %v5395 = vpack.c.bf16 %v5301, %v5299
        %v5396 = vpack.c.bf16 %v5302, %v5300
        %v5397 = vpack.c.bf16 %v5305, %v5303
        %v5398 = vpack.c.bf16 %v5306, %v5304
        %v5399 = vpack.c.bf16 %v5309, %v5307
        %v5400 = vpack.c.bf16 %v5310, %v5308
        %v5401 = vpack.c.bf16 %v5313, %v5311
        %v5402 = vpack.c.bf16 %v5314, %v5312
        %v5403 = vpack.c.bf16 %v5317, %v5315
        %v5404 = vpack.c.bf16 %v5318, %v5316
        %v5405 = vpack.c.bf16 %v5321, %v5319
        %v5406 = vpack.c.bf16 %v5322, %v5320
        %v5407 = vpack.c.bf16 %v5325, %v5323
        %v5408 = vpack.c.bf16 %v5326, %v5324
        %v5409 = vpack.c.bf16 %v5329, %v5327
        %v5410 = vpack.c.bf16 %v5330, %v5328
        %v5411 = vpack.c.bf16 %v5333, %v5331
        %v5412 = vpack.c.bf16 %v5334, %v5332
        %v5413 = vpack.c.bf16 %v5337, %v5335
        %v5414 = vpack.c.bf16 %v5338, %v5336
        %v5415 = vpack.c.bf16 %v5341, %v5339
        %v5416 = vpack.c.bf16 %v5342, %v5340
        %v5417 = vpack.c.bf16 %v5345, %v5343
        %v5418 = vpack.c.bf16 %v5346, %v5344
        %v5419 = vpack.c.bf16 %v5349, %v5347
        %v5420 = vpack.c.bf16 %v5350, %v5348
        %v5421 = vpack.c.bf16 %v5353, %v5351
        %v5422 = vpack.c.bf16 %v5354, %v5352
        %v5423 = vpack.c.bf16 %v5357, %v5355
        %v5424 = vpack.c.bf16 %v5358, %v5356
        %v5425 = vpack.c.bf16 %v5361, %v5359
        %v5426 = vpack.c.bf16 %v5362, %v5360
        %v5427 = vld [vmem:[#allocation5] sm:$0xff]
        %v5428 = vld [vmem:[#allocation5 + $0x8] sm:$0xff]
        %v5429 = vld [vmem:[#allocation5 + $0x10] sm:$0xff]
        %v5430 = vld [vmem:[#allocation5 + $0x18] sm:$0xff]
        %v5431 = vld [vmem:[#allocation5 + $0x20] sm:$0xff]
        %v5432 = vld [vmem:[#allocation5 + $0x28] sm:$0xff]
        %v5433 = vld [vmem:[#allocation5 + $0x30] sm:$0xff]
        %v5434 = vld [vmem:[#allocation5 + $0x38] sm:$0xff]
        %v5435 = vld [vmem:[#allocation5 + $0x40] sm:$0xff]
        %v5436 = vld [vmem:[#allocation5 + $0x48] sm:$0xff]
        %v5437 = vld [vmem:[#allocation5 + $0x50] sm:$0xff]
        %v5438 = vld [vmem:[#allocation5 + $0x58] sm:$0xff]
        %v5439 = vld [vmem:[#allocation5 + $0x60] sm:$0xff]
        %v5440 = vld [vmem:[#allocation5 + $0x68] sm:$0xff]
        %v5441 = vld [vmem:[#allocation5 + $0x70] sm:$0xff]
        %v5442 = vld [vmem:[#allocation5 + $0x78] sm:$0xff]
        %v5443 = vld [vmem:[#allocation5 + $0x80] sm:$0xff]
        %v5444 = vld [vmem:[#allocation5 + $0x88] sm:$0xff]
        %v5445 = vld [vmem:[#allocation5 + $0x90] sm:$0xff]
        %v5446 = vld [vmem:[#allocation5 + $0x98] sm:$0xff]
        %v5447 = vld [vmem:[#allocation5 + $0xa0] sm:$0xff]
        %v5448 = vld [vmem:[#allocation5 + $0xa8] sm:$0xff]
        %v5449 = vld [vmem:[#allocation5 + $0xb0] sm:$0xff]
        %v5450 = vld [vmem:[#allocation5 + $0xb8] sm:$0xff]
        %v5451 = vld [vmem:[#allocation5 + $0xc0] sm:$0xff]
        %v5452 = vld [vmem:[#allocation5 + $0xc8] sm:$0xff]
        %v5453 = vld [vmem:[#allocation5 + $0xd0] sm:$0xff]
        %v5454 = vld [vmem:[#allocation5 + $0xd8] sm:$0xff]
        %v5455 = vld [vmem:[#allocation5 + $0xe0] sm:$0xff]
        %v5456 = vld [vmem:[#allocation5 + $0xe8] sm:$0xff]
        %v5457 = vld [vmem:[#allocation5 + $0xf0] sm:$0xff]
        %v5458 = vld [vmem:[#allocation5 + $0xf8] sm:$0xff]
        %v5459 = vld [vmem:[#allocation5 + $0x100] sm:$0xff]
        %v5460 = vld [vmem:[#allocation5 + $0x108] sm:$0xff]
        %v5461 = vld [vmem:[#allocation5 + $0x110] sm:$0xff]
        %v5462 = vld [vmem:[#allocation5 + $0x118] sm:$0xff]
        %v5463 = vld [vmem:[#allocation5 + $0x120] sm:$0xff]
        %v5464 = vld [vmem:[#allocation5 + $0x128] sm:$0xff]
        %v5465 = vld [vmem:[#allocation5 + $0x130] sm:$0xff]
        %v5466 = vld [vmem:[#allocation5 + $0x138] sm:$0xff]
        %v5467 = vld [vmem:[#allocation5 + $0x140] sm:$0xff]
        %v5468 = vld [vmem:[#allocation5 + $0x148] sm:$0xff]
        %v5469 = vld [vmem:[#allocation5 + $0x150] sm:$0xff]
        %v5470 = vld [vmem:[#allocation5 + $0x158] sm:$0xff]
        %v5471 = vld [vmem:[#allocation5 + $0x160] sm:$0xff]
        %v5472 = vld [vmem:[#allocation5 + $0x168] sm:$0xff]
        %v5473 = vld [vmem:[#allocation5 + $0x170] sm:$0xff]
        %v5474 = vld [vmem:[#allocation5 + $0x178] sm:$0xff]
        %v5475 = vld [vmem:[#allocation5 + $0x180] sm:$0xff]
        %v5476 = vld [vmem:[#allocation5 + $0x188] sm:$0xff]
        %v5477 = vld [vmem:[#allocation5 + $0x190] sm:$0xff]
        %v5478 = vld [vmem:[#allocation5 + $0x198] sm:$0xff]
        %v5479 = vld [vmem:[#allocation5 + $0x1a0] sm:$0xff]
        %v5480 = vld [vmem:[#allocation5 + $0x1a8] sm:$0xff]
        %v5481 = vld [vmem:[#allocation5 + $0x1b0] sm:$0xff]
        %v5482 = vld [vmem:[#allocation5 + $0x1b8] sm:$0xff]
        %v5483 = vld [vmem:[#allocation5 + $0x1c0] sm:$0xff]
        %v5484 = vld [vmem:[#allocation5 + $0x1c8] sm:$0xff]
        %v5485 = vld [vmem:[#allocation5 + $0x1d0] sm:$0xff]
        %v5486 = vld [vmem:[#allocation5 + $0x1d8] sm:$0xff]
        %v5487 = vld [vmem:[#allocation5 + $0x1e0] sm:$0xff]
        %v5488 = vld [vmem:[#allocation5 + $0x1e8] sm:$0xff]
        %v5489 = vld [vmem:[#allocation5 + $0x1f0] sm:$0xff]
        %v5490 = vld [vmem:[#allocation5 + $0x1f8] sm:$0xff]
        %5491 = vmatprep.subr.bf16.mxu0 0
        %5492 = vmatpush1.bf16.msra.mxu0 %v5427
        %5493 = vmatprep.subr.bf16.mxu0 0
        %5494 = vmatpush1.bf16.msra.mxu0 %v5428
        %5495 = vmatprep.subr.bf16.mxu0 0
        %5496 = vmatpush1.bf16.msra.mxu0 %v5429
        %5497 = vmatprep.subr.bf16.mxu0 0
        %5498 = vmatpush1.bf16.msra.mxu0 %v5430
        %5499 = vmatprep.subr.bf16.mxu0 0
        %5500 = vmatpush1.bf16.msra.mxu0 %v5431
        %5501 = vmatprep.subr.bf16.mxu0 0
        %5502 = vmatpush1.bf16.msra.mxu0 %v5432
        %5503 = vmatprep.subr.bf16.mxu0 0
        %5504 = vmatpush1.bf16.msra.mxu0 %v5433
        %5505 = vmatprep.subr.bf16.mxu0 0
        %5506 = vmatpush1.bf16.msra.mxu0 %v5434
        %5507 = vmatprep.subr.bf16.mxu0 0
        %5508 = vmatpush1.bf16.msra.mxu0 %v5435
        %5509 = vmatprep.subr.bf16.mxu0 0
        %5510 = vmatpush1.bf16.msra.mxu0 %v5436
        %5511 = vmatprep.subr.bf16.mxu0 0
        %5512 = vmatpush1.bf16.msra.mxu0 %v5437
        %5513 = vmatprep.subr.bf16.mxu0 0
        %5514 = vmatpush1.bf16.msra.mxu0 %v5438
        %5515 = vmatprep.subr.bf16.mxu0 0
        %5516 = vmatpush1.bf16.msra.mxu0 %v5439
        %5517 = vmatprep.subr.bf16.mxu0 0
        %5518 = vmatpush1.bf16.msra.mxu0 %v5440
        %5519 = vmatprep.subr.bf16.mxu0 0
        %5520 = vmatpush1.bf16.msra.mxu0 %v5441
        %5521 = vmatprep.subr.bf16.mxu0 0
        %5522 = vmatpush1.bf16.msra.mxu0 %v5442
        %5523 = vmatprep.mubr.bf16.mxu0 %v5364
        %5524 = vmatmul.mubr.bf16.gmra.mrb[0].mxu0 %v5363
        %v5525 = vpop.f32.mrb[0].mxu0
        %v5526 = vadd.f32 0.0, %v5525
        %v5527 = vpop.f32.mrb[0].mxu0
        %v5528 = vpop.f32.mrb[0].mxu0
        %v5529 = vadd.f32 0.0, %v5528
        %v5530 = vpop.f32.mrb[0].mxu0
        %5531 = vmatprep.mubr.bf16.mxu0 %v5366
        %5532 = vmatmul.mubr.bf16.gmra.mrb[0].mxu0 %v5365
        %v5533 = vpop.f32.mrb[0].mxu0
        %v5534 = vadd.f32 0.0, %v5533
        %v5535 = vpop.f32.mrb[0].mxu0
        %v5536 = vpop.f32.mrb[0].mxu0
        %v5537 = vadd.f32 0.0, %v5536
        %v5538 = vpop.f32.mrb[0].mxu0
        %5539 = vmatprep.mubr.bf16.mxu0 %v5368
        %5540 = vmatmul.mubr.bf16.gmra.mrb[0].mxu0 %v5367
        %v5541 = vpop.f32.mrb[0].mxu0
        %v5542 = vadd.f32 0.0, %v5541
        %v5543 = vpop.f32.mrb[0].mxu0
        %v5544 = vpop.f32.mrb[0].mxu0
        %v5545 = vadd.f32 0.0, %v5544
        %v5546 = vpop.f32.mrb[0].mxu0
        %5547 = vmatprep.mubr.bf16.mxu0 %v5370
        %5548 = vmatmul.mubr.bf16.gmra.mrb[0].mxu0 %v5369
        %v5549 = vpop.f32.mrb[0].mxu0
        %v5550 = vadd.f32 0.0, %v5549
        %v5551 = vpop.f32.mrb[0].mxu0
        %v5552 = vpop.f32.mrb[0].mxu0
        %v5553 = vadd.f32 0.0, %v5552
        %v5554 = vpop.f32.mrb[0].mxu0
        %5555 = vmatprep.mubr.bf16.mxu0 %v5372
        %5556 = vmatmul.mubr.bf16.gmra.mrb[0].mxu0 %v5371
        %v5557 = vpop.f32.mrb[0].mxu0
        %v5558 = vadd.f32 0.0, %v5557
        %v5559 = vpop.f32.mrb[0].mxu0
        %v5560 = vpop.f32.mrb[0].mxu0
        %v5561 = vadd.f32 0.0, %v5560
        %v5562 = vpop.f32.mrb[0].mxu0
        %5563 = vmatprep.mubr.bf16.mxu0 %v5374
        %5564 = vmatmul.mubr.bf16.gmra.mrb[0].mxu0 %v5373
        %v5565 = vpop.f32.mrb[0].mxu0
        %v5566 = vadd.f32 0.0, %v5565
        %v5567 = vpop.f32.mrb[0].mxu0
        %v5568 = vpop.f32.mrb[0].mxu0
        %v5569 = vadd.f32 0.0, %v5568
        %v5570 = vpop.f32.mrb[0].mxu0
        %5571 = vmatprep.mubr.bf16.mxu0 %v5376
        %5572 = vmatmul.mubr.bf16.gmra.mrb[0].mxu0 %v5375
        %v5573 = vpop.f32.mrb[0].mxu0
        %v5574 = vadd.f32 0.0, %v5573
        %v5575 = vpop.f32.mrb[0].mxu0
        %v5576 = vpop.f32.mrb[0].mxu0
        %v5577 = vadd.f32 0.0, %v5576
        %v5578 = vpop.f32.mrb[0].mxu0
        %5579 = vmatprep.mubr.bf16.mxu0 %v5378
        %5580 = vmatmul.mubr.bf16.gmra.mrb[0].mxu0 %v5377
        %v5581 = vpop.f32.mrb[0].mxu0
        %v5582 = vadd.f32 0.0, %v5581
        %v5583 = vpop.f32.mrb[0].mxu0
        %v5584 = vpop.f32.mrb[0].mxu0
        %v5585 = vadd.f32 0.0, %v5584
        %v5586 = vpop.f32.mrb[0].mxu0
        %5587 = vdwg.mxu0
        %5588 = vmatprep.subr.bf16.mxu0 0
        %5589 = vmatpush1.bf16.msra.mxu0 %v5443
        %5590 = vmatprep.subr.bf16.mxu0 0
        %5591 = vmatpush1.bf16.msra.mxu0 %v5444
        %5592 = vmatprep.subr.bf16.mxu0 0
        %5593 = vmatpush1.bf16.msra.mxu0 %v5445
        %5594 = vmatprep.subr.bf16.mxu0 0
        %5595 = vmatpush1.bf16.msra.mxu0 %v5446
        %5596 = vmatprep.subr.bf16.mxu0 0
        %5597 = vmatpush1.bf16.msra.mxu0 %v5447
        %5598 = vmatprep.subr.bf16.mxu0 0
        %5599 = vmatpush1.bf16.msra.mxu0 %v5448
        %5600 = vmatprep.subr.bf16.mxu0 0
        %5601 = vmatpush1.bf16.msra.mxu0 %v5449
        %5602 = vmatprep.subr.bf16.mxu0 0
        %5603 = vmatpush1.bf16.msra.mxu0 %v5450
        %5604 = vmatprep.subr.bf16.mxu0 0
        %5605 = vmatpush1.bf16.msra.mxu0 %v5451
        %5606 = vmatprep.subr.bf16.mxu0 0
        %5607 = vmatpush1.bf16.msra.mxu0 %v5452
        %5608 = vmatprep.subr.bf16.mxu0 0
        %5609 = vmatpush1.bf16.msra.mxu0 %v5453
        %5610 = vmatprep.subr.bf16.mxu0 0
        %5611 = vmatpush1.bf16.msra.mxu0 %v5454
        %5612 = vmatprep.subr.bf16.mxu0 0
        %5613 = vmatpush1.bf16.msra.mxu0 %v5455
        %5614 = vmatprep.subr.bf16.mxu0 0
        %5615 = vmatpush1.bf16.msra.mxu0 %v5456
        %5616 = vmatprep.subr.bf16.mxu0 0
        %5617 = vmatpush1.bf16.msra.mxu0 %v5457
        %5618 = vmatprep.subr.bf16.mxu0 0
        %5619 = vmatpush1.bf16.msra.mxu0 %v5458
        %5620 = vmatprep.mubr.bf16.mxu0 %v5380
        %5621 = vmatmul.mubr.bf16.gmra.mrb[0].mxu0 %v5379
        %v5622 = vpop.f32.mrb[0].mxu0
        %v5623 = vadd.f32 0.0, %v5622
        %v5624 = vpop.f32.mrb[0].mxu0
        %v5625 = vpop.f32.mrb[0].mxu0
        %v5626 = vadd.f32 0.0, %v5625
        %v5627 = vpop.f32.mrb[0].mxu0
        %5628 = vmatprep.mubr.bf16.mxu0 %v5382
        %5629 = vmatmul.mubr.bf16.gmra.mrb[0].mxu0 %v5381
        %v5630 = vpop.f32.mrb[0].mxu0
        %v5631 = vadd.f32 0.0, %v5630
        %v5632 = vpop.f32.mrb[0].mxu0
        %v5633 = vpop.f32.mrb[0].mxu0
        %v5634 = vadd.f32 0.0, %v5633
        %v5635 = vpop.f32.mrb[0].mxu0
        %5636 = vmatprep.mubr.bf16.mxu0 %v5384
        %5637 = vmatmul.mubr.bf16.gmra.mrb[0].mxu0 %v5383
        %v5638 = vpop.f32.mrb[0].mxu0
        %v5639 = vadd.f32 0.0, %v5638
        %v5640 = vpop.f32.mrb[0].mxu0
        %v5641 = vpop.f32.mrb[0].mxu0
        %v5642 = vadd.f32 0.0, %v5641
        %v5643 = vpop.f32.mrb[0].mxu0
        %5644 = vmatprep.mubr.bf16.mxu0 %v5386
        %5645 = vmatmul.mubr.bf16.gmra.mrb[0].mxu0 %v5385
        %v5646 = vpop.f32.mrb[0].mxu0
        %v5647 = vadd.f32 0.0, %v5646
        %v5648 = vpop.f32.mrb[0].mxu0
        %v5649 = vpop.f32.mrb[0].mxu0
        %v5650 = vadd.f32 0.0, %v5649
        %v5651 = vpop.f32.mrb[0].mxu0
        %5652 = vmatprep.mubr.bf16.mxu0 %v5388
        %5653 = vmatmul.mubr.bf16.gmra.mrb[0].mxu0 %v5387
        %v5654 = vpop.f32.mrb[0].mxu0
        %v5655 = vadd.f32 0.0, %v5654
        %v5656 = vpop.f32.mrb[0].mxu0
        %v5657 = vpop.f32.mrb[0].mxu0
        %v5658 = vadd.f32 0.0, %v5657
        %v5659 = vpop.f32.mrb[0].mxu0
        %5660 = vmatprep.mubr.bf16.mxu0 %v5390
        %5661 = vmatmul.mubr.bf16.gmra.mrb[0].mxu0 %v5389
        %v5662 = vpop.f32.mrb[0].mxu0
        %v5663 = vadd.f32 0.0, %v5662
        %v5664 = vpop.f32.mrb[0].mxu0
        %v5665 = vpop.f32.mrb[0].mxu0
        %v5666 = vadd.f32 0.0, %v5665
        %v5667 = vpop.f32.mrb[0].mxu0
        %5668 = vmatprep.mubr.bf16.mxu0 %v5392
        %5669 = vmatmul.mubr.bf16.gmra.mrb[0].mxu0 %v5391
        %v5670 = vpop.f32.mrb[0].mxu0
        %v5671 = vadd.f32 0.0, %v5670
        %v5672 = vpop.f32.mrb[0].mxu0
        %v5673 = vpop.f32.mrb[0].mxu0
        %v5674 = vadd.f32 0.0, %v5673
        %v5675 = vpop.f32.mrb[0].mxu0
        %5676 = vmatprep.mubr.bf16.mxu0 %v5394
        %5677 = vmatmul.mubr.bf16.gmra.mrb[0].mxu0 %v5393
        %v5678 = vpop.f32.mrb[0].mxu0
        %v5679 = vadd.f32 0.0, %v5678
        %v5680 = vpop.f32.mrb[0].mxu0
        %v5681 = vpop.f32.mrb[0].mxu0
        %v5682 = vadd.f32 0.0, %v5681
        %v5683 = vpop.f32.mrb[0].mxu0
        %5684 = vdwg.mxu0
        %5685 = vmatprep.subr.bf16.mxu0 0
        %5686 = vmatpush1.bf16.msra.mxu0 %v5459
        %5687 = vmatprep.subr.bf16.mxu0 0
        %5688 = vmatpush1.bf16.msra.mxu0 %v5460
        %5689 = vmatprep.subr.bf16.mxu0 0
        %5690 = vmatpush1.bf16.msra.mxu0 %v5461
        %5691 = vmatprep.subr.bf16.mxu0 0
        %5692 = vmatpush1.bf16.msra.mxu0 %v5462
        %5693 = vmatprep.subr.bf16.mxu0 0
        %5694 = vmatpush1.bf16.msra.mxu0 %v5463
        %5695 = vmatprep.subr.bf16.mxu0 0
        %5696 = vmatpush1.bf16.msra.mxu0 %v5464
        %5697 = vmatprep.subr.bf16.mxu0 0
        %5698 = vmatpush1.bf16.msra.mxu0 %v5465
        %5699 = vmatprep.subr.bf16.mxu0 0
        %5700 = vmatpush1.bf16.msra.mxu0 %v5466
        %5701 = vmatprep.subr.bf16.mxu0 0
        %5702 = vmatpush1.bf16.msra.mxu0 %v5467
        %5703 = vmatprep.subr.bf16.mxu0 0
        %5704 = vmatpush1.bf16.msra.mxu0 %v5468
        %5705 = vmatprep.subr.bf16.mxu0 0
        %5706 = vmatpush1.bf16.msra.mxu0 %v5469
        %5707 = vmatprep.subr.bf16.mxu0 0
        %5708 = vmatpush1.bf16.msra.mxu0 %v5470
        %5709 = vmatprep.subr.bf16.mxu0 0
        %5710 = vmatpush1.bf16.msra.mxu0 %v5471
        %5711 = vmatprep.subr.bf16.mxu0 0
        %5712 = vmatpush1.bf16.msra.mxu0 %v5472
        %5713 = vmatprep.subr.bf16.mxu0 0
        %5714 = vmatpush1.bf16.msra.mxu0 %v5473
        %5715 = vmatprep.subr.bf16.mxu0 0
        %5716 = vmatpush1.bf16.msra.mxu0 %v5474
        %5717 = vmatprep.mubr.bf16.mxu0 %v5396
        %5718 = vmatmul.mubr.bf16.gmra.mrb[0].mxu0 %v5395
        %v5719 = vpop.f32.mrb[0].mxu0
        %v5720 = vadd.f32 0.0, %v5719
        %v5721 = vpop.f32.mrb[0].mxu0
        %v5722 = vpop.f32.mrb[0].mxu0
        %v5723 = vadd.f32 0.0, %v5722
        %v5724 = vpop.f32.mrb[0].mxu0
        %5725 = vmatprep.mubr.bf16.mxu0 %v5398
        %5726 = vmatmul.mubr.bf16.gmra.mrb[0].mxu0 %v5397
        %v5727 = vpop.f32.mrb[0].mxu0
        %v5728 = vadd.f32 0.0, %v5727
        %v5729 = vpop.f32.mrb[0].mxu0
        %v5730 = vpop.f32.mrb[0].mxu0
        %v5731 = vadd.f32 0.0, %v5730
        %v5732 = vpop.f32.mrb[0].mxu0
        %5733 = vmatprep.mubr.bf16.mxu0 %v5400
        %5734 = vmatmul.mubr.bf16.gmra.mrb[0].mxu0 %v5399
        %v5735 = vpop.f32.mrb[0].mxu0
        %v5736 = vadd.f32 0.0, %v5735
        %v5737 = vpop.f32.mrb[0].mxu0
        %v5738 = vpop.f32.mrb[0].mxu0
        %v5739 = vadd.f32 0.0, %v5738
        %v5740 = vpop.f32.mrb[0].mxu0
        %5741 = vmatprep.mubr.bf16.mxu0 %v5402
        %5742 = vmatmul.mubr.bf16.gmra.mrb[0].mxu0 %v5401
        %v5743 = vpop.f32.mrb[0].mxu0
        %v5744 = vadd.f32 0.0, %v5743
        %v5745 = vpop.f32.mrb[0].mxu0
        %v5746 = vpop.f32.mrb[0].mxu0
        %v5747 = vadd.f32 0.0, %v5746
        %v5748 = vpop.f32.mrb[0].mxu0
        %5749 = vmatprep.mubr.bf16.mxu0 %v5404
        %5750 = vmatmul.mubr.bf16.gmra.mrb[0].mxu0 %v5403
        %v5751 = vpop.f32.mrb[0].mxu0
        %v5752 = vadd.f32 0.0, %v5751
        %v5753 = vpop.f32.mrb[0].mxu0
        %v5754 = vpop.f32.mrb[0].mxu0
        %v5755 = vadd.f32 0.0, %v5754
        %v5756 = vpop.f32.mrb[0].mxu0
        %5757 = vmatprep.mubr.bf16.mxu0 %v5406
        %5758 = vmatmul.mubr.bf16.gmra.mrb[0].mxu0 %v5405
        %v5759 = vpop.f32.mrb[0].mxu0
        %v5760 = vadd.f32 0.0, %v5759
        %v5761 = vpop.f32.mrb[0].mxu0
        %v5762 = vpop.f32.mrb[0].mxu0
        %v5763 = vadd.f32 0.0, %v5762
        %v5764 = vpop.f32.mrb[0].mxu0
        %5765 = vmatprep.mubr.bf16.mxu0 %v5408
        %5766 = vmatmul.mubr.bf16.gmra.mrb[0].mxu0 %v5407
        %v5767 = vpop.f32.mrb[0].mxu0
        %v5768 = vadd.f32 0.0, %v5767
        %v5769 = vpop.f32.mrb[0].mxu0
        %v5770 = vpop.f32.mrb[0].mxu0
        %v5771 = vadd.f32 0.0, %v5770
        %v5772 = vpop.f32.mrb[0].mxu0
        %5773 = vmatprep.mubr.bf16.mxu0 %v5410
        %5774 = vmatmul.mubr.bf16.gmra.mrb[0].mxu0 %v5409
        %v5775 = vpop.f32.mrb[0].mxu0
        %v5776 = vadd.f32 0.0, %v5775
        %v5777 = vpop.f32.mrb[0].mxu0
        %v5778 = vpop.f32.mrb[0].mxu0
        %v5779 = vadd.f32 0.0, %v5778
        %v5780 = vpop.f32.mrb[0].mxu0
        %5781 = vdwg.mxu0
        %5782 = vmatprep.subr.bf16.mxu0 0
        %5783 = vmatpush1.bf16.msra.mxu0 %v5475
        %5784 = vmatprep.subr.bf16.mxu0 0
        %5785 = vmatpush1.bf16.msra.mxu0 %v5476
        %5786 = vmatprep.subr.bf16.mxu0 0
        %5787 = vmatpush1.bf16.msra.mxu0 %v5477
        %5788 = vmatprep.subr.bf16.mxu0 0
        %5789 = vmatpush1.bf16.msra.mxu0 %v5478
        %5790 = vmatprep.subr.bf16.mxu0 0
        %5791 = vmatpush1.bf16.msra.mxu0 %v5479
        %5792 = vmatprep.subr.bf16.mxu0 0
        %5793 = vmatpush1.bf16.msra.mxu0 %v5480
        %5794 = vmatprep.subr.bf16.mxu0 0
        %5795 = vmatpush1.bf16.msra.mxu0 %v5481
        %5796 = vmatprep.subr.bf16.mxu0 0
        %5797 = vmatpush1.bf16.msra.mxu0 %v5482
        %5798 = vmatprep.subr.bf16.mxu0 0
        %5799 = vmatpush1.bf16.msra.mxu0 %v5483
        %5800 = vmatprep.subr.bf16.mxu0 0
        %5801 = vmatpush1.bf16.msra.mxu0 %v5484
        %5802 = vmatprep.subr.bf16.mxu0 0
        %5803 = vmatpush1.bf16.msra.mxu0 %v5485
        %5804 = vmatprep.subr.bf16.mxu0 0
        %5805 = vmatpush1.bf16.msra.mxu0 %v5486
        %5806 = vmatprep.subr.bf16.mxu0 0
        %5807 = vmatpush1.bf16.msra.mxu0 %v5487
        %5808 = vmatprep.subr.bf16.mxu0 0
        %5809 = vmatpush1.bf16.msra.mxu0 %v5488
        %5810 = vmatprep.subr.bf16.mxu0 0
        %5811 = vmatpush1.bf16.msra.mxu0 %v5489
        %5812 = vmatprep.subr.bf16.mxu0 0
        %5813 = vmatpush1.bf16.msra.mxu0 %v5490
        %5814 = vmatprep.mubr.bf16.mxu0 %v5412
        %5815 = vmatmul.mubr.bf16.gmra.mrb[0].mxu0 %v5411
        %v5816 = vpop.f32.mrb[0].mxu0
        %v5817 = vadd.f32 0.0, %v5816
        %v5818 = vpop.f32.mrb[0].mxu0
        %v5819 = vpop.f32.mrb[0].mxu0
        %v5820 = vadd.f32 0.0, %v5819
        %v5821 = vpop.f32.mrb[0].mxu0
        %5822 = vmatprep.mubr.bf16.mxu0 %v5414
        %5823 = vmatmul.mubr.bf16.gmra.mrb[0].mxu0 %v5413
        %v5824 = vpop.f32.mrb[0].mxu0
        %v5825 = vadd.f32 0.0, %v5824
        %v5826 = vpop.f32.mrb[0].mxu0
        %v5827 = vpop.f32.mrb[0].mxu0
        %v5828 = vadd.f32 0.0, %v5827
        %v5829 = vpop.f32.mrb[0].mxu0
        %5830 = vmatprep.mubr.bf16.mxu0 %v5416
        %5831 = vmatmul.mubr.bf16.gmra.mrb[0].mxu0 %v5415
        %v5832 = vpop.f32.mrb[0].mxu0
        %v5833 = vadd.f32 0.0, %v5832
        %v5834 = vpop.f32.mrb[0].mxu0
        %v5835 = vpop.f32.mrb[0].mxu0
        %v5836 = vadd.f32 0.0, %v5835
        %v5837 = vpop.f32.mrb[0].mxu0
        %5838 = vmatprep.mubr.bf16.mxu0 %v5418
        %5839 = vmatmul.mubr.bf16.gmra.mrb[0].mxu0 %v5417
        %v5840 = vpop.f32.mrb[0].mxu0
        %v5841 = vadd.f32 0.0, %v5840
        %v5842 = vpop.f32.mrb[0].mxu0
        %v5843 = vpop.f32.mrb[0].mxu0
        %v5844 = vadd.f32 0.0, %v5843
        %v5845 = vpop.f32.mrb[0].mxu0
        %5846 = vmatprep.mubr.bf16.mxu0 %v5420
        %5847 = vmatmul.mubr.bf16.gmra.mrb[0].mxu0 %v5419
        %v5848 = vpop.f32.mrb[0].mxu0
        %v5849 = vadd.f32 0.0, %v5848
        %v5850 = vpop.f32.mrb[0].mxu0
        %v5851 = vpop.f32.mrb[0].mxu0
        %v5852 = vadd.f32 0.0, %v5851
        %v5853 = vpop.f32.mrb[0].mxu0
        %5854 = vmatprep.mubr.bf16.mxu0 %v5422
        %5855 = vmatmul.mubr.bf16.gmra.mrb[0].mxu0 %v5421
        %v5856 = vpop.f32.mrb[0].mxu0
        %v5857 = vadd.f32 0.0, %v5856
        %v5858 = vpop.f32.mrb[0].mxu0
        %v5859 = vpop.f32.mrb[0].mxu0
        %v5860 = vadd.f32 0.0, %v5859
        %v5861 = vpop.f32.mrb[0].mxu0
        %5862 = vmatprep.mubr.bf16.mxu0 %v5424
        %5863 = vmatmul.mubr.bf16.gmra.mrb[0].mxu0 %v5423
        %v5864 = vpop.f32.mrb[0].mxu0
        %v5865 = vadd.f32 0.0, %v5864
        %v5866 = vpop.f32.mrb[0].mxu0
        %v5867 = vpop.f32.mrb[0].mxu0
        %v5868 = vadd.f32 0.0, %v5867
        %v5869 = vpop.f32.mrb[0].mxu0
        %5870 = vmatprep.mubr.bf16.mxu0 %v5426
        %5871 = vmatmul.mubr.bf16.gmra.mrb[0].mxu0 %v5425
        %v5872 = vpop.f32.mrb[0].mxu0
        %v5873 = vadd.f32 0.0, %v5872
        %v5874 = vpop.f32.mrb[0].mxu0
        %v5875 = vpop.f32.mrb[0].mxu0
        %v5876 = vadd.f32 0.0, %v5875
        %v5877 = vpop.f32.mrb[0].mxu0
        %5878 = vdwg.mxu0
        %v5879 = vpack.c.bf16 %v5529, %v5526
        %v5880 = vpack.c.bf16 %v5537, %v5534
        %v5881 = vpack.c.bf16 %v5545, %v5542
        %v5882 = vpack.c.bf16 %v5553, %v5550
        %v5883 = vpack.c.bf16 %v5561, %v5558
        %v5884 = vpack.c.bf16 %v5569, %v5566
        %v5885 = vpack.c.bf16 %v5577, %v5574
        %v5886 = vpack.c.bf16 %v5585, %v5582
        %v5887 = vpack.c.bf16 %v5626, %v5623
        %v5888 = vpack.c.bf16 %v5634, %v5631
        %v5889 = vpack.c.bf16 %v5642, %v5639
        %v5890 = vpack.c.bf16 %v5650, %v5647
        %v5891 = vpack.c.bf16 %v5658, %v5655
        %v5892 = vpack.c.bf16 %v5666, %v5663
        %v5893 = vpack.c.bf16 %v5674, %v5671
        %v5894 = vpack.c.bf16 %v5682, %v5679
        %v5895 = vpack.c.bf16 %v5723, %v5720
        %v5896 = vpack.c.bf16 %v5731, %v5728
        %v5897 = vpack.c.bf16 %v5739, %v5736
        %v5898 = vpack.c.bf16 %v5747, %v5744
        %v5899 = vpack.c.bf16 %v5755, %v5752
        %v5900 = vpack.c.bf16 %v5763, %v5760
        %v5901 = vpack.c.bf16 %v5771, %v5768
        %v5902 = vpack.c.bf16 %v5779, %v5776
        %v5903 = vpack.c.bf16 %v5820, %v5817
        %v5904 = vpack.c.bf16 %v5828, %v5825
        %v5905 = vpack.c.bf16 %v5836, %v5833
        %v5906 = vpack.c.bf16 %v5844, %v5841
        %v5907 = vpack.c.bf16 %v5852, %v5849
        %v5908 = vpack.c.bf16 %v5860, %v5857
        %v5909 = vpack.c.bf16 %v5868, %v5865
        %v5910 = vpack.c.bf16 %v5876, %v5873
        %v5911 = vld [vmem:[#allocation14] sm:$0xf]
        %v5912 = vld [vmem:[#allocation14 + $0x4] sm:$0xf]
        %v5913 = vld [vmem:[#allocation14 + $0x8] sm:$0xf]
        %v5914 = vld [vmem:[#allocation14 + $0xc] sm:$0xf]
        %v5915 = vld [vmem:[#allocation14 + $0x10] sm:$0xf]
        %v5916 = vld [vmem:[#allocation14 + $0x14] sm:$0xf]
        %v5917 = vld [vmem:[#allocation14 + $0x18] sm:$0xf]
        %v5918 = vld [vmem:[#allocation14 + $0x1c] sm:$0xf]
        %v5919 = vld [vmem:[#allocation14 + $0x20] sm:$0xf]
        %v5920 = vld [vmem:[#allocation14 + $0x24] sm:$0xf]
        %v5921 = vld [vmem:[#allocation14 + $0x28] sm:$0xf]
        %v5922 = vld [vmem:[#allocation14 + $0x2c] sm:$0xf]
        %v5923 = vld [vmem:[#allocation14 + $0x30] sm:$0xf]
        %v5924 = vld [vmem:[#allocation14 + $0x34] sm:$0xf]
        %v5925 = vld [vmem:[#allocation14 + $0x38] sm:$0xf]
        %v5926 = vld [vmem:[#allocation14 + $0x3c] sm:$0xf]
        %v5931 = vunpack.c.l.b16 %v5911
        %v5932 = vunpack.c.l.b16 %v5912
        %v5933 = vunpack.c.l.b16 %v5913
        %v5934 = vunpack.c.l.b16 %v5914
        %v5935 = vpack.c.b16 %v5932, %v5931
        %v5936 = vpack.c.b16 %v5934, %v5933
        %v5940 = vsel %vm3534, %v5879, 0
        %v5943 = vsel %vm3534, %v5880, 0
        %v5946 = vsel %vm3534, %v5881, 0
        %v5949 = vsel %vm3534, %v5882, 0
        %v5952 = vsel %vm3534, %v5883, 0
        %v5955 = vsel %vm3534, %v5884, 0
        %v5958 = vsel %vm3534, %v5885, 0
        %v5961 = vsel %vm3534, %v5886, 0
        %5963 = vmatprep.subr.bf16.mxu0 0
        %5964 = vmatpush1.bf16.msra.mxu0 %v5935
        %5965 = vmatprep.subr.bf16.mxu0 0
        %5966 = vmatpush1.bf16.msra.mxu0 %v5936
        %5967 = vmatprep.subr.bf16.mxu0 0
        %5968 = vmatpush1.bf16.msra.mxu0 0
        %5969 = vmatprep.subr.bf16.mxu0 0
        %5970 = vmatpush1.bf16.msra.mxu0 0
        %5971 = vmatprep.subr.bf16.mxu0 0
        %5972 = vmatpush1.bf16.msra.mxu0 0
        %5973 = vmatprep.subr.bf16.mxu0 0
        %5974 = vmatpush1.bf16.msra.mxu0 0
        %5975 = vmatprep.subr.bf16.mxu0 0
        %5976 = vmatpush1.bf16.msra.mxu0 0
        %5977 = vmatprep.subr.bf16.mxu0 0
        %5978 = vmatpush1.bf16.msra.mxu0 0
        %5979 = vmatprep.subr.bf16.mxu0 0
        %5980 = vmatpush1.bf16.msra.mxu0 0
        %5981 = vmatprep.subr.bf16.mxu0 0
        %5982 = vmatpush1.bf16.msra.mxu0 0
        %5983 = vmatprep.subr.bf16.mxu0 0
        %5984 = vmatpush1.bf16.msra.mxu0 0
        %5985 = vmatprep.subr.bf16.mxu0 0
        %5986 = vmatpush1.bf16.msra.mxu0 0
        %5987 = vmatprep.subr.bf16.mxu0 0
        %5988 = vmatpush1.bf16.msra.mxu0 0
        %5989 = vmatprep.subr.bf16.mxu0 0
        %5990 = vmatpush1.bf16.msra.mxu0 0
        %5991 = vmatprep.subr.bf16.mxu0 0
        %5992 = vmatpush1.bf16.msra.mxu0 0
        %5993 = vmatprep.subr.bf16.mxu0 0
        %5994 = vmatpush1.bf16.msra.mxu0 0
        %5995 = vmatprep.mubr.bf16.mxu0 0
        %5996 = vmatmul.mubr.bf16.gmra.mrb[0].mxu0 %v5940
        %v5997 = vpop.f32.mrb[0].mxu0
        %v5998 = vadd.f32 0.0, %v5997
        %v5999 = vpop.f32.mrb[0].mxu0
        %v6000 = vpop.f32.mrb[0].mxu0
        %v6001 = vadd.f32 0.0, %v6000
        %v6002 = vpop.f32.mrb[0].mxu0
        %6003 = vmatprep.mubr.bf16.mxu0 0
        %6004 = vmatmul.mubr.bf16.gmra.mrb[0].mxu0 %v5943
        %v6005 = vpop.f32.mrb[0].mxu0
        %v6006 = vadd.f32 0.0, %v6005
        %v6007 = vpop.f32.mrb[0].mxu0
        %v6008 = vpop.f32.mrb[0].mxu0
        %v6009 = vadd.f32 0.0, %v6008
        %v6010 = vpop.f32.mrb[0].mxu0
        %6011 = vmatprep.mubr.bf16.mxu0 0
        %6012 = vmatmul.mubr.bf16.gmra.mrb[0].mxu0 %v5946
        %v6013 = vpop.f32.mrb[0].mxu0
        %v6014 = vadd.f32 0.0, %v6013
        %v6015 = vpop.f32.mrb[0].mxu0
        %v6016 = vpop.f32.mrb[0].mxu0
        %v6017 = vadd.f32 0.0, %v6016
        %v6018 = vpop.f32.mrb[0].mxu0
        %6019 = vmatprep.mubr.bf16.mxu0 0
        %6020 = vmatmul.mubr.bf16.gmra.mrb[0].mxu0 %v5949
        %v6021 = vpop.f32.mrb[0].mxu0
        %v6022 = vadd.f32 0.0, %v6021
        %v6023 = vpop.f32.mrb[0].mxu0
        %v6024 = vpop.f32.mrb[0].mxu0
        %v6025 = vadd.f32 0.0, %v6024
        %v6026 = vpop.f32.mrb[0].mxu0
        %6027 = vmatprep.mubr.bf16.mxu0 0
        %6028 = vmatmul.mubr.bf16.gmra.mrb[0].mxu0 %v5952
        %v6029 = vpop.f32.mrb[0].mxu0
        %v6030 = vadd.f32 0.0, %v6029
        %v6031 = vpop.f32.mrb[0].mxu0
        %v6032 = vpop.f32.mrb[0].mxu0
        %v6033 = vadd.f32 0.0, %v6032
        %v6034 = vpop.f32.mrb[0].mxu0
        %6035 = vmatprep.mubr.bf16.mxu0 0
        %6036 = vmatmul.mubr.bf16.gmra.mrb[0].mxu0 %v5955
        %v6037 = vpop.f32.mrb[0].mxu0
        %v6038 = vadd.f32 0.0, %v6037
        %v6039 = vpop.f32.mrb[0].mxu0
        %v6040 = vpop.f32.mrb[0].mxu0
        %v6041 = vadd.f32 0.0, %v6040
        %v6042 = vpop.f32.mrb[0].mxu0
        %6043 = vmatprep.mubr.bf16.mxu0 0
        %6044 = vmatmul.mubr.bf16.gmra.mrb[0].mxu0 %v5958
        %v6045 = vpop.f32.mrb[0].mxu0
        %v6046 = vadd.f32 0.0, %v6045
        %v6047 = vpop.f32.mrb[0].mxu0
        %v6048 = vpop.f32.mrb[0].mxu0
        %v6049 = vadd.f32 0.0, %v6048
        %v6050 = vpop.f32.mrb[0].mxu0
        %6051 = vmatprep.mubr.bf16.mxu0 0
        %6052 = vmatmul.mubr.bf16.gmra.mrb[0].mxu0 %v5961
        %v6053 = vpop.f32.mrb[0].mxu0
        %v6054 = vadd.f32 0.0, %v6053
        %v6055 = vpop.f32.mrb[0].mxu0
        %v6056 = vpop.f32.mrb[0].mxu0
        %v6057 = vadd.f32 0.0, %v6056
        %v6058 = vpop.f32.mrb[0].mxu0
        %6059 = vdwg.mxu0
        %v6064 = vunpack.c.l.b16 %v5915
        %v6065 = vunpack.c.l.b16 %v5916
        %v6066 = vunpack.c.l.b16 %v5917
        %v6067 = vunpack.c.l.b16 %v5918
        %v6068 = vpack.c.b16 %v6065, %v6064
        %v6069 = vpack.c.b16 %v6067, %v6066
        %v6073 = vsel %vm3534, %v5887, 0
        %v6076 = vsel %vm3534, %v5888, 0
        %v6079 = vsel %vm3534, %v5889, 0
        %v6082 = vsel %vm3534, %v5890, 0
        %v6085 = vsel %vm3534, %v5891, 0
        %v6088 = vsel %vm3534, %v5892, 0
        %v6091 = vsel %vm3534, %v5893, 0
        %v6094 = vsel %vm3534, %v5894, 0
        %6096 = vmatprep.subr.bf16.mxu0 0
        %6097 = vmatpush1.bf16.msra.mxu0 %v6068
        %6098 = vmatprep.subr.bf16.mxu0 0
        %6099 = vmatpush1.bf16.msra.mxu0 %v6069
        %6100 = vmatprep.subr.bf16.mxu0 0
        %6101 = vmatpush1.bf16.msra.mxu0 0
        %6102 = vmatprep.subr.bf16.mxu0 0
        %6103 = vmatpush1.bf16.msra.mxu0 0
        %6104 = vmatprep.subr.bf16.mxu0 0
        %6105 = vmatpush1.bf16.msra.mxu0 0
        %6106 = vmatprep.subr.bf16.mxu0 0
        %6107 = vmatpush1.bf16.msra.mxu0 0
        %6108 = vmatprep.subr.bf16.mxu0 0
        %6109 = vmatpush1.bf16.msra.mxu0 0
        %6110 = vmatprep.subr.bf16.mxu0 0
        %6111 = vmatpush1.bf16.msra.mxu0 0
        %6112 = vmatprep.subr.bf16.mxu0 0
        %6113 = vmatpush1.bf16.msra.mxu0 0
        %6114 = vmatprep.subr.bf16.mxu0 0
        %6115 = vmatpush1.bf16.msra.mxu0 0
        %6116 = vmatprep.subr.bf16.mxu0 0
        %6117 = vmatpush1.bf16.msra.mxu0 0
        %6118 = vmatprep.subr.bf16.mxu0 0
        %6119 = vmatpush1.bf16.msra.mxu0 0
        %6120 = vmatprep.subr.bf16.mxu0 0
        %6121 = vmatpush1.bf16.msra.mxu0 0
        %6122 = vmatprep.subr.bf16.mxu0 0
        %6123 = vmatpush1.bf16.msra.mxu0 0
        %6124 = vmatprep.subr.bf16.mxu0 0
        %6125 = vmatpush1.bf16.msra.mxu0 0
        %6126 = vmatprep.subr.bf16.mxu0 0
        %6127 = vmatpush1.bf16.msra.mxu0 0
        %6128 = vmatprep.mubr.bf16.mxu0 0
        %6129 = vmatmul.mubr.bf16.gmra.mrb[0].mxu0 %v6073
        %v6130 = vpop.f32.mrb[0].mxu0
        %v6131 = vadd.f32 0.0, %v6130
        %v6132 = vpop.f32.mrb[0].mxu0
        %v6133 = vpop.f32.mrb[0].mxu0
        %v6134 = vadd.f32 0.0, %v6133
        %v6135 = vpop.f32.mrb[0].mxu0
        %6136 = vmatprep.mubr.bf16.mxu0 0
        %6137 = vmatmul.mubr.bf16.gmra.mrb[0].mxu0 %v6076
        %v6138 = vpop.f32.mrb[0].mxu0
        %v6139 = vadd.f32 0.0, %v6138
        %v6140 = vpop.f32.mrb[0].mxu0
        %v6141 = vpop.f32.mrb[0].mxu0
        %v6142 = vadd.f32 0.0, %v6141
        %v6143 = vpop.f32.mrb[0].mxu0
        %6144 = vmatprep.mubr.bf16.mxu0 0
        %6145 = vmatmul.mubr.bf16.gmra.mrb[0].mxu0 %v6079
        %v6146 = vpop.f32.mrb[0].mxu0
        %v6147 = vadd.f32 0.0, %v6146
        %v6148 = vpop.f32.mrb[0].mxu0
        %v6149 = vpop.f32.mrb[0].mxu0
        %v6150 = vadd.f32 0.0, %v6149
        %v6151 = vpop.f32.mrb[0].mxu0
        %6152 = vmatprep.mubr.bf16.mxu0 0
        %6153 = vmatmul.mubr.bf16.gmra.mrb[0].mxu0 %v6082
        %v6154 = vpop.f32.mrb[0].mxu0
        %v6155 = vadd.f32 0.0, %v6154
        %v6156 = vpop.f32.mrb[0].mxu0
        %v6157 = vpop.f32.mrb[0].mxu0
        %v6158 = vadd.f32 0.0, %v6157
        %v6159 = vpop.f32.mrb[0].mxu0
        %6160 = vmatprep.mubr.bf16.mxu0 0
        %6161 = vmatmul.mubr.bf16.gmra.mrb[0].mxu0 %v6085
        %v6162 = vpop.f32.mrb[0].mxu0
        %v6163 = vadd.f32 0.0, %v6162
        %v6164 = vpop.f32.mrb[0].mxu0
        %v6165 = vpop.f32.mrb[0].mxu0
        %v6166 = vadd.f32 0.0, %v6165
        %v6167 = vpop.f32.mrb[0].mxu0
        %6168 = vmatprep.mubr.bf16.mxu0 0
        %6169 = vmatmul.mubr.bf16.gmra.mrb[0].mxu0 %v6088
        %v6170 = vpop.f32.mrb[0].mxu0
        %v6171 = vadd.f32 0.0, %v6170
        %v6172 = vpop.f32.mrb[0].mxu0
        %v6173 = vpop.f32.mrb[0].mxu0
        %v6174 = vadd.f32 0.0, %v6173
        %v6175 = vpop.f32.mrb[0].mxu0
        %6176 = vmatprep.mubr.bf16.mxu0 0
        %6177 = vmatmul.mubr.bf16.gmra.mrb[0].mxu0 %v6091
        %v6178 = vpop.f32.mrb[0].mxu0
        %v6179 = vadd.f32 0.0, %v6178
        %v6180 = vpop.f32.mrb[0].mxu0
        %v6181 = vpop.f32.mrb[0].mxu0
        %v6182 = vadd.f32 0.0, %v6181
        %v6183 = vpop.f32.mrb[0].mxu0
        %6184 = vmatprep.mubr.bf16.mxu0 0
        %6185 = vmatmul.mubr.bf16.gmra.mrb[0].mxu0 %v6094
        %v6186 = vpop.f32.mrb[0].mxu0
        %v6187 = vadd.f32 0.0, %v6186
        %v6188 = vpop.f32.mrb[0].mxu0
        %v6189 = vpop.f32.mrb[0].mxu0
        %v6190 = vadd.f32 0.0, %v6189
        %v6191 = vpop.f32.mrb[0].mxu0
        %6192 = vdwg.mxu0
        %v6197 = vunpack.c.l.b16 %v5919
        %v6198 = vunpack.c.l.b16 %v5920
        %v6199 = vunpack.c.l.b16 %v5921
        %v6200 = vunpack.c.l.b16 %v5922
        %v6201 = vpack.c.b16 %v6198, %v6197
        %v6202 = vpack.c.b16 %v6200, %v6199
        %v6206 = vsel %vm3534, %v5895, 0
        %v6209 = vsel %vm3534, %v5896, 0
        %v6212 = vsel %vm3534, %v5897, 0
        %v6215 = vsel %vm3534, %v5898, 0
        %v6218 = vsel %vm3534, %v5899, 0
        %v6221 = vsel %vm3534, %v5900, 0
        %v6224 = vsel %vm3534, %v5901, 0
        %v6227 = vsel %vm3534, %v5902, 0
        %6229 = vmatprep.subr.bf16.mxu0 0
        %6230 = vmatpush1.bf16.msra.mxu0 %v6201
        %6231 = vmatprep.subr.bf16.mxu0 0
        %6232 = vmatpush1.bf16.msra.mxu0 %v6202
        %6233 = vmatprep.subr.bf16.mxu0 0
        %6234 = vmatpush1.bf16.msra.mxu0 0
        %6235 = vmatprep.subr.bf16.mxu0 0
        %6236 = vmatpush1.bf16.msra.mxu0 0
        %6237 = vmatprep.subr.bf16.mxu0 0
        %6238 = vmatpush1.bf16.msra.mxu0 0
        %6239 = vmatprep.subr.bf16.mxu0 0
        %6240 = vmatpush1.bf16.msra.mxu0 0
        %6241 = vmatprep.subr.bf16.mxu0 0
        %6242 = vmatpush1.bf16.msra.mxu0 0
        %6243 = vmatprep.subr.bf16.mxu0 0
        %6244 = vmatpush1.bf16.msra.mxu0 0
        %6245 = vmatprep.subr.bf16.mxu0 0
        %6246 = vmatpush1.bf16.msra.mxu0 0
        %6247 = vmatprep.subr.bf16.mxu0 0
        %6248 = vmatpush1.bf16.msra.mxu0 0
        %6249 = vmatprep.subr.bf16.mxu0 0
        %6250 = vmatpush1.bf16.msra.mxu0 0
        %6251 = vmatprep.subr.bf16.mxu0 0
        %6252 = vmatpush1.bf16.msra.mxu0 0
        %6253 = vmatprep.subr.bf16.mxu0 0
        %6254 = vmatpush1.bf16.msra.mxu0 0
        %6255 = vmatprep.subr.bf16.mxu0 0
        %6256 = vmatpush1.bf16.msra.mxu0 0
        %6257 = vmatprep.subr.bf16.mxu0 0
        %6258 = vmatpush1.bf16.msra.mxu0 0
        %6259 = vmatprep.subr.bf16.mxu0 0
        %6260 = vmatpush1.bf16.msra.mxu0 0
        %6261 = vmatprep.mubr.bf16.mxu0 0
        %6262 = vmatmul.mubr.bf16.gmra.mrb[0].mxu0 %v6206
        %v6263 = vpop.f32.mrb[0].mxu0
        %v6264 = vadd.f32 0.0, %v6263
        %v6265 = vpop.f32.mrb[0].mxu0
        %v6266 = vpop.f32.mrb[0].mxu0
        %v6267 = vadd.f32 0.0, %v6266
        %v6268 = vpop.f32.mrb[0].mxu0
        %6269 = vmatprep.mubr.bf16.mxu0 0
        %6270 = vmatmul.mubr.bf16.gmra.mrb[0].mxu0 %v6209
        %v6271 = vpop.f32.mrb[0].mxu0
        %v6272 = vadd.f32 0.0, %v6271
        %v6273 = vpop.f32.mrb[0].mxu0
        %v6274 = vpop.f32.mrb[0].mxu0
        %v6275 = vadd.f32 0.0, %v6274
        %v6276 = vpop.f32.mrb[0].mxu0
        %6277 = vmatprep.mubr.bf16.mxu0 0
        %6278 = vmatmul.mubr.bf16.gmra.mrb[0].mxu0 %v6212
        %v6279 = vpop.f32.mrb[0].mxu0
        %v6280 = vadd.f32 0.0, %v6279
        %v6281 = vpop.f32.mrb[0].mxu0
        %v6282 = vpop.f32.mrb[0].mxu0
        %v6283 = vadd.f32 0.0, %v6282
        %v6284 = vpop.f32.mrb[0].mxu0
        %6285 = vmatprep.mubr.bf16.mxu0 0
        %6286 = vmatmul.mubr.bf16.gmra.mrb[0].mxu0 %v6215
        %v6287 = vpop.f32.mrb[0].mxu0
        %v6288 = vadd.f32 0.0, %v6287
        %v6289 = vpop.f32.mrb[0].mxu0
        %v6290 = vpop.f32.mrb[0].mxu0
        %v6291 = vadd.f32 0.0, %v6290
        %v6292 = vpop.f32.mrb[0].mxu0
        %6293 = vmatprep.mubr.bf16.mxu0 0
        %6294 = vmatmul.mubr.bf16.gmra.mrb[0].mxu0 %v6218
        %v6295 = vpop.f32.mrb[0].mxu0
        %v6296 = vadd.f32 0.0, %v6295
        %v6297 = vpop.f32.mrb[0].mxu0
        %v6298 = vpop.f32.mrb[0].mxu0
        %v6299 = vadd.f32 0.0, %v6298
        %v6300 = vpop.f32.mrb[0].mxu0
        %6301 = vmatprep.mubr.bf16.mxu0 0
        %6302 = vmatmul.mubr.bf16.gmra.mrb[0].mxu0 %v6221
        %v6303 = vpop.f32.mrb[0].mxu0
        %v6304 = vadd.f32 0.0, %v6303
        %v6305 = vpop.f32.mrb[0].mxu0
        %v6306 = vpop.f32.mrb[0].mxu0
        %v6307 = vadd.f32 0.0, %v6306
        %v6308 = vpop.f32.mrb[0].mxu0
        %6309 = vmatprep.mubr.bf16.mxu0 0
        %6310 = vmatmul.mubr.bf16.gmra.mrb[0].mxu0 %v6224
        %v6311 = vpop.f32.mrb[0].mxu0
        %v6312 = vadd.f32 0.0, %v6311
        %v6313 = vpop.f32.mrb[0].mxu0
        %v6314 = vpop.f32.mrb[0].mxu0
        %v6315 = vadd.f32 0.0, %v6314
        %v6316 = vpop.f32.mrb[0].mxu0
        %6317 = vmatprep.mubr.bf16.mxu0 0
        %6318 = vmatmul.mubr.bf16.gmra.mrb[0].mxu0 %v6227
        %v6319 = vpop.f32.mrb[0].mxu0
        %v6320 = vadd.f32 0.0, %v6319
        %v6321 = vpop.f32.mrb[0].mxu0
        %v6322 = vpop.f32.mrb[0].mxu0
        %v6323 = vadd.f32 0.0, %v6322
        %v6324 = vpop.f32.mrb[0].mxu0
        %6325 = vdwg.mxu0
        %v6330 = vunpack.c.l.b16 %v5923
        %v6331 = vunpack.c.l.b16 %v5924
        %v6332 = vunpack.c.l.b16 %v5925
        %v6333 = vunpack.c.l.b16 %v5926
        %v6334 = vpack.c.b16 %v6331, %v6330
        %v6335 = vpack.c.b16 %v6333, %v6332
        %v6339 = vsel %vm3534, %v5903, 0
        %v6342 = vsel %vm3534, %v5904, 0
        %v6345 = vsel %vm3534, %v5905, 0
        %v6348 = vsel %vm3534, %v5906, 0
        %v6351 = vsel %vm3534, %v5907, 0
        %v6354 = vsel %vm3534, %v5908, 0
        %v6357 = vsel %vm3534, %v5909, 0
        %v6360 = vsel %vm3534, %v5910, 0
        %6362 = vmatprep.subr.bf16.mxu0 0
        %6363 = vmatpush1.bf16.msra.mxu0 %v6334
        %6364 = vmatprep.subr.bf16.mxu0 0
        %6365 = vmatpush1.bf16.msra.mxu0 %v6335
        %6366 = vmatprep.subr.bf16.mxu0 0
        %6367 = vmatpush1.bf16.msra.mxu0 0
        %6368 = vmatprep.subr.bf16.mxu0 0
        %6369 = vmatpush1.bf16.msra.mxu0 0
        %6370 = vmatprep.subr.bf16.mxu0 0
        %6371 = vmatpush1.bf16.msra.mxu0 0
        %6372 = vmatprep.subr.bf16.mxu0 0
        %6373 = vmatpush1.bf16.msra.mxu0 0
        %6374 = vmatprep.subr.bf16.mxu0 0
        %6375 = vmatpush1.bf16.msra.mxu0 0
        %6376 = vmatprep.subr.bf16.mxu0 0
        %6377 = vmatpush1.bf16.msra.mxu0 0
        %6378 = vmatprep.subr.bf16.mxu0 0
        %6379 = vmatpush1.bf16.msra.mxu0 0
        %6380 = vmatprep.subr.bf16.mxu0 0
        %6381 = vmatpush1.bf16.msra.mxu0 0
        %6382 = vmatprep.subr.bf16.mxu0 0
        %6383 = vmatpush1.bf16.msra.mxu0 0
        %6384 = vmatprep.subr.bf16.mxu0 0
        %6385 = vmatpush1.bf16.msra.mxu0 0
        %6386 = vmatprep.subr.bf16.mxu0 0
        %6387 = vmatpush1.bf16.msra.mxu0 0
        %6388 = vmatprep.subr.bf16.mxu0 0
        %6389 = vmatpush1.bf16.msra.mxu0 0
        %6390 = vmatprep.subr.bf16.mxu0 0
        %6391 = vmatpush1.bf16.msra.mxu0 0
        %6392 = vmatprep.subr.bf16.mxu0 0
        %6393 = vmatpush1.bf16.msra.mxu0 0
        %6394 = vmatprep.mubr.bf16.mxu0 0
        %6395 = vmatmul.mubr.bf16.gmra.mrb[0].mxu0 %v6339
        %v6396 = vpop.f32.mrb[0].mxu0
        %v6397 = vadd.f32 0.0, %v6396
        %v6398 = vpop.f32.mrb[0].mxu0
        %v6399 = vpop.f32.mrb[0].mxu0
        %v6400 = vadd.f32 0.0, %v6399
        %v6401 = vpop.f32.mrb[0].mxu0
        %6402 = vmatprep.mubr.bf16.mxu0 0
        %6403 = vmatmul.mubr.bf16.gmra.mrb[0].mxu0 %v6342
        %v6404 = vpop.f32.mrb[0].mxu0
        %v6405 = vadd.f32 0.0, %v6404
        %v6406 = vpop.f32.mrb[0].mxu0
        %v6407 = vpop.f32.mrb[0].mxu0
        %v6408 = vadd.f32 0.0, %v6407
        %v6409 = vpop.f32.mrb[0].mxu0
        %6410 = vmatprep.mubr.bf16.mxu0 0
        %6411 = vmatmul.mubr.bf16.gmra.mrb[0].mxu0 %v6345
        %v6412 = vpop.f32.mrb[0].mxu0
        %v6413 = vadd.f32 0.0, %v6412
        %v6414 = vpop.f32.mrb[0].mxu0
        %v6415 = vpop.f32.mrb[0].mxu0
        %v6416 = vadd.f32 0.0, %v6415
        %v6417 = vpop.f32.mrb[0].mxu0
        %6418 = vmatprep.mubr.bf16.mxu0 0
        %6419 = vmatmul.mubr.bf16.gmra.mrb[0].mxu0 %v6348
        %v6420 = vpop.f32.mrb[0].mxu0
        %v6421 = vadd.f32 0.0, %v6420
        %v6422 = vpop.f32.mrb[0].mxu0
        %v6423 = vpop.f32.mrb[0].mxu0
        %v6424 = vadd.f32 0.0, %v6423
        %v6425 = vpop.f32.mrb[0].mxu0
        %6426 = vmatprep.mubr.bf16.mxu0 0
        %6427 = vmatmul.mubr.bf16.gmra.mrb[0].mxu0 %v6351
        %v6428 = vpop.f32.mrb[0].mxu0
        %v6429 = vadd.f32 0.0, %v6428
        %v6430 = vpop.f32.mrb[0].mxu0
        %v6431 = vpop.f32.mrb[0].mxu0
        %v6432 = vadd.f32 0.0, %v6431
        %v6433 = vpop.f32.mrb[0].mxu0
        %6434 = vmatprep.mubr.bf16.mxu0 0
        %6435 = vmatmul.mubr.bf16.gmra.mrb[0].mxu0 %v6354
        %v6436 = vpop.f32.mrb[0].mxu0
        %v6437 = vadd.f32 0.0, %v6436
        %v6438 = vpop.f32.mrb[0].mxu0
        %v6439 = vpop.f32.mrb[0].mxu0
        %v6440 = vadd.f32 0.0, %v6439
        %v6441 = vpop.f32.mrb[0].mxu0
        %6442 = vmatprep.mubr.bf16.mxu0 0
        %6443 = vmatmul.mubr.bf16.gmra.mrb[0].mxu0 %v6357
        %v6444 = vpop.f32.mrb[0].mxu0
        %v6445 = vadd.f32 0.0, %v6444
        %v6446 = vpop.f32.mrb[0].mxu0
        %v6447 = vpop.f32.mrb[0].mxu0
        %v6448 = vadd.f32 0.0, %v6447
        %v6449 = vpop.f32.mrb[0].mxu0
        %6450 = vmatprep.mubr.bf16.mxu0 0
        %6451 = vmatmul.mubr.bf16.gmra.mrb[0].mxu0 %v6360
        %v6452 = vpop.f32.mrb[0].mxu0
        %v6453 = vadd.f32 0.0, %v6452
        %v6454 = vpop.f32.mrb[0].mxu0
        %v6455 = vpop.f32.mrb[0].mxu0
        %v6456 = vadd.f32 0.0, %v6455
        %v6457 = vpop.f32.mrb[0].mxu0
        %6458 = vdwg.mxu0
        %v6459 = vadd.f32 %v5998, %v6131
        %v6460 = vadd.f32 %v6459, %v6264
        %v6461 = vadd.f32 %v6460, %v6397
        %v6462 = vadd.f32 %v6001, %v6134
        %v6463 = vadd.f32 %v6462, %v6267
        %v6464 = vadd.f32 %v6463, %v6400
        %v6465 = vadd.f32 %v6006, %v6139
        %v6466 = vadd.f32 %v6465, %v6272
        %v6467 = vadd.f32 %v6466, %v6405
        %v6468 = vadd.f32 %v6009, %v6142
        %v6469 = vadd.f32 %v6468, %v6275
        %v6470 = vadd.f32 %v6469, %v6408
        %v6471 = vadd.f32 %v6014, %v6147
        %v6472 = vadd.f32 %v6471, %v6280
        %v6473 = vadd.f32 %v6472, %v6413
        %v6474 = vadd.f32 %v6017, %v6150
        %v6475 = vadd.f32 %v6474, %v6283
        %v6476 = vadd.f32 %v6475, %v6416
        %v6477 = vadd.f32 %v6022, %v6155
        %v6478 = vadd.f32 %v6477, %v6288
        %v6479 = vadd.f32 %v6478, %v6421
        %v6480 = vadd.f32 %v6025, %v6158
        %v6481 = vadd.f32 %v6480, %v6291
        %v6482 = vadd.f32 %v6481, %v6424
        %v6483 = vadd.f32 %v6030, %v6163
        %v6484 = vadd.f32 %v6483, %v6296
        %v6485 = vadd.f32 %v6484, %v6429
        %v6486 = vadd.f32 %v6033, %v6166
        %v6487 = vadd.f32 %v6486, %v6299
        %v6488 = vadd.f32 %v6487, %v6432
        %v6489 = vadd.f32 %v6038, %v6171
        %v6490 = vadd.f32 %v6489, %v6304
        %v6491 = vadd.f32 %v6490, %v6437
        %v6492 = vadd.f32 %v6041, %v6174
        %v6493 = vadd.f32 %v6492, %v6307
        %v6494 = vadd.f32 %v6493, %v6440
        %v6495 = vadd.f32 %v6046, %v6179
        %v6496 = vadd.f32 %v6495, %v6312
        %v6497 = vadd.f32 %v6496, %v6445
        %v6498 = vadd.f32 %v6049, %v6182
        %v6499 = vadd.f32 %v6498, %v6315
        %v6500 = vadd.f32 %v6499, %v6448
        %v6501 = vadd.f32 %v6054, %v6187
        %v6502 = vadd.f32 %v6501, %v6320
        %v6503 = vadd.f32 %v6502, %v6453
        %v6504 = vadd.f32 %v6057, %v6190
        %v6505 = vadd.f32 %v6504, %v6323
        %v6506 = vadd.f32 %v6505, %v6456
        %v6507 = vld [vmem:[%s7] sm:$0x1]
        %v6509 = vlaneseq
        %v6510 = vshrl.u32 %v6509, 7
        %v6511 = vsub.s32 0, %v6510
        %v6512 = vrot.slane %v6507, %v6511
        %v6514 = vadd.f32 %v6461, %v6512
        %v6515 = vadd.f32 %v6464, %v6512
        %v6516 = vadd.f32 %v6467, %v6512
        %v6517 = vadd.f32 %v6470, %v6512
        %v6518 = vadd.f32 %v6473, %v6512
        %v6519 = vadd.f32 %v6476, %v6512
        %v6520 = vadd.f32 %v6479, %v6512
        %v6521 = vadd.f32 %v6482, %v6512
        %v6522 = vadd.f32 %v6485, %v6512
        %v6523 = vadd.f32 %v6488, %v6512
        %v6524 = vadd.f32 %v6491, %v6512
        %v6525 = vadd.f32 %v6494, %v6512
        %v6526 = vadd.f32 %v6497, %v6512
        %v6527 = vadd.f32 %v6500, %v6512
        %v6528 = vadd.f32 %v6503, %v6512
        %v6529 = vadd.f32 %v6506, %v6512
        %v6531 = vlaneseq
        %v6532 = vshrl.u32 %v6531, 7
        %v6533 = vsub.s32 0, %v6532
        %v6534 = vrot.slane %v3412, %v6533
        %v6536 = vmul.f32 %v6534, %v6514
        %v6537 = vmul.f32 %v6534, %v6515
        %v6538 = vmul.f32 %v6534, %v6516
        %v6539 = vmul.f32 %v6534, %v6517
        %v6540 = vmul.f32 %v6534, %v6518
        %v6541 = vmul.f32 %v6534, %v6519
        %v6542 = vmul.f32 %v6534, %v6520
        %v6543 = vmul.f32 %v6534, %v6521
        %v6544 = vmul.f32 %v6534, %v6522
        %v6545 = vmul.f32 %v6534, %v6523
        %v6546 = vmul.f32 %v6534, %v6524
        %v6547 = vmul.f32 %v6534, %v6525
        %v6548 = vmul.f32 %v6534, %v6526
        %v6549 = vmul.f32 %v6534, %v6527
        %v6550 = vmul.f32 %v6534, %v6528
        %v6551 = vmul.f32 %v6534, %v6529
        %v6552 = vadd.f32 %v3418, %v6536
        %v6553 = vadd.f32 %v3419, %v6537
        %v6554 = vadd.f32 %v3420, %v6538
        %v6555 = vadd.f32 %v3421, %v6539
        %v6556 = vadd.f32 %v3422, %v6540
        %v6557 = vadd.f32 %v3423, %v6541
        %v6558 = vadd.f32 %v3424, %v6542
        %v6559 = vadd.f32 %v3425, %v6543
        %v6560 = vadd.f32 %v3426, %v6544
        %v6561 = vadd.f32 %v3427, %v6545
        %v6562 = vadd.f32 %v3428, %v6546
        %v6563 = vadd.f32 %v3429, %v6547
        %v6564 = vadd.f32 %v3430, %v6548
        %v6565 = vadd.f32 %v3431, %v6549
        %v6566 = vadd.f32 %v3432, %v6550
        %v6567 = vadd.f32 %v3433, %v6551
        %6568 = vadd.xlane.f32.xlu0 %v6552
        %v6569 = vpop.xlane.xlu0 %6568
        %6570 = vadd.xlane.f32.xlu0 %v6553
        %v6571 = vpop.xlane.xlu0 %6570
        %6572 = vadd.xlane.f32.xlu0 %v6554
        %v6573 = vpop.xlane.xlu0 %6572
        %6574 = vadd.xlane.f32.xlu0 %v6555
        %v6575 = vpop.xlane.xlu0 %6574
        %6576 = vadd.xlane.f32.xlu0 %v6556
        %v6577 = vpop.xlane.xlu0 %6576
        %6578 = vadd.xlane.f32.xlu0 %v6557
        %v6579 = vpop.xlane.xlu0 %6578
        %6580 = vadd.xlane.f32.xlu0 %v6558
        %v6581 = vpop.xlane.xlu0 %6580
        %6582 = vadd.xlane.f32.xlu0 %v6559
        %v6583 = vpop.xlane.xlu0 %6582
        %6584 = vadd.xlane.f32.xlu0 %v6560
        %v6585 = vpop.xlane.xlu0 %6584
        %6586 = vadd.xlane.f32.xlu0 %v6561
        %v6587 = vpop.xlane.xlu0 %6586
        %6588 = vadd.xlane.f32.xlu0 %v6562
        %v6589 = vpop.xlane.xlu0 %6588
        %6590 = vadd.xlane.f32.xlu0 %v6563
        %v6591 = vpop.xlane.xlu0 %6590
        %6592 = vadd.xlane.f32.xlu0 %v6564
        %v6593 = vpop.xlane.xlu0 %6592
        %6594 = vadd.xlane.f32.xlu0 %v6565
        %v6595 = vpop.xlane.xlu0 %6594
        %6596 = vadd.xlane.f32.xlu0 %v6566
        %v6597 = vpop.xlane.xlu0 %6596
        %6598 = vadd.xlane.f32.xlu0 %v6567
        %v6599 = vpop.xlane.xlu0 %6598
        %v6600 = vrcp.pop 128.0
        %v6601 = vmul.f32 %v6569, %v6600
        %v6602 = vmul.f32 %v6571, %v6600
        %v6603 = vmul.f32 %v6573, %v6600
        %v6604 = vmul.f32 %v6575, %v6600
        %v6605 = vmul.f32 %v6577, %v6600
        %v6606 = vmul.f32 %v6579, %v6600
        %v6607 = vmul.f32 %v6581, %v6600
        %v6608 = vmul.f32 %v6583, %v6600
        %v6609 = vmul.f32 %v6585, %v6600
        %v6610 = vmul.f32 %v6587, %v6600
        %v6611 = vmul.f32 %v6589, %v6600
        %v6612 = vmul.f32 %v6591, %v6600
        %v6613 = vmul.f32 %v6593, %v6600
        %v6614 = vmul.f32 %v6595, %v6600
        %v6615 = vmul.f32 %v6597, %v6600
        %v6616 = vmul.f32 %v6599, %v6600
        %v6617 = vsub.f32 %v6552, %v6601
        %v6618 = vsub.f32 %v6553, %v6602
        %v6619 = vsub.f32 %v6554, %v6603
        %v6620 = vsub.f32 %v6555, %v6604
        %v6621 = vsub.f32 %v6556, %v6605
        %v6622 = vsub.f32 %v6557, %v6606
        %v6623 = vsub.f32 %v6558, %v6607
        %v6624 = vsub.f32 %v6559, %v6608
        %v6625 = vsub.f32 %v6560, %v6609
        %v6626 = vsub.f32 %v6561, %v6610
        %v6627 = vsub.f32 %v6562, %v6611
        %v6628 = vsub.f32 %v6563, %v6612
        %v6629 = vsub.f32 %v6564, %v6613
        %v6630 = vsub.f32 %v6565, %v6614
        %v6631 = vsub.f32 %v6566, %v6615
        %v6632 = vsub.f32 %v6567, %v6616
        %v6633 = vmul.f32 %v6617, %v6617
        %v6634 = vmul.f32 %v6618, %v6618
        %v6635 = vmul.f32 %v6619, %v6619
        %v6636 = vmul.f32 %v6620, %v6620
        %v6637 = vmul.f32 %v6621, %v6621
        %v6638 = vmul.f32 %v6622, %v6622
        %v6639 = vmul.f32 %v6623, %v6623
        %v6640 = vmul.f32 %v6624, %v6624
        %v6641 = vmul.f32 %v6625, %v6625
        %v6642 = vmul.f32 %v6626, %v6626
        %v6643 = vmul.f32 %v6627, %v6627
        %v6644 = vmul.f32 %v6628, %v6628
        %v6645 = vmul.f32 %v6629, %v6629
        %v6646 = vmul.f32 %v6630, %v6630
        %v6647 = vmul.f32 %v6631, %v6631
        %v6648 = vmul.f32 %v6632, %v6632
        %6649 = vadd.xlane.f32.xlu0 %v6633
        %v6650 = vpop.xlane.xlu0 %6649
        %6651 = vadd.xlane.f32.xlu0 %v6634
        %v6652 = vpop.xlane.xlu0 %6651
        %6653 = vadd.xlane.f32.xlu0 %v6635
        %v6654 = vpop.xlane.xlu0 %6653
        %6655 = vadd.xlane.f32.xlu0 %v6636
        %v6656 = vpop.xlane.xlu0 %6655
        %6657 = vadd.xlane.f32.xlu0 %v6637
        %v6658 = vpop.xlane.xlu0 %6657
        %6659 = vadd.xlane.f32.xlu0 %v6638
        %v6660 = vpop.xlane.xlu0 %6659
        %6661 = vadd.xlane.f32.xlu0 %v6639
        %v6662 = vpop.xlane.xlu0 %6661
        %6663 = vadd.xlane.f32.xlu0 %v6640
        %v6664 = vpop.xlane.xlu0 %6663
        %6665 = vadd.xlane.f32.xlu0 %v6641
        %v6666 = vpop.xlane.xlu0 %6665
        %6667 = vadd.xlane.f32.xlu0 %v6642
        %v6668 = vpop.xlane.xlu0 %6667
        %6669 = vadd.xlane.f32.xlu0 %v6643
        %v6670 = vpop.xlane.xlu0 %6669
        %6671 = vadd.xlane.f32.xlu0 %v6644
        %v6672 = vpop.xlane.xlu0 %6671
        %6673 = vadd.xlane.f32.xlu0 %v6645
        %v6674 = vpop.xlane.xlu0 %6673
        %6675 = vadd.xlane.f32.xlu0 %v6646
        %v6676 = vpop.xlane.xlu0 %6675
        %6677 = vadd.xlane.f32.xlu0 %v6647
        %v6678 = vpop.xlane.xlu0 %6677
        %6679 = vadd.xlane.f32.xlu0 %v6648
        %v6680 = vpop.xlane.xlu0 %6679
        %v6681 = vmul.f32 %v6650, %v6600
        %v6682 = vmul.f32 %v6652, %v6600
        %v6683 = vmul.f32 %v6654, %v6600
        %v6684 = vmul.f32 %v6656, %v6600
        %v6685 = vmul.f32 %v6658, %v6600
        %v6686 = vmul.f32 %v6660, %v6600
        %v6687 = vmul.f32 %v6662, %v6600
        %v6688 = vmul.f32 %v6664, %v6600
        %v6689 = vmul.f32 %v6666, %v6600
        %v6690 = vmul.f32 %v6668, %v6600
        %v6691 = vmul.f32 %v6670, %v6600
        %v6692 = vmul.f32 %v6672, %v6600
        %v6693 = vmul.f32 %v6674, %v6600
        %v6694 = vmul.f32 %v6676, %v6600
        %v6695 = vmul.f32 %v6678, %v6600
        %v6696 = vmul.f32 %v6680, %v6600
        %v6697 = vadd.f32 %v6681, 1e-06
        %v6698 = vadd.f32 %v6682, 1e-06
        %v6699 = vadd.f32 %v6683, 1e-06
        %v6700 = vadd.f32 %v6684, 1e-06
        %v6701 = vadd.f32 %v6685, 1e-06
        %v6702 = vadd.f32 %v6686, 1e-06
        %v6703 = vadd.f32 %v6687, 1e-06
        %v6704 = vadd.f32 %v6688, 1e-06
        %v6705 = vadd.f32 %v6689, 1e-06
        %v6706 = vadd.f32 %v6690, 1e-06
        %v6707 = vadd.f32 %v6691, 1e-06
        %v6708 = vadd.f32 %v6692, 1e-06
        %v6709 = vadd.f32 %v6693, 1e-06
        %v6710 = vadd.f32 %v6694, 1e-06
        %v6711 = vadd.f32 %v6695, 1e-06
        %v6712 = vadd.f32 %v6696, 1e-06
        %v6713 = vrsqrt.pop %v6697
        %v6714 = vrsqrt.pop %v6698
        %v6715 = vrsqrt.pop %v6699
        %v6716 = vrsqrt.pop %v6700
        %v6717 = vrsqrt.pop %v6701
        %v6718 = vrsqrt.pop %v6702
        %v6719 = vrsqrt.pop %v6703
        %v6720 = vrsqrt.pop %v6704
        %v6721 = vrsqrt.pop %v6705
        %v6722 = vrsqrt.pop %v6706
        %v6723 = vrsqrt.pop %v6707
        %v6724 = vrsqrt.pop %v6708
        %v6725 = vrsqrt.pop %v6709
        %v6726 = vrsqrt.pop %v6710
        %v6727 = vrsqrt.pop %v6711
        %v6728 = vrsqrt.pop %v6712
        %v6729 = vmul.f32 %v6617, %v6713
        %v6730 = vmul.f32 %v6618, %v6714
        %v6731 = vmul.f32 %v6619, %v6715
        %v6732 = vmul.f32 %v6620, %v6716
        %v6733 = vmul.f32 %v6621, %v6717
        %v6734 = vmul.f32 %v6622, %v6718
        %v6735 = vmul.f32 %v6623, %v6719
        %v6736 = vmul.f32 %v6624, %v6720
        %v6737 = vmul.f32 %v6625, %v6721
        %v6738 = vmul.f32 %v6626, %v6722
        %v6739 = vmul.f32 %v6627, %v6723
        %v6740 = vmul.f32 %v6628, %v6724
        %v6741 = vmul.f32 %v6629, %v6725
        %v6742 = vmul.f32 %v6630, %v6726
        %v6743 = vmul.f32 %v6631, %v6727
        %v6744 = vmul.f32 %v6632, %v6728
        %v6745 = vadd.f32 %v3414, 1.0
        %v6747 = vlaneseq
        %v6748 = vshrl.u32 %v6747, 7
        %v6749 = vsub.s32 0, %v6748
        %v6750 = vrot.slane %v6745, %v6749
        %v6752 = vmul.f32 %v6729, %v6750
        %v6753 = vmul.f32 %v6730, %v6750
        %v6754 = vmul.f32 %v6731, %v6750
        %v6755 = vmul.f32 %v6732, %v6750
        %v6756 = vmul.f32 %v6733, %v6750
        %v6757 = vmul.f32 %v6734, %v6750
        %v6758 = vmul.f32 %v6735, %v6750
        %v6759 = vmul.f32 %v6736, %v6750
        %v6760 = vmul.f32 %v6737, %v6750
        %v6761 = vmul.f32 %v6738, %v6750
        %v6762 = vmul.f32 %v6739, %v6750
        %v6763 = vmul.f32 %v6740, %v6750
        %v6764 = vmul.f32 %v6741, %v6750
        %v6765 = vmul.f32 %v6742, %v6750
        %v6766 = vmul.f32 %v6743, %v6750
        %v6767 = vmul.f32 %v6744, %v6750
        %v6769 = vlaneseq
        %v6770 = vshrl.u32 %v6769, 7
        %v6771 = vsub.s32 0, %v6770
        %v6772 = vrot.slane %v3413, %v6771
        %v6774 = vadd.f32 %v6752, %v6772
        %v6775 = vadd.f32 %v6753, %v6772
        %v6776 = vadd.f32 %v6754, %v6772
        %v6777 = vadd.f32 %v6755, %v6772
        %v6778 = vadd.f32 %v6756, %v6772
        %v6779 = vadd.f32 %v6757, %v6772
        %v6780 = vadd.f32 %v6758, %v6772
        %v6781 = vadd.f32 %v6759, %v6772
        %v6782 = vadd.f32 %v6760, %v6772
        %v6783 = vadd.f32 %v6761, %v6772
        %v6784 = vadd.f32 %v6762, %v6772
        %v6785 = vadd.f32 %v6763, %v6772
        %v6786 = vadd.f32 %v6764, %v6772
        %v6787 = vadd.f32 %v6765, %v6772
        %v6788 = vadd.f32 %v6766, %v6772
        %v6789 = vadd.f32 %v6767, %v6772
        %v6790 = vpack.c.bf16 %v6775, %v6774
        %v6791 = vpack.c.bf16 %v6777, %v6776
        %v6792 = vpack.c.bf16 %v6779, %v6778
        %v6793 = vpack.c.bf16 %v6781, %v6780
        %v6794 = vpack.c.bf16 %v6783, %v6782
        %v6795 = vpack.c.bf16 %v6785, %v6784
        %v6796 = vpack.c.bf16 %v6787, %v6786
        %v6797 = vpack.c.bf16 %v6789, %v6788
        %v6798 = vld [vmem:[#allocation15] sm:$0xff]
        %v6799 = vld [vmem:[#allocation15 + $0x8] sm:$0xff]
        %v6800 = vld [vmem:[#allocation15 + $0x10] sm:$0xff]
        %v6801 = vld [vmem:[#allocation15 + $0x18] sm:$0xff]
        %v6802 = vld [vmem:[#allocation15 + $0x20] sm:$0xff]
        %v6803 = vld [vmem:[#allocation15 + $0x28] sm:$0xff]
        %v6804 = vld [vmem:[#allocation15 + $0x30] sm:$0xff]
        %v6805 = vld [vmem:[#allocation15 + $0x38] sm:$0xff]
        %v6806 = vld [vmem:[#allocation15 + $0x40] sm:$0xff]
        %v6807 = vld [vmem:[#allocation15 + $0x48] sm:$0xff]
        %v6808 = vld [vmem:[#allocation15 + $0x50] sm:$0xff]
        %v6809 = vld [vmem:[#allocation15 + $0x58] sm:$0xff]
        %v6810 = vld [vmem:[#allocation15 + $0x60] sm:$0xff]
        %v6811 = vld [vmem:[#allocation15 + $0x68] sm:$0xff]
        %v6812 = vld [vmem:[#allocation15 + $0x70] sm:$0xff]
        %v6813 = vld [vmem:[#allocation15 + $0x78] sm:$0xff]
        %v6814 = vld [vmem:[#allocation15 + $0x80] sm:$0xff]
        %v6815 = vld [vmem:[#allocation15 + $0x88] sm:$0xff]
        %v6816 = vld [vmem:[#allocation15 + $0x90] sm:$0xff]
        %v6817 = vld [vmem:[#allocation15 + $0x98] sm:$0xff]
        %v6818 = vld [vmem:[#allocation15 + $0xa0] sm:$0xff]
        %v6819 = vld [vmem:[#allocation15 + $0xa8] sm:$0xff]
        %v6820 = vld [vmem:[#allocation15 + $0xb0] sm:$0xff]
        %v6821 = vld [vmem:[#allocation15 + $0xb8] sm:$0xff]
        %v6822 = vld [vmem:[#allocation15 + $0xc0] sm:$0xff]
        %v6823 = vld [vmem:[#allocation15 + $0xc8] sm:$0xff]
        %v6824 = vld [vmem:[#allocation15 + $0xd0] sm:$0xff]
        %v6825 = vld [vmem:[#allocation15 + $0xd8] sm:$0xff]
        %v6826 = vld [vmem:[#allocation15 + $0xe0] sm:$0xff]
        %v6827 = vld [vmem:[#allocation15 + $0xe8] sm:$0xff]
        %v6828 = vld [vmem:[#allocation15 + $0xf0] sm:$0xff]
        %v6829 = vld [vmem:[#allocation15 + $0xf8] sm:$0xff]
        %v6830 = vld [vmem:[%s9] sm:$0xf]
        %v6832 = vlaneseq
        %v6833 = vshrl.u32 %v6832, 7
        %v6834 = vsub.s32 0, %v6833
        %v6835 = vrot.slane %v6830, %v6834
        %v6836 = vlaneseq
        %v6837 = vshrl.u32 %v6836, 7
        %v6838 = vsub.s32 1, %v6837
        %v6839 = vrot.slane %v6830, %v6838
        %v6840 = vlaneseq
        %v6841 = vshrl.u32 %v6840, 7
        %v6842 = vsub.s32 2, %v6841
        %v6843 = vrot.slane %v6830, %v6842
        %v6844 = vlaneseq
        %v6845 = vshrl.u32 %v6844, 7
        %v6846 = vsub.s32 3, %v6845
        %v6847 = vrot.slane %v6830, %v6846
        %v6884 = vunpack.c.l.b16 %v6798
        %v6885 = vunpack.c.h.b16 %v6798
        %v6886 = vunpack.c.l.b16 %v6799
        %v6887 = vunpack.c.h.b16 %v6799
        %v6888 = vunpack.c.l.b16 %v6800
        %v6889 = vunpack.c.h.b16 %v6800
        %v6890 = vunpack.c.l.b16 %v6801
        %v6891 = vunpack.c.h.b16 %v6801
        %v6892 = vunpack.c.l.b16 %v6802
        %v6893 = vunpack.c.h.b16 %v6802
        %v6894 = vunpack.c.l.b16 %v6803
        %v6895 = vunpack.c.h.b16 %v6803
        %v6896 = vunpack.c.l.b16 %v6804
        %v6897 = vunpack.c.h.b16 %v6804
        %v6898 = vunpack.c.l.b16 %v6805
        %v6899 = vunpack.c.h.b16 %v6805
        %v6900 = vunpack.c.l.b16 %v6806
        %v6901 = vunpack.c.h.b16 %v6806
        %v6902 = vunpack.c.l.b16 %v6807
        %v6903 = vunpack.c.h.b16 %v6807
        %v6904 = vunpack.c.l.b16 %v6808
        %v6905 = vunpack.c.h.b16 %v6808
        %v6906 = vunpack.c.l.b16 %v6809
        %v6907 = vunpack.c.h.b16 %v6809
        %v6908 = vunpack.c.l.b16 %v6810
        %v6909 = vunpack.c.h.b16 %v6810
        %v6910 = vunpack.c.l.b16 %v6811
        %v6911 = vunpack.c.h.b16 %v6811
        %v6912 = vunpack.c.l.b16 %v6812
        %v6913 = vunpack.c.h.b16 %v6812
        %v6914 = vunpack.c.l.b16 %v6813
        %v6915 = vunpack.c.h.b16 %v6813
        %v6916 = vunpack.c.l.b16 %v6814
        %v6917 = vunpack.c.h.b16 %v6814
        %v6918 = vunpack.c.l.b16 %v6815
        %v6919 = vunpack.c.h.b16 %v6815
        %v6920 = vunpack.c.l.b16 %v6816
        %v6921 = vunpack.c.h.b16 %v6816
        %v6922 = vunpack.c.l.b16 %v6817
        %v6923 = vunpack.c.h.b16 %v6817
        %v6924 = vunpack.c.l.b16 %v6818
        %v6925 = vunpack.c.h.b16 %v6818
        %v6926 = vunpack.c.l.b16 %v6819
        %v6927 = vunpack.c.h.b16 %v6819
        %v6928 = vunpack.c.l.b16 %v6820
        %v6929 = vunpack.c.h.b16 %v6820
        %v6930 = vunpack.c.l.b16 %v6821
        %v6931 = vunpack.c.h.b16 %v6821
        %v6932 = vunpack.c.l.b16 %v6822
        %v6933 = vunpack.c.h.b16 %v6822
        %v6934 = vunpack.c.l.b16 %v6823
        %v6935 = vunpack.c.h.b16 %v6823
        %v6936 = vunpack.c.l.b16 %v6824
        %v6937 = vunpack.c.h.b16 %v6824
        %v6938 = vunpack.c.l.b16 %v6825
        %v6939 = vunpack.c.h.b16 %v6825
        %v6940 = vunpack.c.l.b16 %v6826
        %v6941 = vunpack.c.h.b16 %v6826
        %v6942 = vunpack.c.l.b16 %v6827
        %v6943 = vunpack.c.h.b16 %v6827
        %v6944 = vunpack.c.l.b16 %v6828
        %v6945 = vunpack.c.h.b16 %v6828
        %v6946 = vunpack.c.l.b16 %v6829
        %v6947 = vunpack.c.h.b16 %v6829
        %v6948 = vpack.c.b16 %v6888, %v6884
        %v6949 = vpack.c.b16 %v6889, %v6885
        %v6950 = vpack.c.b16 %v6890, %v6886
        %v6951 = vpack.c.b16 %v6891, %v6887
        %v6952 = vpack.c.b16 %v6896, %v6892
        %v6953 = vpack.c.b16 %v6897, %v6893
        %v6954 = vpack.c.b16 %v6898, %v6894
        %v6955 = vpack.c.b16 %v6899, %v6895
        %v6956 = vpack.c.b16 %v6904, %v6900
        %v6957 = vpack.c.b16 %v6905, %v6901
        %v6958 = vpack.c.b16 %v6906, %v6902
        %v6959 = vpack.c.b16 %v6907, %v6903
        %v6960 = vpack.c.b16 %v6912, %v6908
        %v6961 = vpack.c.b16 %v6913, %v6909
        %v6962 = vpack.c.b16 %v6914, %v6910
        %v6963 = vpack.c.b16 %v6915, %v6911
        %v6964 = vpack.c.b16 %v6920, %v6916
        %v6965 = vpack.c.b16 %v6921, %v6917
        %v6966 = vpack.c.b16 %v6922, %v6918
        %v6967 = vpack.c.b16 %v6923, %v6919
        %v6968 = vpack.c.b16 %v6928, %v6924
        %v6969 = vpack.c.b16 %v6929, %v6925
        %v6970 = vpack.c.b16 %v6930, %v6926
        %v6971 = vpack.c.b16 %v6931, %v6927
        %v6972 = vpack.c.b16 %v6936, %v6932
        %v6973 = vpack.c.b16 %v6937, %v6933
        %v6974 = vpack.c.b16 %v6938, %v6934
        %v6975 = vpack.c.b16 %v6939, %v6935
        %v6976 = vpack.c.b16 %v6944, %v6940
        %v6977 = vpack.c.b16 %v6945, %v6941
        %v6978 = vpack.c.b16 %v6946, %v6942
        %v6979 = vpack.c.b16 %v6947, %v6943
        %7012 = vmatprep.subr.bf16.mxu0 %v6949
        %7013 = vmatpush1.bf16.msra.mxu0 %v6948
        %7014 = vmatprep.subr.bf16.mxu0 %v6953
        %7015 = vmatpush1.bf16.msra.mxu0 %v6952
        %7016 = vmatprep.subr.bf16.mxu0 %v6957
        %7017 = vmatpush1.bf16.msra.mxu0 %v6956
        %7018 = vmatprep.subr.bf16.mxu0 %v6961
        %7019 = vmatpush1.bf16.msra.mxu0 %v6960
        %7020 = vmatprep.subr.bf16.mxu0 %v6965
        %7021 = vmatpush1.bf16.msra.mxu0 %v6964
        %7022 = vmatprep.subr.bf16.mxu0 %v6969
        %7023 = vmatpush1.bf16.msra.mxu0 %v6968
        %7024 = vmatprep.subr.bf16.mxu0 %v6973
        %7025 = vmatpush1.bf16.msra.mxu0 %v6972
        %7026 = vmatprep.subr.bf16.mxu0 %v6977
        %7027 = vmatpush1.bf16.msra.mxu0 %v6976
        %7028 = vmatprep.subr.bf16.mxu0 0
        %7029 = vmatpush1.bf16.msra.mxu0 0
        %7030 = vmatprep.subr.bf16.mxu0 0
        %7031 = vmatpush1.bf16.msra.mxu0 0
        %7032 = vmatprep.subr.bf16.mxu0 0
        %7033 = vmatpush1.bf16.msra.mxu0 0
        %7034 = vmatprep.subr.bf16.mxu0 0
        %7035 = vmatpush1.bf16.msra.mxu0 0
        %7036 = vmatprep.subr.bf16.mxu0 0
        %7037 = vmatpush1.bf16.msra.mxu0 0
        %7038 = vmatprep.subr.bf16.mxu0 0
        %7039 = vmatpush1.bf16.msra.mxu0 0
        %7040 = vmatprep.subr.bf16.mxu0 0
        %7041 = vmatpush1.bf16.msra.mxu0 0
        %7042 = vmatprep.subr.bf16.mxu0 0
        %7043 = vmatpush1.bf16.msra.mxu0 0
        %7044 = vmatprep.mubr.bf16.mxu0 0
        %7045 = vmatmul.mubr.bf16.gmra.mrb[0].mxu0 %v6790
        %v7046 = vpop.f32.mrb[0].mxu0
        %v7047 = vadd.f32 %v6835, %v7046
        %v7048 = vpop.f32.mrb[0].mxu0
        %v7049 = vadd.f32 %v6839, %v7048
        %v7050 = vpop.f32.mrb[0].mxu0
        %v7051 = vadd.f32 %v6835, %v7050
        %v7052 = vpop.f32.mrb[0].mxu0
        %v7053 = vadd.f32 %v6839, %v7052
        %7054 = vmatprep.mubr.bf16.mxu0 0
        %7055 = vmatmul.mubr.bf16.gmra.mrb[0].mxu0 %v6791
        %v7056 = vpop.f32.mrb[0].mxu0
        %v7057 = vadd.f32 %v6835, %v7056
        %v7058 = vpop.f32.mrb[0].mxu0
        %v7059 = vadd.f32 %v6839, %v7058
        %v7060 = vpop.f32.mrb[0].mxu0
        %v7061 = vadd.f32 %v6835, %v7060
        %v7062 = vpop.f32.mrb[0].mxu0
        %v7063 = vadd.f32 %v6839, %v7062
        %7064 = vmatprep.mubr.bf16.mxu0 0
        %7065 = vmatmul.mubr.bf16.gmra.mrb[0].mxu0 %v6792
        %v7066 = vpop.f32.mrb[0].mxu0
        %v7067 = vadd.f32 %v6835, %v7066
        %v7068 = vpop.f32.mrb[0].mxu0
        %v7069 = vadd.f32 %v6839, %v7068
        %v7070 = vpop.f32.mrb[0].mxu0
        %v7071 = vadd.f32 %v6835, %v7070
        %v7072 = vpop.f32.mrb[0].mxu0
        %v7073 = vadd.f32 %v6839, %v7072
        %7074 = vmatprep.mubr.bf16.mxu0 0
        %7075 = vmatmul.mubr.bf16.gmra.mrb[0].mxu0 %v6793
        %v7076 = vpop.f32.mrb[0].mxu0
        %v7077 = vadd.f32 %v6835, %v7076
        %v7078 = vpop.f32.mrb[0].mxu0
        %v7079 = vadd.f32 %v6839, %v7078
        %v7080 = vpop.f32.mrb[0].mxu0
        %v7081 = vadd.f32 %v6835, %v7080
        %v7082 = vpop.f32.mrb[0].mxu0
        %v7083 = vadd.f32 %v6839, %v7082
        %7084 = vmatprep.mubr.bf16.mxu0 0
        %7085 = vmatmul.mubr.bf16.gmra.mrb[0].mxu0 %v6794
        %v7086 = vpop.f32.mrb[0].mxu0
        %v7087 = vadd.f32 %v6835, %v7086
        %v7088 = vpop.f32.mrb[0].mxu0
        %v7089 = vadd.f32 %v6839, %v7088
        %v7090 = vpop.f32.mrb[0].mxu0
        %v7091 = vadd.f32 %v6835, %v7090
        %v7092 = vpop.f32.mrb[0].mxu0
        %v7093 = vadd.f32 %v6839, %v7092
        %7094 = vmatprep.mubr.bf16.mxu0 0
        %7095 = vmatmul.mubr.bf16.gmra.mrb[0].mxu0 %v6795
        %v7096 = vpop.f32.mrb[0].mxu0
        %v7097 = vadd.f32 %v6835, %v7096
        %v7098 = vpop.f32.mrb[0].mxu0
        %v7099 = vadd.f32 %v6839, %v7098
        %v7100 = vpop.f32.mrb[0].mxu0
        %v7101 = vadd.f32 %v6835, %v7100
        %v7102 = vpop.f32.mrb[0].mxu0
        %v7103 = vadd.f32 %v6839, %v7102
        %7104 = vmatprep.mubr.bf16.mxu0 0
        %7105 = vmatmul.mubr.bf16.gmra.mrb[0].mxu0 %v6796
        %v7106 = vpop.f32.mrb[0].mxu0
        %v7107 = vadd.f32 %v6835, %v7106
        %v7108 = vpop.f32.mrb[0].mxu0
        %v7109 = vadd.f32 %v6839, %v7108
        %v7110 = vpop.f32.mrb[0].mxu0
        %v7111 = vadd.f32 %v6835, %v7110
        %v7112 = vpop.f32.mrb[0].mxu0
        %v7113 = vadd.f32 %v6839, %v7112
        %7114 = vmatprep.mubr.bf16.mxu0 0
        %7115 = vmatmul.mubr.bf16.gmra.mrb[0].mxu0 %v6797
        %v7116 = vpop.f32.mrb[0].mxu0
        %v7117 = vadd.f32 %v6835, %v7116
        %v7118 = vpop.f32.mrb[0].mxu0
        %v7119 = vadd.f32 %v6839, %v7118
        %v7120 = vpop.f32.mrb[0].mxu0
        %v7121 = vadd.f32 %v6835, %v7120
        %v7122 = vpop.f32.mrb[0].mxu0
        %v7123 = vadd.f32 %v6839, %v7122
        %7124 = vdwg.mxu0
        %7125 = vmatprep.subr.bf16.mxu0 %v6951
        %7126 = vmatpush1.bf16.msra.mxu0 %v6950
        %7127 = vmatprep.subr.bf16.mxu0 %v6955
        %7128 = vmatpush1.bf16.msra.mxu0 %v6954
        %7129 = vmatprep.subr.bf16.mxu0 %v6959
        %7130 = vmatpush1.bf16.msra.mxu0 %v6958
        %7131 = vmatprep.subr.bf16.mxu0 %v6963
        %7132 = vmatpush1.bf16.msra.mxu0 %v6962
        %7133 = vmatprep.subr.bf16.mxu0 %v6967
        %7134 = vmatpush1.bf16.msra.mxu0 %v6966
        %7135 = vmatprep.subr.bf16.mxu0 %v6971
        %7136 = vmatpush1.bf16.msra.mxu0 %v6970
        %7137 = vmatprep.subr.bf16.mxu0 %v6975
        %7138 = vmatpush1.bf16.msra.mxu0 %v6974
        %7139 = vmatprep.subr.bf16.mxu0 %v6979
        %7140 = vmatpush1.bf16.msra.mxu0 %v6978
        %7141 = vmatprep.subr.bf16.mxu0 0
        %7142 = vmatpush1.bf16.msra.mxu0 0
        %7143 = vmatprep.subr.bf16.mxu0 0
        %7144 = vmatpush1.bf16.msra.mxu0 0
        %7145 = vmatprep.subr.bf16.mxu0 0
        %7146 = vmatpush1.bf16.msra.mxu0 0
        %7147 = vmatprep.subr.bf16.mxu0 0
        %7148 = vmatpush1.bf16.msra.mxu0 0
        %7149 = vmatprep.subr.bf16.mxu0 0
        %7150 = vmatpush1.bf16.msra.mxu0 0
        %7151 = vmatprep.subr.bf16.mxu0 0
        %7152 = vmatpush1.bf16.msra.mxu0 0
        %7153 = vmatprep.subr.bf16.mxu0 0
        %7154 = vmatpush1.bf16.msra.mxu0 0
        %7155 = vmatprep.subr.bf16.mxu0 0
        %7156 = vmatpush1.bf16.msra.mxu0 0
        %7157 = vmatprep.mubr.bf16.mxu0 0
        %7158 = vmatmul.mubr.bf16.gmra.mrb[0].mxu0 %v6790
        %v7159 = vpop.f32.mrb[0].mxu0
        %v7160 = vadd.f32 %v6843, %v7159
        %v7161 = vpop.f32.mrb[0].mxu0
        %v7162 = vadd.f32 %v6847, %v7161
        %v7163 = vpop.f32.mrb[0].mxu0
        %v7164 = vadd.f32 %v6843, %v7163
        %v7165 = vpop.f32.mrb[0].mxu0
        %v7166 = vadd.f32 %v6847, %v7165
        %7167 = vmatprep.mubr.bf16.mxu0 0
        %7168 = vmatmul.mubr.bf16.gmra.mrb[0].mxu0 %v6791
        %v7169 = vpop.f32.mrb[0].mxu0
        %v7170 = vadd.f32 %v6843, %v7169
        %v7171 = vpop.f32.mrb[0].mxu0
        %v7172 = vadd.f32 %v6847, %v7171
        %v7173 = vpop.f32.mrb[0].mxu0
        %v7174 = vadd.f32 %v6843, %v7173
        %v7175 = vpop.f32.mrb[0].mxu0
        %v7176 = vadd.f32 %v6847, %v7175
        %7177 = vmatprep.mubr.bf16.mxu0 0
        %7178 = vmatmul.mubr.bf16.gmra.mrb[0].mxu0 %v6792
        %v7179 = vpop.f32.mrb[0].mxu0
        %v7180 = vadd.f32 %v6843, %v7179
        %v7181 = vpop.f32.mrb[0].mxu0
        %v7182 = vadd.f32 %v6847, %v7181
        %v7183 = vpop.f32.mrb[0].mxu0
        %v7184 = vadd.f32 %v6843, %v7183
        %v7185 = vpop.f32.mrb[0].mxu0
        %v7186 = vadd.f32 %v6847, %v7185
        %7187 = vmatprep.mubr.bf16.mxu0 0
        %7188 = vmatmul.mubr.bf16.gmra.mrb[0].mxu0 %v6793
        %v7189 = vpop.f32.mrb[0].mxu0
        %v7190 = vadd.f32 %v6843, %v7189
        %v7191 = vpop.f32.mrb[0].mxu0
        %v7192 = vadd.f32 %v6847, %v7191
        %v7193 = vpop.f32.mrb[0].mxu0
        %v7194 = vadd.f32 %v6843, %v7193
        %v7195 = vpop.f32.mrb[0].mxu0
        %v7196 = vadd.f32 %v6847, %v7195
        %7197 = vmatprep.mubr.bf16.mxu0 0
        %7198 = vmatmul.mubr.bf16.gmra.mrb[0].mxu0 %v6794
        %v7199 = vpop.f32.mrb[0].mxu0
        %v7200 = vadd.f32 %v6843, %v7199
        %v7201 = vpop.f32.mrb[0].mxu0
        %v7202 = vadd.f32 %v6847, %v7201
        %v7203 = vpop.f32.mrb[0].mxu0
        %v7204 = vadd.f32 %v6843, %v7203
        %v7205 = vpop.f32.mrb[0].mxu0
        %v7206 = vadd.f32 %v6847, %v7205
        %7207 = vmatprep.mubr.bf16.mxu0 0
        %7208 = vmatmul.mubr.bf16.gmra.mrb[0].mxu0 %v6795
        %v7209 = vpop.f32.mrb[0].mxu0
        %v7210 = vadd.f32 %v6843, %v7209
        %v7211 = vpop.f32.mrb[0].mxu0
        %v7212 = vadd.f32 %v6847, %v7211
        %v7213 = vpop.f32.mrb[0].mxu0
        %v7214 = vadd.f32 %v6843, %v7213
        %v7215 = vpop.f32.mrb[0].mxu0
        %v7216 = vadd.f32 %v6847, %v7215
        %7217 = vmatprep.mubr.bf16.mxu0 0
        %7218 = vmatmul.mubr.bf16.gmra.mrb[0].mxu0 %v6796
        %v7219 = vpop.f32.mrb[0].mxu0
        %v7220 = vadd.f32 %v6843, %v7219
        %v7221 = vpop.f32.mrb[0].mxu0
        %v7222 = vadd.f32 %v6847, %v7221
        %v7223 = vpop.f32.mrb[0].mxu0
        %v7224 = vadd.f32 %v6843, %v7223
        %v7225 = vpop.f32.mrb[0].mxu0
        %v7226 = vadd.f32 %v6847, %v7225
        %7227 = vmatprep.mubr.bf16.mxu0 0
        %7228 = vmatmul.mubr.bf16.gmra.mrb[0].mxu0 %v6797
        %v7229 = vpop.f32.mrb[0].mxu0
        %v7230 = vadd.f32 %v6843, %v7229
        %v7231 = vpop.f32.mrb[0].mxu0
        %v7232 = vadd.f32 %v6847, %v7231
        %v7233 = vpop.f32.mrb[0].mxu0
        %v7234 = vadd.f32 %v6843, %v7233
        %v7235 = vpop.f32.mrb[0].mxu0
        %v7236 = vadd.f32 %v6847, %v7235
        %7237 = vdwg.mxu0
        %v7238 = vmul.f32 %v7047, 0.5
        %v7239 = vmul.f32 %v7049, 0.5
        %v7240 = vmul.f32 %v7160, 0.5
        %v7241 = vmul.f32 %v7162, 0.5
        %v7242 = vmul.f32 %v7051, 0.5
        %v7243 = vmul.f32 %v7053, 0.5
        %v7244 = vmul.f32 %v7164, 0.5
        %v7245 = vmul.f32 %v7166, 0.5
        %v7246 = vmul.f32 %v7057, 0.5
        %v7247 = vmul.f32 %v7059, 0.5
        %v7248 = vmul.f32 %v7170, 0.5
        %v7249 = vmul.f32 %v7172, 0.5
        %v7250 = vmul.f32 %v7061, 0.5
        %v7251 = vmul.f32 %v7063, 0.5
        %v7252 = vmul.f32 %v7174, 0.5
        %v7253 = vmul.f32 %v7176, 0.5
        %v7254 = vmul.f32 %v7067, 0.5
        %v7255 = vmul.f32 %v7069, 0.5
        %v7256 = vmul.f32 %v7180, 0.5
        %v7257 = vmul.f32 %v7182, 0.5
        %v7258 = vmul.f32 %v7071, 0.5
        %v7259 = vmul.f32 %v7073, 0.5
        %v7260 = vmul.f32 %v7184, 0.5
        %v7261 = vmul.f32 %v7186, 0.5
        %v7262 = vmul.f32 %v7077, 0.5
        %v7263 = vmul.f32 %v7079, 0.5
        %v7264 = vmul.f32 %v7190, 0.5
        %v7265 = vmul.f32 %v7192, 0.5
        %v7266 = vmul.f32 %v7081, 0.5
        %v7267 = vmul.f32 %v7083, 0.5
        %v7268 = vmul.f32 %v7194, 0.5
        %v7269 = vmul.f32 %v7196, 0.5
        %v7270 = vmul.f32 %v7087, 0.5
        %v7271 = vmul.f32 %v7089, 0.5
        %v7272 = vmul.f32 %v7200, 0.5
        %v7273 = vmul.f32 %v7202, 0.5
        %v7274 = vmul.f32 %v7091, 0.5
        %v7275 = vmul.f32 %v7093, 0.5
        %v7276 = vmul.f32 %v7204, 0.5
        %v7277 = vmul.f32 %v7206, 0.5
        %v7278 = vmul.f32 %v7097, 0.5
        %v7279 = vmul.f32 %v7099, 0.5
        %v7280 = vmul.f32 %v7210, 0.5
        %v7281 = vmul.f32 %v7212, 0.5
        %v7282 = vmul.f32 %v7101, 0.5
        %v7283 = vmul.f32 %v7103, 0.5
        %v7284 = vmul.f32 %v7214, 0.5
        %v7285 = vmul.f32 %v7216, 0.5
        %v7286 = vmul.f32 %v7107, 0.5
        %v7287 = vmul.f32 %v7109, 0.5
        %v7288 = vmul.f32 %v7220, 0.5
        %v7289 = vmul.f32 %v7222, 0.5
        %v7290 = vmul.f32 %v7111, 0.5
        %v7291 = vmul.f32 %v7113, 0.5
        %v7292 = vmul.f32 %v7224, 0.5
        %v7293 = vmul.f32 %v7226, 0.5
        %v7294 = vmul.f32 %v7117, 0.5
        %v7295 = vmul.f32 %v7119, 0.5
        %v7296 = vmul.f32 %v7230, 0.5
        %v7297 = vmul.f32 %v7232, 0.5
        %v7298 = vmul.f32 %v7121, 0.5
        %v7299 = vmul.f32 %v7123, 0.5
        %v7300 = vmul.f32 %v7234, 0.5
        %v7301 = vmul.f32 %v7236, 0.5
        %v7302 = vmul.f32 %v7047, 0.044715
        %v7303 = vmul.f32 %v7049, 0.044715
        %v7304 = vmul.f32 %v7160, 0.044715
        %v7305 = vmul.f32 %v7162, 0.044715
        %v7306 = vmul.f32 %v7051, 0.044715
        %v7307 = vmul.f32 %v7053, 0.044715
        %v7308 = vmul.f32 %v7164, 0.044715
        %v7309 = vmul.f32 %v7166, 0.044715
        %v7310 = vmul.f32 %v7057, 0.044715
        %v7311 = vmul.f32 %v7059, 0.044715
        %v7312 = vmul.f32 %v7170, 0.044715
        %v7313 = vmul.f32 %v7172, 0.044715
        %v7314 = vmul.f32 %v7061, 0.044715
        %v7315 = vmul.f32 %v7063, 0.044715
        %v7316 = vmul.f32 %v7174, 0.044715
        %v7317 = vmul.f32 %v7176, 0.044715
        %v7318 = vmul.f32 %v7067, 0.044715
        %v7319 = vmul.f32 %v7069, 0.044715
        %v7320 = vmul.f32 %v7180, 0.044715
        %v7321 = vmul.f32 %v7182, 0.044715
        %v7322 = vmul.f32 %v7071, 0.044715
        %v7323 = vmul.f32 %v7073, 0.044715
        %v7324 = vmul.f32 %v7184, 0.044715
        %v7325 = vmul.f32 %v7186, 0.044715
        %v7326 = vmul.f32 %v7077, 0.044715
        %v7327 = vmul.f32 %v7079, 0.044715
        %v7328 = vmul.f32 %v7190, 0.044715
        %v7329 = vmul.f32 %v7192, 0.044715
        %v7330 = vmul.f32 %v7081, 0.044715
        %v7331 = vmul.f32 %v7083, 0.044715
        %v7332 = vmul.f32 %v7194, 0.044715
        %v7333 = vmul.f32 %v7196, 0.044715
        %v7334 = vmul.f32 %v7087, 0.044715
        %v7335 = vmul.f32 %v7089, 0.044715
        %v7336 = vmul.f32 %v7200, 0.044715
        %v7337 = vmul.f32 %v7202, 0.044715
        %v7338 = vmul.f32 %v7091, 0.044715
        %v7339 = vmul.f32 %v7093, 0.044715
        %v7340 = vmul.f32 %v7204, 0.044715
        %v7341 = vmul.f32 %v7206, 0.044715
        %v7342 = vmul.f32 %v7097, 0.044715
        %v7343 = vmul.f32 %v7099, 0.044715
        %v7344 = vmul.f32 %v7210, 0.044715
        %v7345 = vmul.f32 %v7212, 0.044715
        %v7346 = vmul.f32 %v7101, 0.044715
        %v7347 = vmul.f32 %v7103, 0.044715
        %v7348 = vmul.f32 %v7214, 0.044715
        %v7349 = vmul.f32 %v7216, 0.044715
        %v7350 = vmul.f32 %v7107, 0.044715
        %v7351 = vmul.f32 %v7109, 0.044715
        %v7352 = vmul.f32 %v7220, 0.044715
        %v7353 = vmul.f32 %v7222, 0.044715
        %v7354 = vmul.f32 %v7111, 0.044715
        %v7355 = vmul.f32 %v7113, 0.044715
        %v7356 = vmul.f32 %v7224, 0.044715
        %v7357 = vmul.f32 %v7226, 0.044715
        %v7358 = vmul.f32 %v7117, 0.044715
        %v7359 = vmul.f32 %v7119, 0.044715
        %v7360 = vmul.f32 %v7230, 0.044715
        %v7361 = vmul.f32 %v7232, 0.044715
        %v7362 = vmul.f32 %v7121, 0.044715
        %v7363 = vmul.f32 %v7123, 0.044715
        %v7364 = vmul.f32 %v7234, 0.044715
        %v7365 = vmul.f32 %v7236, 0.044715
        %v7366 = vmul.f32 %v7302, %v7047
        %v7367 = vmul.f32 %v7303, %v7049
        %v7368 = vmul.f32 %v7304, %v7160
        %v7369 = vmul.f32 %v7305, %v7162
        %v7370 = vmul.f32 %v7306, %v7051
        %v7371 = vmul.f32 %v7307, %v7053
        %v7372 = vmul.f32 %v7308, %v7164
        %v7373 = vmul.f32 %v7309, %v7166
        %v7374 = vmul.f32 %v7310, %v7057
        %v7375 = vmul.f32 %v7311, %v7059
        %v7376 = vmul.f32 %v7312, %v7170
        %v7377 = vmul.f32 %v7313, %v7172
        %v7378 = vmul.f32 %v7314, %v7061
        %v7379 = vmul.f32 %v7315, %v7063
        %v7380 = vmul.f32 %v7316, %v7174
        %v7381 = vmul.f32 %v7317, %v7176
        %v7382 = vmul.f32 %v7318, %v7067
        %v7383 = vmul.f32 %v7319, %v7069
        %v7384 = vmul.f32 %v7320, %v7180
        %v7385 = vmul.f32 %v7321, %v7182
        %v7386 = vmul.f32 %v7322, %v7071
        %v7387 = vmul.f32 %v7323, %v7073
        %v7388 = vmul.f32 %v7324, %v7184
        %v7389 = vmul.f32 %v7325, %v7186
        %v7390 = vmul.f32 %v7326, %v7077
        %v7391 = vmul.f32 %v7327, %v7079
        %v7392 = vmul.f32 %v7328, %v7190
        %v7393 = vmul.f32 %v7329, %v7192
        %v7394 = vmul.f32 %v7330, %v7081
        %v7395 = vmul.f32 %v7331, %v7083
        %v7396 = vmul.f32 %v7332, %v7194
        %v7397 = vmul.f32 %v7333, %v7196
        %v7398 = vmul.f32 %v7334, %v7087
        %v7399 = vmul.f32 %v7335, %v7089
        %v7400 = vmul.f32 %v7336, %v7200
        %v7401 = vmul.f32 %v7337, %v7202
        %v7402 = vmul.f32 %v7338, %v7091
        %v7403 = vmul.f32 %v7339, %v7093
        %v7404 = vmul.f32 %v7340, %v7204
        %v7405 = vmul.f32 %v7341, %v7206
        %v7406 = vmul.f32 %v7342, %v7097
        %v7407 = vmul.f32 %v7343, %v7099
        %v7408 = vmul.f32 %v7344, %v7210
        %v7409 = vmul.f32 %v7345, %v7212
        %v7410 = vmul.f32 %v7346, %v7101
        %v7411 = vmul.f32 %v7347, %v7103
        %v7412 = vmul.f32 %v7348, %v7214
        %v7413 = vmul.f32 %v7349, %v7216
        %v7414 = vmul.f32 %v7350, %v7107
        %v7415 = vmul.f32 %v7351, %v7109
        %v7416 = vmul.f32 %v7352, %v7220
        %v7417 = vmul.f32 %v7353, %v7222
        %v7418 = vmul.f32 %v7354, %v7111
        %v7419 = vmul.f32 %v7355, %v7113
        %v7420 = vmul.f32 %v7356, %v7224
        %v7421 = vmul.f32 %v7357, %v7226
        %v7422 = vmul.f32 %v7358, %v7117
        %v7423 = vmul.f32 %v7359, %v7119
        %v7424 = vmul.f32 %v7360, %v7230
        %v7425 = vmul.f32 %v7361, %v7232
        %v7426 = vmul.f32 %v7362, %v7121
        %v7427 = vmul.f32 %v7363, %v7123
        %v7428 = vmul.f32 %v7364, %v7234
        %v7429 = vmul.f32 %v7365, %v7236
        %v7430 = vmul.f32 %v7366, %v7047
        %v7431 = vmul.f32 %v7367, %v7049
        %v7432 = vmul.f32 %v7368, %v7160
        %v7433 = vmul.f32 %v7369, %v7162
        %v7434 = vmul.f32 %v7370, %v7051
        %v7435 = vmul.f32 %v7371, %v7053
        %v7436 = vmul.f32 %v7372, %v7164
        %v7437 = vmul.f32 %v7373, %v7166
        %v7438 = vmul.f32 %v7374, %v7057
        %v7439 = vmul.f32 %v7375, %v7059
        %v7440 = vmul.f32 %v7376, %v7170
        %v7441 = vmul.f32 %v7377, %v7172
        %v7442 = vmul.f32 %v7378, %v7061
        %v7443 = vmul.f32 %v7379, %v7063
        %v7444 = vmul.f32 %v7380, %v7174
        %v7445 = vmul.f32 %v7381, %v7176
        %v7446 = vmul.f32 %v7382, %v7067
        %v7447 = vmul.f32 %v7383, %v7069
        %v7448 = vmul.f32 %v7384, %v7180
        %v7449 = vmul.f32 %v7385, %v7182
        %v7450 = vmul.f32 %v7386, %v7071
        %v7451 = vmul.f32 %v7387, %v7073
        %v7452 = vmul.f32 %v7388, %v7184
        %v7453 = vmul.f32 %v7389, %v7186
        %v7454 = vmul.f32 %v7390, %v7077
        %v7455 = vmul.f32 %v7391, %v7079
        %v7456 = vmul.f32 %v7392, %v7190
        %v7457 = vmul.f32 %v7393, %v7192
        %v7458 = vmul.f32 %v7394, %v7081
        %v7459 = vmul.f32 %v7395, %v7083
        %v7460 = vmul.f32 %v7396, %v7194
        %v7461 = vmul.f32 %v7397, %v7196
        %v7462 = vmul.f32 %v7398, %v7087
        %v7463 = vmul.f32 %v7399, %v7089
        %v7464 = vmul.f32 %v7400, %v7200
        %v7465 = vmul.f32 %v7401, %v7202
        %v7466 = vmul.f32 %v7402, %v7091
        %v7467 = vmul.f32 %v7403, %v7093
        %v7468 = vmul.f32 %v7404, %v7204
        %v7469 = vmul.f32 %v7405, %v7206
        %v7470 = vmul.f32 %v7406, %v7097
        %v7471 = vmul.f32 %v7407, %v7099
        %v7472 = vmul.f32 %v7408, %v7210
        %v7473 = vmul.f32 %v7409, %v7212
        %v7474 = vmul.f32 %v7410, %v7101
        %v7475 = vmul.f32 %v7411, %v7103
        %v7476 = vmul.f32 %v7412, %v7214
        %v7477 = vmul.f32 %v7413, %v7216
        %v7478 = vmul.f32 %v7414, %v7107
        %v7479 = vmul.f32 %v7415, %v7109
        %v7480 = vmul.f32 %v7416, %v7220
        %v7481 = vmul.f32 %v7417, %v7222
        %v7482 = vmul.f32 %v7418, %v7111
        %v7483 = vmul.f32 %v7419, %v7113
        %v7484 = vmul.f32 %v7420, %v7224
        %v7485 = vmul.f32 %v7421, %v7226
        %v7486 = vmul.f32 %v7422, %v7117
        %v7487 = vmul.f32 %v7423, %v7119
        %v7488 = vmul.f32 %v7424, %v7230
        %v7489 = vmul.f32 %v7425, %v7232
        %v7490 = vmul.f32 %v7426, %v7121
        %v7491 = vmul.f32 %v7427, %v7123
        %v7492 = vmul.f32 %v7428, %v7234
        %v7493 = vmul.f32 %v7429, %v7236
        %v7494 = vadd.f32 %v7047, %v7430
        %v7495 = vadd.f32 %v7049, %v7431
        %v7496 = vadd.f32 %v7160, %v7432
        %v7497 = vadd.f32 %v7162, %v7433
        %v7498 = vadd.f32 %v7051, %v7434
        %v7499 = vadd.f32 %v7053, %v7435
        %v7500 = vadd.f32 %v7164, %v7436
        %v7501 = vadd.f32 %v7166, %v7437
        %v7502 = vadd.f32 %v7057, %v7438
        %v7503 = vadd.f32 %v7059, %v7439
        %v7504 = vadd.f32 %v7170, %v7440
        %v7505 = vadd.f32 %v7172, %v7441
        %v7506 = vadd.f32 %v7061, %v7442
        %v7507 = vadd.f32 %v7063, %v7443
        %v7508 = vadd.f32 %v7174, %v7444
        %v7509 = vadd.f32 %v7176, %v7445
        %v7510 = vadd.f32 %v7067, %v7446
        %v7511 = vadd.f32 %v7069, %v7447
        %v7512 = vadd.f32 %v7180, %v7448
        %v7513 = vadd.f32 %v7182, %v7449
        %v7514 = vadd.f32 %v7071, %v7450
        %v7515 = vadd.f32 %v7073, %v7451
        %v7516 = vadd.f32 %v7184, %v7452
        %v7517 = vadd.f32 %v7186, %v7453
        %v7518 = vadd.f32 %v7077, %v7454
        %v7519 = vadd.f32 %v7079, %v7455
        %v7520 = vadd.f32 %v7190, %v7456
        %v7521 = vadd.f32 %v7192, %v7457
        %v7522 = vadd.f32 %v7081, %v7458
        %v7523 = vadd.f32 %v7083, %v7459
        %v7524 = vadd.f32 %v7194, %v7460
        %v7525 = vadd.f32 %v7196, %v7461
        %v7526 = vadd.f32 %v7087, %v7462
        %v7527 = vadd.f32 %v7089, %v7463
        %v7528 = vadd.f32 %v7200, %v7464
        %v7529 = vadd.f32 %v7202, %v7465
        %v7530 = vadd.f32 %v7091, %v7466
        %v7531 = vadd.f32 %v7093, %v7467
        %v7532 = vadd.f32 %v7204, %v7468
        %v7533 = vadd.f32 %v7206, %v7469
        %v7534 = vadd.f32 %v7097, %v7470
        %v7535 = vadd.f32 %v7099, %v7471
        %v7536 = vadd.f32 %v7210, %v7472
        %v7537 = vadd.f32 %v7212, %v7473
        %v7538 = vadd.f32 %v7101, %v7474
        %v7539 = vadd.f32 %v7103, %v7475
        %v7540 = vadd.f32 %v7214, %v7476
        %v7541 = vadd.f32 %v7216, %v7477
        %v7542 = vadd.f32 %v7107, %v7478
        %v7543 = vadd.f32 %v7109, %v7479
        %v7544 = vadd.f32 %v7220, %v7480
        %v7545 = vadd.f32 %v7222, %v7481
        %v7546 = vadd.f32 %v7111, %v7482
        %v7547 = vadd.f32 %v7113, %v7483
        %v7548 = vadd.f32 %v7224, %v7484
        %v7549 = vadd.f32 %v7226, %v7485
        %v7550 = vadd.f32 %v7117, %v7486
        %v7551 = vadd.f32 %v7119, %v7487
        %v7552 = vadd.f32 %v7230, %v7488
        %v7553 = vadd.f32 %v7232, %v7489
        %v7554 = vadd.f32 %v7121, %v7490
        %v7555 = vadd.f32 %v7123, %v7491
        %v7556 = vadd.f32 %v7234, %v7492
        %v7557 = vadd.f32 %v7236, %v7493
        %v7558 = vmul.f32 %v7494, 0.7978846
        %v7559 = vmul.f32 %v7495, 0.7978846
        %v7560 = vmul.f32 %v7496, 0.7978846
        %v7561 = vmul.f32 %v7497, 0.7978846
        %v7562 = vmul.f32 %v7498, 0.7978846
        %v7563 = vmul.f32 %v7499, 0.7978846
        %v7564 = vmul.f32 %v7500, 0.7978846
        %v7565 = vmul.f32 %v7501, 0.7978846
        %v7566 = vmul.f32 %v7502, 0.7978846
        %v7567 = vmul.f32 %v7503, 0.7978846
        %v7568 = vmul.f32 %v7504, 0.7978846
        %v7569 = vmul.f32 %v7505, 0.7978846
        %v7570 = vmul.f32 %v7506, 0.7978846
        %v7571 = vmul.f32 %v7507, 0.7978846
        %v7572 = vmul.f32 %v7508, 0.7978846
        %v7573 = vmul.f32 %v7509, 0.7978846
        %v7574 = vmul.f32 %v7510, 0.7978846
        %v7575 = vmul.f32 %v7511, 0.7978846
        %v7576 = vmul.f32 %v7512, 0.7978846
        %v7577 = vmul.f32 %v7513, 0.7978846
        %v7578 = vmul.f32 %v7514, 0.7978846
        %v7579 = vmul.f32 %v7515, 0.7978846
        %v7580 = vmul.f32 %v7516, 0.7978846
        %v7581 = vmul.f32 %v7517, 0.7978846
        %v7582 = vmul.f32 %v7518, 0.7978846
        %v7583 = vmul.f32 %v7519, 0.7978846
        %v7584 = vmul.f32 %v7520, 0.7978846
        %v7585 = vmul.f32 %v7521, 0.7978846
        %v7586 = vmul.f32 %v7522, 0.7978846
        %v7587 = vmul.f32 %v7523, 0.7978846
        %v7588 = vmul.f32 %v7524, 0.7978846
        %v7589 = vmul.f32 %v7525, 0.7978846
        %v7590 = vmul.f32 %v7526, 0.7978846
        %v7591 = vmul.f32 %v7527, 0.7978846
        %v7592 = vmul.f32 %v7528, 0.7978846
        %v7593 = vmul.f32 %v7529, 0.7978846
        %v7594 = vmul.f32 %v7530, 0.7978846
        %v7595 = vmul.f32 %v7531, 0.7978846
        %v7596 = vmul.f32 %v7532, 0.7978846
        %v7597 = vmul.f32 %v7533, 0.7978846
        %v7598 = vmul.f32 %v7534, 0.7978846
        %v7599 = vmul.f32 %v7535, 0.7978846
        %v7600 = vmul.f32 %v7536, 0.7978846
        %v7601 = vmul.f32 %v7537, 0.7978846
        %v7602 = vmul.f32 %v7538, 0.7978846
        %v7603 = vmul.f32 %v7539, 0.7978846
        %v7604 = vmul.f32 %v7540, 0.7978846
        %v7605 = vmul.f32 %v7541, 0.7978846
        %v7606 = vmul.f32 %v7542, 0.7978846
        %v7607 = vmul.f32 %v7543, 0.7978846
        %v7608 = vmul.f32 %v7544, 0.7978846
        %v7609 = vmul.f32 %v7545, 0.7978846
        %v7610 = vmul.f32 %v7546, 0.7978846
        %v7611 = vmul.f32 %v7547, 0.7978846
        %v7612 = vmul.f32 %v7548, 0.7978846
        %v7613 = vmul.f32 %v7549, 0.7978846
        %v7614 = vmul.f32 %v7550, 0.7978846
        %v7615 = vmul.f32 %v7551, 0.7978846
        %v7616 = vmul.f32 %v7552, 0.7978846
        %v7617 = vmul.f32 %v7553, 0.7978846
        %v7618 = vmul.f32 %v7554, 0.7978846
        %v7619 = vmul.f32 %v7555, 0.7978846
        %v7620 = vmul.f32 %v7556, 0.7978846
        %v7621 = vmul.f32 %v7557, 0.7978846
        %v7622 = vtanh.pop %v7558
        %v7623 = vtanh.pop %v7559
        %v7624 = vtanh.pop %v7560
        %v7625 = vtanh.pop %v7561
        %v7626 = vtanh.pop %v7562
        %v7627 = vtanh.pop %v7563
        %v7628 = vtanh.pop %v7564
        %v7629 = vtanh.pop %v7565
        %v7630 = vtanh.pop %v7566
        %v7631 = vtanh.pop %v7567
        %v7632 = vtanh.pop %v7568
        %v7633 = vtanh.pop %v7569
        %v7634 = vtanh.pop %v7570
        %v7635 = vtanh.pop %v7571
        %v7636 = vtanh.pop %v7572
        %v7637 = vtanh.pop %v7573
        %v7638 = vtanh.pop %v7574
        %v7639 = vtanh.pop %v7575
        %v7640 = vtanh.pop %v7576
        %v7641 = vtanh.pop %v7577
        %v7642 = vtanh.pop %v7578
        %v7643 = vtanh.pop %v7579
        %v7644 = vtanh.pop %v7580
        %v7645 = vtanh.pop %v7581
        %v7646 = vtanh.pop %v7582
        %v7647 = vtanh.pop %v7583
        %v7648 = vtanh.pop %v7584
        %v7649 = vtanh.pop %v7585
        %v7650 = vtanh.pop %v7586
        %v7651 = vtanh.pop %v7587
        %v7652 = vtanh.pop %v7588
        %v7653 = vtanh.pop %v7589
        %v7654 = vtanh.pop %v7590
        %v7655 = vtanh.pop %v7591
        %v7656 = vtanh.pop %v7592
        %v7657 = vtanh.pop %v7593
        %v7658 = vtanh.pop %v7594
        %v7659 = vtanh.pop %v7595
        %v7660 = vtanh.pop %v7596
        %v7661 = vtanh.pop %v7597
        %v7662 = vtanh.pop %v7598
        %v7663 = vtanh.pop %v7599
        %v7664 = vtanh.pop %v7600
        %v7665 = vtanh.pop %v7601
        %v7666 = vtanh.pop %v7602
        %v7667 = vtanh.pop %v7603
        %v7668 = vtanh.pop %v7604
        %v7669 = vtanh.pop %v7605
        %v7670 = vtanh.pop %v7606
        %v7671 = vtanh.pop %v7607
        %v7672 = vtanh.pop %v7608
        %v7673 = vtanh.pop %v7609
        %v7674 = vtanh.pop %v7610
        %v7675 = vtanh.pop %v7611
        %v7676 = vtanh.pop %v7612
        %v7677 = vtanh.pop %v7613
        %v7678 = vtanh.pop %v7614
        %v7679 = vtanh.pop %v7615
        %v7680 = vtanh.pop %v7616
        %v7681 = vtanh.pop %v7617
        %v7682 = vtanh.pop %v7618
        %v7683 = vtanh.pop %v7619
        %v7684 = vtanh.pop %v7620
        %v7685 = vtanh.pop %v7621
        %v7686 = vadd.f32 %v7622, 1.0
        %v7687 = vadd.f32 %v7623, 1.0
        %v7688 = vadd.f32 %v7624, 1.0
        %v7689 = vadd.f32 %v7625, 1.0
        %v7690 = vadd.f32 %v7626, 1.0
        %v7691 = vadd.f32 %v7627, 1.0
        %v7692 = vadd.f32 %v7628, 1.0
        %v7693 = vadd.f32 %v7629, 1.0
        %v7694 = vadd.f32 %v7630, 1.0
        %v7695 = vadd.f32 %v7631, 1.0
        %v7696 = vadd.f32 %v7632, 1.0
        %v7697 = vadd.f32 %v7633, 1.0
        %v7698 = vadd.f32 %v7634, 1.0
        %v7699 = vadd.f32 %v7635, 1.0
        %v7700 = vadd.f32 %v7636, 1.0
        %v7701 = vadd.f32 %v7637, 1.0
        %v7702 = vadd.f32 %v7638, 1.0
        %v7703 = vadd.f32 %v7639, 1.0
        %v7704 = vadd.f32 %v7640, 1.0
        %v7705 = vadd.f32 %v7641, 1.0
        %v7706 = vadd.f32 %v7642, 1.0
        %v7707 = vadd.f32 %v7643, 1.0
        %v7708 = vadd.f32 %v7644, 1.0
        %v7709 = vadd.f32 %v7645, 1.0
        %v7710 = vadd.f32 %v7646, 1.0
        %v7711 = vadd.f32 %v7647, 1.0
        %v7712 = vadd.f32 %v7648, 1.0
        %v7713 = vadd.f32 %v7649, 1.0
        %v7714 = vadd.f32 %v7650, 1.0
        %v7715 = vadd.f32 %v7651, 1.0
        %v7716 = vadd.f32 %v7652, 1.0
        %v7717 = vadd.f32 %v7653, 1.0
        %v7718 = vadd.f32 %v7654, 1.0
        %v7719 = vadd.f32 %v7655, 1.0
        %v7720 = vadd.f32 %v7656, 1.0
        %v7721 = vadd.f32 %v7657, 1.0
        %v7722 = vadd.f32 %v7658, 1.0
        %v7723 = vadd.f32 %v7659, 1.0
        %v7724 = vadd.f32 %v7660, 1.0
        %v7725 = vadd.f32 %v7661, 1.0
        %v7726 = vadd.f32 %v7662, 1.0
        %v7727 = vadd.f32 %v7663, 1.0
        %v7728 = vadd.f32 %v7664, 1.0
        %v7729 = vadd.f32 %v7665, 1.0
        %v7730 = vadd.f32 %v7666, 1.0
        %v7731 = vadd.f32 %v7667, 1.0
        %v7732 = vadd.f32 %v7668, 1.0
        %v7733 = vadd.f32 %v7669, 1.0
        %v7734 = vadd.f32 %v7670, 1.0
        %v7735 = vadd.f32 %v7671, 1.0
        %v7736 = vadd.f32 %v7672, 1.0
        %v7737 = vadd.f32 %v7673, 1.0
        %v7738 = vadd.f32 %v7674, 1.0
        %v7739 = vadd.f32 %v7675, 1.0
        %v7740 = vadd.f32 %v7676, 1.0
        %v7741 = vadd.f32 %v7677, 1.0
        %v7742 = vadd.f32 %v7678, 1.0
        %v7743 = vadd.f32 %v7679, 1.0
        %v7744 = vadd.f32 %v7680, 1.0
        %v7745 = vadd.f32 %v7681, 1.0
        %v7746 = vadd.f32 %v7682, 1.0
        %v7747 = vadd.f32 %v7683, 1.0
        %v7748 = vadd.f32 %v7684, 1.0
        %v7749 = vadd.f32 %v7685, 1.0
        %v7750 = vmul.f32 %v7238, %v7686
        %v7751 = vmul.f32 %v7239, %v7687
        %v7752 = vmul.f32 %v7240, %v7688
        %v7753 = vmul.f32 %v7241, %v7689
        %v7754 = vmul.f32 %v7242, %v7690
        %v7755 = vmul.f32 %v7243, %v7691
        %v7756 = vmul.f32 %v7244, %v7692
        %v7757 = vmul.f32 %v7245, %v7693
        %v7758 = vmul.f32 %v7246, %v7694
        %v7759 = vmul.f32 %v7247, %v7695
        %v7760 = vmul.f32 %v7248, %v7696
        %v7761 = vmul.f32 %v7249, %v7697
        %v7762 = vmul.f32 %v7250, %v7698
        %v7763 = vmul.f32 %v7251, %v7699
        %v7764 = vmul.f32 %v7252, %v7700
        %v7765 = vmul.f32 %v7253, %v7701
        %v7766 = vmul.f32 %v7254, %v7702
        %v7767 = vmul.f32 %v7255, %v7703
        %v7768 = vmul.f32 %v7256, %v7704
        %v7769 = vmul.f32 %v7257, %v7705
        %v7770 = vmul.f32 %v7258, %v7706
        %v7771 = vmul.f32 %v7259, %v7707
        %v7772 = vmul.f32 %v7260, %v7708
        %v7773 = vmul.f32 %v7261, %v7709
        %v7774 = vmul.f32 %v7262, %v7710
        %v7775 = vmul.f32 %v7263, %v7711
        %v7776 = vmul.f32 %v7264, %v7712
        %v7777 = vmul.f32 %v7265, %v7713
        %v7778 = vmul.f32 %v7266, %v7714
        %v7779 = vmul.f32 %v7267, %v7715
        %v7780 = vmul.f32 %v7268, %v7716
        %v7781 = vmul.f32 %v7269, %v7717
        %v7782 = vmul.f32 %v7270, %v7718
        %v7783 = vmul.f32 %v7271, %v7719
        %v7784 = vmul.f32 %v7272, %v7720
        %v7785 = vmul.f32 %v7273, %v7721
        %v7786 = vmul.f32 %v7274, %v7722
        %v7787 = vmul.f32 %v7275, %v7723
        %v7788 = vmul.f32 %v7276, %v7724
        %v7789 = vmul.f32 %v7277, %v7725
        %v7790 = vmul.f32 %v7278, %v7726
        %v7791 = vmul.f32 %v7279, %v7727
        %v7792 = vmul.f32 %v7280, %v7728
        %v7793 = vmul.f32 %v7281, %v7729
        %v7794 = vmul.f32 %v7282, %v7730
        %v7795 = vmul.f32 %v7283, %v7731
        %v7796 = vmul.f32 %v7284, %v7732
        %v7797 = vmul.f32 %v7285, %v7733
        %v7798 = vmul.f32 %v7286, %v7734
        %v7799 = vmul.f32 %v7287, %v7735
        %v7800 = vmul.f32 %v7288, %v7736
        %v7801 = vmul.f32 %v7289, %v7737
        %v7802 = vmul.f32 %v7290, %v7738
        %v7803 = vmul.f32 %v7291, %v7739
        %v7804 = vmul.f32 %v7292, %v7740
        %v7805 = vmul.f32 %v7293, %v7741
        %v7806 = vmul.f32 %v7294, %v7742
        %v7807 = vmul.f32 %v7295, %v7743
        %v7808 = vmul.f32 %v7296, %v7744
        %v7809 = vmul.f32 %v7297, %v7745
        %v7810 = vmul.f32 %v7298, %v7746
        %v7811 = vmul.f32 %v7299, %v7747
        %v7812 = vmul.f32 %v7300, %v7748
        %v7813 = vmul.f32 %v7301, %v7749
        %v7814 = vpack.c.bf16 %v7754, %v7750
        %v7815 = vpack.c.bf16 %v7755, %v7751
        %v7816 = vpack.c.bf16 %v7756, %v7752
        %v7817 = vpack.c.bf16 %v7757, %v7753
        %v7818 = vpack.c.bf16 %v7762, %v7758
        %v7819 = vpack.c.bf16 %v7763, %v7759
        %v7820 = vpack.c.bf16 %v7764, %v7760
        %v7821 = vpack.c.bf16 %v7765, %v7761
        %v7822 = vpack.c.bf16 %v7770, %v7766
        %v7823 = vpack.c.bf16 %v7771, %v7767
        %v7824 = vpack.c.bf16 %v7772, %v7768
        %v7825 = vpack.c.bf16 %v7773, %v7769
        %v7826 = vpack.c.bf16 %v7778, %v7774
        %v7827 = vpack.c.bf16 %v7779, %v7775
        %v7828 = vpack.c.bf16 %v7780, %v7776
        %v7829 = vpack.c.bf16 %v7781, %v7777
        %v7830 = vpack.c.bf16 %v7786, %v7782
        %v7831 = vpack.c.bf16 %v7787, %v7783
        %v7832 = vpack.c.bf16 %v7788, %v7784
        %v7833 = vpack.c.bf16 %v7789, %v7785
        %v7834 = vpack.c.bf16 %v7794, %v7790
        %v7835 = vpack.c.bf16 %v7795, %v7791
        %v7836 = vpack.c.bf16 %v7796, %v7792
        %v7837 = vpack.c.bf16 %v7797, %v7793
        %v7838 = vpack.c.bf16 %v7802, %v7798
        %v7839 = vpack.c.bf16 %v7803, %v7799
        %v7840 = vpack.c.bf16 %v7804, %v7800
        %v7841 = vpack.c.bf16 %v7805, %v7801
        %v7842 = vpack.c.bf16 %v7810, %v7806
        %v7843 = vpack.c.bf16 %v7811, %v7807
        %v7844 = vpack.c.bf16 %v7812, %v7808
        %v7845 = vpack.c.bf16 %v7813, %v7809
        %v7846 = vld [vmem:[#allocation17] sm:$0xf]
        %v7847 = vld [vmem:[#allocation17 + $0x4] sm:$0xf]
        %v7848 = vld [vmem:[#allocation17 + $0x8] sm:$0xf]
        %v7849 = vld [vmem:[#allocation17 + $0xc] sm:$0xf]
        %v7850 = vld [vmem:[#allocation17 + $0x10] sm:$0xf]
        %v7851 = vld [vmem:[#allocation17 + $0x14] sm:$0xf]
        %v7852 = vld [vmem:[#allocation17 + $0x18] sm:$0xf]
        %v7853 = vld [vmem:[#allocation17 + $0x1c] sm:$0xf]
        %v7854 = vld [vmem:[#allocation17 + $0x20] sm:$0xf]
        %v7855 = vld [vmem:[#allocation17 + $0x24] sm:$0xf]
        %v7856 = vld [vmem:[#allocation17 + $0x28] sm:$0xf]
        %v7857 = vld [vmem:[#allocation17 + $0x2c] sm:$0xf]
        %v7858 = vld [vmem:[#allocation17 + $0x30] sm:$0xf]
        %v7859 = vld [vmem:[#allocation17 + $0x34] sm:$0xf]
        %v7860 = vld [vmem:[#allocation17 + $0x38] sm:$0xf]
        %v7861 = vld [vmem:[#allocation17 + $0x3c] sm:$0xf]
        %v7862 = vld [vmem:[#allocation17 + $0x40] sm:$0xf]
        %v7863 = vld [vmem:[#allocation17 + $0x44] sm:$0xf]
        %v7864 = vld [vmem:[#allocation17 + $0x48] sm:$0xf]
        %v7865 = vld [vmem:[#allocation17 + $0x4c] sm:$0xf]
        %v7866 = vld [vmem:[#allocation17 + $0x50] sm:$0xf]
        %v7867 = vld [vmem:[#allocation17 + $0x54] sm:$0xf]
        %v7868 = vld [vmem:[#allocation17 + $0x58] sm:$0xf]
        %v7869 = vld [vmem:[#allocation17 + $0x5c] sm:$0xf]
        %v7870 = vld [vmem:[#allocation17 + $0x60] sm:$0xf]
        %v7871 = vld [vmem:[#allocation17 + $0x64] sm:$0xf]
        %v7872 = vld [vmem:[#allocation17 + $0x68] sm:$0xf]
        %v7873 = vld [vmem:[#allocation17 + $0x6c] sm:$0xf]
        %v7874 = vld [vmem:[#allocation17 + $0x70] sm:$0xf]
        %v7875 = vld [vmem:[#allocation17 + $0x74] sm:$0xf]
        %v7876 = vld [vmem:[#allocation17 + $0x78] sm:$0xf]
        %v7877 = vld [vmem:[#allocation17 + $0x7c] sm:$0xf]
        %v7878 = vld [vmem:[#allocation17 + $0x80] sm:$0xf]
        %v7879 = vld [vmem:[#allocation17 + $0x84] sm:$0xf]
        %v7880 = vld [vmem:[#allocation17 + $0x88] sm:$0xf]
        %v7881 = vld [vmem:[#allocation17 + $0x8c] sm:$0xf]
        %v7882 = vld [vmem:[#allocation17 + $0x90] sm:$0xf]
        %v7883 = vld [vmem:[#allocation17 + $0x94] sm:$0xf]
        %v7884 = vld [vmem:[#allocation17 + $0x98] sm:$0xf]
        %v7885 = vld [vmem:[#allocation17 + $0x9c] sm:$0xf]
        %v7886 = vld [vmem:[#allocation17 + $0xa0] sm:$0xf]
        %v7887 = vld [vmem:[#allocation17 + $0xa4] sm:$0xf]
        %v7888 = vld [vmem:[#allocation17 + $0xa8] sm:$0xf]
        %v7889 = vld [vmem:[#allocation17 + $0xac] sm:$0xf]
        %v7890 = vld [vmem:[#allocation17 + $0xb0] sm:$0xf]
        %v7891 = vld [vmem:[#allocation17 + $0xb4] sm:$0xf]
        %v7892 = vld [vmem:[#allocation17 + $0xb8] sm:$0xf]
        %v7893 = vld [vmem:[#allocation17 + $0xbc] sm:$0xf]
        %v7894 = vld [vmem:[#allocation17 + $0xc0] sm:$0xf]
        %v7895 = vld [vmem:[#allocation17 + $0xc4] sm:$0xf]
        %v7896 = vld [vmem:[#allocation17 + $0xc8] sm:$0xf]
        %v7897 = vld [vmem:[#allocation17 + $0xcc] sm:$0xf]
        %v7898 = vld [vmem:[#allocation17 + $0xd0] sm:$0xf]
        %v7899 = vld [vmem:[#allocation17 + $0xd4] sm:$0xf]
        %v7900 = vld [vmem:[#allocation17 + $0xd8] sm:$0xf]
        %v7901 = vld [vmem:[#allocation17 + $0xdc] sm:$0xf]
        %v7902 = vld [vmem:[#allocation17 + $0xe0] sm:$0xf]
        %v7903 = vld [vmem:[#allocation17 + $0xe4] sm:$0xf]
        %v7904 = vld [vmem:[#allocation17 + $0xe8] sm:$0xf]
        %v7905 = vld [vmem:[#allocation17 + $0xec] sm:$0xf]
        %v7906 = vld [vmem:[#allocation17 + $0xf0] sm:$0xf]
        %v7907 = vld [vmem:[#allocation17 + $0xf4] sm:$0xf]
        %v7908 = vld [vmem:[#allocation17 + $0xf8] sm:$0xf]
        %v7909 = vld [vmem:[#allocation17 + $0xfc] sm:$0xf]
        %v7910 = vld [vmem:[%s11] sm:$0x1]
        %v7912 = vlaneseq
        %v7913 = vshrl.u32 %v7912, 7
        %v7914 = vsub.s32 0, %v7913
        %v7915 = vrot.slane %v7910, %v7914
        %v7981 = vunpack.c.l.b16 %v7846
        %v7982 = vunpack.c.l.b16 %v7847
        %v7983 = vunpack.c.l.b16 %v7848
        %v7984 = vunpack.c.l.b16 %v7849
        %v7985 = vunpack.c.l.b16 %v7850
        %v7986 = vunpack.c.l.b16 %v7851
        %v7987 = vunpack.c.l.b16 %v7852
        %v7988 = vunpack.c.l.b16 %v7853
        %v7989 = vunpack.c.l.b16 %v7854
        %v7990 = vunpack.c.l.b16 %v7855
        %v7991 = vunpack.c.l.b16 %v7856
        %v7992 = vunpack.c.l.b16 %v7857
        %v7993 = vunpack.c.l.b16 %v7858
        %v7994 = vunpack.c.l.b16 %v7859
        %v7995 = vunpack.c.l.b16 %v7860
        %v7996 = vunpack.c.l.b16 %v7861
        %v7997 = vunpack.c.l.b16 %v7862
        %v7998 = vunpack.c.l.b16 %v7863
        %v7999 = vunpack.c.l.b16 %v7864
        %v8000 = vunpack.c.l.b16 %v7865
        %v8001 = vunpack.c.l.b16 %v7866
        %v8002 = vunpack.c.l.b16 %v7867
        %v8003 = vunpack.c.l.b16 %v7868
        %v8004 = vunpack.c.l.b16 %v7869
        %v8005 = vunpack.c.l.b16 %v7870
        %v8006 = vunpack.c.l.b16 %v7871
        %v8007 = vunpack.c.l.b16 %v7872
        %v8008 = vunpack.c.l.b16 %v7873
        %v8009 = vunpack.c.l.b16 %v7874
        %v8010 = vunpack.c.l.b16 %v7875
        %v8011 = vunpack.c.l.b16 %v7876
        %v8012 = vunpack.c.l.b16 %v7877
        %v8013 = vunpack.c.l.b16 %v7878
        %v8014 = vunpack.c.l.b16 %v7879
        %v8015 = vunpack.c.l.b16 %v7880
        %v8016 = vunpack.c.l.b16 %v7881
        %v8017 = vunpack.c.l.b16 %v7882
        %v8018 = vunpack.c.l.b16 %v7883
        %v8019 = vunpack.c.l.b16 %v7884
        %v8020 = vunpack.c.l.b16 %v7885
        %v8021 = vunpack.c.l.b16 %v7886
        %v8022 = vunpack.c.l.b16 %v7887
        %v8023 = vunpack.c.l.b16 %v7888
        %v8024 = vunpack.c.l.b16 %v7889
        %v8025 = vunpack.c.l.b16 %v7890
        %v8026 = vunpack.c.l.b16 %v7891
        %v8027 = vunpack.c.l.b16 %v7892
        %v8028 = vunpack.c.l.b16 %v7893
        %v8029 = vunpack.c.l.b16 %v7894
        %v8030 = vunpack.c.l.b16 %v7895
        %v8031 = vunpack.c.l.b16 %v7896
        %v8032 = vunpack.c.l.b16 %v7897
        %v8033 = vunpack.c.l.b16 %v7898
        %v8034 = vunpack.c.l.b16 %v7899
        %v8035 = vunpack.c.l.b16 %v7900
        %v8036 = vunpack.c.l.b16 %v7901
        %v8037 = vunpack.c.l.b16 %v7902
        %v8038 = vunpack.c.l.b16 %v7903
        %v8039 = vunpack.c.l.b16 %v7904
        %v8040 = vunpack.c.l.b16 %v7905
        %v8041 = vunpack.c.l.b16 %v7906
        %v8042 = vunpack.c.l.b16 %v7907
        %v8043 = vunpack.c.l.b16 %v7908
        %v8044 = vunpack.c.l.b16 %v7909
        %v8045 = vpack.c.b16 %v7982, %v7981
        %v8046 = vpack.c.b16 %v7984, %v7983
        %v8047 = vpack.c.b16 %v7986, %v7985
        %v8048 = vpack.c.b16 %v7988, %v7987
        %v8049 = vpack.c.b16 %v7990, %v7989
        %v8050 = vpack.c.b16 %v7992, %v7991
        %v8051 = vpack.c.b16 %v7994, %v7993
        %v8052 = vpack.c.b16 %v7996, %v7995
        %v8053 = vpack.c.b16 %v7998, %v7997
        %v8054 = vpack.c.b16 %v8000, %v7999
        %v8055 = vpack.c.b16 %v8002, %v8001
        %v8056 = vpack.c.b16 %v8004, %v8003
        %v8057 = vpack.c.b16 %v8006, %v8005
        %v8058 = vpack.c.b16 %v8008, %v8007
        %v8059 = vpack.c.b16 %v8010, %v8009
        %v8060 = vpack.c.b16 %v8012, %v8011
        %v8061 = vpack.c.b16 %v8014, %v8013
        %v8062 = vpack.c.b16 %v8016, %v8015
        %v8063 = vpack.c.b16 %v8018, %v8017
        %v8064 = vpack.c.b16 %v8020, %v8019
        %v8065 = vpack.c.b16 %v8022, %v8021
        %v8066 = vpack.c.b16 %v8024, %v8023
        %v8067 = vpack.c.b16 %v8026, %v8025
        %v8068 = vpack.c.b16 %v8028, %v8027
        %v8069 = vpack.c.b16 %v8030, %v8029
        %v8070 = vpack.c.b16 %v8032, %v8031
        %v8071 = vpack.c.b16 %v8034, %v8033
        %v8072 = vpack.c.b16 %v8036, %v8035
        %v8073 = vpack.c.b16 %v8038, %v8037
        %v8074 = vpack.c.b16 %v8040, %v8039
        %v8075 = vpack.c.b16 %v8042, %v8041
        %v8076 = vpack.c.b16 %v8044, %v8043
        %8109 = vmatprep.subr.bf16.mxu0 0
        %8110 = vmatpush1.bf16.msra.mxu0 %v8045
        %8111 = vmatprep.subr.bf16.mxu0 0
        %8112 = vmatpush1.bf16.msra.mxu0 %v8046
        %8113 = vmatprep.subr.bf16.mxu0 0
        %8114 = vmatpush1.bf16.msra.mxu0 %v8047
        %8115 = vmatprep.subr.bf16.mxu0 0
        %8116 = vmatpush1.bf16.msra.mxu0 %v8048
        %8117 = vmatprep.subr.bf16.mxu0 0
        %8118 = vmatpush1.bf16.msra.mxu0 %v8049
        %8119 = vmatprep.subr.bf16.mxu0 0
        %8120 = vmatpush1.bf16.msra.mxu0 %v8050
        %8121 = vmatprep.subr.bf16.mxu0 0
        %8122 = vmatpush1.bf16.msra.mxu0 %v8051
        %8123 = vmatprep.subr.bf16.mxu0 0
        %8124 = vmatpush1.bf16.msra.mxu0 %v8052
        %8125 = vmatprep.subr.bf16.mxu0 0
        %8126 = vmatpush1.bf16.msra.mxu0 %v8053
        %8127 = vmatprep.subr.bf16.mxu0 0
        %8128 = vmatpush1.bf16.msra.mxu0 %v8054
        %8129 = vmatprep.subr.bf16.mxu0 0
        %8130 = vmatpush1.bf16.msra.mxu0 %v8055
        %8131 = vmatprep.subr.bf16.mxu0 0
        %8132 = vmatpush1.bf16.msra.mxu0 %v8056
        %8133 = vmatprep.subr.bf16.mxu0 0
        %8134 = vmatpush1.bf16.msra.mxu0 %v8057
        %8135 = vmatprep.subr.bf16.mxu0 0
        %8136 = vmatpush1.bf16.msra.mxu0 %v8058
        %8137 = vmatprep.subr.bf16.mxu0 0
        %8138 = vmatpush1.bf16.msra.mxu0 %v8059
        %8139 = vmatprep.subr.bf16.mxu0 0
        %8140 = vmatpush1.bf16.msra.mxu0 %v8060
        %8141 = vmatprep.mubr.bf16.mxu0 %v7815
        %8142 = vmatmul.mubr.bf16.gmra.mrb[0].mxu0 %v7814
        %v8143 = vpop.f32.mrb[0].mxu0
        %v8144 = vadd.f32 %v7915, %v8143
        %v8145 = vpop.f32.mrb[0].mxu0
        %v8146 = vpop.f32.mrb[0].mxu0
        %v8147 = vadd.f32 %v7915, %v8146
        %v8148 = vpop.f32.mrb[0].mxu0
        %8149 = vmatprep.mubr.bf16.mxu0 %v7819
        %8150 = vmatmul.mubr.bf16.gmra.mrb[0].mxu0 %v7818
        %v8151 = vpop.f32.mrb[0].mxu0
        %v8152 = vadd.f32 %v7915, %v8151
        %v8153 = vpop.f32.mrb[0].mxu0
        %v8154 = vpop.f32.mrb[0].mxu0
        %v8155 = vadd.f32 %v7915, %v8154
        %v8156 = vpop.f32.mrb[0].mxu0
        %8157 = vmatprep.mubr.bf16.mxu0 %v7823
        %8158 = vmatmul.mubr.bf16.gmra.mrb[0].mxu0 %v7822
        %v8159 = vpop.f32.mrb[0].mxu0
        %v8160 = vadd.f32 %v7915, %v8159
        %v8161 = vpop.f32.mrb[0].mxu0
        %v8162 = vpop.f32.mrb[0].mxu0
        %v8163 = vadd.f32 %v7915, %v8162
        %v8164 = vpop.f32.mrb[0].mxu0
        %8165 = vmatprep.mubr.bf16.mxu0 %v7827
        %8166 = vmatmul.mubr.bf16.gmra.mrb[0].mxu0 %v7826
        %v8167 = vpop.f32.mrb[0].mxu0
        %v8168 = vadd.f32 %v7915, %v8167
        %v8169 = vpop.f32.mrb[0].mxu0
        %v8170 = vpop.f32.mrb[0].mxu0
        %v8171 = vadd.f32 %v7915, %v8170
        %v8172 = vpop.f32.mrb[0].mxu0
        %8173 = vmatprep.mubr.bf16.mxu0 %v7831
        %8174 = vmatmul.mubr.bf16.gmra.mrb[0].mxu0 %v7830
        %v8175 = vpop.f32.mrb[0].mxu0
        %v8176 = vadd.f32 %v7915, %v8175
        %v8177 = vpop.f32.mrb[0].mxu0
        %v8178 = vpop.f32.mrb[0].mxu0
        %v8179 = vadd.f32 %v7915, %v8178
        %v8180 = vpop.f32.mrb[0].mxu0
        %8181 = vmatprep.mubr.bf16.mxu0 %v7835
        %8182 = vmatmul.mubr.bf16.gmra.mrb[0].mxu0 %v7834
        %v8183 = vpop.f32.mrb[0].mxu0
        %v8184 = vadd.f32 %v7915, %v8183
        %v8185 = vpop.f32.mrb[0].mxu0
        %v8186 = vpop.f32.mrb[0].mxu0
        %v8187 = vadd.f32 %v7915, %v8186
        %v8188 = vpop.f32.mrb[0].mxu0
        %8189 = vmatprep.mubr.bf16.mxu0 %v7839
        %8190 = vmatmul.mubr.bf16.gmra.mrb[0].mxu0 %v7838
        %v8191 = vpop.f32.mrb[0].mxu0
        %v8192 = vadd.f32 %v7915, %v8191
        %v8193 = vpop.f32.mrb[0].mxu0
        %v8194 = vpop.f32.mrb[0].mxu0
        %v8195 = vadd.f32 %v7915, %v8194
        %v8196 = vpop.f32.mrb[0].mxu0
        %8197 = vmatprep.mubr.bf16.mxu0 %v7843
        %8198 = vmatmul.mubr.bf16.gmra.mrb[0].mxu0 %v7842
        %v8199 = vpop.f32.mrb[0].mxu0
        %v8200 = vadd.f32 %v7915, %v8199
        %v8201 = vpop.f32.mrb[0].mxu0
        %v8202 = vpop.f32.mrb[0].mxu0
        %v8203 = vadd.f32 %v7915, %v8202
        %v8204 = vpop.f32.mrb[0].mxu0
        %8205 = vdwg.mxu0
        %8206 = vmatprep.subr.bf16.mxu0 0
        %8207 = vmatpush1.bf16.msra.mxu0 %v8061
        %8208 = vmatprep.subr.bf16.mxu0 0
        %8209 = vmatpush1.bf16.msra.mxu0 %v8062
        %8210 = vmatprep.subr.bf16.mxu0 0
        %8211 = vmatpush1.bf16.msra.mxu0 %v8063
        %8212 = vmatprep.subr.bf16.mxu0 0
        %8213 = vmatpush1.bf16.msra.mxu0 %v8064
        %8214 = vmatprep.subr.bf16.mxu0 0
        %8215 = vmatpush1.bf16.msra.mxu0 %v8065
        %8216 = vmatprep.subr.bf16.mxu0 0
        %8217 = vmatpush1.bf16.msra.mxu0 %v8066
        %8218 = vmatprep.subr.bf16.mxu0 0
        %8219 = vmatpush1.bf16.msra.mxu0 %v8067
        %8220 = vmatprep.subr.bf16.mxu0 0
        %8221 = vmatpush1.bf16.msra.mxu0 %v8068
        %8222 = vmatprep.subr.bf16.mxu0 0
        %8223 = vmatpush1.bf16.msra.mxu0 %v8069
        %8224 = vmatprep.subr.bf16.mxu0 0
        %8225 = vmatpush1.bf16.msra.mxu0 %v8070
        %8226 = vmatprep.subr.bf16.mxu0 0
        %8227 = vmatpush1.bf16.msra.mxu0 %v8071
        %8228 = vmatprep.subr.bf16.mxu0 0
        %8229 = vmatpush1.bf16.msra.mxu0 %v8072
        %8230 = vmatprep.subr.bf16.mxu0 0
        %8231 = vmatpush1.bf16.msra.mxu0 %v8073
        %8232 = vmatprep.subr.bf16.mxu0 0
        %8233 = vmatpush1.bf16.msra.mxu0 %v8074
        %8234 = vmatprep.subr.bf16.mxu0 0
        %8235 = vmatpush1.bf16.msra.mxu0 %v8075
        %8236 = vmatprep.subr.bf16.mxu0 0
        %8237 = vmatpush1.bf16.msra.mxu0 %v8076
        %8238 = vmatprep.mubr.bf16.mxu0 %v7817
        %8239 = vmatmul.mubr.bf16.gmra.mrb[0].mxu0 %v7816
        %v8240 = vpop.f32.mrb[0].mxu0
        %v8241 = vadd.f32 %v8144, %v8240
        %v8242 = vpop.f32.mrb[0].mxu0
        %v8243 = vpop.f32.mrb[0].mxu0
        %v8244 = vadd.f32 %v8147, %v8243
        %v8245 = vpop.f32.mrb[0].mxu0
        %8246 = vmatprep.mubr.bf16.mxu0 %v7821
        %8247 = vmatmul.mubr.bf16.gmra.mrb[0].mxu0 %v7820
        %v8248 = vpop.f32.mrb[0].mxu0
        %v8249 = vadd.f32 %v8152, %v8248
        %v8250 = vpop.f32.mrb[0].mxu0
        %v8251 = vpop.f32.mrb[0].mxu0
        %v8252 = vadd.f32 %v8155, %v8251
        %v8253 = vpop.f32.mrb[0].mxu0
        %8254 = vmatprep.mubr.bf16.mxu0 %v7825
        %8255 = vmatmul.mubr.bf16.gmra.mrb[0].mxu0 %v7824
        %v8256 = vpop.f32.mrb[0].mxu0
        %v8257 = vadd.f32 %v8160, %v8256
        %v8258 = vpop.f32.mrb[0].mxu0
        %v8259 = vpop.f32.mrb[0].mxu0
        %v8260 = vadd.f32 %v8163, %v8259
        %v8261 = vpop.f32.mrb[0].mxu0
        %8262 = vmatprep.mubr.bf16.mxu0 %v7829
        %8263 = vmatmul.mubr.bf16.gmra.mrb[0].mxu0 %v7828
        %v8264 = vpop.f32.mrb[0].mxu0
        %v8265 = vadd.f32 %v8168, %v8264
        %v8266 = vpop.f32.mrb[0].mxu0
        %v8267 = vpop.f32.mrb[0].mxu0
        %v8268 = vadd.f32 %v8171, %v8267
        %v8269 = vpop.f32.mrb[0].mxu0
        %8270 = vmatprep.mubr.bf16.mxu0 %v7833
        %8271 = vmatmul.mubr.bf16.gmra.mrb[0].mxu0 %v7832
        %v8272 = vpop.f32.mrb[0].mxu0
        %v8273 = vadd.f32 %v8176, %v8272
        %v8274 = vpop.f32.mrb[0].mxu0
        %v8275 = vpop.f32.mrb[0].mxu0
        %v8276 = vadd.f32 %v8179, %v8275
        %v8277 = vpop.f32.mrb[0].mxu0
        %8278 = vmatprep.mubr.bf16.mxu0 %v7837
        %8279 = vmatmul.mubr.bf16.gmra.mrb[0].mxu0 %v7836
        %v8280 = vpop.f32.mrb[0].mxu0
        %v8281 = vadd.f32 %v8184, %v8280
        %v8282 = vpop.f32.mrb[0].mxu0
        %v8283 = vpop.f32.mrb[0].mxu0
        %v8284 = vadd.f32 %v8187, %v8283
        %v8285 = vpop.f32.mrb[0].mxu0
        %8286 = vmatprep.mubr.bf16.mxu0 %v7841
        %8287 = vmatmul.mubr.bf16.gmra.mrb[0].mxu0 %v7840
        %v8288 = vpop.f32.mrb[0].mxu0
        %v8289 = vadd.f32 %v8192, %v8288
        %v8290 = vpop.f32.mrb[0].mxu0
        %v8291 = vpop.f32.mrb[0].mxu0
        %v8292 = vadd.f32 %v8195, %v8291
        %v8293 = vpop.f32.mrb[0].mxu0
        %8294 = vmatprep.mubr.bf16.mxu0 %v7845
        %8295 = vmatmul.mubr.bf16.gmra.mrb[0].mxu0 %v7844
        %v8296 = vpop.f32.mrb[0].mxu0
        %v8297 = vadd.f32 %v8200, %v8296
        %v8298 = vpop.f32.mrb[0].mxu0
        %v8299 = vpop.f32.mrb[0].mxu0
        %v8300 = vadd.f32 %v8203, %v8299
        %v8301 = vpop.f32.mrb[0].mxu0
        %8302 = vdwg.mxu0
        %v8304 = vlaneseq
        %v8305 = vshrl.u32 %v8304, 7
        %v8306 = vsub.s32 0, %v8305
        %v8307 = vrot.slane %v3415, %v8306
        %v8309 = vmul.f32 %v8307, %v8241
        %v8310 = vmul.f32 %v8307, %v8244
        %v8311 = vmul.f32 %v8307, %v8249
        %v8312 = vmul.f32 %v8307, %v8252
        %v8313 = vmul.f32 %v8307, %v8257
        %v8314 = vmul.f32 %v8307, %v8260
        %v8315 = vmul.f32 %v8307, %v8265
        %v8316 = vmul.f32 %v8307, %v8268
        %v8317 = vmul.f32 %v8307, %v8273
        %v8318 = vmul.f32 %v8307, %v8276
        %v8319 = vmul.f32 %v8307, %v8281
        %v8320 = vmul.f32 %v8307, %v8284
        %v8321 = vmul.f32 %v8307, %v8289
        %v8322 = vmul.f32 %v8307, %v8292
        %v8323 = vmul.f32 %v8307, %v8297
        %v8324 = vmul.f32 %v8307, %v8300
        %v8325 = vadd.f32 %v6552, %v8309
        %v8326 = vadd.f32 %v6553, %v8310
        %v8327 = vadd.f32 %v6554, %v8311
        %v8328 = vadd.f32 %v6555, %v8312
        %v8329 = vadd.f32 %v6556, %v8313
        %v8330 = vadd.f32 %v6557, %v8314
        %v8331 = vadd.f32 %v6558, %v8315
        %v8332 = vadd.f32 %v6559, %v8316
        %v8333 = vadd.f32 %v6560, %v8317
        %v8334 = vadd.f32 %v6561, %v8318
        %v8335 = vadd.f32 %v6562, %v8319
        %v8336 = vadd.f32 %v6563, %v8320
        %v8337 = vadd.f32 %v6564, %v8321
        %v8338 = vadd.f32 %v6565, %v8322
        %v8339 = vadd.f32 %v6566, %v8323
        %v8340 = vadd.f32 %v6567, %v8324
        %8341 = vst [vmem:[%s551] sm:$0xff] %v8325
        %8342 = vst [vmem:[%s551 + $0x8] sm:$0xff] %v8326
        %8343 = vst [vmem:[%s551 + $0x10] sm:$0xff] %v8327
        %8344 = vst [vmem:[%s551 + $0x18] sm:$0xff] %v8328
        %8345 = vst [vmem:[%s551 + $0x20] sm:$0xff] %v8329
        %8346 = vst [vmem:[%s551 + $0x28] sm:$0xff] %v8330
        %8347 = vst [vmem:[%s551 + $0x30] sm:$0xff] %v8331
        %8348 = vst [vmem:[%s551 + $0x38] sm:$0xff] %v8332
        %8349 = vst [vmem:[%s551 + $0x40] sm:$0xff] %v8333
        %8350 = vst [vmem:[%s551 + $0x48] sm:$0xff] %v8334
        %8351 = vst [vmem:[%s551 + $0x50] sm:$0xff] %v8335
        %8352 = vst [vmem:[%s551 + $0x58] sm:$0xff] %v8336
        %8353 = vst [vmem:[%s551 + $0x60] sm:$0xff] %v8337
        %8354 = vst [vmem:[%s551 + $0x68] sm:$0xff] %v8338
        %8355 = vst [vmem:[%s551 + $0x70] sm:$0xff] %v8339
        %8356 = vst [vmem:[%s551 + $0x78] sm:$0xff] %v8340
        %s8357 = sand.u32 %s318, 1
        %s8358 = scalar_lea.sflag [#allocation8], %s8357
        %s8359 = sand.u32 %s318, 1
        %s8360 = smul.addr %s8359, 128
        %s8361 = scalar_lea.vmem [#allocation18], %s8360
        // Predicated region
        $region101: #{tpu_custom_call.1} parent=67 // pred_check
          %p8362 = pneg %p328
        $region102: #{tpu_custom_call.1} parent=67 // pred_check_branch
          %8364 = sbr.rel (%p8362) target = $region104
        $region103: #{tpu_custom_call.1} parent=67 // pred_region
          %s8365 = smul.u32 16, %s39
          %s8367 = ssub.s32 2048, 2048
          %8368 = vsyncadd %s8358, %s8367
          %s8369 = smul.addr %s38, 32
          %s8370 = sadd.s32 %s8365, %s8369
          %s8371 = smul.addr %s8370, 128
          %s8372 = scalar_lea.hbm %s12, %s8371
          %s8373 = sshll.u32 %s8361, 4
          %s8374 = int_to_ptr.vmem [resolvable:$true] %s8373
          %8379 = dma.vmem_to_hbm [thread:$0]  %s8374, 2048, %s8372, %s8358, 128, 128, 8
        $region104: #{tpu_custom_call.1} parent=67 // pred_fallthru
          _
      $region68: #{tpu_custom_call.1} parent=5 // pred_fallthru
        _
      %p8380 = scmp.le.s32.totalorder 2, %s29
      // Predicated region
      $region105: #{tpu_custom_call.1} parent=5 // pred_check
        %p8381 = pneg %p8380
      $region106: #{tpu_custom_call.1} parent=5 // pred_check_branch
        %8383 = sbr.rel (%p8381) target = $region108
      $region107: #{tpu_custom_call.1} parent=5 // pred_region
        %s8384 = ssub.s32 %s29, 2
        // Predicated region
        $region109: #{tpu_custom_call.1} parent=107 // pred_check
          %p8385 = pneg %p334
        $region110: #{tpu_custom_call.1} parent=107 // pred_check_branch
          %8387 = sbr.rel (%p8385) target = $region112
        $region111: #{tpu_custom_call.1} parent=107 // pred_region
          %s8388 = sand.u32 %s319, 1
          %s8389 = scalar_lea.sflag [#allocation8], %s8388
          %s8390 = sand.u32 %s319, 1
          %s8391 = smul.addr %s8390, 128
          %s8392 = scalar_lea.vmem [#allocation18], %s8391
          %8393 = dma.done %s8389, 2048
        $region112: #{tpu_custom_call.1} parent=107 // pred_fallthru
          _
      $region108: #{tpu_custom_call.1} parent=5 // pred_fallthru
        _
    $region6: #{tpu_custom_call.1} parent=1 // loop_footer
      %s33 = sadd.s32 1, %s29
    $region7: #{tpu_custom_call.1} parent=1 // loop_footer_branch
      %28 = sbr.rel target = $region3
    $region8: #{tpu_custom_call.1} parent=1 // loop_exit
      _
    %8394 = vsyncpa [#allocation7], 1
    %s8395 = scalar_lea.sflag [#allocation7], 1
    %8396 = vsyncpa %s8395, 1
    %8397 = vsyncpa [#allocation10], 1
    %s8398 = scalar_lea.sflag [#allocation10], 1
    %8399 = vsyncpa %s8398, 1
    %8400 = vsyncpa [#allocation13], 1
    %8401 = vsyncpa [#allocation16], 1
    %8402 = vsyncpa [#allocation8], 1
    %s8403 = scalar_lea.sflag [#allocation8], 1
    %8404 = vsyncpa %s8403, 1

</llo_original>
